<compile_context>
chip_gen: v7x
topology: tpu7x:2x2x1
jax: 0.10.0
libtpu: 0.0.40
codegen_flags: <defaults>
</compile_context>

<pallas_src>
import functools

import numpy as np

import jax
import jax.numpy as jnp
from jax import lax
from jax.experimental import pallas as pl
from jax.experimental.pallas import tpu as pltpu


# ----------------------------- Static geometry ------------------------------

_HO1, _WO1 = 26, 26                    # conv1 output spatial (28 - 2)
_ROWS1 = _HO1 * _WO1                   # 676 valid rows per image
_PAD_ROWS1 = 680                       # padded rows/img (mult of 8, >= 624+54)
_HO2, _WO2 = 24, 24                    # conv2 valid output spatial
_MFULL = _HO2 * _WO1                   # 624 full-width conv2 rows (2 junk cols)
_LAST_POOL_ROW = (_HO2 - 2) * _WO1 + (_WO2 - 2)     # 594
_PM_ROWS = _LAST_POOL_ROW + 1          # 595 rows of pooled-window maxima
_WM_ROWS = _LAST_POOL_ROW + _WO1 + 1   # 621 rows of W-pair maxima
_TAP_OFFSETS = tuple(kh * _WO1 + kw for kh in range(3) for kw in range(3))
_CIN2, _COUT2 = 32, 64
_HP, _WP = 12, 12
_FLAT = _HP * _WP * _COUT2             # 9216


def _round_up(x, m):
    return ((x + m - 1) // m) * m


def _pick_image_block(n):
    """Images per conv2 grid step: amortize per-step overhead but keep grid>=2."""
    for b in (8, 4, 2):
        if n % b == 0 and n // b >= 2:
            return b
    return 1


# ---------------------------------------------------------------------------
# Kernel 1: M-tiled matmul + bias + relu (conv1's tiny im2col matmul), bf16 out
# ---------------------------------------------------------------------------

def _mm_bias_relu_kernel(a_ref, w_ref, b_ref, o_ref):
    acc = jnp.dot(a_ref[...], w_ref[...], preferred_element_type=jnp.float32)
    o_ref[...] = jnp.maximum(acc + b_ref[...], 0.0).astype(o_ref.dtype)


def matmul_bias_relu(a, w, b, *, out_dtype=jnp.bfloat16):
    """a: (M, K) bf16, w: (K, N) bf16, b: (1, N) f32 -> (M, N) out_dtype."""
    m, k = a.shape
    _, n_out = w.shape
    tm = min(4096, _round_up(pl.cdiv(m, 2), 8))       # big tiles, grid >= 2
    return pl.pallas_call(
        _mm_bias_relu_kernel,
        out_shape=jax.ShapeDtypeStruct((m, n_out), out_dtype),
        grid=(pl.cdiv(m, tm),),
        in_specs=[pl.BlockSpec((tm, k), lambda i: (i, 0)),
                  pl.BlockSpec((k, n_out), lambda i: (0, 0)),
                  pl.BlockSpec((1, n_out), lambda i: (0, 0))],
        out_specs=pl.BlockSpec((tm, n_out), lambda i: (i, 0)),
        compiler_params=pltpu.CompilerParams(
            dimension_semantics=("parallel",)),
        cost_estimate=pl.CostEstimate(
            flops=int(2 * m * k * n_out), transcendentals=0,
            bytes_accessed=int(a.size * a.dtype.itemsize + w.size * 2
                               + m * n_out * 2)),
    )(a, w, b)


# ---------------------------------------------------------------------------
# Kernel 2: fused conv2 3x3 (32->64) + bias + relu + 2x2 maxpool + NHWC flatten.
# Per image: 9 contiguous full-width tap slices -> one (624, 288) x (288, 64)
# MXU matmul -> relu -> W-pair / H-pair maxima -> MXU gather of the 144 pooled
# rows into a lane-dense (72, 128) tile.
# ---------------------------------------------------------------------------

def _conv2_pool_kernel(x_ref, w_ref, b_ref, se_ref, so_ref, o_ref, *, n_img):
    w = w_ref[...]                                     # (288, 64)  bf16
    bias = b_ref[...]                                  # (1, 64)    f32
    se = se_ref[...]                                   # (72, 595)  bf16
    so = so_ref[...]                                   # (72, 595)  bf16
    for b in range(n_img):
        # 9 contiguous sublane slices of the flattened (680, 32) image; merged
        # along K into one (624, 288) operand (no per-tap reshape relayout).
        taps = [x_ref[b, off:off + _MFULL, :] for off in _TAP_OFFSETS]
        a = jnp.concatenate(taps, axis=1)              # (624, 288) bf16
        z = jnp.dot(a, w, preferred_element_type=jnp.float32)      # (624, 64)
        z = jnp.maximum(z + bias, 0.0).astype(jnp.bfloat16)
        # W-pair max (rows o, o+1) then H-pair max (rows o, o+26): pm[o] is the
        # 2x2-max of the window starting at flattened position o.
        wm = jnp.maximum(z[0:_WM_ROWS, :], z[1:_WM_ROWS + 1, :])        # (621, 64)
        pm = jnp.maximum(wm[0:_PM_ROWS, :], wm[_WO1:_WO1 + _PM_ROWS, :])  # (595, 64)
        # Gather the 144 valid pooled rows on the MXU (constant 0/1 matrices),
        # split by wp parity so the result is already the (72, 128) lane-dense
        # layout whose row-major flatten equals the NHWC (hp, wp, c) flatten.
        pe = jnp.dot(se, pm, preferred_element_type=jnp.float32)    # (72, 64)
        po = jnp.dot(so, pm, preferred_element_type=jnp.float32)    # (72, 64)
        o_ref[b] = jnp.concatenate(
            [pe.astype(jnp.bfloat16), po.astype(jnp.bfloat16)], axis=1)


def conv2_pool_flatten(y1p, w2m, b2, s_even, s_odd):
    """y1p: (N, 680, 32) bf16, w2m: (288, 64) bf16, b2: (1, 64) f32,
    s_even/s_odd: (72, 595) bf16 -> (N, 72, 128) bf16 (pooled, NHWC-flattened)."""
    n = y1p.shape[0]
    n_img = _pick_image_block(n)
    kernel = functools.partial(_conv2_pool_kernel, n_img=n_img)
    flops = 2 * n * (_MFULL * 9 * _CIN2 * _COUT2 + 2 * 72 * _PM_ROWS * _COUT2)
    bytes_accessed = (y1p.size * 2 + w2m.size * 2 + s_even.size * 4
                      + n * 72 * 128 * 2)
    return pl.pallas_call(
        kernel,
        out_shape=jax.ShapeDtypeStruct((n, 72, 128), jnp.bfloat16),
        grid=(n // n_img,),
        in_specs=[pl.BlockSpec((n_img, _PAD_ROWS1, _CIN2), lambda i: (i, 0, 0)),
                  pl.BlockSpec((9 * _CIN2, _COUT2), lambda i: (0, 0)),
                  pl.BlockSpec((1, _COUT2), lambda i: (0, 0)),
                  pl.BlockSpec((72, _PM_ROWS), lambda i: (0, 0)),
                  pl.BlockSpec((72, _PM_ROWS), lambda i: (0, 0))],
        out_specs=pl.BlockSpec((n_img, 72, 128), lambda i: (i, 0, 0)),
        compiler_params=pltpu.CompilerParams(
            dimension_semantics=("parallel",)),
        cost_estimate=pl.CostEstimate(flops=int(flops), transcendentals=0,
                                      bytes_accessed=int(bytes_accessed)),
    )(y1p, w2m, b2, s_even, s_odd)


# ---------------------------------------------------------------------------
# Kernel 3: fused fc1(9216->128) + relu + fc2(128->10) + log_softmax.
# ---------------------------------------------------------------------------

def _fc_head_kernel(x_ref, w1_ref, b1_ref, w2_ref, b2_ref, o_ref):
    h = jnp.dot(x_ref[...], w1_ref[...], preferred_element_type=jnp.float32)
    h = jnp.maximum(h + b1_ref[...], 0.0)                        # (tb, 128) f32
    z = jnp.dot(h.astype(jnp.bfloat16), w2_ref[...],
                preferred_element_type=jnp.float32) + b2_ref[...]
    m = jnp.max(z, axis=-1, keepdims=True)
    s = z - m
    lse = jnp.log(jnp.sum(jnp.exp(s), axis=-1, keepdims=True))
    o_ref[...] = s - lse


def fc_head(x, w1, b1, w2, b2):
    """x: (B, 9216) bf16, w1: (9216, 128) bf16, w2: (128, 10) bf16 -> (B, 10) f32."""
    bsz, k = x.shape
    hdim = w1.shape[1]
    odim = w2.shape[1]
    # Fixed batch tile (full MXU M on v6e/v7x); the cdiv grid masks any partial
    # last block, so odd large batches never get a whole-batch VMEM block.
    tb = min(256, bsz)
    flops = 2 * bsz * k * hdim + 2 * bsz * hdim * odim
    bytes_accessed = x.size * 2 + w1.size * 2 + w2.size * 2 + bsz * odim * 4
    return pl.pallas_call(
        _fc_head_kernel,
        out_shape=jax.ShapeDtypeStruct((bsz, odim), jnp.float32),
        grid=(pl.cdiv(bsz, tb),),
        in_specs=[pl.BlockSpec((tb, k), lambda i: (i, 0)),
                  pl.BlockSpec((k, hdim), lambda i: (0, 0)),
                  pl.BlockSpec((1, hdim), lambda i: (0, 0)),
                  pl.BlockSpec((hdim, odim), lambda i: (0, 0)),
                  pl.BlockSpec((1, odim), lambda i: (0, 0))],
        out_specs=pl.BlockSpec((tb, odim), lambda i: (i, 0)),
        compiler_params=pltpu.CompilerParams(
            dimension_semantics=("parallel",),
            vmem_limit_bytes=32 * 1024 * 1024),
        cost_estimate=pl.CostEstimate(flops=int(flops),
                                      transcendentals=int(bsz * (odim + 1)),
                                      bytes_accessed=int(bytes_accessed)),
    )(x, w1, b1, w2, b2)


# ------------------------------ Model helpers ------------------------------

def im2col_conv1(x_nhwc):
    """3x3 valid patches ((kh,kw)-major) of the (N,28,28,1) input, zero-padded
    to _PAD_ROWS1 rows per image so conv2's full-width tap slices stay in bounds.
    Returns (N*_PAD_ROWS1, 9) bf16."""
    n, h, w, c = x_nhwc.shape
    ho, wo = h - 2, w - 2
    patches = [x_nhwc[:, i:i + ho, j:j + wo, :] for i in range(3) for j in range(3)]
    p = jnp.stack(patches, axis=3).reshape(n, ho * wo, 9 * c)
    p = jnp.pad(p, ((0, 0), (0, _PAD_ROWS1 - ho * wo), (0, 0)))
    return p.reshape(n * _PAD_ROWS1, 9 * c).astype(jnp.bfloat16)


def _pool_select_matrix(parity):
    """(72, 595) 0/1 bf16 matrix: row hp*6+wq picks pooled-window row
    2*hp*26 + 2*(2*wq + parity) of pm (the 2x2-max gather, done on the MXU)."""
    s = np.zeros((72, _PM_ROWS), np.float32)
    for hp in range(_HP):
        for wq in range(_WP // 2):
            wp = 2 * wq + parity
            s[hp * 6 + wq, 2 * hp * _WO1 + 2 * wp] = 1.0
    return jnp.asarray(s, jnp.bfloat16)


def init_params(key):
    ks = jax.random.split(key, 8)
    p = {}
    p["conv1_w"] = 0.1 * jax.random.normal(ks[0], (32, 1, 3, 3), jnp.float32)
    p["conv1_b"] = 0.01 * jax.random.normal(ks[1], (32,), jnp.float32)
    p["conv2_w"] = 0.05 * jax.random.normal(ks[2], (64, 32, 3, 3), jnp.float32)
    p["conv2_b"] = 0.01 * jax.random.normal(ks[3], (64,), jnp.float32)
    p["fc1_w"] = 0.02 * jax.random.normal(ks[4], (128, 9216), jnp.float32)  # (out,in)
    p["fc1_b"] = 0.01 * jax.random.normal(ks[5], (128,), jnp.float32)
    p["fc2_w"] = 0.1 * jax.random.normal(ks[6], (10, 128), jnp.float32)
    p["fc2_b"] = 0.01 * jax.random.normal(ks[7], (10,), jnp.float32)
    return p


def prepare_params(p):
    """One-time weight layout transforms: conv weights to matmul layouts
    (conv2 merged to K=288), fc1 transposed + input axis permuted for the NHWC
    flatten, fc2 transposed, pooling gather matrices; MXU operands bf16."""
    q = {}
    # conv1: (Cout, 1, 3, 3) -> (9, 32), row = kh*3 + kw (matches im2col cols).
    q["conv1_w"] = (jnp.transpose(p["conv1_w"], (2, 3, 1, 0))
                    .reshape(9, 32).astype(jnp.bfloat16))
    q["conv1_b"] = p["conv1_b"][None, :].astype(jnp.float32)
    # conv2: (Cout, Cin, 3, 3) -> (kh, kw, cin, cout) -> (288, 64): one merged
    # K=288 MXU operand instead of 9 mostly-empty K=32 passes.
    q["conv2_w"] = (jnp.transpose(p["conv2_w"], (2, 3, 1, 0))
                    .reshape(9 * _CIN2, _COUT2).astype(jnp.bfloat16))
    q["conv2_b"] = p["conv2_b"][None, :].astype(jnp.float32)
    # fc1: PyTorch flattens NCHW (c*144 + h*12 + w); we flatten NHWC
    # (h*768 + w*64 + c), so permute the 9216-input axis accordingly + transpose.
    w1 = p["fc1_w"].reshape(128, 64, 12, 12)                   # (out, C, H, W)
    w1 = jnp.transpose(w1, (2, 3, 1, 0)).reshape(9216, 128)    # (H, W, C, out)
    q["fc1_w"] = w1.astype(jnp.bfloat16)
    q["fc1_b"] = p["fc1_b"][None, :].astype(jnp.float32)
    q["fc2_w"] = jnp.transpose(p["fc2_w"]).astype(jnp.bfloat16)   # (128, 10)
    q["fc2_b"] = p["fc2_b"][None, :].astype(jnp.float32)
    q["pool_sel_even"] = _pool_select_matrix(0)
    q["pool_sel_odd"] = _pool_select_matrix(1)
    return q


def cnn_net_forward(params, x_nchw):
    """x_nchw: (N, 1, 28, 28) f32 -> (N, 10) log-probabilities."""
    n = x_nchw.shape[0]
    x = jnp.transpose(x_nchw, (0, 2, 3, 1))             # NCHW -> NHWC (N,28,28,1)

    # conv1 + relu: tiny Cin=1 im2col (XLA glue) + M-tiled fused matmul kernel,
    # bf16 output (halves y1 HBM traffic and conv2's input block).
    a1 = im2col_conv1(x)                                 # (N*680, 9) bf16
    y1 = matmul_bias_relu(a1, params["conv1_w"], params["conv1_b"])  # (N*680, 32) bf16
    y1 = y1.reshape(n, _PAD_ROWS1, _CIN2)

    # conv2 + relu + 2x2 maxpool + NHWC flatten fused in one kernel; the output
    # is already lane-dense (N, 72, 128) so the free HBM reshape below is the
    # fc1 input (fc1's weight rows were permuted at init to match).
    pooled = conv2_pool_flatten(y1, params["conv2_w"], params["conv2_b"],
                                params["pool_sel_even"], params["pool_sel_odd"])

    # dropout1 / dropout2 are identity at inference time.
    # TODO(synk): training-mode Dropout2d not implemented (inference semantics only).

    flat = pooled.reshape(n, _FLAT)                      # (N, 9216) bf16, free

    # fc1 + relu + fc2 + log_softmax, fused in one Pallas kernel.
    return fc_head(flat, params["fc1_w"], params["fc1_b"],
                   params["fc2_w"], params["fc2_b"])     # (N, 10) f32


# ----------------------- Pure-JAX reference (f32) ---------------------------

def reference_forward(p, x_nchw):
    y = lax.conv_general_dilated(x_nchw, p["conv1_w"], (1, 1), "VALID",
                                 dimension_numbers=("NCHW", "OIHW", "NCHW"))
    y = jax.nn.relu(y + p["conv1_b"][None, :, None, None])
    y = lax.conv_general_dilated(y, p["conv2_w"], (1, 1), "VALID",
                                 dimension_numbers=("NCHW", "OIHW", "NCHW"))
    y = jax.nn.relu(y + p["conv2_b"][None, :, None, None])
    n, c, h, w = y.shape
    y = y.reshape(n, c, h // 2, 2, w // 2, 2).max(axis=(3, 5))
    y = y.reshape(n, c * (h // 2) * (w // 2))
    y = jax.nn.relu(y @ p["fc1_w"].T + p["fc1_b"])
    y = y @ p["fc2_w"].T + p["fc2_b"]
    return jax.nn.log_softmax(y, axis=-1)


# ---------------------------------- Main ------------------------------------

if __name__ == "__main__":
    key = jax.random.PRNGKey(0)
    k_param, k_x = jax.random.split(key)
    raw_params = init_params(k_param)
    params = prepare_params(raw_params)                  # one-time layout transforms

    # MNIST-shaped input: batch=2, 1 channel, 28x28 (required by fc1's 9216 input).
    x = jax.random.normal(k_x, (2, 1, 28, 28), jnp.float32)

    fwd = jax.jit(cnn_net_forward)
    out = jax.block_until_ready(fwd(params, x))

    assert out.shape == (2, 10), out.shape
    # log_softmax sanity: probabilities sum to 1 per row (computed in f32).
    row_sums = jnp.exp(out).sum(axis=-1)
    assert bool(jnp.all(jnp.abs(row_sums - 1.0) < 1e-4)), row_sums

    # bf16 MXU path vs f32 reference: agree to ~1e-2 on log-probabilities.
    ref = reference_forward(raw_params, x)
    max_err = float(jnp.max(jnp.abs(out - ref)))
    assert max_err < 0.1, f"max |pallas - reference| = {max_err}"

    print("KERNEL_OK")
</pallas_src>

<mosaic_0001>
module attributes {stable_mosaic.version = 11 : i64} {
  func.func @_mm_bias_relu_kernel(%arg0: i32, %arg1: memref<680x9xbf16, #tpu.memory_space<vmem>>, %arg2: memref<9x32xbf16, #tpu.memory_space<vmem>>, %arg3: memref<1x32xf32, #tpu.memory_space<vmem>>, %arg4: memref<680x32xbf16, #tpu.memory_space<vmem>>) attributes {dimension_semantics = [#tpu.dimension_semantics<parallel>], iteration_bounds = array<i64: 2>, scalar_prefetch = 0 : i64, scratch_operands = 0 : i64, tpu.core_type = #tpu.core_type<tc>, window_params = [{transform_indices = @transform_0, window_bounds = array<i64: 680, 9>}, {pipeline_mode = #tpu.pipeline_mode<synchronous>, transform_indices = @transform_1, window_bounds = array<i64: 9, 32>}, {pipeline_mode = #tpu.pipeline_mode<synchronous>, transform_indices = @transform_2, window_bounds = array<i64: 1, 32>}, {transform_indices = @transform_3, window_bounds = array<i64: 680, 32>}]} {
    %c0 = arith.constant 0 : index
    %c0_0 = arith.constant 0 : index
    %0 = vector.load %arg1[%c0, %c0_0] : memref<680x9xbf16, #tpu.memory_space<vmem>>, vector<680x9xbf16>
    %c0_1 = arith.constant 0 : index
    %c0_2 = arith.constant 0 : index
    %1 = vector.load %arg2[%c0_1, %c0_2] : memref<9x32xbf16, #tpu.memory_space<vmem>>, vector<9x32xbf16>
    %cst = arith.constant dense<0.000000e+00> : vector<680x32xf32>
    %2 = tpu.matmul %0, %1, %cst {dimension_numbers = #tpu.dot_dimension_numbers<[1], [0], [0], [1], [0, 0, 1, 1], [], []>} : vector<680x9xbf16>, vector<9x32xbf16>, vector<680x32xf32> -> vector<680x32xf32>
    %c0_3 = arith.constant 0 : index
    %c0_4 = arith.constant 0 : index
    %3 = vector.load %arg3[%c0_3, %c0_4] : memref<1x32xf32, #tpu.memory_space<vmem>>, vector<1x32xf32>
    %4 = vector.broadcast %3 : vector<1x32xf32> to vector<680x32xf32>
    %5 = arith.addf %2, %4 : vector<680x32xf32>
    %cst_5 = arith.constant 0.000000e+00 : f32
    %6 = vector.broadcast %cst_5 : f32 to vector<680x32xf32>
    %7 = arith.maximumf %5, %6 : vector<680x32xf32>
    %8 = arith.truncf %7 : vector<680x32xf32> to vector<680x32xbf16>
    %c0_6 = arith.constant 0 : index
    %c0_7 = arith.constant 0 : index
    %9 = vector.load %arg4[%c0_6, %c0_7] : memref<680x32xbf16, #tpu.memory_space<vmem>>, vector<680x32xbf16>
    tpu.vector_store %arg4[%c0_6, %c0_7], %8 {strides = array<i32>} : memref<680x32xbf16, #tpu.memory_space<vmem>>, vector<680x32xbf16>,
    return
  }
  func.func @transform_0(%arg0: i32) -> (i32, i32) {
    %c0_i32 = arith.constant 0 : i32
    %c0_i32_0 = arith.constant 0 : i32
    return %arg0, %c0_i32 : i32, i32
  }
  func.func @transform_1(%arg0: i32) -> (i32, i32) {
    %c0_i32 = arith.constant 0 : i32
    %c0_i32_0 = arith.constant 0 : i32
    %c0_i32_1 = arith.constant 0 : i32
    return %c0_i32, %c0_i32_0 : i32, i32
  }
  func.func @transform_2(%arg0: i32) -> (i32, i32) {
    %c0_i32 = arith.constant 0 : i32
    %c0_i32_0 = arith.constant 0 : i32
    %c0_i32_1 = arith.constant 0 : i32
    return %c0_i32, %c0_i32_0 : i32, i32
  }
  func.func @transform_3(%arg0: i32) -> (i32, i32) {
    %c0_i32 = arith.constant 0 : i32
    %c0_i32_0 = arith.constant 0 : i32
    return %arg0, %c0_i32 : i32, i32
  }
}

module attributes {stable_mosaic.version = 11 : i64} {
  func.func @_conv2_pool_kernel(%arg0: i32, %arg1: memref<1x680x32xbf16, #tpu.memory_space<vmem>>, %arg2: memref<288x64xbf16, #tpu.memory_space<vmem>>, %arg3: memref<1x64xf32, #tpu.memory_space<vmem>>, %arg4: memref<72x595xbf16, #tpu.memory_space<vmem>>, %arg5: memref<72x595xbf16, #tpu.memory_space<vmem>>, %arg6: memref<1x72x128xbf16, #tpu.memory_space<vmem>>) attributes {dimension_semantics = [#tpu.dimension_semantics<parallel>], iteration_bounds = array<i64: 2>, scalar_prefetch = 0 : i64, scratch_operands = 0 : i64, tpu.core_type = #tpu.core_type<tc>, window_params = [{transform_indices = @transform_0, window_bounds = array<i64: 1, 680, 32>}, {pipeline_mode = #tpu.pipeline_mode<synchronous>, transform_indices = @transform_1, window_bounds = array<i64: 288, 64>}, {pipeline_mode = #tpu.pipeline_mode<synchronous>, transform_indices = @transform_2, window_bounds = array<i64: 1, 64>}, {pipeline_mode = #tpu.pipeline_mode<synchronous>, transform_indices = @transform_3, window_bounds = array<i64: 72, 595>}, {pipeline_mode = #tpu.pipeline_mode<synchronous>, transform_indices = @transform_4, window_bounds = array<i64: 72, 595>}, {transform_indices = @transform_5, window_bounds = array<i64: 1, 72, 128>}]} {
    %c0 = arith.constant 0 : index
    %c0_0 = arith.constant 0 : index
    %0 = vector.load %arg2[%c0, %c0_0] : memref<288x64xbf16, #tpu.memory_space<vmem>>, vector<288x64xbf16>
    %c0_1 = arith.constant 0 : index
    %c0_2 = arith.constant 0 : index
    %1 = vector.load %arg3[%c0_1, %c0_2] : memref<1x64xf32, #tpu.memory_space<vmem>>, vector<1x64xf32>
    %c0_3 = arith.constant 0 : index
    %c0_4 = arith.constant 0 : index
    %2 = vector.load %arg4[%c0_3, %c0_4] : memref<72x595xbf16, #tpu.memory_space<vmem>>, vector<72x595xbf16>
    %c0_5 = arith.constant 0 : index
    %c0_6 = arith.constant 0 : index
    %3 = vector.load %arg5[%c0_5, %c0_6] : memref<72x595xbf16, #tpu.memory_space<vmem>>, vector<72x595xbf16>
    %c0_7 = arith.constant 0 : index
    %c0_8 = arith.constant 0 : index
    %c0_9 = arith.constant 0 : index
    %4 = vector.load %arg1[%c0_7, %c0_8, %c0_9] : memref<1x680x32xbf16, #tpu.memory_space<vmem>>, vector<1x624x32xbf16>
    %5 = vector.shape_cast %4 : vector<1x624x32xbf16> to vector<624x32xbf16>
    %c0_10 = arith.constant 0 : index
    %c1 = arith.constant 1 : index
    %c0_11 = arith.constant 0 : index
    %6 = vector.load %arg1[%c0_10, %c1, %c0_11] : memref<1x680x32xbf16, #tpu.memory_space<vmem>>, vector<1x624x32xbf16>
    %7 = vector.shape_cast %6 : vector<1x624x32xbf16> to vector<624x32xbf16>
    %c0_12 = arith.constant 0 : index
    %c2 = arith.constant 2 : index
    %c0_13 = arith.constant 0 : index
    %8 = vector.load %arg1[%c0_12, %c2, %c0_13] : memref<1x680x32xbf16, #tpu.memory_space<vmem>>, vector<1x624x32xbf16>
    %9 = vector.shape_cast %8 : vector<1x624x32xbf16> to vector<624x32xbf16>
    %c0_14 = arith.constant 0 : index
    %c26 = arith.constant 26 : index
    %c0_15 = arith.constant 0 : index
    %10 = vector.load %arg1[%c0_14, %c26, %c0_15] : memref<1x680x32xbf16, #tpu.memory_space<vmem>>, vector<1x624x32xbf16>
    %11 = vector.shape_cast %10 : vector<1x624x32xbf16> to vector<624x32xbf16>
    %c0_16 = arith.constant 0 : index
    %c27 = arith.constant 27 : index
    %c0_17 = arith.constant 0 : index
    %12 = vector.load %arg1[%c0_16, %c27, %c0_17] : memref<1x680x32xbf16, #tpu.memory_space<vmem>>, vector<1x624x32xbf16>
    %13 = vector.shape_cast %12 : vector<1x624x32xbf16> to vector<624x32xbf16>
    %c0_18 = arith.constant 0 : index
    %c28 = arith.constant 28 : index
    %c0_19 = arith.constant 0 : index
    %14 = vector.load %arg1[%c0_18, %c28, %c0_19] : memref<1x680x32xbf16, #tpu.memory_space<vmem>>, vector<1x624x32xbf16>
    %15 = vector.shape_cast %14 : vector<1x624x32xbf16> to vector<624x32xbf16>
    %c0_20 = arith.constant 0 : index
    %c52 = arith.constant 52 : index
    %c0_21 = arith.constant 0 : index
    %16 = vector.load %arg1[%c0_20, %c52, %c0_21] : memref<1x680x32xbf16, #tpu.memory_space<vmem>>, vector<1x624x32xbf16>
    %17 = vector.shape_cast %16 : vector<1x624x32xbf16> to vector<624x32xbf16>
    %c0_22 = arith.constant 0 : index
    %c53 = arith.constant 53 : index
    %c0_23 = arith.constant 0 : index
    %18 = vector.load %arg1[%c0_22, %c53, %c0_23] : memref<1x680x32xbf16, #tpu.memory_space<vmem>>, vector<1x624x32xbf16>
    %19 = vector.shape_cast %18 : vector<1x624x32xbf16> to vector<624x32xbf16>
    %c0_24 = arith.constant 0 : index
    %c54 = arith.constant 54 : index
    %c0_25 = arith.constant 0 : index
    %20 = vector.load %arg1[%c0_24, %c54, %c0_25] : memref<1x680x32xbf16, #tpu.memory_space<vmem>>, vector<1x624x32xbf16>
    %21 = vector.shape_cast %20 : vector<1x624x32xbf16> to vector<624x32xbf16>
    %22 = tpu.concatenate %5, %7, %9, %11, %13, %15, %17, %19, %21 in 1 : vector<624x32xbf16>, vector<624x32xbf16>, vector<624x32xbf16>, vector<624x32xbf16>, vector<624x32xbf16>, vector<624x32xbf16>, vector<624x32xbf16>, vector<624x32xbf16>, vector<624x32xbf16> -> vector<624x288xbf16>
    %cst = arith.constant dense<0.000000e+00> : vector<624x64xf32>
    %23 = tpu.matmul %22, %0, %cst {dimension_numbers = #tpu.dot_dimension_numbers<[1], [0], [0], [1], [0, 0, 1, 1], [], []>} : vector<624x288xbf16>, vector<288x64xbf16>, vector<624x64xf32> -> vector<624x64xf32>
    %24 = vector.broadcast %1 : vector<1x64xf32> to vector<624x64xf32>
    %25 = arith.addf %23, %24 : vector<624x64xf32>
    %cst_26 = arith.constant 0.000000e+00 : f32
    %26 = vector.broadcast %cst_26 : f32 to vector<624x64xf32>
    %27 = arith.maximumf %25, %26 : vector<624x64xf32>
    %28 = arith.truncf %27 : vector<624x64xf32> to vector<624x64xbf16>
    %29 = vector.extract_strided_slice %28 {offsets = [0, 0], sizes = [621, 64], strides = [1, 1]} : vector<624x64xbf16> to vector<621x64xbf16>
    %30 = vector.extract_strided_slice %28 {offsets = [1, 0], sizes = [621, 64], strides = [1, 1]} : vector<624x64xbf16> to vector<621x64xbf16>
    %31 = arith.maximumf %29, %30 : vector<621x64xbf16>
    %32 = vector.extract_strided_slice %31 {offsets = [0, 0], sizes = [595, 64], strides = [1, 1]} : vector<621x64xbf16> to vector<595x64xbf16>
    %33 = vector.extract_strided_slice %31 {offsets = [26, 0], sizes = [595, 64], strides = [1, 1]} : vector<621x64xbf16> to vector<595x64xbf16>
    %34 = arith.maximumf %32, %33 : vector<595x64xbf16>
    %cst_27 = arith.constant dense<0.000000e+00> : vector<72x64xf32>
    %35 = tpu.matmul %2, %34, %cst_27 {dimension_numbers = #tpu.dot_dimension_numbers<[1], [0], [0], [1], [0, 0, 1, 1], [], []>} : vector<72x595xbf16>, vector<595x64xbf16>, vector<72x64xf32> -> vector<72x64xf32>
    %cst_28 = arith.constant dense<0.000000e+00> : vector<72x64xf32>
    %36 = tpu.matmul %3, %34, %cst_28 {dimension_numbers = #tpu.dot_dimension_numbers<[1], [0], [0], [1], [0, 0, 1, 1], [], []>} : vector<72x595xbf16>, vector<595x64xbf16>, vector<72x64xf32> -> vector<72x64xf32>
    %37 = arith.truncf %35 : vector<72x64xf32> to vector<72x64xbf16>
    %38 = arith.truncf %36 : vector<72x64xf32> to vector<72x64xbf16>
    %39 = tpu.concatenate %37, %38 in 1 : vector<72x64xbf16>, vector<72x64xbf16> -> vector<72x128xbf16>
    %c0_29 = arith.constant 0 : index
    %c0_30 = arith.constant 0 : index
    %c0_31 = arith.constant 0 : index
    %40 = vector.load %arg6[%c0_29, %c0_30, %c0_31] : memref<1x72x128xbf16, #tpu.memory_space<vmem>>, vector<1x72x128xbf16>
    %41 = vector.shape_cast %40 : vector<1x72x128xbf16> to vector<72x128xbf16>
    %42 = vector.shape_cast %39 : vector<72x128xbf16> to vector<1x72x128xbf16>
    tpu.vector_store %arg6[%c0_29, %c0_30, %c0_31], %42 {strides = array<i32>} : memref<1x72x128xbf16, #tpu.memory_space<vmem>>, vector<1x72x128xbf16>,
    return
  }
  func.func @transform_0(%arg0: i32) -> (i32, i32, i32) {
    %c0_i32 = arith.constant 0 : i32
    %c0_i32_0 = arith.constant 0 : i32
    %c0_i32_1 = arith.constant 0 : i32
    return %arg0, %c0_i32, %c0_i32_0 : i32, i32, i32
  }
  func.func @transform_1(%arg0: i32) -> (i32, i32) {
    %c0_i32 = arith.constant 0 : i32
    %c0_i32_0 = arith.constant 0 : i32
    %c0_i32_1 = arith.constant 0 : i32
    return %c0_i32, %c0_i32_0 : i32, i32
  }
  func.func @transform_2(%arg0: i32) -> (i32, i32) {
    %c0_i32 = arith.constant 0 : i32
    %c0_i32_0 = arith.constant 0 : i32
    %c0_i32_1 = arith.constant 0 : i32
    return %c0_i32, %c0_i32_0 : i32, i32
  }
  func.func @transform_3(%arg0: i32) -> (i32, i32) {
    %c0_i32 = arith.constant 0 : i32
    %c0_i32_0 = arith.constant 0 : i32
    %c0_i32_1 = arith.constant 0 : i32
    return %c0_i32, %c0_i32_0 : i32, i32
  }
  func.func @transform_4(%arg0: i32) -> (i32, i32) {
    %c0_i32 = arith.constant 0 : i32
    %c0_i32_0 = arith.constant 0 : i32
    %c0_i32_1 = arith.constant 0 : i32
    return %c0_i32, %c0_i32_0 : i32, i32
  }
  func.func @transform_5(%arg0: i32) -> (i32, i32, i32) {
    %c0_i32 = arith.constant 0 : i32
    %c0_i32_0 = arith.constant 0 : i32
    %c0_i32_1 = arith.constant 0 : i32
    return %arg0, %c0_i32, %c0_i32_0 : i32, i32, i32
  }
}

module attributes {stable_mosaic.version = 11 : i64} {
  func.func @_fc_head_kernel(%arg0: i32, %arg1: memref<2x9216xbf16, #tpu.memory_space<vmem>>, %arg2: memref<9216x128xbf16, #tpu.memory_space<vmem>>, %arg3: memref<1x128xf32, #tpu.memory_space<vmem>>, %arg4: memref<128x10xbf16, #tpu.memory_space<vmem>>, %arg5: memref<1x10xf32, #tpu.memory_space<vmem>>, %arg6: memref<2x10xf32, #tpu.memory_space<vmem>>) attributes {dimension_semantics = [#tpu.dimension_semantics<parallel>], iteration_bounds = array<i64: 1>, scalar_prefetch = 0 : i64, scratch_operands = 0 : i64, tpu.core_type = #tpu.core_type<tc>, window_params = [{transform_indices = @transform_0, window_bounds = array<i64: 2, 9216>}, {pipeline_mode = #tpu.pipeline_mode<synchronous>, transform_indices = @transform_1, window_bounds = array<i64: 9216, 128>}, {pipeline_mode = #tpu.pipeline_mode<synchronous>, transform_indices = @transform_2, window_bounds = array<i64: 1, 128>}, {pipeline_mode = #tpu.pipeline_mode<synchronous>, transform_indices = @transform_3, window_bounds = array<i64: 128, 10>}, {pipeline_mode = #tpu.pipeline_mode<synchronous>, transform_indices = @transform_4, window_bounds = array<i64: 1, 10>}, {transform_indices = @transform_5, window_bounds = array<i64: 2, 10>}]} {
    %c0 = arith.constant 0 : index
    %c0_0 = arith.constant 0 : index
    %0 = vector.load %arg1[%c0, %c0_0] : memref<2x9216xbf16, #tpu.memory_space<vmem>>, vector<2x9216xbf16>
    %c0_1 = arith.constant 0 : index
    %c0_2 = arith.constant 0 : index
    %1 = vector.load %arg2[%c0_1, %c0_2] : memref<9216x128xbf16, #tpu.memory_space<vmem>>, vector<9216x128xbf16>
    %cst = arith.constant dense<0.000000e+00> : vector<2x128xf32>
    %2 = tpu.matmul %0, %1, %cst {dimension_numbers = #tpu.dot_dimension_numbers<[1], [0], [0], [1], [0, 0, 1, 1], [], []>} : vector<2x9216xbf16>, vector<9216x128xbf16>, vector<2x128xf32> -> vector<2x128xf32>
    %c0_3 = arith.constant 0 : index
    %c0_4 = arith.constant 0 : index
    %3 = vector.load %arg3[%c0_3, %c0_4] : memref<1x128xf32, #tpu.memory_space<vmem>>, vector<1x128xf32>
    %4 = vector.broadcast %3 : vector<1x128xf32> to vector<2x128xf32>
    %5 = arith.addf %2, %4 : vector<2x128xf32>
    %cst_5 = arith.constant 0.000000e+00 : f32
    %6 = vector.broadcast %cst_5 : f32 to vector<2x128xf32>
    %7 = arith.maximumf %5, %6 : vector<2x128xf32>
    %8 = arith.truncf %7 : vector<2x128xf32> to vector<2x128xbf16>
    %c0_6 = arith.constant 0 : index
    %c0_7 = arith.constant 0 : index
    %9 = vector.load %arg4[%c0_6, %c0_7] : memref<128x10xbf16, #tpu.memory_space<vmem>>, vector<128x10xbf16>
    %cst_8 = arith.constant dense<0.000000e+00> : vector<2x10xf32>
    %10 = tpu.matmul %8, %9, %cst_8 {dimension_numbers = #tpu.dot_dimension_numbers<[1], [0], [0], [1], [0, 0, 1, 1], [], []>} : vector<2x128xbf16>, vector<128x10xbf16>, vector<2x10xf32> -> vector<2x10xf32>
    %c0_9 = arith.constant 0 : index
    %c0_10 = arith.constant 0 : index
    %11 = vector.load %arg5[%c0_9, %c0_10] : memref<1x10xf32, #tpu.memory_space<vmem>>, vector<1x10xf32>
    %12 = vector.broadcast %11 : vector<1x10xf32> to vector<2x10xf32>
    %13 = arith.addf %10, %12 : vector<2x10xf32>
    %cst_11 = arith.constant dense<0xFF800000> : vector<2xf32>
    %14 = vector.multi_reduction <maximumf>, %13, %cst_11 [1] : vector<2x10xf32> to vector<2xf32>
    %15 = vector.shape_cast %14 : vector<2xf32> to vector<2x1xf32>
    %16 = vector.broadcast %15 : vector<2x1xf32> to vector<2x10xf32>
    %17 = arith.subf %13, %16 : vector<2x10xf32>
    %18 = math.exp %17 : vector<2x10xf32>
    %cst_12 = arith.constant dense<0.000000e+00> : vector<2xf32>
    %19 = vector.multi_reduction <add>, %18, %cst_12 [1] : vector<2x10xf32> to vector<2xf32>
    %20 = vector.shape_cast %19 : vector<2xf32> to vector<2x1xf32>
    %21 = math.log %20 : vector<2x1xf32>
    %22 = vector.broadcast %21 : vector<2x1xf32> to vector<2x10xf32>
    %23 = arith.subf %17, %22 : vector<2x10xf32>
    %c0_13 = arith.constant 0 : index
    %c0_14 = arith.constant 0 : index
    %24 = vector.load %arg6[%c0_13, %c0_14] : memref<2x10xf32, #tpu.memory_space<vmem>>, vector<2x10xf32>
    tpu.vector_store %arg6[%c0_13, %c0_14], %23 {strides = array<i32>} : memref<2x10xf32, #tpu.memory_space<vmem>>, vector<2x10xf32>,
    return
  }
  func.func @transform_0(%arg0: i32) -> (i32, i32) {
    %c0_i32 = arith.constant 0 : i32
    %c0_i32_0 = arith.constant 0 : i32
    return %arg0, %c0_i32 : i32, i32
  }
  func.func @transform_1(%arg0: i32) -> (i32, i32) {
    %c0_i32 = arith.constant 0 : i32
    %c0_i32_0 = arith.constant 0 : i32
    %c0_i32_1 = arith.constant 0 : i32
    return %c0_i32, %c0_i32_0 : i32, i32
  }
  func.func @transform_2(%arg0: i32) -> (i32, i32) {
    %c0_i32 = arith.constant 0 : i32
    %c0_i32_0 = arith.constant 0 : i32
    %c0_i32_1 = arith.constant 0 : i32
    return %c0_i32, %c0_i32_0 : i32, i32
  }
  func.func @transform_3(%arg0: i32) -> (i32, i32) {
    %c0_i32 = arith.constant 0 : i32
    %c0_i32_0 = arith.constant 0 : i32
    %c0_i32_1 = arith.constant 0 : i32
    return %c0_i32, %c0_i32_0 : i32, i32
  }
  func.func @transform_4(%arg0: i32) -> (i32, i32) {
    %c0_i32 = arith.constant 0 : i32
    %c0_i32_0 = arith.constant 0 : i32
    %c0_i32_1 = arith.constant 0 : i32
    return %c0_i32, %c0_i32_0 : i32, i32
  }
  func.func @transform_5(%arg0: i32) -> (i32, i32) {
    %c0_i32 = arith.constant 0 : i32
    %c0_i32_0 = arith.constant 0 : i32
    return %arg0, %c0_i32 : i32, i32
  }
}

</mosaic_0001>

<llo_original>
// kernel: cnn_net_forward.3
$region0: #{cnn_net_forward.3}
  #allocation0 [shape = 'u32[]', space=smem, size = 0x4, offset = 0x4, fixed_abs, tag = 'smem constant byte address 0x4 - core index']
  #allocation1 [shape = 'u32[144,128]{1,0:T(1,128)}', space=vmem, size = 0x12000, scoped, tag = 'internal scratch']
  %s0 = inlined_call_operand.vmem [shape: bf16[1360,9], index: 0, kind: input, shape index: {}]
  %s1 = inlined_call_operand.hbm [shape: bf16[9,32], index: 1, kind: input, shape index: {}]
  %s2 = inlined_call_operand.hbm [shape: f32[1,32], index: 2, kind: input, shape index: {}]
  %s3 = inlined_call_operand.vmem [shape: bf16[1360,32], index: 3, kind: output, shape index: {}]
  %s4 = sld [smem:[#allocation0]]
  $region53: #{cnn_net_forward.3} parent=0
    _
  %s6 = ssub.s32 1, %s4
  %s7 = scalar_select 0, %s6, %s4
  $region1: #{cnn_net_forward.3} parent=0
    #allocation2 [shape = 'u8[4096]{0}', space=vmem, size = 0x1000, scoped, tag = 'input window, operand 1, single buffered']
    #allocation3 [shape = 's32[2]{0}', space=sflag, size = 0x8, scoped, tag = 'scoped memory for cnn_net_forward.3']
    #allocation4 [shape = 'u8[512]{0}', space=vmem, size = 0x400, scoped, tag = 'input window, operand 2, single buffered']
    #allocation5 [shape = 's32[1]{0}', space=sflag, size = 0x4, scoped, tag = 'scoped memory for cnn_net_forward.3']
    %8 = vsyncpa [#allocation3], 0
    %9 = vsyncpa [#allocation5], 0
    loop: start=0, step=1, limit=4
    $region2: #{cnn_net_forward.3} parent=1 // loop_pre_header
      _
    $region3: #{cnn_net_forward.3} parent=1 // loop_header
      %s11 = sphi 0, %s15
      %p12 = scmp.ge.s32.totalorder %s11, 4
      %s21 = sphi 0, %s23
      %s24 = sphi 0, %s21
      %s25 = sphi 0, %s24
      %s41 = sphi 0, %s25
      %s45 = sphi 0, %s45
      %s47 = sphi 0, %s45
      %s48 = sphi 0, %s47
      %s62 = sphi 0, %s48
      %s66 = sphi 0, %s66
      %s68 = sphi 0, %s66
      %s69 = sphi 0, %s68
      %s83 = sphi 0, %s69
      %s89 = sphi 0, %s91
      %s92 = sphi 0, %s89
      %s93 = sphi 0, %s92
      %s109 = sphi 0, %s93
    $region4: #{cnn_net_forward.3} parent=1 // loop_header_branch
      %14 = sbr.rel (%p12) target = $region8
    $region5: #{cnn_net_forward.3} parent=1 // loop_body
      %s16 = ssub.s32 %s11, 1
      %s17 = ssub.s32 %s11, 2
      %s18 = sadd.s32 %s11, 1
      %s19 = ssub.s32 %s11, %s18
      %p20 = scmp.eq.s32.totalorder %s19, 0
      %s22 = sadd.s32 %s21, 1
      %s23 = scalar_select %p20, %s21, %s22
      %p26 = pneg %p20
      %p27 = scmp.eq.s32.totalorder %s11, 1
      %p28 = por %p26, %p27
      %p29 = scmp.ne.s32.totalorder %s21, %s24
      %p30 = scmp.eq.s32.totalorder %s11, 0
      %p31 = por %p29, %p30
      %p32 = scmp.ne.s32.totalorder %s21, %s24
      %p33 = scmp.eq.s32.totalorder %s16, 1
      %p34 = por %p32, %p33
      %p35 = scmp.ne.s32.totalorder %s24, %s25
      %p36 = scmp.eq.s32.totalorder %s16, 0
      %p37 = por %p35, %p36
      %p38 = scmp.ne.s32.totalorder %s24, %s25
      %p39 = scmp.eq.s32.totalorder %s17, 1
      %p40 = por %p38, %p39
      %p42 = scmp.ne.s32.totalorder %s25, %s41
      %p43 = scmp.eq.s32.totalorder %s17, 0
      %p44 = por %p42, %p43
      %s46 = sadd.s32 %s45, 1
      %p49 = scmp.eq.s32.totalorder %s11, 1
      %p50 = scmp.ne.s32.totalorder %s45, %s47
      %p51 = scmp.eq.s32.totalorder %s11, 0
      %p52 = por %p50, %p51
      %p53 = scmp.ne.s32.totalorder %s45, %s47
      %p54 = scmp.eq.s32.totalorder %s16, 1
      %p55 = por %p53, %p54
      %p56 = scmp.ne.s32.totalorder %s47, %s48
      %p57 = scmp.eq.s32.totalorder %s16, 0
      %p58 = por %p56, %p57
      %p59 = scmp.ne.s32.totalorder %s47, %s48
      %p60 = scmp.eq.s32.totalorder %s17, 1
      %p61 = por %p59, %p60
      %p63 = scmp.ne.s32.totalorder %s48, %s62
      %p64 = scmp.eq.s32.totalorder %s17, 0
      %p65 = por %p63, %p64
      %s67 = sadd.s32 %s66, 1
      %p70 = scmp.eq.s32.totalorder %s11, 1
      %p71 = scmp.ne.s32.totalorder %s66, %s68
      %p72 = scmp.eq.s32.totalorder %s11, 0
      %p73 = por %p71, %p72
      %p74 = scmp.ne.s32.totalorder %s66, %s68
      %p75 = scmp.eq.s32.totalorder %s16, 1
      %p76 = por %p74, %p75
      %p77 = scmp.ne.s32.totalorder %s68, %s69
      %p78 = scmp.eq.s32.totalorder %s16, 0
      %p79 = por %p77, %p78
      %p80 = scmp.ne.s32.totalorder %s68, %s69
      %p81 = scmp.eq.s32.totalorder %s17, 1
      %p82 = por %p80, %p81
      %p84 = scmp.ne.s32.totalorder %s69, %s83
      %p85 = scmp.eq.s32.totalorder %s17, 0
      %p86 = por %p84, %p85
      %s87 = ssub.s32 %s11, %s18
      %p88 = scmp.eq.s32.totalorder %s87, 0
      %s90 = sadd.s32 %s89, 1
      %s91 = scalar_select %p88, %s89, %s90
      %p94 = pneg %p88
      %p95 = scmp.eq.s32.totalorder %s11, 1
      %p96 = por %p94, %p95
      %p97 = scmp.ne.s32.totalorder %s89, %s92
      %p98 = scmp.eq.s32.totalorder %s11, 0
      %p99 = por %p97, %p98
      %p100 = scmp.ne.s32.totalorder %s89, %s92
      %p101 = scmp.eq.s32.totalorder %s16, 1
      %p102 = por %p100, %p101
      %p103 = scmp.ne.s32.totalorder %s92, %s93
      %p104 = scmp.eq.s32.totalorder %s16, 0
      %p105 = por %p103, %p104
      %p106 = scmp.ne.s32.totalorder %s92, %s93
      %p107 = scmp.eq.s32.totalorder %s17, 1
      %p108 = por %p106, %p107
      %p110 = scmp.ne.s32.totalorder %s93, %s109
      %p111 = scmp.eq.s32.totalorder %s17, 0
      %p112 = por %p110, %p111
      %p113 = scmp.le.s32.totalorder 1, %s11
      %p114 = scmp.lt.s32.totalorder %s11, 3
      %p115 = pnand %p113, %p114
      %p116 = pneg %p115
      // Predicated region
      $region9: #{cnn_net_forward.3} parent=5 // pred_check
        _
      $region10: #{cnn_net_forward.3} parent=5 // pred_check_branch
        %118 = sbr.rel (%p115) target = $region12
      $region11: #{cnn_net_forward.3} parent=5 // pred_region
        %s119 = ssub.s32 %s11, 1
        // Predicated region
        $region13: #{cnn_net_forward.3} parent=11 // pred_check
          %p120 = pneg %p58
        $region14: #{cnn_net_forward.3} parent=11 // pred_check_branch
          %122 = sbr.rel (%p120) target = $region16
        $region15: #{cnn_net_forward.3} parent=11 // pred_region
          %s124 = ssub.s32 128, 128
          %125 = vsyncadd [#allocation3], %s124
          %s126 = sshll.u32 [#allocation2], 4
          %s127 = int_to_ptr.vmem [resolvable:$true] %s126
          %132 = dma.hbm_to_vmem [thread:$0]  %s1, 128, %s127, [#allocation3], 64, 64, 4
        $region16: #{cnn_net_forward.3} parent=11 // pred_fallthru
          _
        // Predicated region
        $region17: #{cnn_net_forward.3} parent=11 // pred_check
          %p133 = pneg %p79
        $region18: #{cnn_net_forward.3} parent=11 // pred_check_branch
          %135 = sbr.rel (%p133) target = $region20
        $region19: #{cnn_net_forward.3} parent=11 // pred_region
          %s137 = ssub.s32 16, 16
          %138 = vsyncadd [#allocation5], %s137
          %s140 = sshll.u32 [#allocation4], 4
          %s141 = int_to_ptr.vmem [resolvable:$true] %s140
          %143 = dma.hbm_to_vmem [thread:$0]  %s2, 16, %s141, [#allocation5]
        $region20: #{cnn_net_forward.3} parent=11 // pred_fallthru
          _
      $region12: #{cnn_net_forward.3} parent=5 // pred_fallthru
        _
      %p144 = scmp.lt.s32.totalorder %s11, 2
      // Predicated region
      $region21: #{cnn_net_forward.3} parent=5 // pred_check
        %p145 = pneg %p144
      $region22: #{cnn_net_forward.3} parent=5 // pred_check_branch
        %147 = sbr.rel (%p145) target = $region24
      $region23: #{cnn_net_forward.3} parent=5 // pred_region
        // Predicated region
        $region25: #{cnn_net_forward.3} parent=23 // pred_check
          %p148 = pneg %p31
        $region26: #{cnn_net_forward.3} parent=23 // pred_check_branch
          %150 = sbr.rel (%p148) target = $region28
        $region27: #{cnn_net_forward.3} parent=23 // pred_region
          %s151 = smul.u32 85, %s11
          %p152 = scmp.lt.s32.totalorder %s151, 169
          %s153 = scalar_select %p152, %s151, 169
          %s154 = smul.addr %s153, 4
          %s155 = scalar_lea.vmem %s0, %s154
          %s156 = smul.u32 85, %s11
        $region28: #{cnn_net_forward.3} parent=23 // pred_fallthru
          _
      $region24: #{cnn_net_forward.3} parent=5 // pred_fallthru
        _
      %p157 = scmp.le.s32.totalorder 1, %s11
      %p158 = scmp.lt.s32.totalorder %s11, 3
      %p159 = pnand %p157, %p158
      %p160 = pneg %p159
      // Predicated region
      $region29: #{cnn_net_forward.3} parent=5 // pred_check
        _
      $region30: #{cnn_net_forward.3} parent=5 // pred_check_branch
        %162 = sbr.rel (%p159) target = $region32
      $region31: #{cnn_net_forward.3} parent=5 // pred_region
        %s163 = ssub.s32 %s11, 1
        // Predicated region
        $region33: #{cnn_net_forward.3} parent=31 // pred_check
          %p164 = pneg %p58
        $region34: #{cnn_net_forward.3} parent=31 // pred_check_branch
          %166 = sbr.rel (%p164) target = $region36
        $region35: #{cnn_net_forward.3} parent=31 // pred_region
          %167 = dma.done [#allocation3], 128
        $region36: #{cnn_net_forward.3} parent=31 // pred_fallthru
          _
        // Predicated region
        $region37: #{cnn_net_forward.3} parent=31 // pred_check
          %p168 = pneg %p79
        $region38: #{cnn_net_forward.3} parent=31 // pred_check_branch
          %170 = sbr.rel (%p168) target = $region40
        $region39: #{cnn_net_forward.3} parent=31 // pred_region
          %171 = dma.done [#allocation5], 16
        $region40: #{cnn_net_forward.3} parent=31 // pred_fallthru
          _
        %s172 = smul.u32 85, %s16
        %p173 = scmp.lt.s32.totalorder %s172, 169
        %s174 = scalar_select %p173, %s172, 169
        %s175 = smul.addr %s174, 4
        %s176 = scalar_lea.vmem %s0, %s175
        %p177 = pneg %p37
        %p178 = pneg %p34
        %p179 = pneg %p58
        %p180 = pneg %p55
        %p181 = pneg %p79
        %p182 = pneg %p76
        %p183 = pneg %p105
        %p184 = pneg %p102
        %s185 = smul.u32 85, %s16
        %p186 = scmp.lt.s32.totalorder %s185, 169
        %s187 = scalar_select %p186, %s185, 169
        %s188 = smul.addr %s187, 4
        %s189 = scalar_lea.vmem %s3, %s188
        %s190 = smul.u32 85, %s16
        %p191 = scmp.lt.s32.totalorder %s190, 169
        %s192 = scalar_select %p191, %s190, 169
        %s193 = smul.addr %s192, 4
        %s194 = scalar_lea.vmem %s0, %s193
        %s195 = smul.u32 85, %s16
        %s196 = smul.u32 85, %s16
        %p197 = scmp.lt.s32.totalorder %s196, 169
        %s198 = scalar_select %p197, %s196, 169
        %s199 = smul.addr %s198, 4
        %s200 = scalar_lea.vmem %s3, %s199
        %s201 = smul.u32 85, %s16
        %v203 = vld [vmem:[%s194] sm:$0xf]
        %v204 = vld [vmem:[%s194 + $0x4] sm:$0xf]
        %v205 = vld [vmem:[%s194 + $0x8] sm:$0xf]
        %v206 = vld [vmem:[%s194 + $0xc] sm:$0xf]
        %v207 = vld [vmem:[%s194 + $0x10] sm:$0xf]
        %v208 = vld [vmem:[%s194 + $0x14] sm:$0xf]
        %v209 = vld [vmem:[%s194 + $0x18] sm:$0xf]
        %v210 = vld [vmem:[%s194 + $0x1c] sm:$0xf]
        %v211 = vld [vmem:[%s194 + $0x20] sm:$0xf]
        %v212 = vld [vmem:[%s194 + $0x24] sm:$0xf]
        %v213 = vld [vmem:[%s194 + $0x28] sm:$0xf]
        %v214 = vld [vmem:[%s194 + $0x2c] sm:$0xf]
        %v215 = vld [vmem:[%s194 + $0x30] sm:$0xf]
        %v216 = vld [vmem:[%s194 + $0x34] sm:$0xf]
        %v217 = vld [vmem:[%s194 + $0x38] sm:$0xf]
        %v218 = vld [vmem:[%s194 + $0x3c] sm:$0xf]
        %v219 = vld [vmem:[%s194 + $0x40] sm:$0xf]
        %v220 = vld [vmem:[%s194 + $0x44] sm:$0xf]
        %v221 = vld [vmem:[%s194 + $0x48] sm:$0xf]
        %v222 = vld [vmem:[%s194 + $0x4c] sm:$0xf]
        %v223 = vld [vmem:[%s194 + $0x50] sm:$0xf]
        %v224 = vld [vmem:[%s194 + $0x54] sm:$0xf]
        %v225 = vld [vmem:[%s194 + $0x58] sm:$0xf]
        %v226 = vld [vmem:[%s194 + $0x5c] sm:$0xf]
        %v227 = vld [vmem:[%s194 + $0x60] sm:$0xf]
        %v228 = vld [vmem:[%s194 + $0x64] sm:$0xf]
        %v229 = vld [vmem:[%s194 + $0x68] sm:$0xf]
        %v230 = vld [vmem:[%s194 + $0x6c] sm:$0xf]
        %v231 = vld [vmem:[%s194 + $0x70] sm:$0xf]
        %v232 = vld [vmem:[%s194 + $0x74] sm:$0xf]
        %v233 = vld [vmem:[%s194 + $0x78] sm:$0xf]
        %v234 = vld [vmem:[%s194 + $0x7c] sm:$0xf]
        %v235 = vld [vmem:[%s194 + $0x80] sm:$0xf]
        %v236 = vld [vmem:[%s194 + $0x84] sm:$0xf]
        %v237 = vld [vmem:[%s194 + $0x88] sm:$0xf]
        %v238 = vld [vmem:[%s194 + $0x8c] sm:$0xf]
        %v239 = vld [vmem:[%s194 + $0x90] sm:$0xf]
        %v240 = vld [vmem:[%s194 + $0x94] sm:$0xf]
        %v241 = vld [vmem:[%s194 + $0x98] sm:$0xf]
        %v242 = vld [vmem:[%s194 + $0x9c] sm:$0xf]
        %v243 = vld [vmem:[%s194 + $0xa0] sm:$0xf]
        %v244 = vld [vmem:[%s194 + $0xa4] sm:$0xf]
        %v245 = vld [vmem:[%s194 + $0xa8] sm:$0xf]
        %v246 = vld [vmem:[%s194 + $0xac] sm:$0xf]
        %v247 = vld [vmem:[%s194 + $0xb0] sm:$0xf]
        %v248 = vld [vmem:[%s194 + $0xb4] sm:$0xf]
        %v249 = vld [vmem:[%s194 + $0xb8] sm:$0xf]
        %v250 = vld [vmem:[%s194 + $0xbc] sm:$0xf]
        %v251 = vld [vmem:[%s194 + $0xc0] sm:$0xf]
        %v252 = vld [vmem:[%s194 + $0xc4] sm:$0xf]
        %v253 = vld [vmem:[%s194 + $0xc8] sm:$0xf]
        %v254 = vld [vmem:[%s194 + $0xcc] sm:$0xf]
        %v255 = vld [vmem:[%s194 + $0xd0] sm:$0xf]
        %v256 = vld [vmem:[%s194 + $0xd4] sm:$0xf]
        %v257 = vld [vmem:[%s194 + $0xd8] sm:$0xf]
        %v258 = vld [vmem:[%s194 + $0xdc] sm:$0xf]
        %v259 = vld [vmem:[%s194 + $0xe0] sm:$0xf]
        %v260 = vld [vmem:[%s194 + $0xe4] sm:$0xf]
        %v261 = vld [vmem:[%s194 + $0xe8] sm:$0xf]
        %v262 = vld [vmem:[%s194 + $0xec] sm:$0xf]
        %v263 = vld [vmem:[%s194 + $0xf0] sm:$0xf]
        %v264 = vld [vmem:[%s194 + $0xf4] sm:$0xf]
        %v265 = vld [vmem:[%s194 + $0xf8] sm:$0xf]
        %v266 = vld [vmem:[%s194 + $0xfc] sm:$0xf]
        %v267 = vld [vmem:[%s194 + $0x100] sm:$0xf]
        %v268 = vld [vmem:[%s194 + $0x104] sm:$0xf]
        %v269 = vld [vmem:[%s194 + $0x108] sm:$0xf]
        %v270 = vld [vmem:[%s194 + $0x10c] sm:$0xf]
        %v271 = vld [vmem:[%s194 + $0x110] sm:$0xf]
        %v272 = vld [vmem:[%s194 + $0x114] sm:$0xf]
        %v273 = vld [vmem:[%s194 + $0x118] sm:$0xf]
        %v274 = vld [vmem:[%s194 + $0x11c] sm:$0xf]
        %v275 = vld [vmem:[%s194 + $0x120] sm:$0xf]
        %v276 = vld [vmem:[%s194 + $0x124] sm:$0xf]
        %v277 = vld [vmem:[%s194 + $0x128] sm:$0xf]
        %v278 = vld [vmem:[%s194 + $0x12c] sm:$0xf]
        %v279 = vld [vmem:[%s194 + $0x130] sm:$0xf]
        %v280 = vld [vmem:[%s194 + $0x134] sm:$0xf]
        %v281 = vld [vmem:[%s194 + $0x138] sm:$0xf]
        %v282 = vld [vmem:[%s194 + $0x13c] sm:$0xf]
        %v283 = vld [vmem:[%s194 + $0x140] sm:$0xf]
        %v284 = vld [vmem:[%s194 + $0x144] sm:$0xf]
        %v285 = vld [vmem:[%s194 + $0x148] sm:$0xf]
        %v286 = vld [vmem:[%s194 + $0x14c] sm:$0xf]
        %v287 = vld [vmem:[%s194 + $0x150] sm:$0xf]
        %v288 = vld [vmem:[#allocation2] sm:$0xf]
        %v289 = vld [vmem:[#allocation2 + $0x4] sm:$0x1]
        %v290 = vld [vmem:[#allocation4] sm:$0x1]
        %v292 = vlaneseq
        %v293 = vshrl.u32 %v292, 7
        %v294 = vsub.s32 0, %v293
        %v295 = vrot.slane %v290, %v294
        %v382 = vunpack.c.l.b16 %v203
        %v383 = vunpack.c.l.b16 %v204
        %v384 = vunpack.c.l.b16 %v205
        %v385 = vunpack.c.l.b16 %v206
        %v386 = vunpack.c.l.b16 %v207
        %v387 = vunpack.c.l.b16 %v208
        %v388 = vunpack.c.l.b16 %v209
        %v389 = vunpack.c.l.b16 %v210
        %v390 = vunpack.c.l.b16 %v211
        %v391 = vunpack.c.l.b16 %v212
        %v392 = vunpack.c.l.b16 %v213
        %v393 = vunpack.c.l.b16 %v214
        %v394 = vunpack.c.l.b16 %v215
        %v395 = vunpack.c.l.b16 %v216
        %v396 = vunpack.c.l.b16 %v217
        %v397 = vunpack.c.l.b16 %v218
        %v398 = vunpack.c.l.b16 %v219
        %v399 = vunpack.c.l.b16 %v220
        %v400 = vunpack.c.l.b16 %v221
        %v401 = vunpack.c.l.b16 %v222
        %v402 = vunpack.c.l.b16 %v223
        %v403 = vunpack.c.l.b16 %v224
        %v404 = vunpack.c.l.b16 %v225
        %v405 = vunpack.c.l.b16 %v226
        %v406 = vunpack.c.l.b16 %v227
        %v407 = vunpack.c.l.b16 %v228
        %v408 = vunpack.c.l.b16 %v229
        %v409 = vunpack.c.l.b16 %v230
        %v410 = vunpack.c.l.b16 %v231
        %v411 = vunpack.c.l.b16 %v232
        %v412 = vunpack.c.l.b16 %v233
        %v413 = vunpack.c.l.b16 %v234
        %v414 = vunpack.c.l.b16 %v235
        %v415 = vunpack.c.l.b16 %v236
        %v416 = vunpack.c.l.b16 %v237
        %v417 = vunpack.c.l.b16 %v238
        %v418 = vunpack.c.l.b16 %v239
        %v419 = vunpack.c.l.b16 %v240
        %v420 = vunpack.c.l.b16 %v241
        %v421 = vunpack.c.l.b16 %v242
        %v422 = vunpack.c.l.b16 %v243
        %v423 = vunpack.c.l.b16 %v244
        %v424 = vunpack.c.l.b16 %v245
        %v425 = vunpack.c.l.b16 %v246
        %v426 = vunpack.c.l.b16 %v247
        %v427 = vunpack.c.l.b16 %v248
        %v428 = vunpack.c.l.b16 %v249
        %v429 = vunpack.c.l.b16 %v250
        %v430 = vunpack.c.l.b16 %v251
        %v431 = vunpack.c.l.b16 %v252
        %v432 = vunpack.c.l.b16 %v253
        %v433 = vunpack.c.l.b16 %v254
        %v434 = vunpack.c.l.b16 %v255
        %v435 = vunpack.c.l.b16 %v256
        %v436 = vunpack.c.l.b16 %v257
        %v437 = vunpack.c.l.b16 %v258
        %v438 = vunpack.c.l.b16 %v259
        %v439 = vunpack.c.l.b16 %v260
        %v440 = vunpack.c.l.b16 %v261
        %v441 = vunpack.c.l.b16 %v262
        %v442 = vunpack.c.l.b16 %v263
        %v443 = vunpack.c.l.b16 %v264
        %v444 = vunpack.c.l.b16 %v265
        %v445 = vunpack.c.l.b16 %v266
        %v446 = vunpack.c.l.b16 %v267
        %v447 = vunpack.c.l.b16 %v268
        %v448 = vunpack.c.l.b16 %v269
        %v449 = vunpack.c.l.b16 %v270
        %v450 = vunpack.c.l.b16 %v271
        %v451 = vunpack.c.l.b16 %v272
        %v452 = vunpack.c.l.b16 %v273
        %v453 = vunpack.c.l.b16 %v274
        %v454 = vunpack.c.l.b16 %v275
        %v455 = vunpack.c.l.b16 %v276
        %v456 = vunpack.c.l.b16 %v277
        %v457 = vunpack.c.l.b16 %v278
        %v458 = vunpack.c.l.b16 %v279
        %v459 = vunpack.c.l.b16 %v280
        %v460 = vunpack.c.l.b16 %v281
        %v461 = vunpack.c.l.b16 %v282
        %v462 = vunpack.c.l.b16 %v283
        %v463 = vunpack.c.l.b16 %v284
        %v464 = vunpack.c.l.b16 %v285
        %v465 = vunpack.c.l.b16 %v286
        %v466 = vunpack.c.l.b16 %v287
        %v467 = vpack.c.b16 %v383, %v382
        %v468 = vpack.c.b16 %v385, %v384
        %v469 = vpack.c.b16 %v387, %v386
        %v470 = vpack.c.b16 %v389, %v388
        %v471 = vpack.c.b16 %v391, %v390
        %v472 = vpack.c.b16 %v393, %v392
        %v473 = vpack.c.b16 %v395, %v394
        %v474 = vpack.c.b16 %v397, %v396
        %v475 = vpack.c.b16 %v399, %v398
        %v476 = vpack.c.b16 %v401, %v400
        %v477 = vpack.c.b16 %v403, %v402
        %v478 = vpack.c.b16 %v405, %v404
        %v479 = vpack.c.b16 %v407, %v406
        %v480 = vpack.c.b16 %v409, %v408
        %v481 = vpack.c.b16 %v411, %v410
        %v482 = vpack.c.b16 %v413, %v412
        %v483 = vpack.c.b16 %v415, %v414
        %v484 = vpack.c.b16 %v417, %v416
        %v485 = vpack.c.b16 %v419, %v418
        %v486 = vpack.c.b16 %v421, %v420
        %v487 = vpack.c.b16 %v423, %v422
        %v488 = vpack.c.b16 %v425, %v424
        %v489 = vpack.c.b16 %v427, %v426
        %v490 = vpack.c.b16 %v429, %v428
        %v491 = vpack.c.b16 %v431, %v430
        %v492 = vpack.c.b16 %v433, %v432
        %v493 = vpack.c.b16 %v435, %v434
        %v494 = vpack.c.b16 %v437, %v436
        %v495 = vpack.c.b16 %v439, %v438
        %v496 = vpack.c.b16 %v441, %v440
        %v497 = vpack.c.b16 %v443, %v442
        %v498 = vpack.c.b16 %v445, %v444
        %v499 = vpack.c.b16 %v447, %v446
        %v500 = vpack.c.b16 %v449, %v448
        %v501 = vpack.c.b16 %v451, %v450
        %v502 = vpack.c.b16 %v453, %v452
        %v503 = vpack.c.b16 %v455, %v454
        %v504 = vpack.c.b16 %v457, %v456
        %v505 = vpack.c.b16 %v459, %v458
        %v506 = vpack.c.b16 %v461, %v460
        %v507 = vpack.c.b16 %v463, %v462
        %v508 = vpack.c.b16 %v465, %v464
        %v509 = vpack.c.b16 %v466, %v466
        %v512 = vunpack.c.l.b16 %v288
        %v513 = vunpack.c.l.b16 %v289
        %v514 = vpack.c.b16 %v513, %v512
        %vm515 = vcmask 72704
        %v517 = vsel %vm515, %v467, 0
        %v520 = vsel %vm515, %v468, 0
        %v523 = vsel %vm515, %v469, 0
        %v526 = vsel %vm515, %v470, 0
        %v529 = vsel %vm515, %v471, 0
        %v532 = vsel %vm515, %v472, 0
        %v535 = vsel %vm515, %v473, 0
        %v538 = vsel %vm515, %v474, 0
        %v541 = vsel %vm515, %v475, 0
        %v544 = vsel %vm515, %v476, 0
        %v547 = vsel %vm515, %v477, 0
        %v550 = vsel %vm515, %v478, 0
        %v553 = vsel %vm515, %v479, 0
        %v556 = vsel %vm515, %v480, 0
        %v559 = vsel %vm515, %v481, 0
        %v562 = vsel %vm515, %v482, 0
        %v565 = vsel %vm515, %v483, 0
        %v568 = vsel %vm515, %v484, 0
        %v571 = vsel %vm515, %v485, 0
        %v574 = vsel %vm515, %v486, 0
        %v577 = vsel %vm515, %v487, 0
        %v580 = vsel %vm515, %v488, 0
        %v583 = vsel %vm515, %v489, 0
        %v586 = vsel %vm515, %v490, 0
        %v589 = vsel %vm515, %v491, 0
        %v592 = vsel %vm515, %v492, 0
        %v595 = vsel %vm515, %v493, 0
        %v598 = vsel %vm515, %v494, 0
        %v601 = vsel %vm515, %v495, 0
        %v604 = vsel %vm515, %v496, 0
        %v607 = vsel %vm515, %v497, 0
        %v610 = vsel %vm515, %v498, 0
        %v613 = vsel %vm515, %v499, 0
        %v616 = vsel %vm515, %v500, 0
        %v619 = vsel %vm515, %v501, 0
        %v622 = vsel %vm515, %v502, 0
        %v625 = vsel %vm515, %v503, 0
        %v628 = vsel %vm515, %v504, 0
        %v631 = vsel %vm515, %v505, 0
        %v634 = vsel %vm515, %v506, 0
        %v637 = vsel %vm515, %v507, 0
        %v640 = vsel %vm515, %v508, 0
        %v643 = vsel %vm515, %v509, 0
        %vm645 = vcmask 1043456
        %vm646 = vcmask 1044480
        %v647 = vsel %vm645, 4294967295, 65535
        %v648 = vsel %vm646, %v647, 0
        %v650 = vand.u32 %v514, %v648
        %652 = vmatprep.subr.bf16.mxu0 0
        %653 = vmatpush1.bf16.msra.mxu0 %v650
        %654 = vmatprep.subr.bf16.mxu0 0
        %655 = vmatpush1.bf16.msra.mxu0 0
        %656 = vmatprep.subr.bf16.mxu0 0
        %657 = vmatpush1.bf16.msra.mxu0 0
        %658 = vmatprep.subr.bf16.mxu0 0
        %659 = vmatpush1.bf16.msra.mxu0 0
        %660 = vmatprep.subr.bf16.mxu0 0
        %661 = vmatpush1.bf16.msra.mxu0 0
        %662 = vmatprep.subr.bf16.mxu0 0
        %663 = vmatpush1.bf16.msra.mxu0 0
        %664 = vmatprep.subr.bf16.mxu0 0
        %665 = vmatpush1.bf16.msra.mxu0 0
        %666 = vmatprep.subr.bf16.mxu0 0
        %667 = vmatpush1.bf16.msra.mxu0 0
        %668 = vmatprep.subr.bf16.mxu0 0
        %669 = vmatpush1.bf16.msra.mxu0 0
        %670 = vmatprep.subr.bf16.mxu0 0
        %671 = vmatpush1.bf16.msra.mxu0 0
        %672 = vmatprep.subr.bf16.mxu0 0
        %673 = vmatpush1.bf16.msra.mxu0 0
        %674 = vmatprep.subr.bf16.mxu0 0
        %675 = vmatpush1.bf16.msra.mxu0 0
        %676 = vmatprep.subr.bf16.mxu0 0
        %677 = vmatpush1.bf16.msra.mxu0 0
        %678 = vmatprep.subr.bf16.mxu0 0
        %679 = vmatpush1.bf16.msra.mxu0 0
        %680 = vmatprep.subr.bf16.mxu0 0
        %681 = vmatpush1.bf16.msra.mxu0 0
        %682 = vmatprep.subr.bf16.mxu0 0
        %683 = vmatpush1.bf16.msra.mxu0 0
        %684 = vmatprep.mubr.bf16.mxu0 0
        %685 = vmatmul.mubr.bf16.gmra.mrb[0].mxu0 %v517
        %v686 = vpop.f32.mrb[0].mxu0
        %v687 = vadd.f32 %v295, %v686
        %v688 = vpop.f32.mrb[0].mxu0
        %v689 = vpop.f32.mrb[0].mxu0
        %v690 = vadd.f32 %v295, %v689
        %v691 = vpop.f32.mrb[0].mxu0
        %692 = vmatprep.mubr.bf16.mxu0 0
        %693 = vmatmul.mubr.bf16.gmra.mrb[0].mxu0 %v520
        %v694 = vpop.f32.mrb[0].mxu0
        %v695 = vadd.f32 %v295, %v694
        %v696 = vpop.f32.mrb[0].mxu0
        %v697 = vpop.f32.mrb[0].mxu0
        %v698 = vadd.f32 %v295, %v697
        %v699 = vpop.f32.mrb[0].mxu0
        %700 = vmatprep.mubr.bf16.mxu0 0
        %701 = vmatmul.mubr.bf16.gmra.mrb[0].mxu0 %v523
        %v702 = vpop.f32.mrb[0].mxu0
        %v703 = vadd.f32 %v295, %v702
        %v704 = vpop.f32.mrb[0].mxu0
        %v705 = vpop.f32.mrb[0].mxu0
        %v706 = vadd.f32 %v295, %v705
        %v707 = vpop.f32.mrb[0].mxu0
        %708 = vmatprep.mubr.bf16.mxu0 0
        %709 = vmatmul.mubr.bf16.gmra.mrb[0].mxu0 %v526
        %v710 = vpop.f32.mrb[0].mxu0
        %v711 = vadd.f32 %v295, %v710
        %v712 = vpop.f32.mrb[0].mxu0
        %v713 = vpop.f32.mrb[0].mxu0
        %v714 = vadd.f32 %v295, %v713
        %v715 = vpop.f32.mrb[0].mxu0
        %716 = vmatprep.mubr.bf16.mxu0 0
        %717 = vmatmul.mubr.bf16.gmra.mrb[0].mxu0 %v529
        %v718 = vpop.f32.mrb[0].mxu0
        %v719 = vadd.f32 %v295, %v718
        %v720 = vpop.f32.mrb[0].mxu0
        %v721 = vpop.f32.mrb[0].mxu0
        %v722 = vadd.f32 %v295, %v721
        %v723 = vpop.f32.mrb[0].mxu0
        %724 = vmatprep.mubr.bf16.mxu0 0
        %725 = vmatmul.mubr.bf16.gmra.mrb[0].mxu0 %v532
        %v726 = vpop.f32.mrb[0].mxu0
        %v727 = vadd.f32 %v295, %v726
        %v728 = vpop.f32.mrb[0].mxu0
        %v729 = vpop.f32.mrb[0].mxu0
        %v730 = vadd.f32 %v295, %v729
        %v731 = vpop.f32.mrb[0].mxu0
        %732 = vmatprep.mubr.bf16.mxu0 0
        %733 = vmatmul.mubr.bf16.gmra.mrb[0].mxu0 %v535
        %v734 = vpop.f32.mrb[0].mxu0
        %v735 = vadd.f32 %v295, %v734
        %v736 = vpop.f32.mrb[0].mxu0
        %v737 = vpop.f32.mrb[0].mxu0
        %v738 = vadd.f32 %v295, %v737
        %v739 = vpop.f32.mrb[0].mxu0
        %740 = vmatprep.mubr.bf16.mxu0 0
        %741 = vmatmul.mubr.bf16.gmra.mrb[0].mxu0 %v538
        %v742 = vpop.f32.mrb[0].mxu0
        %v743 = vadd.f32 %v295, %v742
        %v744 = vpop.f32.mrb[0].mxu0
        %v745 = vpop.f32.mrb[0].mxu0
        %v746 = vadd.f32 %v295, %v745
        %v747 = vpop.f32.mrb[0].mxu0
        %748 = vmatprep.mubr.bf16.mxu0 0
        %749 = vmatmul.mubr.bf16.gmra.mrb[0].mxu0 %v541
        %v750 = vpop.f32.mrb[0].mxu0
        %v751 = vadd.f32 %v295, %v750
        %v752 = vpop.f32.mrb[0].mxu0
        %v753 = vpop.f32.mrb[0].mxu0
        %v754 = vadd.f32 %v295, %v753
        %v755 = vpop.f32.mrb[0].mxu0
        %756 = vmatprep.mubr.bf16.mxu0 0
        %757 = vmatmul.mubr.bf16.gmra.mrb[0].mxu0 %v544
        %v758 = vpop.f32.mrb[0].mxu0
        %v759 = vadd.f32 %v295, %v758
        %v760 = vpop.f32.mrb[0].mxu0
        %v761 = vpop.f32.mrb[0].mxu0
        %v762 = vadd.f32 %v295, %v761
        %v763 = vpop.f32.mrb[0].mxu0
        %764 = vmatprep.mubr.bf16.mxu0 0
        %765 = vmatmul.mubr.bf16.gmra.mrb[0].mxu0 %v547
        %v766 = vpop.f32.mrb[0].mxu0
        %v767 = vadd.f32 %v295, %v766
        %v768 = vpop.f32.mrb[0].mxu0
        %v769 = vpop.f32.mrb[0].mxu0
        %v770 = vadd.f32 %v295, %v769
        %v771 = vpop.f32.mrb[0].mxu0
        %772 = vmatprep.mubr.bf16.mxu0 0
        %773 = vmatmul.mubr.bf16.gmra.mrb[0].mxu0 %v550
        %v774 = vpop.f32.mrb[0].mxu0
        %v775 = vadd.f32 %v295, %v774
        %v776 = vpop.f32.mrb[0].mxu0
        %v777 = vpop.f32.mrb[0].mxu0
        %v778 = vadd.f32 %v295, %v777
        %v779 = vpop.f32.mrb[0].mxu0
        %780 = vmatprep.mubr.bf16.mxu0 0
        %781 = vmatmul.mubr.bf16.gmra.mrb[0].mxu0 %v553
        %v782 = vpop.f32.mrb[0].mxu0
        %v783 = vadd.f32 %v295, %v782
        %v784 = vpop.f32.mrb[0].mxu0
        %v785 = vpop.f32.mrb[0].mxu0
        %v786 = vadd.f32 %v295, %v785
        %v787 = vpop.f32.mrb[0].mxu0
        %788 = vmatprep.mubr.bf16.mxu0 0
        %789 = vmatmul.mubr.bf16.gmra.mrb[0].mxu0 %v556
        %v790 = vpop.f32.mrb[0].mxu0
        %v791 = vadd.f32 %v295, %v790
        %v792 = vpop.f32.mrb[0].mxu0
        %v793 = vpop.f32.mrb[0].mxu0
        %v794 = vadd.f32 %v295, %v793
        %v795 = vpop.f32.mrb[0].mxu0
        %796 = vmatprep.mubr.bf16.mxu0 0
        %797 = vmatmul.mubr.bf16.gmra.mrb[0].mxu0 %v559
        %v798 = vpop.f32.mrb[0].mxu0
        %v799 = vadd.f32 %v295, %v798
        %v800 = vpop.f32.mrb[0].mxu0
        %v801 = vpop.f32.mrb[0].mxu0
        %v802 = vadd.f32 %v295, %v801
        %v803 = vpop.f32.mrb[0].mxu0
        %804 = vmatprep.mubr.bf16.mxu0 0
        %805 = vmatmul.mubr.bf16.gmra.mrb[0].mxu0 %v562
        %v806 = vpop.f32.mrb[0].mxu0
        %v807 = vadd.f32 %v295, %v806
        %v808 = vpop.f32.mrb[0].mxu0
        %v809 = vpop.f32.mrb[0].mxu0
        %v810 = vadd.f32 %v295, %v809
        %v811 = vpop.f32.mrb[0].mxu0
        %812 = vmatprep.mubr.bf16.mxu0 0
        %813 = vmatmul.mubr.bf16.gmra.mrb[0].mxu0 %v565
        %v814 = vpop.f32.mrb[0].mxu0
        %v815 = vadd.f32 %v295, %v814
        %v816 = vpop.f32.mrb[0].mxu0
        %v817 = vpop.f32.mrb[0].mxu0
        %v818 = vadd.f32 %v295, %v817
        %v819 = vpop.f32.mrb[0].mxu0
        %820 = vmatprep.mubr.bf16.mxu0 0
        %821 = vmatmul.mubr.bf16.gmra.mrb[0].mxu0 %v568
        %v822 = vpop.f32.mrb[0].mxu0
        %v823 = vadd.f32 %v295, %v822
        %v824 = vpop.f32.mrb[0].mxu0
        %v825 = vpop.f32.mrb[0].mxu0
        %v826 = vadd.f32 %v295, %v825
        %v827 = vpop.f32.mrb[0].mxu0
        %828 = vmatprep.mubr.bf16.mxu0 0
        %829 = vmatmul.mubr.bf16.gmra.mrb[0].mxu0 %v571
        %v830 = vpop.f32.mrb[0].mxu0
        %v831 = vadd.f32 %v295, %v830
        %v832 = vpop.f32.mrb[0].mxu0
        %v833 = vpop.f32.mrb[0].mxu0
        %v834 = vadd.f32 %v295, %v833
        %v835 = vpop.f32.mrb[0].mxu0
        %836 = vmatprep.mubr.bf16.mxu0 0
        %837 = vmatmul.mubr.bf16.gmra.mrb[0].mxu0 %v574
        %v838 = vpop.f32.mrb[0].mxu0
        %v839 = vadd.f32 %v295, %v838
        %v840 = vpop.f32.mrb[0].mxu0
        %v841 = vpop.f32.mrb[0].mxu0
        %v842 = vadd.f32 %v295, %v841
        %v843 = vpop.f32.mrb[0].mxu0
        %844 = vmatprep.mubr.bf16.mxu0 0
        %845 = vmatmul.mubr.bf16.gmra.mrb[0].mxu0 %v577
        %v846 = vpop.f32.mrb[0].mxu0
        %v847 = vadd.f32 %v295, %v846
        %v848 = vpop.f32.mrb[0].mxu0
        %v849 = vpop.f32.mrb[0].mxu0
        %v850 = vadd.f32 %v295, %v849
        %v851 = vpop.f32.mrb[0].mxu0
        %852 = vmatprep.mubr.bf16.mxu0 0
        %853 = vmatmul.mubr.bf16.gmra.mrb[0].mxu0 %v580
        %v854 = vpop.f32.mrb[0].mxu0
        %v855 = vadd.f32 %v295, %v854
        %v856 = vpop.f32.mrb[0].mxu0
        %v857 = vpop.f32.mrb[0].mxu0
        %v858 = vadd.f32 %v295, %v857
        %v859 = vpop.f32.mrb[0].mxu0
        %860 = vmatprep.mubr.bf16.mxu0 0
        %861 = vmatmul.mubr.bf16.gmra.mrb[0].mxu0 %v583
        %v862 = vpop.f32.mrb[0].mxu0
        %v863 = vadd.f32 %v295, %v862
        %v864 = vpop.f32.mrb[0].mxu0
        %v865 = vpop.f32.mrb[0].mxu0
        %v866 = vadd.f32 %v295, %v865
        %v867 = vpop.f32.mrb[0].mxu0
        %868 = vmatprep.mubr.bf16.mxu0 0
        %869 = vmatmul.mubr.bf16.gmra.mrb[0].mxu0 %v586
        %v870 = vpop.f32.mrb[0].mxu0
        %v871 = vadd.f32 %v295, %v870
        %v872 = vpop.f32.mrb[0].mxu0
        %v873 = vpop.f32.mrb[0].mxu0
        %v874 = vadd.f32 %v295, %v873
        %v875 = vpop.f32.mrb[0].mxu0
        %876 = vmatprep.mubr.bf16.mxu0 0
        %877 = vmatmul.mubr.bf16.gmra.mrb[0].mxu0 %v589
        %v878 = vpop.f32.mrb[0].mxu0
        %v879 = vadd.f32 %v295, %v878
        %v880 = vpop.f32.mrb[0].mxu0
        %v881 = vpop.f32.mrb[0].mxu0
        %v882 = vadd.f32 %v295, %v881
        %v883 = vpop.f32.mrb[0].mxu0
        %884 = vmatprep.mubr.bf16.mxu0 0
        %885 = vmatmul.mubr.bf16.gmra.mrb[0].mxu0 %v592
        %v886 = vpop.f32.mrb[0].mxu0
        %v887 = vadd.f32 %v295, %v886
        %v888 = vpop.f32.mrb[0].mxu0
        %v889 = vpop.f32.mrb[0].mxu0
        %v890 = vadd.f32 %v295, %v889
        %v891 = vpop.f32.mrb[0].mxu0
        %892 = vmatprep.mubr.bf16.mxu0 0
        %893 = vmatmul.mubr.bf16.gmra.mrb[0].mxu0 %v595
        %v894 = vpop.f32.mrb[0].mxu0
        %v895 = vadd.f32 %v295, %v894
        %v896 = vpop.f32.mrb[0].mxu0
        %v897 = vpop.f32.mrb[0].mxu0
        %v898 = vadd.f32 %v295, %v897
        %v899 = vpop.f32.mrb[0].mxu0
        %900 = vmatprep.mubr.bf16.mxu0 0
        %901 = vmatmul.mubr.bf16.gmra.mrb[0].mxu0 %v598
        %v902 = vpop.f32.mrb[0].mxu0
        %v903 = vadd.f32 %v295, %v902
        %v904 = vpop.f32.mrb[0].mxu0
        %v905 = vpop.f32.mrb[0].mxu0
        %v906 = vadd.f32 %v295, %v905
        %v907 = vpop.f32.mrb[0].mxu0
        %908 = vmatprep.mubr.bf16.mxu0 0
        %909 = vmatmul.mubr.bf16.gmra.mrb[0].mxu0 %v601
        %v910 = vpop.f32.mrb[0].mxu0
        %v911 = vadd.f32 %v295, %v910
        %v912 = vpop.f32.mrb[0].mxu0
        %v913 = vpop.f32.mrb[0].mxu0
        %v914 = vadd.f32 %v295, %v913
        %v915 = vpop.f32.mrb[0].mxu0
        %916 = vmatprep.mubr.bf16.mxu0 0
        %917 = vmatmul.mubr.bf16.gmra.mrb[0].mxu0 %v604
        %v918 = vpop.f32.mrb[0].mxu0
        %v919 = vadd.f32 %v295, %v918
        %v920 = vpop.f32.mrb[0].mxu0
        %v921 = vpop.f32.mrb[0].mxu0
        %v922 = vadd.f32 %v295, %v921
        %v923 = vpop.f32.mrb[0].mxu0
        %924 = vmatprep.mubr.bf16.mxu0 0
        %925 = vmatmul.mubr.bf16.gmra.mrb[0].mxu0 %v607
        %v926 = vpop.f32.mrb[0].mxu0
        %v927 = vadd.f32 %v295, %v926
        %v928 = vpop.f32.mrb[0].mxu0
        %v929 = vpop.f32.mrb[0].mxu0
        %v930 = vadd.f32 %v295, %v929
        %v931 = vpop.f32.mrb[0].mxu0
        %932 = vmatprep.mubr.bf16.mxu0 0
        %933 = vmatmul.mubr.bf16.gmra.mrb[0].mxu0 %v610
        %v934 = vpop.f32.mrb[0].mxu0
        %v935 = vadd.f32 %v295, %v934
        %v936 = vpop.f32.mrb[0].mxu0
        %v937 = vpop.f32.mrb[0].mxu0
        %v938 = vadd.f32 %v295, %v937
        %v939 = vpop.f32.mrb[0].mxu0
        %940 = vmatprep.mubr.bf16.mxu0 0
        %941 = vmatmul.mubr.bf16.gmra.mrb[0].mxu0 %v613
        %v942 = vpop.f32.mrb[0].mxu0
        %v943 = vadd.f32 %v295, %v942
        %v944 = vpop.f32.mrb[0].mxu0
        %v945 = vpop.f32.mrb[0].mxu0
        %v946 = vadd.f32 %v295, %v945
        %v947 = vpop.f32.mrb[0].mxu0
        %948 = vmatprep.mubr.bf16.mxu0 0
        %949 = vmatmul.mubr.bf16.gmra.mrb[0].mxu0 %v616
        %v950 = vpop.f32.mrb[0].mxu0
        %v951 = vadd.f32 %v295, %v950
        %v952 = vpop.f32.mrb[0].mxu0
        %v953 = vpop.f32.mrb[0].mxu0
        %v954 = vadd.f32 %v295, %v953
        %v955 = vpop.f32.mrb[0].mxu0
        %956 = vmatprep.mubr.bf16.mxu0 0
        %957 = vmatmul.mubr.bf16.gmra.mrb[0].mxu0 %v619
        %v958 = vpop.f32.mrb[0].mxu0
        %v959 = vadd.f32 %v295, %v958
        %v960 = vpop.f32.mrb[0].mxu0
        %v961 = vpop.f32.mrb[0].mxu0
        %v962 = vadd.f32 %v295, %v961
        %v963 = vpop.f32.mrb[0].mxu0
        %964 = vmatprep.mubr.bf16.mxu0 0
        %965 = vmatmul.mubr.bf16.gmra.mrb[0].mxu0 %v622
        %v966 = vpop.f32.mrb[0].mxu0
        %v967 = vadd.f32 %v295, %v966
        %v968 = vpop.f32.mrb[0].mxu0
        %v969 = vpop.f32.mrb[0].mxu0
        %v970 = vadd.f32 %v295, %v969
        %v971 = vpop.f32.mrb[0].mxu0
        %972 = vmatprep.mubr.bf16.mxu0 0
        %973 = vmatmul.mubr.bf16.gmra.mrb[0].mxu0 %v625
        %v974 = vpop.f32.mrb[0].mxu0
        %v975 = vadd.f32 %v295, %v974
        %v976 = vpop.f32.mrb[0].mxu0
        %v977 = vpop.f32.mrb[0].mxu0
        %v978 = vadd.f32 %v295, %v977
        %v979 = vpop.f32.mrb[0].mxu0
        %980 = vmatprep.mubr.bf16.mxu0 0
        %981 = vmatmul.mubr.bf16.gmra.mrb[0].mxu0 %v628
        %v982 = vpop.f32.mrb[0].mxu0
        %v983 = vadd.f32 %v295, %v982
        %v984 = vpop.f32.mrb[0].mxu0
        %v985 = vpop.f32.mrb[0].mxu0
        %v986 = vadd.f32 %v295, %v985
        %v987 = vpop.f32.mrb[0].mxu0
        %988 = vmatprep.mubr.bf16.mxu0 0
        %989 = vmatmul.mubr.bf16.gmra.mrb[0].mxu0 %v631
        %v990 = vpop.f32.mrb[0].mxu0
        %v991 = vadd.f32 %v295, %v990
        %v992 = vpop.f32.mrb[0].mxu0
        %v993 = vpop.f32.mrb[0].mxu0
        %v994 = vadd.f32 %v295, %v993
        %v995 = vpop.f32.mrb[0].mxu0
        %996 = vmatprep.mubr.bf16.mxu0 0
        %997 = vmatmul.mubr.bf16.gmra.mrb[0].mxu0 %v634
        %v998 = vpop.f32.mrb[0].mxu0
        %v999 = vadd.f32 %v295, %v998
        %v1000 = vpop.f32.mrb[0].mxu0
        %v1001 = vpop.f32.mrb[0].mxu0
        %v1002 = vadd.f32 %v295, %v1001
        %v1003 = vpop.f32.mrb[0].mxu0
        %1004 = vmatprep.mubr.bf16.mxu0 0
        %1005 = vmatmul.mubr.bf16.gmra.mrb[0].mxu0 %v637
        %v1006 = vpop.f32.mrb[0].mxu0
        %v1007 = vadd.f32 %v295, %v1006
        %v1008 = vpop.f32.mrb[0].mxu0
        %v1009 = vpop.f32.mrb[0].mxu0
        %v1010 = vadd.f32 %v295, %v1009
        %v1011 = vpop.f32.mrb[0].mxu0
        %1012 = vmatprep.mubr.bf16.mxu0 0
        %1013 = vmatmul.mubr.bf16.gmra.mrb[0].mxu0 %v640
        %v1014 = vpop.f32.mrb[0].mxu0
        %v1015 = vadd.f32 %v295, %v1014
        %v1016 = vpop.f32.mrb[0].mxu0
        %v1017 = vpop.f32.mrb[0].mxu0
        %v1018 = vadd.f32 %v295, %v1017
        %v1019 = vpop.f32.mrb[0].mxu0
        %1020 = vmatprep.mubr.bf16.mxu0 0
        %1021 = vmatmul.mubr.bf16.gmra.mrb[0].mxu0 %v643
        %v1022 = vpop.f32.mrb[0].mxu0
        %v1023 = vadd.f32 %v295, %v1022
        %v1024 = vpop.f32.mrb[0].mxu0
        %v1025 = vpop.f32.mrb[0].mxu0
        %v1026 = vpop.f32.mrb[0].mxu0
        %1027 = vdwg.mxu0
        %v1028 = vmax.f32 %v687, 0.0
        %v1029 = vmax.f32 %v690, 0.0
        %v1030 = vmax.f32 %v695, 0.0
        %v1031 = vmax.f32 %v698, 0.0
        %v1032 = vmax.f32 %v703, 0.0
        %v1033 = vmax.f32 %v706, 0.0
        %v1034 = vmax.f32 %v711, 0.0
        %v1035 = vmax.f32 %v714, 0.0
        %v1036 = vmax.f32 %v719, 0.0
        %v1037 = vmax.f32 %v722, 0.0
        %v1038 = vmax.f32 %v727, 0.0
        %v1039 = vmax.f32 %v730, 0.0
        %v1040 = vmax.f32 %v735, 0.0
        %v1041 = vmax.f32 %v738, 0.0
        %v1042 = vmax.f32 %v743, 0.0
        %v1043 = vmax.f32 %v746, 0.0
        %v1044 = vmax.f32 %v751, 0.0
        %v1045 = vmax.f32 %v754, 0.0
        %v1046 = vmax.f32 %v759, 0.0
        %v1047 = vmax.f32 %v762, 0.0
        %v1048 = vmax.f32 %v767, 0.0
        %v1049 = vmax.f32 %v770, 0.0
        %v1050 = vmax.f32 %v775, 0.0
        %v1051 = vmax.f32 %v778, 0.0
        %v1052 = vmax.f32 %v783, 0.0
        %v1053 = vmax.f32 %v786, 0.0
        %v1054 = vmax.f32 %v791, 0.0
        %v1055 = vmax.f32 %v794, 0.0
        %v1056 = vmax.f32 %v799, 0.0
        %v1057 = vmax.f32 %v802, 0.0
        %v1058 = vmax.f32 %v807, 0.0
        %v1059 = vmax.f32 %v810, 0.0
        %v1060 = vmax.f32 %v815, 0.0
        %v1061 = vmax.f32 %v818, 0.0
        %v1062 = vmax.f32 %v823, 0.0
        %v1063 = vmax.f32 %v826, 0.0
        %v1064 = vmax.f32 %v831, 0.0
        %v1065 = vmax.f32 %v834, 0.0
        %v1066 = vmax.f32 %v839, 0.0
        %v1067 = vmax.f32 %v842, 0.0
        %v1068 = vmax.f32 %v847, 0.0
        %v1069 = vmax.f32 %v850, 0.0
        %v1070 = vmax.f32 %v855, 0.0
        %v1071 = vmax.f32 %v858, 0.0
        %v1072 = vmax.f32 %v863, 0.0
        %v1073 = vmax.f32 %v866, 0.0
        %v1074 = vmax.f32 %v871, 0.0
        %v1075 = vmax.f32 %v874, 0.0
        %v1076 = vmax.f32 %v879, 0.0
        %v1077 = vmax.f32 %v882, 0.0
        %v1078 = vmax.f32 %v887, 0.0
        %v1079 = vmax.f32 %v890, 0.0
        %v1080 = vmax.f32 %v895, 0.0
        %v1081 = vmax.f32 %v898, 0.0
        %v1082 = vmax.f32 %v903, 0.0
        %v1083 = vmax.f32 %v906, 0.0
        %v1084 = vmax.f32 %v911, 0.0
        %v1085 = vmax.f32 %v914, 0.0
        %v1086 = vmax.f32 %v919, 0.0
        %v1087 = vmax.f32 %v922, 0.0
        %v1088 = vmax.f32 %v927, 0.0
        %v1089 = vmax.f32 %v930, 0.0
        %v1090 = vmax.f32 %v935, 0.0
        %v1091 = vmax.f32 %v938, 0.0
        %v1092 = vmax.f32 %v943, 0.0
        %v1093 = vmax.f32 %v946, 0.0
        %v1094 = vmax.f32 %v951, 0.0
        %v1095 = vmax.f32 %v954, 0.0
        %v1096 = vmax.f32 %v959, 0.0
        %v1097 = vmax.f32 %v962, 0.0
        %v1098 = vmax.f32 %v967, 0.0
        %v1099 = vmax.f32 %v970, 0.0
        %v1100 = vmax.f32 %v975, 0.0
        %v1101 = vmax.f32 %v978, 0.0
        %v1102 = vmax.f32 %v983, 0.0
        %v1103 = vmax.f32 %v986, 0.0
        %v1104 = vmax.f32 %v991, 0.0
        %v1105 = vmax.f32 %v994, 0.0
        %v1106 = vmax.f32 %v999, 0.0
        %v1107 = vmax.f32 %v1002, 0.0
        %v1108 = vmax.f32 %v1007, 0.0
        %v1109 = vmax.f32 %v1010, 0.0
        %v1110 = vmax.f32 %v1015, 0.0
        %v1111 = vmax.f32 %v1018, 0.0
        %v1112 = vmax.f32 %v1023, 0.0
        %v1113 = vpack.c.bf16 %v1029, %v1028
        %v1114 = vpack.c.bf16 %v1031, %v1030
        %v1115 = vpack.c.bf16 %v1033, %v1032
        %v1116 = vpack.c.bf16 %v1035, %v1034
        %v1117 = vpack.c.bf16 %v1037, %v1036
        %v1118 = vpack.c.bf16 %v1039, %v1038
        %v1119 = vpack.c.bf16 %v1041, %v1040
        %v1120 = vpack.c.bf16 %v1043, %v1042
        %v1121 = vpack.c.bf16 %v1045, %v1044
        %v1122 = vpack.c.bf16 %v1047, %v1046
        %v1123 = vpack.c.bf16 %v1049, %v1048
        %v1124 = vpack.c.bf16 %v1051, %v1050
        %v1125 = vpack.c.bf16 %v1053, %v1052
        %v1126 = vpack.c.bf16 %v1055, %v1054
        %v1127 = vpack.c.bf16 %v1057, %v1056
        %v1128 = vpack.c.bf16 %v1059, %v1058
        %v1129 = vpack.c.bf16 %v1061, %v1060
        %v1130 = vpack.c.bf16 %v1063, %v1062
        %v1131 = vpack.c.bf16 %v1065, %v1064
        %v1132 = vpack.c.bf16 %v1067, %v1066
        %v1133 = vpack.c.bf16 %v1069, %v1068
        %v1134 = vpack.c.bf16 %v1071, %v1070
        %v1135 = vpack.c.bf16 %v1073, %v1072
        %v1136 = vpack.c.bf16 %v1075, %v1074
        %v1137 = vpack.c.bf16 %v1077, %v1076
        %v1138 = vpack.c.bf16 %v1079, %v1078
        %v1139 = vpack.c.bf16 %v1081, %v1080
        %v1140 = vpack.c.bf16 %v1083, %v1082
        %v1141 = vpack.c.bf16 %v1085, %v1084
        %v1142 = vpack.c.bf16 %v1087, %v1086
        %v1143 = vpack.c.bf16 %v1089, %v1088
        %v1144 = vpack.c.bf16 %v1091, %v1090
        %v1145 = vpack.c.bf16 %v1093, %v1092
        %v1146 = vpack.c.bf16 %v1095, %v1094
        %v1147 = vpack.c.bf16 %v1097, %v1096
        %v1148 = vpack.c.bf16 %v1099, %v1098
        %v1149 = vpack.c.bf16 %v1101, %v1100
        %v1150 = vpack.c.bf16 %v1103, %v1102
        %v1151 = vpack.c.bf16 %v1105, %v1104
        %v1152 = vpack.c.bf16 %v1107, %v1106
        %v1153 = vpack.c.bf16 %v1109, %v1108
        %v1154 = vpack.c.bf16 %v1111, %v1110
        %v1155 = vpack.c.bf16 %v1112, %v1112
        %v1199 = vunpack.c.l.b16 %v1113
        %v1200 = vunpack.c.h.b16 %v1113
        %v1201 = vunpack.c.l.b16 %v1114
        %v1202 = vunpack.c.h.b16 %v1114
        %v1203 = vunpack.c.l.b16 %v1115
        %v1204 = vunpack.c.h.b16 %v1115
        %v1205 = vunpack.c.l.b16 %v1116
        %v1206 = vunpack.c.h.b16 %v1116
        %v1207 = vunpack.c.l.b16 %v1117
        %v1208 = vunpack.c.h.b16 %v1117
        %v1209 = vunpack.c.l.b16 %v1118
        %v1210 = vunpack.c.h.b16 %v1118
        %v1211 = vunpack.c.l.b16 %v1119
        %v1212 = vunpack.c.h.b16 %v1119
        %v1213 = vunpack.c.l.b16 %v1120
        %v1214 = vunpack.c.h.b16 %v1120
        %v1215 = vunpack.c.l.b16 %v1121
        %v1216 = vunpack.c.h.b16 %v1121
        %v1217 = vunpack.c.l.b16 %v1122
        %v1218 = vunpack.c.h.b16 %v1122
        %v1219 = vunpack.c.l.b16 %v1123
        %v1220 = vunpack.c.h.b16 %v1123
        %v1221 = vunpack.c.l.b16 %v1124
        %v1222 = vunpack.c.h.b16 %v1124
        %v1223 = vunpack.c.l.b16 %v1125
        %v1224 = vunpack.c.h.b16 %v1125
        %v1225 = vunpack.c.l.b16 %v1126
        %v1226 = vunpack.c.h.b16 %v1126
        %v1227 = vunpack.c.l.b16 %v1127
        %v1228 = vunpack.c.h.b16 %v1127
        %v1229 = vunpack.c.l.b16 %v1128
        %v1230 = vunpack.c.h.b16 %v1128
        %v1231 = vunpack.c.l.b16 %v1129
        %v1232 = vunpack.c.h.b16 %v1129
        %v1233 = vunpack.c.l.b16 %v1130
        %v1234 = vunpack.c.h.b16 %v1130
        %v1235 = vunpack.c.l.b16 %v1131
        %v1236 = vunpack.c.h.b16 %v1131
        %v1237 = vunpack.c.l.b16 %v1132
        %v1238 = vunpack.c.h.b16 %v1132
        %v1239 = vunpack.c.l.b16 %v1133
        %v1240 = vunpack.c.h.b16 %v1133
        %v1241 = vunpack.c.l.b16 %v1134
        %v1242 = vunpack.c.h.b16 %v1134
        %v1243 = vunpack.c.l.b16 %v1135
        %v1244 = vunpack.c.h.b16 %v1135
        %v1245 = vunpack.c.l.b16 %v1136
        %v1246 = vunpack.c.h.b16 %v1136
        %v1247 = vunpack.c.l.b16 %v1137
        %v1248 = vunpack.c.h.b16 %v1137
        %v1249 = vunpack.c.l.b16 %v1138
        %v1250 = vunpack.c.h.b16 %v1138
        %v1251 = vunpack.c.l.b16 %v1139
        %v1252 = vunpack.c.h.b16 %v1139
        %v1253 = vunpack.c.l.b16 %v1140
        %v1254 = vunpack.c.h.b16 %v1140
        %v1255 = vunpack.c.l.b16 %v1141
        %v1256 = vunpack.c.h.b16 %v1141
        %v1257 = vunpack.c.l.b16 %v1142
        %v1258 = vunpack.c.h.b16 %v1142
        %v1259 = vunpack.c.l.b16 %v1143
        %v1260 = vunpack.c.h.b16 %v1143
        %v1261 = vunpack.c.l.b16 %v1144
        %v1262 = vunpack.c.h.b16 %v1144
        %v1263 = vunpack.c.l.b16 %v1145
        %v1264 = vunpack.c.h.b16 %v1145
        %v1265 = vunpack.c.l.b16 %v1146
        %v1266 = vunpack.c.h.b16 %v1146
        %v1267 = vunpack.c.l.b16 %v1147
        %v1268 = vunpack.c.h.b16 %v1147
        %v1269 = vunpack.c.l.b16 %v1148
        %v1270 = vunpack.c.h.b16 %v1148
        %v1271 = vunpack.c.l.b16 %v1149
        %v1272 = vunpack.c.h.b16 %v1149
        %v1273 = vunpack.c.l.b16 %v1150
        %v1274 = vunpack.c.h.b16 %v1150
        %v1275 = vunpack.c.l.b16 %v1151
        %v1276 = vunpack.c.h.b16 %v1151
        %v1277 = vunpack.c.l.b16 %v1152
        %v1278 = vunpack.c.h.b16 %v1152
        %v1279 = vunpack.c.l.b16 %v1153
        %v1280 = vunpack.c.h.b16 %v1153
        %v1281 = vunpack.c.l.b16 %v1154
        %v1282 = vunpack.c.h.b16 %v1154
        %v1283 = vunpack.c.l.b16 %v1155
        %v1284 = vpack.c.b16 %v1199, %v1199
        %v1285 = vpack.c.b16 %v1200, %v1200
        %v1286 = vpack.c.b16 %v1201, %v1201
        %v1287 = vpack.c.b16 %v1202, %v1202
        %v1288 = vpack.c.b16 %v1203, %v1203
        %v1289 = vpack.c.b16 %v1204, %v1204
        %v1290 = vpack.c.b16 %v1205, %v1205
        %v1291 = vpack.c.b16 %v1206, %v1206
        %v1292 = vpack.c.b16 %v1207, %v1207
        %v1293 = vpack.c.b16 %v1208, %v1208
        %v1294 = vpack.c.b16 %v1209, %v1209
        %v1295 = vpack.c.b16 %v1210, %v1210
        %v1296 = vpack.c.b16 %v1211, %v1211
        %v1297 = vpack.c.b16 %v1212, %v1212
        %v1298 = vpack.c.b16 %v1213, %v1213
        %v1299 = vpack.c.b16 %v1214, %v1214
        %v1300 = vpack.c.b16 %v1215, %v1215
        %v1301 = vpack.c.b16 %v1216, %v1216
        %v1302 = vpack.c.b16 %v1217, %v1217
        %v1303 = vpack.c.b16 %v1218, %v1218
        %v1304 = vpack.c.b16 %v1219, %v1219
        %v1305 = vpack.c.b16 %v1220, %v1220
        %v1306 = vpack.c.b16 %v1221, %v1221
        %v1307 = vpack.c.b16 %v1222, %v1222
        %v1308 = vpack.c.b16 %v1223, %v1223
        %v1309 = vpack.c.b16 %v1224, %v1224
        %v1310 = vpack.c.b16 %v1225, %v1225
        %v1311 = vpack.c.b16 %v1226, %v1226
        %v1312 = vpack.c.b16 %v1227, %v1227
        %v1313 = vpack.c.b16 %v1228, %v1228
        %v1314 = vpack.c.b16 %v1229, %v1229
        %v1315 = vpack.c.b16 %v1230, %v1230
        %v1316 = vpack.c.b16 %v1231, %v1231
        %v1317 = vpack.c.b16 %v1232, %v1232
        %v1318 = vpack.c.b16 %v1233, %v1233
        %v1319 = vpack.c.b16 %v1234, %v1234
        %v1320 = vpack.c.b16 %v1235, %v1235
        %v1321 = vpack.c.b16 %v1236, %v1236
        %v1322 = vpack.c.b16 %v1237, %v1237
        %v1323 = vpack.c.b16 %v1238, %v1238
        %v1324 = vpack.c.b16 %v1239, %v1239
        %v1325 = vpack.c.b16 %v1240, %v1240
        %v1326 = vpack.c.b16 %v1241, %v1241
        %v1327 = vpack.c.b16 %v1242, %v1242
        %v1328 = vpack.c.b16 %v1243, %v1243
        %v1329 = vpack.c.b16 %v1244, %v1244
        %v1330 = vpack.c.b16 %v1245, %v1245
        %v1331 = vpack.c.b16 %v1246, %v1246
        %v1332 = vpack.c.b16 %v1247, %v1247
        %v1333 = vpack.c.b16 %v1248, %v1248
        %v1334 = vpack.c.b16 %v1249, %v1249
        %v1335 = vpack.c.b16 %v1250, %v1250
        %v1336 = vpack.c.b16 %v1251, %v1251
        %v1337 = vpack.c.b16 %v1252, %v1252
        %v1338 = vpack.c.b16 %v1253, %v1253
        %v1339 = vpack.c.b16 %v1254, %v1254
        %v1340 = vpack.c.b16 %v1255, %v1255
        %v1341 = vpack.c.b16 %v1256, %v1256
        %v1342 = vpack.c.b16 %v1257, %v1257
        %v1343 = vpack.c.b16 %v1258, %v1258
        %v1344 = vpack.c.b16 %v1259, %v1259
        %v1345 = vpack.c.b16 %v1260, %v1260
        %v1346 = vpack.c.b16 %v1261, %v1261
        %v1347 = vpack.c.b16 %v1262, %v1262
        %v1348 = vpack.c.b16 %v1263, %v1263
        %v1349 = vpack.c.b16 %v1264, %v1264
        %v1350 = vpack.c.b16 %v1265, %v1265
        %v1351 = vpack.c.b16 %v1266, %v1266
        %v1352 = vpack.c.b16 %v1267, %v1267
        %v1353 = vpack.c.b16 %v1268, %v1268
        %v1354 = vpack.c.b16 %v1269, %v1269
        %v1355 = vpack.c.b16 %v1270, %v1270
        %v1356 = vpack.c.b16 %v1271, %v1271
        %v1357 = vpack.c.b16 %v1272, %v1272
        %v1358 = vpack.c.b16 %v1273, %v1273
        %v1359 = vpack.c.b16 %v1274, %v1274
        %v1360 = vpack.c.b16 %v1275, %v1275
        %v1361 = vpack.c.b16 %v1276, %v1276
        %v1362 = vpack.c.b16 %v1277, %v1277
        %v1363 = vpack.c.b16 %v1278, %v1278
        %v1364 = vpack.c.b16 %v1279, %v1279
        %v1365 = vpack.c.b16 %v1280, %v1280
        %v1366 = vpack.c.b16 %v1281, %v1281
        %v1367 = vpack.c.b16 %v1282, %v1282
        %v1368 = vpack.c.b16 %v1283, %v1283
        %vm1454 = vcmask 257024
        %1455 = vst.msk [vmem:[%s200] sm:$0xf] %vm1454, %v1284
        %1456 = vst.msk [vmem:[%s200 + $0x4] sm:$0xf] %vm1454, %v1285
        %1457 = vst.msk [vmem:[%s200 + $0x8] sm:$0xf] %vm1454, %v1286
        %1458 = vst.msk [vmem:[%s200 + $0xc] sm:$0xf] %vm1454, %v1287
        %1459 = vst.msk [vmem:[%s200 + $0x10] sm:$0xf] %vm1454, %v1288
        %1460 = vst.msk [vmem:[%s200 + $0x14] sm:$0xf] %vm1454, %v1289
        %1461 = vst.msk [vmem:[%s200 + $0x18] sm:$0xf] %vm1454, %v1290
        %1462 = vst.msk [vmem:[%s200 + $0x1c] sm:$0xf] %vm1454, %v1291
        %1463 = vst.msk [vmem:[%s200 + $0x20] sm:$0xf] %vm1454, %v1292
        %1464 = vst.msk [vmem:[%s200 + $0x24] sm:$0xf] %vm1454, %v1293
        %1465 = vst.msk [vmem:[%s200 + $0x28] sm:$0xf] %vm1454, %v1294
        %1466 = vst.msk [vmem:[%s200 + $0x2c] sm:$0xf] %vm1454, %v1295
        %1467 = vst.msk [vmem:[%s200 + $0x30] sm:$0xf] %vm1454, %v1296
        %1468 = vst.msk [vmem:[%s200 + $0x34] sm:$0xf] %vm1454, %v1297
        %1469 = vst.msk [vmem:[%s200 + $0x38] sm:$0xf] %vm1454, %v1298
        %1470 = vst.msk [vmem:[%s200 + $0x3c] sm:$0xf] %vm1454, %v1299
        %1471 = vst.msk [vmem:[%s200 + $0x40] sm:$0xf] %vm1454, %v1300
        %1472 = vst.msk [vmem:[%s200 + $0x44] sm:$0xf] %vm1454, %v1301
        %1473 = vst.msk [vmem:[%s200 + $0x48] sm:$0xf] %vm1454, %v1302
        %1474 = vst.msk [vmem:[%s200 + $0x4c] sm:$0xf] %vm1454, %v1303
        %1475 = vst.msk [vmem:[%s200 + $0x50] sm:$0xf] %vm1454, %v1304
        %1476 = vst.msk [vmem:[%s200 + $0x54] sm:$0xf] %vm1454, %v1305
        %1477 = vst.msk [vmem:[%s200 + $0x58] sm:$0xf] %vm1454, %v1306
        %1478 = vst.msk [vmem:[%s200 + $0x5c] sm:$0xf] %vm1454, %v1307
        %1479 = vst.msk [vmem:[%s200 + $0x60] sm:$0xf] %vm1454, %v1308
        %1480 = vst.msk [vmem:[%s200 + $0x64] sm:$0xf] %vm1454, %v1309
        %1481 = vst.msk [vmem:[%s200 + $0x68] sm:$0xf] %vm1454, %v1310
        %1482 = vst.msk [vmem:[%s200 + $0x6c] sm:$0xf] %vm1454, %v1311
        %1483 = vst.msk [vmem:[%s200 + $0x70] sm:$0xf] %vm1454, %v1312
        %1484 = vst.msk [vmem:[%s200 + $0x74] sm:$0xf] %vm1454, %v1313
        %1485 = vst.msk [vmem:[%s200 + $0x78] sm:$0xf] %vm1454, %v1314
        %1486 = vst.msk [vmem:[%s200 + $0x7c] sm:$0xf] %vm1454, %v1315
        %1487 = vst.msk [vmem:[%s200 + $0x80] sm:$0xf] %vm1454, %v1316
        %1488 = vst.msk [vmem:[%s200 + $0x84] sm:$0xf] %vm1454, %v1317
        %1489 = vst.msk [vmem:[%s200 + $0x88] sm:$0xf] %vm1454, %v1318
        %1490 = vst.msk [vmem:[%s200 + $0x8c] sm:$0xf] %vm1454, %v1319
        %1491 = vst.msk [vmem:[%s200 + $0x90] sm:$0xf] %vm1454, %v1320
        %1492 = vst.msk [vmem:[%s200 + $0x94] sm:$0xf] %vm1454, %v1321
        %1493 = vst.msk [vmem:[%s200 + $0x98] sm:$0xf] %vm1454, %v1322
        %1494 = vst.msk [vmem:[%s200 + $0x9c] sm:$0xf] %vm1454, %v1323
        %1495 = vst.msk [vmem:[%s200 + $0xa0] sm:$0xf] %vm1454, %v1324
        %1496 = vst.msk [vmem:[%s200 + $0xa4] sm:$0xf] %vm1454, %v1325
        %1497 = vst.msk [vmem:[%s200 + $0xa8] sm:$0xf] %vm1454, %v1326
        %1498 = vst.msk [vmem:[%s200 + $0xac] sm:$0xf] %vm1454, %v1327
        %1499 = vst.msk [vmem:[%s200 + $0xb0] sm:$0xf] %vm1454, %v1328
        %1500 = vst.msk [vmem:[%s200 + $0xb4] sm:$0xf] %vm1454, %v1329
        %1501 = vst.msk [vmem:[%s200 + $0xb8] sm:$0xf] %vm1454, %v1330
        %1502 = vst.msk [vmem:[%s200 + $0xbc] sm:$0xf] %vm1454, %v1331
        %1503 = vst.msk [vmem:[%s200 + $0xc0] sm:$0xf] %vm1454, %v1332
        %1504 = vst.msk [vmem:[%s200 + $0xc4] sm:$0xf] %vm1454, %v1333
        %1505 = vst.msk [vmem:[%s200 + $0xc8] sm:$0xf] %vm1454, %v1334
        %1506 = vst.msk [vmem:[%s200 + $0xcc] sm:$0xf] %vm1454, %v1335
        %1507 = vst.msk [vmem:[%s200 + $0xd0] sm:$0xf] %vm1454, %v1336
        %1508 = vst.msk [vmem:[%s200 + $0xd4] sm:$0xf] %vm1454, %v1337
        %1509 = vst.msk [vmem:[%s200 + $0xd8] sm:$0xf] %vm1454, %v1338
        %1510 = vst.msk [vmem:[%s200 + $0xdc] sm:$0xf] %vm1454, %v1339
        %1511 = vst.msk [vmem:[%s200 + $0xe0] sm:$0xf] %vm1454, %v1340
        %1512 = vst.msk [vmem:[%s200 + $0xe4] sm:$0xf] %vm1454, %v1341
        %1513 = vst.msk [vmem:[%s200 + $0xe8] sm:$0xf] %vm1454, %v1342
        %1514 = vst.msk [vmem:[%s200 + $0xec] sm:$0xf] %vm1454, %v1343
        %1515 = vst.msk [vmem:[%s200 + $0xf0] sm:$0xf] %vm1454, %v1344
        %1516 = vst.msk [vmem:[%s200 + $0xf4] sm:$0xf] %vm1454, %v1345
        %1517 = vst.msk [vmem:[%s200 + $0xf8] sm:$0xf] %vm1454, %v1346
        %1518 = vst.msk [vmem:[%s200 + $0xfc] sm:$0xf] %vm1454, %v1347
        %1519 = vst.msk [vmem:[%s200 + $0x100] sm:$0xf] %vm1454, %v1348
        %1520 = vst.msk [vmem:[%s200 + $0x104] sm:$0xf] %vm1454, %v1349
        %1521 = vst.msk [vmem:[%s200 + $0x108] sm:$0xf] %vm1454, %v1350
        %1522 = vst.msk [vmem:[%s200 + $0x10c] sm:$0xf] %vm1454, %v1351
        %1523 = vst.msk [vmem:[%s200 + $0x110] sm:$0xf] %vm1454, %v1352
        %1524 = vst.msk [vmem:[%s200 + $0x114] sm:$0xf] %vm1454, %v1353
        %1525 = vst.msk [vmem:[%s200 + $0x118] sm:$0xf] %vm1454, %v1354
        %1526 = vst.msk [vmem:[%s200 + $0x11c] sm:$0xf] %vm1454, %v1355
        %1527 = vst.msk [vmem:[%s200 + $0x120] sm:$0xf] %vm1454, %v1356
        %1528 = vst.msk [vmem:[%s200 + $0x124] sm:$0xf] %vm1454, %v1357
        %1529 = vst.msk [vmem:[%s200 + $0x128] sm:$0xf] %vm1454, %v1358
        %1530 = vst.msk [vmem:[%s200 + $0x12c] sm:$0xf] %vm1454, %v1359
        %1531 = vst.msk [vmem:[%s200 + $0x130] sm:$0xf] %vm1454, %v1360
        %1532 = vst.msk [vmem:[%s200 + $0x134] sm:$0xf] %vm1454, %v1361
        %1533 = vst.msk [vmem:[%s200 + $0x138] sm:$0xf] %vm1454, %v1362
        %1534 = vst.msk [vmem:[%s200 + $0x13c] sm:$0xf] %vm1454, %v1363
        %1535 = vst.msk [vmem:[%s200 + $0x140] sm:$0xf] %vm1454, %v1364
        %1536 = vst.msk [vmem:[%s200 + $0x144] sm:$0xf] %vm1454, %v1365
        %1537 = vst.msk [vmem:[%s200 + $0x148] sm:$0xf] %vm1454, %v1366
        %1538 = vst.msk [vmem:[%s200 + $0x14c] sm:$0xf] %vm1454, %v1367
        %1539 = vst.msk [vmem:[%s200 + $0x150] sm:$0xf] %vm1454, %v1368
        %s1540 = smul.u32 85, %s16
        %p1541 = scmp.lt.s32.totalorder %s1540, 169
        %s1542 = scalar_select %p1541, %s1540, 169
        %s1543 = smul.addr %s1542, 4
        %s1544 = scalar_lea.vmem %s3, %s1543
        // Predicated region
        $region41: #{cnn_net_forward.3} parent=31 // pred_check
          %p1545 = pneg %p102
        $region42: #{cnn_net_forward.3} parent=31 // pred_check_branch
          %1547 = sbr.rel (%p1545) target = $region44
        $region43: #{cnn_net_forward.3} parent=31 // pred_region
          %s1548 = smul.u32 85, %s16
        $region44: #{cnn_net_forward.3} parent=31 // pred_fallthru
          _
      $region32: #{cnn_net_forward.3} parent=5 // pred_fallthru
        _
      %p1549 = scmp.le.s32.totalorder 2, %s11
      // Predicated region
      $region45: #{cnn_net_forward.3} parent=5 // pred_check
        %p1550 = pneg %p1549
      $region46: #{cnn_net_forward.3} parent=5 // pred_check_branch
        %1552 = sbr.rel (%p1550) target = $region48
      $region47: #{cnn_net_forward.3} parent=5 // pred_region
        %s1553 = ssub.s32 %s11, 2
        // Predicated region
        $region49: #{cnn_net_forward.3} parent=47 // pred_check
          %p1554 = pneg %p108
        $region50: #{cnn_net_forward.3} parent=47 // pred_check_branch
          %1556 = sbr.rel (%p1554) target = $region52
        $region51: #{cnn_net_forward.3} parent=47 // pred_region
          %s1557 = smul.u32 85, %s17
          %p1558 = scmp.lt.s32.totalorder %s1557, 169
          %s1559 = scalar_select %p1558, %s1557, 169
          %s1560 = smul.addr %s1559, 4
          %s1561 = scalar_lea.vmem %s3, %s1560
        $region52: #{cnn_net_forward.3} parent=47 // pred_fallthru
          _
      $region48: #{cnn_net_forward.3} parent=5 // pred_fallthru
        _
    $region6: #{cnn_net_forward.3} parent=1 // loop_footer
      %s15 = sadd.s32 1, %s11
    $region7: #{cnn_net_forward.3} parent=1 // loop_footer_branch
      %10 = sbr.rel target = $region3
    $region8: #{cnn_net_forward.3} parent=1 // loop_exit
      _
    %1562 = vsyncpa [#allocation3], 1
    %s1563 = scalar_lea.sflag [#allocation3], 1
    %1564 = vsyncpa %s1563, 1
    %1565 = vsyncpa [#allocation5], 1

// kernel: cnn_net_forward.4
$region0: #{cnn_net_forward.4}
  #allocation0 [shape = 'u32[]', space=smem, size = 0x4, offset = 0x4, fixed_abs, tag = 'smem constant byte address 0x4 - core index']
  #allocation1 [shape = 'u32[144,128]{1,0:T(1,128)}', space=vmem, size = 0x12000, scoped, tag = 'internal scratch']
  %s0 = inlined_call_operand.vmem [shape: bf16[2,680,32], index: 0, kind: input, shape index: {}]
  %s1 = inlined_call_operand.vmem [shape: bf16[288,64], index: 1, kind: input, shape index: {}]
  %s2 = inlined_call_operand.vmem [shape: f32[1,64], index: 2, kind: input, shape index: {}]
  %s3 = inlined_call_operand.vmem [shape: bf16[72,595], index: 3, kind: input, shape index: {}]
  %s4 = inlined_call_operand.vmem [shape: bf16[72,595], index: 4, kind: input, shape index: {}]
  %s5 = inlined_call_operand.vmem [shape: bf16[2,72,128], index: 5, kind: output, shape index: {}]
  %s6 = sld [smem:[#allocation0]]
  $region53: #{cnn_net_forward.4} parent=0
    _
  %s8 = ssub.s32 1, %s6
  %s9 = scalar_select 0, %s8, %s6
  loop: start=0, step=1, limit=4
  $region2: #{cnn_net_forward.4} parent=0 // loop_pre_header
    _
  $region3: #{cnn_net_forward.4} parent=0 // loop_header
    %s11 = sphi 0, %s15
    %p12 = scmp.ge.s32.totalorder %s11, 4
    %s21 = sphi 0, %s23
    %s24 = sphi 0, %s21
    %s25 = sphi 0, %s24
    %s41 = sphi 0, %s25
    %s45 = sphi 0, %s45
    %s47 = sphi 0, %s45
    %s48 = sphi 0, %s47
    %s62 = sphi 0, %s48
    %s66 = sphi 0, %s66
    %s68 = sphi 0, %s66
    %s69 = sphi 0, %s68
    %s83 = sphi 0, %s69
    %s87 = sphi 0, %s87
    %s89 = sphi 0, %s87
    %s90 = sphi 0, %s89
    %s104 = sphi 0, %s90
    %s108 = sphi 0, %s108
    %s110 = sphi 0, %s108
    %s111 = sphi 0, %s110
    %s125 = sphi 0, %s111
    %s131 = sphi 0, %s133
    %s134 = sphi 0, %s131
    %s135 = sphi 0, %s134
    %s151 = sphi 0, %s135
  $region4: #{cnn_net_forward.4} parent=0 // loop_header_branch
    %14 = sbr.rel (%p12) target = $region8
  $region5: #{cnn_net_forward.4} parent=0 // loop_body
    %s16 = ssub.s32 %s11, 1
    %s17 = ssub.s32 %s11, 2
    %s18 = sadd.s32 %s11, 1
    %s19 = ssub.s32 %s11, %s18
    %p20 = scmp.eq.s32.totalorder %s19, 0
    %s22 = sadd.s32 %s21, 1
    %s23 = scalar_select %p20, %s21, %s22
    %p26 = pneg %p20
    %p27 = scmp.eq.s32.totalorder %s11, 1
    %p28 = por %p26, %p27
    %p29 = scmp.ne.s32.totalorder %s21, %s24
    %p30 = scmp.eq.s32.totalorder %s11, 0
    %p31 = por %p29, %p30
    %p32 = scmp.ne.s32.totalorder %s21, %s24
    %p33 = scmp.eq.s32.totalorder %s16, 1
    %p34 = por %p32, %p33
    %p35 = scmp.ne.s32.totalorder %s24, %s25
    %p36 = scmp.eq.s32.totalorder %s16, 0
    %p37 = por %p35, %p36
    %p38 = scmp.ne.s32.totalorder %s24, %s25
    %p39 = scmp.eq.s32.totalorder %s17, 1
    %p40 = por %p38, %p39
    %p42 = scmp.ne.s32.totalorder %s25, %s41
    %p43 = scmp.eq.s32.totalorder %s17, 0
    %p44 = por %p42, %p43
    %s46 = sadd.s32 %s45, 1
    %p49 = scmp.eq.s32.totalorder %s11, 1
    %p50 = scmp.ne.s32.totalorder %s45, %s47
    %p51 = scmp.eq.s32.totalorder %s11, 0
    %p52 = por %p50, %p51
    %p53 = scmp.ne.s32.totalorder %s45, %s47
    %p54 = scmp.eq.s32.totalorder %s16, 1
    %p55 = por %p53, %p54
    %p56 = scmp.ne.s32.totalorder %s47, %s48
    %p57 = scmp.eq.s32.totalorder %s16, 0
    %p58 = por %p56, %p57
    %p59 = scmp.ne.s32.totalorder %s47, %s48
    %p60 = scmp.eq.s32.totalorder %s17, 1
    %p61 = por %p59, %p60
    %p63 = scmp.ne.s32.totalorder %s48, %s62
    %p64 = scmp.eq.s32.totalorder %s17, 0
    %p65 = por %p63, %p64
    %s67 = sadd.s32 %s66, 1
    %p70 = scmp.eq.s32.totalorder %s11, 1
    %p71 = scmp.ne.s32.totalorder %s66, %s68
    %p72 = scmp.eq.s32.totalorder %s11, 0
    %p73 = por %p71, %p72
    %p74 = scmp.ne.s32.totalorder %s66, %s68
    %p75 = scmp.eq.s32.totalorder %s16, 1
    %p76 = por %p74, %p75
    %p77 = scmp.ne.s32.totalorder %s68, %s69
    %p78 = scmp.eq.s32.totalorder %s16, 0
    %p79 = por %p77, %p78
    %p80 = scmp.ne.s32.totalorder %s68, %s69
    %p81 = scmp.eq.s32.totalorder %s17, 1
    %p82 = por %p80, %p81
    %p84 = scmp.ne.s32.totalorder %s69, %s83
    %p85 = scmp.eq.s32.totalorder %s17, 0
    %p86 = por %p84, %p85
    %s88 = sadd.s32 %s87, 1
    %p91 = scmp.eq.s32.totalorder %s11, 1
    %p92 = scmp.ne.s32.totalorder %s87, %s89
    %p93 = scmp.eq.s32.totalorder %s11, 0
    %p94 = por %p92, %p93
    %p95 = scmp.ne.s32.totalorder %s87, %s89
    %p96 = scmp.eq.s32.totalorder %s16, 1
    %p97 = por %p95, %p96
    %p98 = scmp.ne.s32.totalorder %s89, %s90
    %p99 = scmp.eq.s32.totalorder %s16, 0
    %p100 = por %p98, %p99
    %p101 = scmp.ne.s32.totalorder %s89, %s90
    %p102 = scmp.eq.s32.totalorder %s17, 1
    %p103 = por %p101, %p102
    %p105 = scmp.ne.s32.totalorder %s90, %s104
    %p106 = scmp.eq.s32.totalorder %s17, 0
    %p107 = por %p105, %p106
    %s109 = sadd.s32 %s108, 1
    %p112 = scmp.eq.s32.totalorder %s11, 1
    %p113 = scmp.ne.s32.totalorder %s108, %s110
    %p114 = scmp.eq.s32.totalorder %s11, 0
    %p115 = por %p113, %p114
    %p116 = scmp.ne.s32.totalorder %s108, %s110
    %p117 = scmp.eq.s32.totalorder %s16, 1
    %p118 = por %p116, %p117
    %p119 = scmp.ne.s32.totalorder %s110, %s111
    %p120 = scmp.eq.s32.totalorder %s16, 0
    %p121 = por %p119, %p120
    %p122 = scmp.ne.s32.totalorder %s110, %s111
    %p123 = scmp.eq.s32.totalorder %s17, 1
    %p124 = por %p122, %p123
    %p126 = scmp.ne.s32.totalorder %s111, %s125
    %p127 = scmp.eq.s32.totalorder %s17, 0
    %p128 = por %p126, %p127
    %s129 = ssub.s32 %s11, %s18
    %p130 = scmp.eq.s32.totalorder %s129, 0
    %s132 = sadd.s32 %s131, 1
    %s133 = scalar_select %p130, %s131, %s132
    %p136 = pneg %p130
    %p137 = scmp.eq.s32.totalorder %s11, 1
    %p138 = por %p136, %p137
    %p139 = scmp.ne.s32.totalorder %s131, %s134
    %p140 = scmp.eq.s32.totalorder %s11, 0
    %p141 = por %p139, %p140
    %p142 = scmp.ne.s32.totalorder %s131, %s134
    %p143 = scmp.eq.s32.totalorder %s16, 1
    %p144 = por %p142, %p143
    %p145 = scmp.ne.s32.totalorder %s134, %s135
    %p146 = scmp.eq.s32.totalorder %s16, 0
    %p147 = por %p145, %p146
    %p148 = scmp.ne.s32.totalorder %s134, %s135
    %p149 = scmp.eq.s32.totalorder %s17, 1
    %p150 = por %p148, %p149
    %p152 = scmp.ne.s32.totalorder %s135, %s151
    %p153 = scmp.eq.s32.totalorder %s17, 0
    %p154 = por %p152, %p153
    %p155 = scmp.le.s32.totalorder 1, %s11
    %p156 = scmp.lt.s32.totalorder %s11, 3
    %p157 = pnand %p155, %p156
    %p158 = pneg %p157
    // Predicated region
    $region9: #{cnn_net_forward.4} parent=5 // pred_check
      _
    $region10: #{cnn_net_forward.4} parent=5 // pred_check_branch
      %160 = sbr.rel (%p157) target = $region12
    $region11: #{cnn_net_forward.4} parent=5 // pred_region
      %s161 = ssub.s32 %s11, 1
      // Predicated region
      $region13: #{cnn_net_forward.4} parent=11 // pred_check
        %p162 = pneg %p58
      $region14: #{cnn_net_forward.4} parent=11 // pred_check_branch
        %164 = sbr.rel (%p162) target = $region16
      $region15: #{cnn_net_forward.4} parent=11 // pred_region
        _
      $region16: #{cnn_net_forward.4} parent=11 // pred_fallthru
        _
      // Predicated region
      $region17: #{cnn_net_forward.4} parent=11 // pred_check
        %p165 = pneg %p79
      $region18: #{cnn_net_forward.4} parent=11 // pred_check_branch
        %167 = sbr.rel (%p165) target = $region20
      $region19: #{cnn_net_forward.4} parent=11 // pred_region
        _
      $region20: #{cnn_net_forward.4} parent=11 // pred_fallthru
        _
      // Predicated region
      $region21: #{cnn_net_forward.4} parent=11 // pred_check
        %p168 = pneg %p100
      $region22: #{cnn_net_forward.4} parent=11 // pred_check_branch
        %170 = sbr.rel (%p168) target = $region24
      $region23: #{cnn_net_forward.4} parent=11 // pred_region
        _
      $region24: #{cnn_net_forward.4} parent=11 // pred_fallthru
        _
      // Predicated region
      $region25: #{cnn_net_forward.4} parent=11 // pred_check
        %p171 = pneg %p121
      $region26: #{cnn_net_forward.4} parent=11 // pred_check_branch
        %173 = sbr.rel (%p171) target = $region28
      $region27: #{cnn_net_forward.4} parent=11 // pred_region
        _
      $region28: #{cnn_net_forward.4} parent=11 // pred_fallthru
        _
    $region12: #{cnn_net_forward.4} parent=5 // pred_fallthru
      _
    %p174 = scmp.lt.s32.totalorder %s11, 2
    // Predicated region
    $region29: #{cnn_net_forward.4} parent=5 // pred_check
      %p175 = pneg %p174
    $region30: #{cnn_net_forward.4} parent=5 // pred_check_branch
      %177 = sbr.rel (%p175) target = $region32
    $region31: #{cnn_net_forward.4} parent=5 // pred_region
      // Predicated region
      $region33: #{cnn_net_forward.4} parent=31 // pred_check
        %p178 = pneg %p31
      $region34: #{cnn_net_forward.4} parent=31 // pred_check_branch
        %180 = sbr.rel (%p178) target = $region36
      $region35: #{cnn_net_forward.4} parent=31 // pred_region
        %p181 = scmp.lt.s32.totalorder %s11, 1
        %s182 = scalar_select %p181, %s11, 1
        %s183 = smul.addr %s182, 85
        %s184 = smul.addr %s183, 4
        %s185 = scalar_lea.vmem %s0, %s184
      $region36: #{cnn_net_forward.4} parent=31 // pred_fallthru
        _
    $region32: #{cnn_net_forward.4} parent=5 // pred_fallthru
      _
    %p186 = scmp.le.s32.totalorder 1, %s11
    %p187 = scmp.lt.s32.totalorder %s11, 3
    %p188 = pnand %p186, %p187
    %p189 = pneg %p188
    // Predicated region
    $region37: #{cnn_net_forward.4} parent=5 // pred_check
      _
    $region38: #{cnn_net_forward.4} parent=5 // pred_check_branch
      %191 = sbr.rel (%p188) target = $region40
    $region39: #{cnn_net_forward.4} parent=5 // pred_region
      %s192 = ssub.s32 %s11, 1
      %p193 = scmp.lt.s32.totalorder %s16, 1
      %s194 = scalar_select %p193, %s16, 1
      %s195 = smul.addr %s194, 85
      %s196 = smul.addr %s195, 4
      %s197 = scalar_lea.vmem %s0, %s196
      %p198 = pneg %p37
      %p199 = pneg %p34
      %p200 = pneg %p58
      %p201 = pneg %p55
      %p202 = pneg %p79
      %p203 = pneg %p76
      %p204 = pneg %p100
      %p205 = pneg %p97
      %p206 = pneg %p121
      %p207 = pneg %p118
      %p208 = pneg %p147
      %p209 = pneg %p144
      %p210 = scmp.lt.s32.totalorder %s16, 1
      %s211 = scalar_select %p210, %s16, 1
      %s212 = smul.addr %s211, 9
      %s213 = smul.addr %s212, 4
      %s214 = scalar_lea.vmem %s5, %s213
      %p215 = scmp.lt.s32.totalorder %s16, 1
      %s216 = scalar_select %p215, %s16, 1
      %s217 = smul.addr %s216, 85
      %s218 = smul.addr %s217, 4
      %s219 = scalar_lea.vmem %s0, %s218
      %p220 = scmp.lt.s32.totalorder %s16, 1
      %s221 = scalar_select %p220, %s16, 1
      %s222 = smul.addr %s221, 9
      %s223 = smul.addr %s222, 4
      %s224 = scalar_lea.vmem %s5, %s223
      %v226 = vld [vmem:[%s1] sm:$0xf]
      %v227 = vld [vmem:[%s1 + $0x4] sm:$0xf]
      %v228 = vld [vmem:[%s1 + $0x8] sm:$0xf]
      %v229 = vld [vmem:[%s1 + $0xc] sm:$0xf]
      %v230 = vld [vmem:[%s1 + $0x10] sm:$0xf]
      %v231 = vld [vmem:[%s1 + $0x14] sm:$0xf]
      %v232 = vld [vmem:[%s1 + $0x18] sm:$0xf]
      %v233 = vld [vmem:[%s1 + $0x1c] sm:$0xf]
      %v234 = vld [vmem:[%s1 + $0x20] sm:$0xf]
      %v235 = vld [vmem:[%s1 + $0x24] sm:$0xf]
      %v236 = vld [vmem:[%s1 + $0x28] sm:$0xf]
      %v237 = vld [vmem:[%s1 + $0x2c] sm:$0xf]
      %v238 = vld [vmem:[%s1 + $0x30] sm:$0xf]
      %v239 = vld [vmem:[%s1 + $0x34] sm:$0xf]
      %v240 = vld [vmem:[%s1 + $0x38] sm:$0xf]
      %v241 = vld [vmem:[%s1 + $0x3c] sm:$0xf]
      %v242 = vld [vmem:[%s1 + $0x40] sm:$0xf]
      %v243 = vld [vmem:[%s1 + $0x44] sm:$0xf]
      %v244 = vld [vmem:[%s1 + $0x48] sm:$0xf]
      %v245 = vld [vmem:[%s1 + $0x4c] sm:$0xf]
      %v246 = vld [vmem:[%s1 + $0x50] sm:$0xf]
      %v247 = vld [vmem:[%s1 + $0x54] sm:$0xf]
      %v248 = vld [vmem:[%s1 + $0x58] sm:$0xf]
      %v249 = vld [vmem:[%s1 + $0x5c] sm:$0xf]
      %v250 = vld [vmem:[%s1 + $0x60] sm:$0xf]
      %v251 = vld [vmem:[%s1 + $0x64] sm:$0xf]
      %v252 = vld [vmem:[%s1 + $0x68] sm:$0xf]
      %v253 = vld [vmem:[%s1 + $0x6c] sm:$0xf]
      %v254 = vld [vmem:[%s1 + $0x70] sm:$0xf]
      %v255 = vld [vmem:[%s1 + $0x74] sm:$0xf]
      %v256 = vld [vmem:[%s1 + $0x78] sm:$0xf]
      %v257 = vld [vmem:[%s1 + $0x7c] sm:$0xf]
      %v258 = vld [vmem:[%s1 + $0x80] sm:$0xf]
      %v259 = vld [vmem:[%s1 + $0x84] sm:$0xf]
      %v260 = vld [vmem:[%s1 + $0x88] sm:$0xf]
      %v261 = vld [vmem:[%s1 + $0x8c] sm:$0xf]
      %v262 = vld [vmem:[%s2] sm:$0x1]
      %v263 = vld [vmem:[%s3] sm:$0xff]
      %v264 = vld [vmem:[%s3 + $0x8] sm:$0xff]
      %v265 = vld [vmem:[%s3 + $0x10] sm:$0xf]
      %v266 = vld [vmem:[%s3 + $0x14] sm:$0xff]
      %v267 = vld [vmem:[%s3 + $0x1c] sm:$0xff]
      %v268 = vld [vmem:[%s3 + $0x24] sm:$0xf]
      %v269 = vld [vmem:[%s3 + $0x28] sm:$0xff]
      %v270 = vld [vmem:[%s3 + $0x30] sm:$0xff]
      %v271 = vld [vmem:[%s3 + $0x38] sm:$0xf]
      %v272 = vld [vmem:[%s3 + $0x3c] sm:$0xff]
      %v273 = vld [vmem:[%s3 + $0x44] sm:$0xff]
      %v274 = vld [vmem:[%s3 + $0x4c] sm:$0xf]
      %v275 = vld [vmem:[%s3 + $0x50] sm:$0xff]
      %v276 = vld [vmem:[%s3 + $0x58] sm:$0xff]
      %v277 = vld [vmem:[%s3 + $0x60] sm:$0xf]
      %v278 = vld [vmem:[%s3 + $0x64] sm:$0xff]
      %v279 = vld [vmem:[%s3 + $0x6c] sm:$0xff]
      %v280 = vld [vmem:[%s3 + $0x74] sm:$0xf]
      %v281 = vld [vmem:[%s3 + $0x78] sm:$0xff]
      %v282 = vld [vmem:[%s3 + $0x80] sm:$0xff]
      %v283 = vld [vmem:[%s3 + $0x88] sm:$0xf]
      %v284 = vld [vmem:[%s3 + $0x8c] sm:$0xff]
      %v285 = vld [vmem:[%s3 + $0x94] sm:$0xff]
      %v286 = vld [vmem:[%s3 + $0x9c] sm:$0xf]
      %v287 = vld [vmem:[%s3 + $0xa0] sm:$0xff]
      %v288 = vld [vmem:[%s3 + $0xa8] sm:$0xff]
      %v289 = vld [vmem:[%s3 + $0xb0] sm:$0xf]
      %v290 = vld [vmem:[%s4] sm:$0xff]
      %v291 = vld [vmem:[%s4 + $0x8] sm:$0xff]
      %v292 = vld [vmem:[%s4 + $0x10] sm:$0xf]
      %v293 = vld [vmem:[%s4 + $0x14] sm:$0xff]
      %v294 = vld [vmem:[%s4 + $0x1c] sm:$0xff]
      %v295 = vld [vmem:[%s4 + $0x24] sm:$0xf]
      %v296 = vld [vmem:[%s4 + $0x28] sm:$0xff]
      %v297 = vld [vmem:[%s4 + $0x30] sm:$0xff]
      %v298 = vld [vmem:[%s4 + $0x38] sm:$0xf]
      %v299 = vld [vmem:[%s4 + $0x3c] sm:$0xff]
      %v300 = vld [vmem:[%s4 + $0x44] sm:$0xff]
      %v301 = vld [vmem:[%s4 + $0x4c] sm:$0xf]
      %v302 = vld [vmem:[%s4 + $0x50] sm:$0xff]
      %v303 = vld [vmem:[%s4 + $0x58] sm:$0xff]
      %v304 = vld [vmem:[%s4 + $0x60] sm:$0xf]
      %v305 = vld [vmem:[%s4 + $0x64] sm:$0xff]
      %v306 = vld [vmem:[%s4 + $0x6c] sm:$0xff]
      %v307 = vld [vmem:[%s4 + $0x74] sm:$0xf]
      %v308 = vld [vmem:[%s4 + $0x78] sm:$0xff]
      %v309 = vld [vmem:[%s4 + $0x80] sm:$0xff]
      %v310 = vld [vmem:[%s4 + $0x88] sm:$0xf]
      %v311 = vld [vmem:[%s4 + $0x8c] sm:$0xff]
      %v312 = vld [vmem:[%s4 + $0x94] sm:$0xff]
      %v313 = vld [vmem:[%s4 + $0x9c] sm:$0xf]
      %v314 = vld [vmem:[%s4 + $0xa0] sm:$0xff]
      %v315 = vld [vmem:[%s4 + $0xa8] sm:$0xff]
      %v316 = vld [vmem:[%s4 + $0xb0] sm:$0xf]
      %v317 = vld [vmem:[%s219] sm:$0xf]
      %v318 = vld [vmem:[%s219 + $0x4] sm:$0xf]
      %v319 = vld [vmem:[%s219 + $0x8] sm:$0xf]
      %v320 = vld [vmem:[%s219 + $0xc] sm:$0xf]
      %v321 = vld [vmem:[%s219 + $0x10] sm:$0xf]
      %v322 = vld [vmem:[%s219 + $0x14] sm:$0xf]
      %v323 = vld [vmem:[%s219 + $0x18] sm:$0xf]
      %v324 = vld [vmem:[%s219 + $0x1c] sm:$0xf]
      %v325 = vld [vmem:[%s219 + $0x20] sm:$0xf]
      %v326 = vld [vmem:[%s219 + $0x24] sm:$0xf]
      %v327 = vld [vmem:[%s219 + $0x28] sm:$0xf]
      %v328 = vld [vmem:[%s219 + $0x2c] sm:$0xf]
      %v329 = vld [vmem:[%s219 + $0x30] sm:$0xf]
      %v330 = vld [vmem:[%s219 + $0x34] sm:$0xf]
      %v331 = vld [vmem:[%s219 + $0x38] sm:$0xf]
      %v332 = vld [vmem:[%s219 + $0x3c] sm:$0xf]
      %v333 = vld [vmem:[%s219 + $0x40] sm:$0xf]
      %v334 = vld [vmem:[%s219 + $0x44] sm:$0xf]
      %v335 = vld [vmem:[%s219 + $0x48] sm:$0xf]
      %v336 = vld [vmem:[%s219 + $0x4c] sm:$0xf]
      %v337 = vld [vmem:[%s219 + $0x50] sm:$0xf]
      %v338 = vld [vmem:[%s219 + $0x54] sm:$0xf]
      %v339 = vld [vmem:[%s219 + $0x58] sm:$0xf]
      %v340 = vld [vmem:[%s219 + $0x5c] sm:$0xf]
      %v341 = vld [vmem:[%s219 + $0x60] sm:$0xf]
      %v342 = vld [vmem:[%s219 + $0x64] sm:$0xf]
      %v343 = vld [vmem:[%s219 + $0x68] sm:$0xf]
      %v344 = vld [vmem:[%s219 + $0x6c] sm:$0xf]
      %v345 = vld [vmem:[%s219 + $0x70] sm:$0xf]
      %v346 = vld [vmem:[%s219 + $0x74] sm:$0xf]
      %v347 = vld [vmem:[%s219 + $0x78] sm:$0xf]
      %v348 = vld [vmem:[%s219 + $0x7c] sm:$0xf]
      %v349 = vld [vmem:[%s219 + $0x80] sm:$0xf]
      %v350 = vld [vmem:[%s219 + $0x84] sm:$0xf]
      %v351 = vld [vmem:[%s219 + $0x88] sm:$0xf]
      %v352 = vld [vmem:[%s219 + $0x8c] sm:$0xf]
      %v353 = vld [vmem:[%s219 + $0x90] sm:$0xf]
      %v354 = vld [vmem:[%s219 + $0x94] sm:$0xf]
      %v355 = vld [vmem:[%s219 + $0x98] sm:$0xf]
      %v356 = vld [vmem:[%s219 + $0x9c] sm:$0xf]
      %v357 = vld [vmem:[%s219 + $0xa0] sm:$0xf]
      %v358 = vld [vmem:[%s219 + $0xa4] sm:$0xf]
      %v359 = vld [vmem:[%s219 + $0xa8] sm:$0xf]
      %v360 = vld [vmem:[%s219 + $0xac] sm:$0xf]
      %v361 = vld [vmem:[%s219 + $0xb0] sm:$0xf]
      %v362 = vld [vmem:[%s219 + $0xb4] sm:$0xf]
      %v363 = vld [vmem:[%s219 + $0xb8] sm:$0xf]
      %v364 = vld [vmem:[%s219 + $0xbc] sm:$0xf]
      %v365 = vld [vmem:[%s219 + $0xc0] sm:$0xf]
      %v366 = vld [vmem:[%s219 + $0xc4] sm:$0xf]
      %v367 = vld [vmem:[%s219 + $0xc8] sm:$0xf]
      %v368 = vld [vmem:[%s219 + $0xcc] sm:$0xf]
      %v369 = vld [vmem:[%s219 + $0xd0] sm:$0xf]
      %v370 = vld [vmem:[%s219 + $0xd4] sm:$0xf]
      %v371 = vld [vmem:[%s219 + $0xd8] sm:$0xf]
      %v372 = vld [vmem:[%s219 + $0xdc] sm:$0xf]
      %v373 = vld [vmem:[%s219 + $0xe0] sm:$0xf]
      %v374 = vld [vmem:[%s219 + $0xe4] sm:$0xf]
      %v375 = vld [vmem:[%s219 + $0xe8] sm:$0xf]
      %v376 = vld [vmem:[%s219 + $0xec] sm:$0xf]
      %v377 = vld [vmem:[%s219 + $0xf0] sm:$0xf]
      %v378 = vld [vmem:[%s219 + $0xf4] sm:$0xf]
      %v379 = vld [vmem:[%s219 + $0xf8] sm:$0xf]
      %v380 = vld [vmem:[%s219 + $0xfc] sm:$0xf]
      %v381 = vld [vmem:[%s219 + $0x100] sm:$0xf]
      %v382 = vld [vmem:[%s219 + $0x104] sm:$0xf]
      %v383 = vld [vmem:[%s219 + $0x108] sm:$0xf]
      %v384 = vld [vmem:[%s219 + $0x10c] sm:$0xf]
      %v385 = vld [vmem:[%s219 + $0x110] sm:$0xf]
      %v386 = vld [vmem:[%s219 + $0x114] sm:$0xf]
      %v387 = vld [vmem:[%s219 + $0x118] sm:$0xf]
      %v388 = vld [vmem:[%s219 + $0x11c] sm:$0xf]
      %v389 = vld [vmem:[%s219 + $0x120] sm:$0xf]
      %v390 = vld [vmem:[%s219 + $0x124] sm:$0xf]
      %v391 = vld [vmem:[%s219 + $0x128] sm:$0xf]
      %v392 = vld [vmem:[%s219 + $0x12c] sm:$0xf]
      %v393 = vld [vmem:[%s219 + $0x130] sm:$0xf]
      %v394 = vld [vmem:[%s219 + $0x134] sm:$0xf]
      %v395 = vld [vmem:[%s219 + $0x138] sm:$0x1]
      %v396 = vld [vmem:[%s219] sm:$0xe]
      %v397 = vld [vmem:[%s219 + $0xc] sm:$0xe]
      %v398 = vld [vmem:[%s219 + $0x138] sm:$0xf]
      %v399 = vld [vmem:[%s219 + $0x13c] sm:$0xf]
      %v400 = vld [vmem:[%s219 + $0x140] sm:$0xf]
      %v401 = vld [vmem:[%s219 + $0x144] sm:$0x1]
      %v402 = vld [vmem:[%s219 + $0x144] sm:$0x3]
      %v403 = vld [vmem:[%s219 + $0xc] sm:$0xc]
      %v404 = vld [vmem:[%s219 + $0x18] sm:$0xc]
      %v405 = vld [vmem:[%s219 + $0x144] sm:$0xf]
      %v406 = vld [vmem:[%s219 + $0x148] sm:$0xf]
      %v407 = vld [vmem:[%s219 + $0x14c] sm:$0xf]
      %v408 = vld [vmem:[%s219 + $0x150] sm:$0x3]
      %v409 = vld [vmem:[%s219 + $0x150] sm:$0x7]
      %v410 = vld [vmem:[%s219 + $0x18] sm:$0x8]
      %v489 = vunpack.c.l.b16 %v317
      %v490 = vunpack.c.l.b16 %v318
      %v491 = vunpack.c.l.b16 %v319
      %v492 = vunpack.c.l.b16 %v320
      %v493 = vunpack.c.l.b16 %v321
      %v494 = vunpack.c.l.b16 %v322
      %v495 = vunpack.c.l.b16 %v323
      %v496 = vunpack.c.l.b16 %v324
      %v497 = vunpack.c.l.b16 %v325
      %v498 = vunpack.c.l.b16 %v326
      %v499 = vunpack.c.l.b16 %v327
      %v500 = vunpack.c.l.b16 %v328
      %v501 = vunpack.c.l.b16 %v329
      %v502 = vunpack.c.l.b16 %v330
      %v503 = vunpack.c.l.b16 %v331
      %v504 = vunpack.c.l.b16 %v332
      %v505 = vunpack.c.l.b16 %v333
      %v506 = vunpack.c.l.b16 %v334
      %v507 = vunpack.c.l.b16 %v335
      %v508 = vunpack.c.l.b16 %v336
      %v509 = vunpack.c.l.b16 %v337
      %v510 = vunpack.c.l.b16 %v338
      %v511 = vunpack.c.l.b16 %v339
      %v512 = vunpack.c.l.b16 %v340
      %v513 = vunpack.c.l.b16 %v341
      %v514 = vunpack.c.l.b16 %v342
      %v515 = vunpack.c.l.b16 %v343
      %v516 = vunpack.c.l.b16 %v344
      %v517 = vunpack.c.l.b16 %v345
      %v518 = vunpack.c.l.b16 %v346
      %v519 = vunpack.c.l.b16 %v347
      %v520 = vunpack.c.l.b16 %v348
      %v521 = vunpack.c.l.b16 %v349
      %v522 = vunpack.c.l.b16 %v350
      %v523 = vunpack.c.l.b16 %v351
      %v524 = vunpack.c.l.b16 %v352
      %v525 = vunpack.c.l.b16 %v353
      %v526 = vunpack.c.l.b16 %v354
      %v527 = vunpack.c.l.b16 %v355
      %v528 = vunpack.c.l.b16 %v356
      %v529 = vunpack.c.l.b16 %v357
      %v530 = vunpack.c.l.b16 %v358
      %v531 = vunpack.c.l.b16 %v359
      %v532 = vunpack.c.l.b16 %v360
      %v533 = vunpack.c.l.b16 %v361
      %v534 = vunpack.c.l.b16 %v362
      %v535 = vunpack.c.l.b16 %v363
      %v536 = vunpack.c.l.b16 %v364
      %v537 = vunpack.c.l.b16 %v365
      %v538 = vunpack.c.l.b16 %v366
      %v539 = vunpack.c.l.b16 %v367
      %v540 = vunpack.c.l.b16 %v368
      %v541 = vunpack.c.l.b16 %v369
      %v542 = vunpack.c.l.b16 %v370
      %v543 = vunpack.c.l.b16 %v371
      %v544 = vunpack.c.l.b16 %v372
      %v545 = vunpack.c.l.b16 %v373
      %v546 = vunpack.c.l.b16 %v374
      %v547 = vunpack.c.l.b16 %v375
      %v548 = vunpack.c.l.b16 %v376
      %v549 = vunpack.c.l.b16 %v377
      %v550 = vunpack.c.l.b16 %v378
      %v551 = vunpack.c.l.b16 %v379
      %v552 = vunpack.c.l.b16 %v380
      %v553 = vunpack.c.l.b16 %v381
      %v554 = vunpack.c.l.b16 %v382
      %v555 = vunpack.c.l.b16 %v383
      %v556 = vunpack.c.l.b16 %v384
      %v557 = vunpack.c.l.b16 %v385
      %v558 = vunpack.c.l.b16 %v386
      %v559 = vunpack.c.l.b16 %v387
      %v560 = vunpack.c.l.b16 %v388
      %v561 = vunpack.c.l.b16 %v389
      %v562 = vunpack.c.l.b16 %v390
      %v563 = vunpack.c.l.b16 %v391
      %v564 = vunpack.c.l.b16 %v392
      %v565 = vunpack.c.l.b16 %v393
      %v566 = vunpack.c.l.b16 %v394
      %v567 = vpack.c.b16 %v490, %v489
      %v568 = vpack.c.b16 %v492, %v491
      %v569 = vpack.c.b16 %v494, %v493
      %v570 = vpack.c.b16 %v496, %v495
      %v571 = vpack.c.b16 %v498, %v497
      %v572 = vpack.c.b16 %v500, %v499
      %v573 = vpack.c.b16 %v502, %v501
      %v574 = vpack.c.b16 %v504, %v503
      %v575 = vpack.c.b16 %v506, %v505
      %v576 = vpack.c.b16 %v508, %v507
      %v577 = vpack.c.b16 %v510, %v509
      %v578 = vpack.c.b16 %v512, %v511
      %v579 = vpack.c.b16 %v514, %v513
      %v580 = vpack.c.b16 %v516, %v515
      %v581 = vpack.c.b16 %v518, %v517
      %v582 = vpack.c.b16 %v520, %v519
      %v583 = vpack.c.b16 %v522, %v521
      %v584 = vpack.c.b16 %v524, %v523
      %v585 = vpack.c.b16 %v526, %v525
      %v586 = vpack.c.b16 %v528, %v527
      %v587 = vpack.c.b16 %v530, %v529
      %v588 = vpack.c.b16 %v532, %v531
      %v589 = vpack.c.b16 %v534, %v533
      %v590 = vpack.c.b16 %v536, %v535
      %v591 = vpack.c.b16 %v538, %v537
      %v592 = vpack.c.b16 %v540, %v539
      %v593 = vpack.c.b16 %v542, %v541
      %v594 = vpack.c.b16 %v544, %v543
      %v595 = vpack.c.b16 %v546, %v545
      %v596 = vpack.c.b16 %v548, %v547
      %v597 = vpack.c.b16 %v550, %v549
      %v598 = vpack.c.b16 %v552, %v551
      %v599 = vpack.c.b16 %v554, %v553
      %v600 = vpack.c.b16 %v556, %v555
      %v601 = vpack.c.b16 %v558, %v557
      %v602 = vpack.c.b16 %v560, %v559
      %v603 = vpack.c.b16 %v562, %v561
      %v604 = vpack.c.b16 %v564, %v563
      %v605 = vpack.c.b16 %v566, %v565
      %v607 = vunpack.c.l.b16 %v395
      %v608 = vpack.c.b16 %v607, %v607
      %vm609 = vsmask.f32 7424
      %v611 = vshrl.u32 %v567, 16
      %v613 = vshll.u32 %v567, 16
      %v615 = vrot.slane %v613, 1
      %v616 = vor.u32 %v611, %v615
      %v618 = vshll.u32 %v568, 16
      %v620 = vrot.slane %v618, 1
      %v621 = vsel %vm609, %v616, %v620
      %v622 = vshrl.u32 %v568, 16
      %v624 = vor.u32 %v622, %v620
      %v626 = vshll.u32 %v569, 16
      %v628 = vrot.slane %v626, 1
      %v629 = vsel %vm609, %v624, %v628
      %v630 = vshrl.u32 %v569, 16
      %v632 = vor.u32 %v630, %v628
      %v634 = vshll.u32 %v570, 16
      %v636 = vrot.slane %v634, 1
      %v637 = vsel %vm609, %v632, %v636
      %v638 = vshrl.u32 %v570, 16
      %v640 = vor.u32 %v638, %v636
      %v642 = vshll.u32 %v571, 16
      %v644 = vrot.slane %v642, 1
      %v645 = vsel %vm609, %v640, %v644
      %v646 = vshrl.u32 %v571, 16
      %v648 = vor.u32 %v646, %v644
      %v650 = vshll.u32 %v572, 16
      %v652 = vrot.slane %v650, 1
      %v653 = vsel %vm609, %v648, %v652
      %v654 = vshrl.u32 %v572, 16
      %v656 = vor.u32 %v654, %v652
      %v658 = vshll.u32 %v573, 16
      %v660 = vrot.slane %v658, 1
      %v661 = vsel %vm609, %v656, %v660
      %v662 = vshrl.u32 %v573, 16
      %v664 = vor.u32 %v662, %v660
      %v666 = vshll.u32 %v574, 16
      %v668 = vrot.slane %v666, 1
      %v669 = vsel %vm609, %v664, %v668
      %v670 = vshrl.u32 %v574, 16
      %v672 = vor.u32 %v670, %v668
      %v674 = vshll.u32 %v575, 16
      %v676 = vrot.slane %v674, 1
      %v677 = vsel %vm609, %v672, %v676
      %v678 = vshrl.u32 %v575, 16
      %v680 = vor.u32 %v678, %v676
      %v682 = vshll.u32 %v576, 16
      %v684 = vrot.slane %v682, 1
      %v685 = vsel %vm609, %v680, %v684
      %v686 = vshrl.u32 %v576, 16
      %v688 = vor.u32 %v686, %v684
      %v690 = vshll.u32 %v577, 16
      %v692 = vrot.slane %v690, 1
      %v693 = vsel %vm609, %v688, %v692
      %v694 = vshrl.u32 %v577, 16
      %v696 = vor.u32 %v694, %v692
      %v698 = vshll.u32 %v578, 16
      %v700 = vrot.slane %v698, 1
      %v701 = vsel %vm609, %v696, %v700
      %v702 = vshrl.u32 %v578, 16
      %v704 = vor.u32 %v702, %v700
      %v706 = vshll.u32 %v579, 16
      %v708 = vrot.slane %v706, 1
      %v709 = vsel %vm609, %v704, %v708
      %v710 = vshrl.u32 %v579, 16
      %v712 = vor.u32 %v710, %v708
      %v714 = vshll.u32 %v580, 16
      %v716 = vrot.slane %v714, 1
      %v717 = vsel %vm609, %v712, %v716
      %v718 = vshrl.u32 %v580, 16
      %v720 = vor.u32 %v718, %v716
      %v722 = vshll.u32 %v581, 16
      %v724 = vrot.slane %v722, 1
      %v725 = vsel %vm609, %v720, %v724
      %v726 = vshrl.u32 %v581, 16
      %v728 = vor.u32 %v726, %v724
      %v730 = vshll.u32 %v582, 16
      %v732 = vrot.slane %v730, 1
      %v733 = vsel %vm609, %v728, %v732
      %v734 = vshrl.u32 %v582, 16
      %v736 = vor.u32 %v734, %v732
      %v738 = vshll.u32 %v583, 16
      %v740 = vrot.slane %v738, 1
      %v741 = vsel %vm609, %v736, %v740
      %v742 = vshrl.u32 %v583, 16
      %v744 = vor.u32 %v742, %v740
      %v746 = vshll.u32 %v584, 16
      %v748 = vrot.slane %v746, 1
      %v749 = vsel %vm609, %v744, %v748
      %v750 = vshrl.u32 %v584, 16
      %v752 = vor.u32 %v750, %v748
      %v754 = vshll.u32 %v585, 16
      %v756 = vrot.slane %v754, 1
      %v757 = vsel %vm609, %v752, %v756
      %v758 = vshrl.u32 %v585, 16
      %v760 = vor.u32 %v758, %v756
      %v762 = vshll.u32 %v586, 16
      %v764 = vrot.slane %v762, 1
      %v765 = vsel %vm609, %v760, %v764
      %v766 = vshrl.u32 %v586, 16
      %v768 = vor.u32 %v766, %v764
      %v770 = vshll.u32 %v587, 16
      %v772 = vrot.slane %v770, 1
      %v773 = vsel %vm609, %v768, %v772
      %v774 = vshrl.u32 %v587, 16
      %v776 = vor.u32 %v774, %v772
      %v778 = vshll.u32 %v588, 16
      %v780 = vrot.slane %v778, 1
      %v781 = vsel %vm609, %v776, %v780
      %v782 = vshrl.u32 %v588, 16
      %v784 = vor.u32 %v782, %v780
      %v786 = vshll.u32 %v589, 16
      %v788 = vrot.slane %v786, 1
      %v789 = vsel %vm609, %v784, %v788
      %v790 = vshrl.u32 %v589, 16
      %v792 = vor.u32 %v790, %v788
      %v794 = vshll.u32 %v590, 16
      %v796 = vrot.slane %v794, 1
      %v797 = vsel %vm609, %v792, %v796
      %v798 = vshrl.u32 %v590, 16
      %v800 = vor.u32 %v798, %v796
      %v802 = vshll.u32 %v591, 16
      %v804 = vrot.slane %v802, 1
      %v805 = vsel %vm609, %v800, %v804
      %v806 = vshrl.u32 %v591, 16
      %v808 = vor.u32 %v806, %v804
      %v810 = vshll.u32 %v592, 16
      %v812 = vrot.slane %v810, 1
      %v813 = vsel %vm609, %v808, %v812
      %v814 = vshrl.u32 %v592, 16
      %v816 = vor.u32 %v814, %v812
      %v818 = vshll.u32 %v593, 16
      %v820 = vrot.slane %v818, 1
      %v821 = vsel %vm609, %v816, %v820
      %v822 = vshrl.u32 %v593, 16
      %v824 = vor.u32 %v822, %v820
      %v826 = vshll.u32 %v594, 16
      %v828 = vrot.slane %v826, 1
      %v829 = vsel %vm609, %v824, %v828
      %v830 = vshrl.u32 %v594, 16
      %v832 = vor.u32 %v830, %v828
      %v834 = vshll.u32 %v595, 16
      %v836 = vrot.slane %v834, 1
      %v837 = vsel %vm609, %v832, %v836
      %v838 = vshrl.u32 %v595, 16
      %v840 = vor.u32 %v838, %v836
      %v842 = vshll.u32 %v596, 16
      %v844 = vrot.slane %v842, 1
      %v845 = vsel %vm609, %v840, %v844
      %v846 = vshrl.u32 %v596, 16
      %v848 = vor.u32 %v846, %v844
      %v850 = vshll.u32 %v597, 16
      %v852 = vrot.slane %v850, 1
      %v853 = vsel %vm609, %v848, %v852
      %v854 = vshrl.u32 %v597, 16
      %v856 = vor.u32 %v854, %v852
      %v858 = vshll.u32 %v598, 16
      %v860 = vrot.slane %v858, 1
      %v861 = vsel %vm609, %v856, %v860
      %v862 = vshrl.u32 %v598, 16
      %v864 = vor.u32 %v862, %v860
      %v866 = vshll.u32 %v599, 16
      %v868 = vrot.slane %v866, 1
      %v869 = vsel %vm609, %v864, %v868
      %v870 = vshrl.u32 %v599, 16
      %v872 = vor.u32 %v870, %v868
      %v874 = vshll.u32 %v600, 16
      %v876 = vrot.slane %v874, 1
      %v877 = vsel %vm609, %v872, %v876
      %v878 = vshrl.u32 %v600, 16
      %v880 = vor.u32 %v878, %v876
      %v882 = vshll.u32 %v601, 16
      %v884 = vrot.slane %v882, 1
      %v885 = vsel %vm609, %v880, %v884
      %v886 = vshrl.u32 %v601, 16
      %v888 = vor.u32 %v886, %v884
      %v890 = vshll.u32 %v602, 16
      %v892 = vrot.slane %v890, 1
      %v893 = vsel %vm609, %v888, %v892
      %v894 = vshrl.u32 %v602, 16
      %v896 = vor.u32 %v894, %v892
      %v898 = vshll.u32 %v603, 16
      %v900 = vrot.slane %v898, 1
      %v901 = vsel %vm609, %v896, %v900
      %v902 = vshrl.u32 %v603, 16
      %v904 = vor.u32 %v902, %v900
      %v906 = vshll.u32 %v604, 16
      %v908 = vrot.slane %v906, 1
      %v909 = vsel %vm609, %v904, %v908
      %v910 = vshrl.u32 %v604, 16
      %v912 = vor.u32 %v910, %v908
      %v914 = vshll.u32 %v605, 16
      %v916 = vrot.slane %v914, 1
      %v917 = vsel %vm609, %v912, %v916
      %v918 = vshrl.u32 %v605, 16
      %v920 = vor.u32 %v918, %v916
      %v922 = vshll.u32 %v608, 16
      %v924 = vrot.slane %v922, 1
      %v925 = vsel %vm609, %v920, %v924
      %926 = vrot.lane.b32.xlu0 %v621, 32
      %v927 = vpop.permute.xlu0 %926
      %928 = vrot.lane.b32.xlu0 %v629, 32
      %v929 = vpop.permute.xlu0 %928
      %930 = vrot.lane.b32.xlu0 %v637, 32
      %v931 = vpop.permute.xlu0 %930
      %932 = vrot.lane.b32.xlu0 %v645, 32
      %v933 = vpop.permute.xlu0 %932
      %934 = vrot.lane.b32.xlu0 %v653, 32
      %v935 = vpop.permute.xlu0 %934
      %936 = vrot.lane.b32.xlu0 %v661, 32
      %v937 = vpop.permute.xlu0 %936
      %938 = vrot.lane.b32.xlu0 %v669, 32
      %v939 = vpop.permute.xlu0 %938
      %940 = vrot.lane.b32.xlu0 %v677, 32
      %v941 = vpop.permute.xlu0 %940
      %942 = vrot.lane.b32.xlu0 %v685, 32
      %v943 = vpop.permute.xlu0 %942
      %944 = vrot.lane.b32.xlu0 %v693, 32
      %v945 = vpop.permute.xlu0 %944
      %946 = vrot.lane.b32.xlu0 %v701, 32
      %v947 = vpop.permute.xlu0 %946
      %948 = vrot.lane.b32.xlu0 %v709, 32
      %v949 = vpop.permute.xlu0 %948
      %950 = vrot.lane.b32.xlu0 %v717, 32
      %v951 = vpop.permute.xlu0 %950
      %952 = vrot.lane.b32.xlu0 %v725, 32
      %v953 = vpop.permute.xlu0 %952
      %954 = vrot.lane.b32.xlu0 %v733, 32
      %v955 = vpop.permute.xlu0 %954
      %956 = vrot.lane.b32.xlu0 %v741, 32
      %v957 = vpop.permute.xlu0 %956
      %958 = vrot.lane.b32.xlu0 %v749, 32
      %v959 = vpop.permute.xlu0 %958
      %960 = vrot.lane.b32.xlu0 %v757, 32
      %v961 = vpop.permute.xlu0 %960
      %962 = vrot.lane.b32.xlu0 %v765, 32
      %v963 = vpop.permute.xlu0 %962
      %964 = vrot.lane.b32.xlu0 %v773, 32
      %v965 = vpop.permute.xlu0 %964
      %966 = vrot.lane.b32.xlu0 %v781, 32
      %v967 = vpop.permute.xlu0 %966
      %968 = vrot.lane.b32.xlu0 %v789, 32
      %v969 = vpop.permute.xlu0 %968
      %970 = vrot.lane.b32.xlu0 %v797, 32
      %v971 = vpop.permute.xlu0 %970
      %972 = vrot.lane.b32.xlu0 %v805, 32
      %v973 = vpop.permute.xlu0 %972
      %974 = vrot.lane.b32.xlu0 %v813, 32
      %v975 = vpop.permute.xlu0 %974
      %976 = vrot.lane.b32.xlu0 %v821, 32
      %v977 = vpop.permute.xlu0 %976
      %978 = vrot.lane.b32.xlu0 %v829, 32
      %v979 = vpop.permute.xlu0 %978
      %980 = vrot.lane.b32.xlu0 %v837, 32
      %v981 = vpop.permute.xlu0 %980
      %982 = vrot.lane.b32.xlu0 %v845, 32
      %v983 = vpop.permute.xlu0 %982
      %984 = vrot.lane.b32.xlu0 %v853, 32
      %v985 = vpop.permute.xlu0 %984
      %986 = vrot.lane.b32.xlu0 %v861, 32
      %v987 = vpop.permute.xlu0 %986
      %988 = vrot.lane.b32.xlu0 %v869, 32
      %v989 = vpop.permute.xlu0 %988
      %990 = vrot.lane.b32.xlu0 %v877, 32
      %v991 = vpop.permute.xlu0 %990
      %992 = vrot.lane.b32.xlu0 %v885, 32
      %v993 = vpop.permute.xlu0 %992
      %994 = vrot.lane.b32.xlu0 %v893, 32
      %v995 = vpop.permute.xlu0 %994
      %996 = vrot.lane.b32.xlu0 %v901, 32
      %v997 = vpop.permute.xlu0 %996
      %998 = vrot.lane.b32.xlu0 %v909, 32
      %v999 = vpop.permute.xlu0 %998
      %1000 = vrot.lane.b32.xlu0 %v917, 32
      %v1001 = vpop.permute.xlu0 %1000
      %1002 = vrot.lane.b32.xlu0 %v925, 32
      %v1003 = vpop.permute.xlu0 %1002
      %v1005 = vunpack.c.l.b16 %v396
      %v1006 = vpack.c.b16 %v490, %v1005
      %vm1007 = vcmask 1046528
      %v1008 = vrot.slane %v1006, 1
      %v1009 = vrot.slane %v568, 1
      %v1010 = vsel %vm1007, %v1008, %v1009
      %v1011 = vrot.slane %v569, 1
      %v1012 = vsel %vm1007, %v1009, %v1011
      %v1013 = vrot.slane %v570, 1
      %v1014 = vsel %vm1007, %v1011, %v1013
      %v1015 = vrot.slane %v571, 1
      %v1016 = vsel %vm1007, %v1013, %v1015
      %v1017 = vrot.slane %v572, 1
      %v1018 = vsel %vm1007, %v1015, %v1017
      %v1019 = vrot.slane %v573, 1
      %v1020 = vsel %vm1007, %v1017, %v1019
      %v1021 = vrot.slane %v574, 1
      %v1022 = vsel %vm1007, %v1019, %v1021
      %v1023 = vrot.slane %v575, 1
      %v1024 = vsel %vm1007, %v1021, %v1023
      %v1025 = vrot.slane %v576, 1
      %v1026 = vsel %vm1007, %v1023, %v1025
      %v1027 = vrot.slane %v577, 1
      %v1028 = vsel %vm1007, %v1025, %v1027
      %v1029 = vrot.slane %v578, 1
      %v1030 = vsel %vm1007, %v1027, %v1029
      %v1031 = vrot.slane %v579, 1
      %v1032 = vsel %vm1007, %v1029, %v1031
      %v1033 = vrot.slane %v580, 1
      %v1034 = vsel %vm1007, %v1031, %v1033
      %v1035 = vrot.slane %v581, 1
      %v1036 = vsel %vm1007, %v1033, %v1035
      %v1037 = vrot.slane %v582, 1
      %v1038 = vsel %vm1007, %v1035, %v1037
      %v1039 = vrot.slane %v583, 1
      %v1040 = vsel %vm1007, %v1037, %v1039
      %v1041 = vrot.slane %v584, 1
      %v1042 = vsel %vm1007, %v1039, %v1041
      %v1043 = vrot.slane %v585, 1
      %v1044 = vsel %vm1007, %v1041, %v1043
      %v1045 = vrot.slane %v586, 1
      %v1046 = vsel %vm1007, %v1043, %v1045
      %v1047 = vrot.slane %v587, 1
      %v1048 = vsel %vm1007, %v1045, %v1047
      %v1049 = vrot.slane %v588, 1
      %v1050 = vsel %vm1007, %v1047, %v1049
      %v1051 = vrot.slane %v589, 1
      %v1052 = vsel %vm1007, %v1049, %v1051
      %v1053 = vrot.slane %v590, 1
      %v1054 = vsel %vm1007, %v1051, %v1053
      %v1055 = vrot.slane %v591, 1
      %v1056 = vsel %vm1007, %v1053, %v1055
      %v1057 = vrot.slane %v592, 1
      %v1058 = vsel %vm1007, %v1055, %v1057
      %v1059 = vrot.slane %v593, 1
      %v1060 = vsel %vm1007, %v1057, %v1059
      %v1061 = vrot.slane %v594, 1
      %v1062 = vsel %vm1007, %v1059, %v1061
      %v1063 = vrot.slane %v595, 1
      %v1064 = vsel %vm1007, %v1061, %v1063
      %v1065 = vrot.slane %v596, 1
      %v1066 = vsel %vm1007, %v1063, %v1065
      %v1067 = vrot.slane %v597, 1
      %v1068 = vsel %vm1007, %v1065, %v1067
      %v1069 = vrot.slane %v598, 1
      %v1070 = vsel %vm1007, %v1067, %v1069
      %v1071 = vrot.slane %v599, 1
      %v1072 = vsel %vm1007, %v1069, %v1071
      %v1073 = vrot.slane %v600, 1
      %v1074 = vsel %vm1007, %v1071, %v1073
      %v1075 = vrot.slane %v601, 1
      %v1076 = vsel %vm1007, %v1073, %v1075
      %v1077 = vrot.slane %v602, 1
      %v1078 = vsel %vm1007, %v1075, %v1077
      %v1079 = vrot.slane %v603, 1
      %v1080 = vsel %vm1007, %v1077, %v1079
      %v1081 = vrot.slane %v604, 1
      %v1082 = vsel %vm1007, %v1079, %v1081
      %v1083 = vrot.slane %v605, 1
      %v1084 = vsel %vm1007, %v1081, %v1083
      %v1085 = vrot.slane %v608, 1
      %v1086 = vsel %vm1007, %v1083, %v1085
      %1087 = vrot.lane.b32.xlu0 %v1010, 64
      %v1088 = vpop.permute.xlu0 %1087
      %1089 = vrot.lane.b32.xlu0 %v1012, 64
      %v1090 = vpop.permute.xlu0 %1089
      %1091 = vrot.lane.b32.xlu0 %v1014, 64
      %v1092 = vpop.permute.xlu0 %1091
      %1093 = vrot.lane.b32.xlu0 %v1016, 64
      %v1094 = vpop.permute.xlu0 %1093
      %1095 = vrot.lane.b32.xlu0 %v1018, 64
      %v1096 = vpop.permute.xlu0 %1095
      %1097 = vrot.lane.b32.xlu0 %v1020, 64
      %v1098 = vpop.permute.xlu0 %1097
      %1099 = vrot.lane.b32.xlu0 %v1022, 64
      %v1100 = vpop.permute.xlu0 %1099
      %1101 = vrot.lane.b32.xlu0 %v1024, 64
      %v1102 = vpop.permute.xlu0 %1101
      %1103 = vrot.lane.b32.xlu0 %v1026, 64
      %v1104 = vpop.permute.xlu0 %1103
      %1105 = vrot.lane.b32.xlu0 %v1028, 64
      %v1106 = vpop.permute.xlu0 %1105
      %1107 = vrot.lane.b32.xlu0 %v1030, 64
      %v1108 = vpop.permute.xlu0 %1107
      %1109 = vrot.lane.b32.xlu0 %v1032, 64
      %v1110 = vpop.permute.xlu0 %1109
      %1111 = vrot.lane.b32.xlu0 %v1034, 64
      %v1112 = vpop.permute.xlu0 %1111
      %1113 = vrot.lane.b32.xlu0 %v1036, 64
      %v1114 = vpop.permute.xlu0 %1113
      %1115 = vrot.lane.b32.xlu0 %v1038, 64
      %v1116 = vpop.permute.xlu0 %1115
      %1117 = vrot.lane.b32.xlu0 %v1040, 64
      %v1118 = vpop.permute.xlu0 %1117
      %1119 = vrot.lane.b32.xlu0 %v1042, 64
      %v1120 = vpop.permute.xlu0 %1119
      %1121 = vrot.lane.b32.xlu0 %v1044, 64
      %v1122 = vpop.permute.xlu0 %1121
      %1123 = vrot.lane.b32.xlu0 %v1046, 64
      %v1124 = vpop.permute.xlu0 %1123
      %1125 = vrot.lane.b32.xlu0 %v1048, 64
      %v1126 = vpop.permute.xlu0 %1125
      %1127 = vrot.lane.b32.xlu0 %v1050, 64
      %v1128 = vpop.permute.xlu0 %1127
      %1129 = vrot.lane.b32.xlu0 %v1052, 64
      %v1130 = vpop.permute.xlu0 %1129
      %1131 = vrot.lane.b32.xlu0 %v1054, 64
      %v1132 = vpop.permute.xlu0 %1131
      %1133 = vrot.lane.b32.xlu0 %v1056, 64
      %v1134 = vpop.permute.xlu0 %1133
      %1135 = vrot.lane.b32.xlu0 %v1058, 64
      %v1136 = vpop.permute.xlu0 %1135
      %1137 = vrot.lane.b32.xlu0 %v1060, 64
      %v1138 = vpop.permute.xlu0 %1137
      %1139 = vrot.lane.b32.xlu0 %v1062, 64
      %v1140 = vpop.permute.xlu0 %1139
      %1141 = vrot.lane.b32.xlu0 %v1064, 64
      %v1142 = vpop.permute.xlu0 %1141
      %1143 = vrot.lane.b32.xlu0 %v1066, 64
      %v1144 = vpop.permute.xlu0 %1143
      %1145 = vrot.lane.b32.xlu0 %v1068, 64
      %v1146 = vpop.permute.xlu0 %1145
      %1147 = vrot.lane.b32.xlu0 %v1070, 64
      %v1148 = vpop.permute.xlu0 %1147
      %1149 = vrot.lane.b32.xlu0 %v1072, 64
      %v1150 = vpop.permute.xlu0 %1149
      %1151 = vrot.lane.b32.xlu0 %v1074, 64
      %v1152 = vpop.permute.xlu0 %1151
      %1153 = vrot.lane.b32.xlu0 %v1076, 64
      %v1154 = vpop.permute.xlu0 %1153
      %1155 = vrot.lane.b32.xlu0 %v1078, 64
      %v1156 = vpop.permute.xlu0 %1155
      %1157 = vrot.lane.b32.xlu0 %v1080, 64
      %v1158 = vpop.permute.xlu0 %1157
      %1159 = vrot.lane.b32.xlu0 %v1082, 64
      %v1160 = vpop.permute.xlu0 %1159
      %1161 = vrot.lane.b32.xlu0 %v1084, 64
      %v1162 = vpop.permute.xlu0 %1161
      %1163 = vrot.lane.b32.xlu0 %v1086, 64
      %v1164 = vpop.permute.xlu0 %1163
      %v1170 = vunpack.c.l.b16 %v397
      %v1171 = vunpack.c.l.b16 %v398
      %v1172 = vunpack.c.l.b16 %v399
      %v1173 = vunpack.c.l.b16 %v400
      %v1174 = vunpack.c.l.b16 %v401
      %v1175 = vpack.c.b16 %v493, %v1170
      %v1176 = vpack.c.b16 %v495, %v494
      %v1177 = vpack.c.b16 %v497, %v496
      %v1178 = vpack.c.b16 %v499, %v498
      %v1179 = vpack.c.b16 %v501, %v500
      %v1180 = vpack.c.b16 %v503, %v502
      %v1181 = vpack.c.b16 %v505, %v504
      %v1182 = vpack.c.b16 %v507, %v506
      %v1183 = vpack.c.b16 %v509, %v508
      %v1184 = vpack.c.b16 %v511, %v510
      %v1185 = vpack.c.b16 %v513, %v512
      %v1186 = vpack.c.b16 %v515, %v514
      %v1187 = vpack.c.b16 %v517, %v516
      %v1188 = vpack.c.b16 %v519, %v518
      %v1189 = vpack.c.b16 %v521, %v520
      %v1190 = vpack.c.b16 %v523, %v522
      %v1191 = vpack.c.b16 %v525, %v524
      %v1192 = vpack.c.b16 %v527, %v526
      %v1193 = vpack.c.b16 %v529, %v528
      %v1194 = vpack.c.b16 %v531, %v530
      %v1195 = vpack.c.b16 %v533, %v532
      %v1196 = vpack.c.b16 %v535, %v534
      %v1197 = vpack.c.b16 %v537, %v536
      %v1198 = vpack.c.b16 %v539, %v538
      %v1199 = vpack.c.b16 %v541, %v540
      %v1200 = vpack.c.b16 %v543, %v542
      %v1201 = vpack.c.b16 %v545, %v544
      %v1202 = vpack.c.b16 %v547, %v546
      %v1203 = vpack.c.b16 %v549, %v548
      %v1204 = vpack.c.b16 %v551, %v550
      %v1205 = vpack.c.b16 %v553, %v552
      %v1206 = vpack.c.b16 %v555, %v554
      %v1207 = vpack.c.b16 %v557, %v556
      %v1208 = vpack.c.b16 %v559, %v558
      %v1209 = vpack.c.b16 %v561, %v560
      %v1210 = vpack.c.b16 %v563, %v562
      %v1211 = vpack.c.b16 %v565, %v564
      %v1212 = vpack.c.b16 %v1171, %v566
      %v1213 = vpack.c.b16 %v1173, %v1172
      %v1214 = vpack.c.b16 %v1174, %v1174
      %v1215 = vrot.slane %v1175, 1
      %v1216 = vrot.slane %v1176, 1
      %v1217 = vsel %vm1007, %v1215, %v1216
      %v1218 = vrot.slane %v1177, 1
      %v1219 = vsel %vm1007, %v1216, %v1218
      %v1220 = vrot.slane %v1178, 1
      %v1221 = vsel %vm1007, %v1218, %v1220
      %v1222 = vrot.slane %v1179, 1
      %v1223 = vsel %vm1007, %v1220, %v1222
      %v1224 = vrot.slane %v1180, 1
      %v1225 = vsel %vm1007, %v1222, %v1224
      %v1226 = vrot.slane %v1181, 1
      %v1227 = vsel %vm1007, %v1224, %v1226
      %v1228 = vrot.slane %v1182, 1
      %v1229 = vsel %vm1007, %v1226, %v1228
      %v1230 = vrot.slane %v1183, 1
      %v1231 = vsel %vm1007, %v1228, %v1230
      %v1232 = vrot.slane %v1184, 1
      %v1233 = vsel %vm1007, %v1230, %v1232
      %v1234 = vrot.slane %v1185, 1
      %v1235 = vsel %vm1007, %v1232, %v1234
      %v1236 = vrot.slane %v1186, 1
      %v1237 = vsel %vm1007, %v1234, %v1236
      %v1238 = vrot.slane %v1187, 1
      %v1239 = vsel %vm1007, %v1236, %v1238
      %v1240 = vrot.slane %v1188, 1
      %v1241 = vsel %vm1007, %v1238, %v1240
      %v1242 = vrot.slane %v1189, 1
      %v1243 = vsel %vm1007, %v1240, %v1242
      %v1244 = vrot.slane %v1190, 1
      %v1245 = vsel %vm1007, %v1242, %v1244
      %v1246 = vrot.slane %v1191, 1
      %v1247 = vsel %vm1007, %v1244, %v1246
      %v1248 = vrot.slane %v1192, 1
      %v1249 = vsel %vm1007, %v1246, %v1248
      %v1250 = vrot.slane %v1193, 1
      %v1251 = vsel %vm1007, %v1248, %v1250
      %v1252 = vrot.slane %v1194, 1
      %v1253 = vsel %vm1007, %v1250, %v1252
      %v1254 = vrot.slane %v1195, 1
      %v1255 = vsel %vm1007, %v1252, %v1254
      %v1256 = vrot.slane %v1196, 1
      %v1257 = vsel %vm1007, %v1254, %v1256
      %v1258 = vrot.slane %v1197, 1
      %v1259 = vsel %vm1007, %v1256, %v1258
      %v1260 = vrot.slane %v1198, 1
      %v1261 = vsel %vm1007, %v1258, %v1260
      %v1262 = vrot.slane %v1199, 1
      %v1263 = vsel %vm1007, %v1260, %v1262
      %v1264 = vrot.slane %v1200, 1
      %v1265 = vsel %vm1007, %v1262, %v1264
      %v1266 = vrot.slane %v1201, 1
      %v1267 = vsel %vm1007, %v1264, %v1266
      %v1268 = vrot.slane %v1202, 1
      %v1269 = vsel %vm1007, %v1266, %v1268
      %v1270 = vrot.slane %v1203, 1
      %v1271 = vsel %vm1007, %v1268, %v1270
      %v1272 = vrot.slane %v1204, 1
      %v1273 = vsel %vm1007, %v1270, %v1272
      %v1274 = vrot.slane %v1205, 1
      %v1275 = vsel %vm1007, %v1272, %v1274
      %v1276 = vrot.slane %v1206, 1
      %v1277 = vsel %vm1007, %v1274, %v1276
      %v1278 = vrot.slane %v1207, 1
      %v1279 = vsel %vm1007, %v1276, %v1278
      %v1280 = vrot.slane %v1208, 1
      %v1281 = vsel %vm1007, %v1278, %v1280
      %v1282 = vrot.slane %v1209, 1
      %v1283 = vsel %vm1007, %v1280, %v1282
      %v1284 = vrot.slane %v1210, 1
      %v1285 = vsel %vm1007, %v1282, %v1284
      %v1286 = vrot.slane %v1211, 1
      %v1287 = vsel %vm1007, %v1284, %v1286
      %v1288 = vrot.slane %v1212, 1
      %v1289 = vsel %vm1007, %v1286, %v1288
      %v1290 = vrot.slane %v1213, 1
      %v1291 = vsel %vm1007, %v1288, %v1290
      %v1292 = vrot.slane %v1214, 1
      %v1293 = vsel %vm1007, %v1290, %v1292
      %1294 = vrot.lane.b32.xlu0 %v1217, 96
      %v1295 = vpop.permute.xlu0 %1294
      %1296 = vrot.lane.b32.xlu0 %v1219, 96
      %v1297 = vpop.permute.xlu0 %1296
      %1298 = vrot.lane.b32.xlu0 %v1221, 96
      %v1299 = vpop.permute.xlu0 %1298
      %1300 = vrot.lane.b32.xlu0 %v1223, 96
      %v1301 = vpop.permute.xlu0 %1300
      %1302 = vrot.lane.b32.xlu0 %v1225, 96
      %v1303 = vpop.permute.xlu0 %1302
      %1304 = vrot.lane.b32.xlu0 %v1227, 96
      %v1305 = vpop.permute.xlu0 %1304
      %1306 = vrot.lane.b32.xlu0 %v1229, 96
      %v1307 = vpop.permute.xlu0 %1306
      %1308 = vrot.lane.b32.xlu0 %v1231, 96
      %v1309 = vpop.permute.xlu0 %1308
      %1310 = vrot.lane.b32.xlu0 %v1233, 96
      %v1311 = vpop.permute.xlu0 %1310
      %1312 = vrot.lane.b32.xlu0 %v1235, 96
      %v1313 = vpop.permute.xlu0 %1312
      %1314 = vrot.lane.b32.xlu0 %v1237, 96
      %v1315 = vpop.permute.xlu0 %1314
      %1316 = vrot.lane.b32.xlu0 %v1239, 96
      %v1317 = vpop.permute.xlu0 %1316
      %1318 = vrot.lane.b32.xlu0 %v1241, 96
      %v1319 = vpop.permute.xlu0 %1318
      %1320 = vrot.lane.b32.xlu0 %v1243, 96
      %v1321 = vpop.permute.xlu0 %1320
      %1322 = vrot.lane.b32.xlu0 %v1245, 96
      %v1323 = vpop.permute.xlu0 %1322
      %1324 = vrot.lane.b32.xlu0 %v1247, 96
      %v1325 = vpop.permute.xlu0 %1324
      %1326 = vrot.lane.b32.xlu0 %v1249, 96
      %v1327 = vpop.permute.xlu0 %1326
      %1328 = vrot.lane.b32.xlu0 %v1251, 96
      %v1329 = vpop.permute.xlu0 %1328
      %1330 = vrot.lane.b32.xlu0 %v1253, 96
      %v1331 = vpop.permute.xlu0 %1330
      %1332 = vrot.lane.b32.xlu0 %v1255, 96
      %v1333 = vpop.permute.xlu0 %1332
      %1334 = vrot.lane.b32.xlu0 %v1257, 96
      %v1335 = vpop.permute.xlu0 %1334
      %1336 = vrot.lane.b32.xlu0 %v1259, 96
      %v1337 = vpop.permute.xlu0 %1336
      %1338 = vrot.lane.b32.xlu0 %v1261, 96
      %v1339 = vpop.permute.xlu0 %1338
      %1340 = vrot.lane.b32.xlu0 %v1263, 96
      %v1341 = vpop.permute.xlu0 %1340
      %1342 = vrot.lane.b32.xlu0 %v1265, 96
      %v1343 = vpop.permute.xlu0 %1342
      %1344 = vrot.lane.b32.xlu0 %v1267, 96
      %v1345 = vpop.permute.xlu0 %1344
      %1346 = vrot.lane.b32.xlu0 %v1269, 96
      %v1347 = vpop.permute.xlu0 %1346
      %1348 = vrot.lane.b32.xlu0 %v1271, 96
      %v1349 = vpop.permute.xlu0 %1348
      %1350 = vrot.lane.b32.xlu0 %v1273, 96
      %v1351 = vpop.permute.xlu0 %1350
      %1352 = vrot.lane.b32.xlu0 %v1275, 96
      %v1353 = vpop.permute.xlu0 %1352
      %1354 = vrot.lane.b32.xlu0 %v1277, 96
      %v1355 = vpop.permute.xlu0 %1354
      %1356 = vrot.lane.b32.xlu0 %v1279, 96
      %v1357 = vpop.permute.xlu0 %1356
      %1358 = vrot.lane.b32.xlu0 %v1281, 96
      %v1359 = vpop.permute.xlu0 %1358
      %1360 = vrot.lane.b32.xlu0 %v1283, 96
      %v1361 = vpop.permute.xlu0 %1360
      %1362 = vrot.lane.b32.xlu0 %v1285, 96
      %v1363 = vpop.permute.xlu0 %1362
      %1364 = vrot.lane.b32.xlu0 %v1287, 96
      %v1365 = vpop.permute.xlu0 %1364
      %1366 = vrot.lane.b32.xlu0 %v1289, 96
      %v1367 = vpop.permute.xlu0 %1366
      %1368 = vrot.lane.b32.xlu0 %v1291, 96
      %v1369 = vpop.permute.xlu0 %1368
      %1370 = vrot.lane.b32.xlu0 %v1293, 96
      %v1371 = vpop.permute.xlu0 %1370
      %v1373 = vunpack.c.l.b16 %v402
      %v1374 = vpack.c.b16 %v1373, %v1373
      %vm1375 = vsmask.f32 6400
      %v1377 = vshrl.u32 %v1175, 16
      %v1379 = vrot.slane %v1377, 1
      %v1380 = vshll.u32 %v1175, 16
      %v1382 = vrot.slane %v1380, 2
      %v1383 = vor.u32 %v1379, %v1382
      %v1385 = vshrl.u32 %v1176, 16
      %v1387 = vrot.slane %v1385, 1
      %v1388 = vshll.u32 %v1176, 16
      %v1390 = vrot.slane %v1388, 2
      %v1391 = vor.u32 %v1387, %v1390
      %v1392 = vsel %vm1375, %v1383, %v1391
      %v1394 = vshrl.u32 %v1177, 16
      %v1396 = vrot.slane %v1394, 1
      %v1397 = vshll.u32 %v1177, 16
      %v1399 = vrot.slane %v1397, 2
      %v1400 = vor.u32 %v1396, %v1399
      %v1401 = vsel %vm1375, %v1391, %v1400
      %v1403 = vshrl.u32 %v1178, 16
      %v1405 = vrot.slane %v1403, 1
      %v1406 = vshll.u32 %v1178, 16
      %v1408 = vrot.slane %v1406, 2
      %v1409 = vor.u32 %v1405, %v1408
      %v1410 = vsel %vm1375, %v1400, %v1409
      %v1412 = vshrl.u32 %v1179, 16
      %v1414 = vrot.slane %v1412, 1
      %v1415 = vshll.u32 %v1179, 16
      %v1417 = vrot.slane %v1415, 2
      %v1418 = vor.u32 %v1414, %v1417
      %v1419 = vsel %vm1375, %v1409, %v1418
      %v1421 = vshrl.u32 %v1180, 16
      %v1423 = vrot.slane %v1421, 1
      %v1424 = vshll.u32 %v1180, 16
      %v1426 = vrot.slane %v1424, 2
      %v1427 = vor.u32 %v1423, %v1426
      %v1428 = vsel %vm1375, %v1418, %v1427
      %v1430 = vshrl.u32 %v1181, 16
      %v1432 = vrot.slane %v1430, 1
      %v1433 = vshll.u32 %v1181, 16
      %v1435 = vrot.slane %v1433, 2
      %v1436 = vor.u32 %v1432, %v1435
      %v1437 = vsel %vm1375, %v1427, %v1436
      %v1439 = vshrl.u32 %v1182, 16
      %v1441 = vrot.slane %v1439, 1
      %v1442 = vshll.u32 %v1182, 16
      %v1444 = vrot.slane %v1442, 2
      %v1445 = vor.u32 %v1441, %v1444
      %v1446 = vsel %vm1375, %v1436, %v1445
      %v1448 = vshrl.u32 %v1183, 16
      %v1450 = vrot.slane %v1448, 1
      %v1451 = vshll.u32 %v1183, 16
      %v1453 = vrot.slane %v1451, 2
      %v1454 = vor.u32 %v1450, %v1453
      %v1455 = vsel %vm1375, %v1445, %v1454
      %v1457 = vshrl.u32 %v1184, 16
      %v1459 = vrot.slane %v1457, 1
      %v1460 = vshll.u32 %v1184, 16
      %v1462 = vrot.slane %v1460, 2
      %v1463 = vor.u32 %v1459, %v1462
      %v1464 = vsel %vm1375, %v1454, %v1463
      %v1466 = vshrl.u32 %v1185, 16
      %v1468 = vrot.slane %v1466, 1
      %v1469 = vshll.u32 %v1185, 16
      %v1471 = vrot.slane %v1469, 2
      %v1472 = vor.u32 %v1468, %v1471
      %v1473 = vsel %vm1375, %v1463, %v1472
      %v1475 = vshrl.u32 %v1186, 16
      %v1477 = vrot.slane %v1475, 1
      %v1478 = vshll.u32 %v1186, 16
      %v1480 = vrot.slane %v1478, 2
      %v1481 = vor.u32 %v1477, %v1480
      %v1482 = vsel %vm1375, %v1472, %v1481
      %v1484 = vshrl.u32 %v1187, 16
      %v1486 = vrot.slane %v1484, 1
      %v1487 = vshll.u32 %v1187, 16
      %v1489 = vrot.slane %v1487, 2
      %v1490 = vor.u32 %v1486, %v1489
      %v1491 = vsel %vm1375, %v1481, %v1490
      %v1493 = vshrl.u32 %v1188, 16
      %v1495 = vrot.slane %v1493, 1
      %v1496 = vshll.u32 %v1188, 16
      %v1498 = vrot.slane %v1496, 2
      %v1499 = vor.u32 %v1495, %v1498
      %v1500 = vsel %vm1375, %v1490, %v1499
      %v1502 = vshrl.u32 %v1189, 16
      %v1504 = vrot.slane %v1502, 1
      %v1505 = vshll.u32 %v1189, 16
      %v1507 = vrot.slane %v1505, 2
      %v1508 = vor.u32 %v1504, %v1507
      %v1509 = vsel %vm1375, %v1499, %v1508
      %v1511 = vshrl.u32 %v1190, 16
      %v1513 = vrot.slane %v1511, 1
      %v1514 = vshll.u32 %v1190, 16
      %v1516 = vrot.slane %v1514, 2
      %v1517 = vor.u32 %v1513, %v1516
      %v1518 = vsel %vm1375, %v1508, %v1517
      %v1520 = vshrl.u32 %v1191, 16
      %v1522 = vrot.slane %v1520, 1
      %v1523 = vshll.u32 %v1191, 16
      %v1525 = vrot.slane %v1523, 2
      %v1526 = vor.u32 %v1522, %v1525
      %v1527 = vsel %vm1375, %v1517, %v1526
      %v1529 = vshrl.u32 %v1192, 16
      %v1531 = vrot.slane %v1529, 1
      %v1532 = vshll.u32 %v1192, 16
      %v1534 = vrot.slane %v1532, 2
      %v1535 = vor.u32 %v1531, %v1534
      %v1536 = vsel %vm1375, %v1526, %v1535
      %v1538 = vshrl.u32 %v1193, 16
      %v1540 = vrot.slane %v1538, 1
      %v1541 = vshll.u32 %v1193, 16
      %v1543 = vrot.slane %v1541, 2
      %v1544 = vor.u32 %v1540, %v1543
      %v1545 = vsel %vm1375, %v1535, %v1544
      %v1547 = vshrl.u32 %v1194, 16
      %v1549 = vrot.slane %v1547, 1
      %v1550 = vshll.u32 %v1194, 16
      %v1552 = vrot.slane %v1550, 2
      %v1553 = vor.u32 %v1549, %v1552
      %v1554 = vsel %vm1375, %v1544, %v1553
      %v1556 = vshrl.u32 %v1195, 16
      %v1558 = vrot.slane %v1556, 1
      %v1559 = vshll.u32 %v1195, 16
      %v1561 = vrot.slane %v1559, 2
      %v1562 = vor.u32 %v1558, %v1561
      %v1563 = vsel %vm1375, %v1553, %v1562
      %v1565 = vshrl.u32 %v1196, 16
      %v1567 = vrot.slane %v1565, 1
      %v1568 = vshll.u32 %v1196, 16
      %v1570 = vrot.slane %v1568, 2
      %v1571 = vor.u32 %v1567, %v1570
      %v1572 = vsel %vm1375, %v1562, %v1571
      %v1574 = vshrl.u32 %v1197, 16
      %v1576 = vrot.slane %v1574, 1
      %v1577 = vshll.u32 %v1197, 16
      %v1579 = vrot.slane %v1577, 2
      %v1580 = vor.u32 %v1576, %v1579
      %v1581 = vsel %vm1375, %v1571, %v1580
      %v1583 = vshrl.u32 %v1198, 16
      %v1585 = vrot.slane %v1583, 1
      %v1586 = vshll.u32 %v1198, 16
      %v1588 = vrot.slane %v1586, 2
      %v1589 = vor.u32 %v1585, %v1588
      %v1590 = vsel %vm1375, %v1580, %v1589
      %v1592 = vshrl.u32 %v1199, 16
      %v1594 = vrot.slane %v1592, 1
      %v1595 = vshll.u32 %v1199, 16
      %v1597 = vrot.slane %v1595, 2
      %v1598 = vor.u32 %v1594, %v1597
      %v1599 = vsel %vm1375, %v1589, %v1598
      %v1601 = vshrl.u32 %v1200, 16
      %v1603 = vrot.slane %v1601, 1
      %v1604 = vshll.u32 %v1200, 16
      %v1606 = vrot.slane %v1604, 2
      %v1607 = vor.u32 %v1603, %v1606
      %v1608 = vsel %vm1375, %v1598, %v1607
      %v1610 = vshrl.u32 %v1201, 16
      %v1612 = vrot.slane %v1610, 1
      %v1613 = vshll.u32 %v1201, 16
      %v1615 = vrot.slane %v1613, 2
      %v1616 = vor.u32 %v1612, %v1615
      %v1617 = vsel %vm1375, %v1607, %v1616
      %v1619 = vshrl.u32 %v1202, 16
      %v1621 = vrot.slane %v1619, 1
      %v1622 = vshll.u32 %v1202, 16
      %v1624 = vrot.slane %v1622, 2
      %v1625 = vor.u32 %v1621, %v1624
      %v1626 = vsel %vm1375, %v1616, %v1625
      %v1628 = vshrl.u32 %v1203, 16
      %v1630 = vrot.slane %v1628, 1
      %v1631 = vshll.u32 %v1203, 16
      %v1633 = vrot.slane %v1631, 2
      %v1634 = vor.u32 %v1630, %v1633
      %v1635 = vsel %vm1375, %v1625, %v1634
      %v1637 = vshrl.u32 %v1204, 16
      %v1639 = vrot.slane %v1637, 1
      %v1640 = vshll.u32 %v1204, 16
      %v1642 = vrot.slane %v1640, 2
      %v1643 = vor.u32 %v1639, %v1642
      %v1644 = vsel %vm1375, %v1634, %v1643
      %v1646 = vshrl.u32 %v1205, 16
      %v1648 = vrot.slane %v1646, 1
      %v1649 = vshll.u32 %v1205, 16
      %v1651 = vrot.slane %v1649, 2
      %v1652 = vor.u32 %v1648, %v1651
      %v1653 = vsel %vm1375, %v1643, %v1652
      %v1655 = vshrl.u32 %v1206, 16
      %v1657 = vrot.slane %v1655, 1
      %v1658 = vshll.u32 %v1206, 16
      %v1660 = vrot.slane %v1658, 2
      %v1661 = vor.u32 %v1657, %v1660
      %v1662 = vsel %vm1375, %v1652, %v1661
      %v1664 = vshrl.u32 %v1207, 16
      %v1666 = vrot.slane %v1664, 1
      %v1667 = vshll.u32 %v1207, 16
      %v1669 = vrot.slane %v1667, 2
      %v1670 = vor.u32 %v1666, %v1669
      %v1671 = vsel %vm1375, %v1661, %v1670
      %v1673 = vshrl.u32 %v1208, 16
      %v1675 = vrot.slane %v1673, 1
      %v1676 = vshll.u32 %v1208, 16
      %v1678 = vrot.slane %v1676, 2
      %v1679 = vor.u32 %v1675, %v1678
      %v1680 = vsel %vm1375, %v1670, %v1679
      %v1682 = vshrl.u32 %v1209, 16
      %v1684 = vrot.slane %v1682, 1
      %v1685 = vshll.u32 %v1209, 16
      %v1687 = vrot.slane %v1685, 2
      %v1688 = vor.u32 %v1684, %v1687
      %v1689 = vsel %vm1375, %v1679, %v1688
      %v1691 = vshrl.u32 %v1210, 16
      %v1693 = vrot.slane %v1691, 1
      %v1694 = vshll.u32 %v1210, 16
      %v1696 = vrot.slane %v1694, 2
      %v1697 = vor.u32 %v1693, %v1696
      %v1698 = vsel %vm1375, %v1688, %v1697
      %v1700 = vshrl.u32 %v1211, 16
      %v1702 = vrot.slane %v1700, 1
      %v1703 = vshll.u32 %v1211, 16
      %v1705 = vrot.slane %v1703, 2
      %v1706 = vor.u32 %v1702, %v1705
      %v1707 = vsel %vm1375, %v1697, %v1706
      %v1709 = vshrl.u32 %v1212, 16
      %v1711 = vrot.slane %v1709, 1
      %v1712 = vshll.u32 %v1212, 16
      %v1714 = vrot.slane %v1712, 2
      %v1715 = vor.u32 %v1711, %v1714
      %v1716 = vsel %vm1375, %v1706, %v1715
      %v1718 = vshrl.u32 %v1213, 16
      %v1720 = vrot.slane %v1718, 1
      %v1721 = vshll.u32 %v1213, 16
      %v1723 = vrot.slane %v1721, 2
      %v1724 = vor.u32 %v1720, %v1723
      %v1725 = vsel %vm1375, %v1715, %v1724
      %v1727 = vshrl.u32 %v1374, 16
      %v1729 = vrot.slane %v1727, 1
      %v1730 = vshll.u32 %v1374, 16
      %v1732 = vrot.slane %v1730, 2
      %v1733 = vor.u32 %v1729, %v1732
      %v1734 = vsel %vm1375, %v1724, %v1733
      %v1736 = vunpack.c.l.b16 %v403
      %v1737 = vpack.c.b16 %v493, %v1736
      %vm1738 = vcmask 1045504
      %v1739 = vrot.slane %v1737, 2
      %v1740 = vrot.slane %v1176, 2
      %v1741 = vsel %vm1738, %v1739, %v1740
      %v1742 = vrot.slane %v1177, 2
      %v1743 = vsel %vm1738, %v1740, %v1742
      %v1744 = vrot.slane %v1178, 2
      %v1745 = vsel %vm1738, %v1742, %v1744
      %v1746 = vrot.slane %v1179, 2
      %v1747 = vsel %vm1738, %v1744, %v1746
      %v1748 = vrot.slane %v1180, 2
      %v1749 = vsel %vm1738, %v1746, %v1748
      %v1750 = vrot.slane %v1181, 2
      %v1751 = vsel %vm1738, %v1748, %v1750
      %v1752 = vrot.slane %v1182, 2
      %v1753 = vsel %vm1738, %v1750, %v1752
      %v1754 = vrot.slane %v1183, 2
      %v1755 = vsel %vm1738, %v1752, %v1754
      %v1756 = vrot.slane %v1184, 2
      %v1757 = vsel %vm1738, %v1754, %v1756
      %v1758 = vrot.slane %v1185, 2
      %v1759 = vsel %vm1738, %v1756, %v1758
      %v1760 = vrot.slane %v1186, 2
      %v1761 = vsel %vm1738, %v1758, %v1760
      %v1762 = vrot.slane %v1187, 2
      %v1763 = vsel %vm1738, %v1760, %v1762
      %v1764 = vrot.slane %v1188, 2
      %v1765 = vsel %vm1738, %v1762, %v1764
      %v1766 = vrot.slane %v1189, 2
      %v1767 = vsel %vm1738, %v1764, %v1766
      %v1768 = vrot.slane %v1190, 2
      %v1769 = vsel %vm1738, %v1766, %v1768
      %v1770 = vrot.slane %v1191, 2
      %v1771 = vsel %vm1738, %v1768, %v1770
      %v1772 = vrot.slane %v1192, 2
      %v1773 = vsel %vm1738, %v1770, %v1772
      %v1774 = vrot.slane %v1193, 2
      %v1775 = vsel %vm1738, %v1772, %v1774
      %v1776 = vrot.slane %v1194, 2
      %v1777 = vsel %vm1738, %v1774, %v1776
      %v1778 = vrot.slane %v1195, 2
      %v1779 = vsel %vm1738, %v1776, %v1778
      %v1780 = vrot.slane %v1196, 2
      %v1781 = vsel %vm1738, %v1778, %v1780
      %v1782 = vrot.slane %v1197, 2
      %v1783 = vsel %vm1738, %v1780, %v1782
      %v1784 = vrot.slane %v1198, 2
      %v1785 = vsel %vm1738, %v1782, %v1784
      %v1786 = vrot.slane %v1199, 2
      %v1787 = vsel %vm1738, %v1784, %v1786
      %v1788 = vrot.slane %v1200, 2
      %v1789 = vsel %vm1738, %v1786, %v1788
      %v1790 = vrot.slane %v1201, 2
      %v1791 = vsel %vm1738, %v1788, %v1790
      %v1792 = vrot.slane %v1202, 2
      %v1793 = vsel %vm1738, %v1790, %v1792
      %v1794 = vrot.slane %v1203, 2
      %v1795 = vsel %vm1738, %v1792, %v1794
      %v1796 = vrot.slane %v1204, 2
      %v1797 = vsel %vm1738, %v1794, %v1796
      %v1798 = vrot.slane %v1205, 2
      %v1799 = vsel %vm1738, %v1796, %v1798
      %v1800 = vrot.slane %v1206, 2
      %v1801 = vsel %vm1738, %v1798, %v1800
      %v1802 = vrot.slane %v1207, 2
      %v1803 = vsel %vm1738, %v1800, %v1802
      %v1804 = vrot.slane %v1208, 2
      %v1805 = vsel %vm1738, %v1802, %v1804
      %v1806 = vrot.slane %v1209, 2
      %v1807 = vsel %vm1738, %v1804, %v1806
      %v1808 = vrot.slane %v1210, 2
      %v1809 = vsel %vm1738, %v1806, %v1808
      %v1810 = vrot.slane %v1211, 2
      %v1811 = vsel %vm1738, %v1808, %v1810
      %v1812 = vrot.slane %v1212, 2
      %v1813 = vsel %vm1738, %v1810, %v1812
      %v1814 = vrot.slane %v1213, 2
      %v1815 = vsel %vm1738, %v1812, %v1814
      %v1816 = vrot.slane %v1374, 2
      %v1817 = vsel %vm1738, %v1814, %v1816
      %1818 = vrot.lane.b32.xlu0 %v1741, 32
      %v1819 = vpop.permute.xlu0 %1818
      %1820 = vrot.lane.b32.xlu0 %v1743, 32
      %v1821 = vpop.permute.xlu0 %1820
      %1822 = vrot.lane.b32.xlu0 %v1745, 32
      %v1823 = vpop.permute.xlu0 %1822
      %1824 = vrot.lane.b32.xlu0 %v1747, 32
      %v1825 = vpop.permute.xlu0 %1824
      %1826 = vrot.lane.b32.xlu0 %v1749, 32
      %v1827 = vpop.permute.xlu0 %1826
      %1828 = vrot.lane.b32.xlu0 %v1751, 32
      %v1829 = vpop.permute.xlu0 %1828
      %1830 = vrot.lane.b32.xlu0 %v1753, 32
      %v1831 = vpop.permute.xlu0 %1830
      %1832 = vrot.lane.b32.xlu0 %v1755, 32
      %v1833 = vpop.permute.xlu0 %1832
      %1834 = vrot.lane.b32.xlu0 %v1757, 32
      %v1835 = vpop.permute.xlu0 %1834
      %1836 = vrot.lane.b32.xlu0 %v1759, 32
      %v1837 = vpop.permute.xlu0 %1836
      %1838 = vrot.lane.b32.xlu0 %v1761, 32
      %v1839 = vpop.permute.xlu0 %1838
      %1840 = vrot.lane.b32.xlu0 %v1763, 32
      %v1841 = vpop.permute.xlu0 %1840
      %1842 = vrot.lane.b32.xlu0 %v1765, 32
      %v1843 = vpop.permute.xlu0 %1842
      %1844 = vrot.lane.b32.xlu0 %v1767, 32
      %v1845 = vpop.permute.xlu0 %1844
      %1846 = vrot.lane.b32.xlu0 %v1769, 32
      %v1847 = vpop.permute.xlu0 %1846
      %1848 = vrot.lane.b32.xlu0 %v1771, 32
      %v1849 = vpop.permute.xlu0 %1848
      %1850 = vrot.lane.b32.xlu0 %v1773, 32
      %v1851 = vpop.permute.xlu0 %1850
      %1852 = vrot.lane.b32.xlu0 %v1775, 32
      %v1853 = vpop.permute.xlu0 %1852
      %1854 = vrot.lane.b32.xlu0 %v1777, 32
      %v1855 = vpop.permute.xlu0 %1854
      %1856 = vrot.lane.b32.xlu0 %v1779, 32
      %v1857 = vpop.permute.xlu0 %1856
      %1858 = vrot.lane.b32.xlu0 %v1781, 32
      %v1859 = vpop.permute.xlu0 %1858
      %1860 = vrot.lane.b32.xlu0 %v1783, 32
      %v1861 = vpop.permute.xlu0 %1860
      %1862 = vrot.lane.b32.xlu0 %v1785, 32
      %v1863 = vpop.permute.xlu0 %1862
      %1864 = vrot.lane.b32.xlu0 %v1787, 32
      %v1865 = vpop.permute.xlu0 %1864
      %1866 = vrot.lane.b32.xlu0 %v1789, 32
      %v1867 = vpop.permute.xlu0 %1866
      %1868 = vrot.lane.b32.xlu0 %v1791, 32
      %v1869 = vpop.permute.xlu0 %1868
      %1870 = vrot.lane.b32.xlu0 %v1793, 32
      %v1871 = vpop.permute.xlu0 %1870
      %1872 = vrot.lane.b32.xlu0 %v1795, 32
      %v1873 = vpop.permute.xlu0 %1872
      %1874 = vrot.lane.b32.xlu0 %v1797, 32
      %v1875 = vpop.permute.xlu0 %1874
      %1876 = vrot.lane.b32.xlu0 %v1799, 32
      %v1877 = vpop.permute.xlu0 %1876
      %1878 = vrot.lane.b32.xlu0 %v1801, 32
      %v1879 = vpop.permute.xlu0 %1878
      %1880 = vrot.lane.b32.xlu0 %v1803, 32
      %v1881 = vpop.permute.xlu0 %1880
      %1882 = vrot.lane.b32.xlu0 %v1805, 32
      %v1883 = vpop.permute.xlu0 %1882
      %1884 = vrot.lane.b32.xlu0 %v1807, 32
      %v1885 = vpop.permute.xlu0 %1884
      %1886 = vrot.lane.b32.xlu0 %v1809, 32
      %v1887 = vpop.permute.xlu0 %1886
      %1888 = vrot.lane.b32.xlu0 %v1811, 32
      %v1889 = vpop.permute.xlu0 %1888
      %1890 = vrot.lane.b32.xlu0 %v1813, 32
      %v1891 = vpop.permute.xlu0 %1890
      %1892 = vrot.lane.b32.xlu0 %v1815, 32
      %v1893 = vpop.permute.xlu0 %1892
      %1894 = vrot.lane.b32.xlu0 %v1817, 32
      %v1895 = vpop.permute.xlu0 %1894
      %v1901 = vunpack.c.l.b16 %v404
      %v1902 = vunpack.c.l.b16 %v405
      %v1903 = vunpack.c.l.b16 %v406
      %v1904 = vunpack.c.l.b16 %v407
      %v1905 = vunpack.c.l.b16 %v408
      %v1906 = vpack.c.b16 %v496, %v1901
      %v1907 = vpack.c.b16 %v1172, %v1171
      %v1908 = vpack.c.b16 %v1902, %v1173
      %v1909 = vpack.c.b16 %v1904, %v1903
      %v1910 = vpack.c.b16 %v1905, %v1905
      %v1911 = vrot.slane %v1906, 2
      %v1912 = vrot.slane %v571, 2
      %v1913 = vsel %vm1738, %v1911, %v1912
      %v1914 = vrot.slane %v572, 2
      %v1915 = vsel %vm1738, %v1912, %v1914
      %v1916 = vrot.slane %v573, 2
      %v1917 = vsel %vm1738, %v1914, %v1916
      %v1918 = vrot.slane %v574, 2
      %v1919 = vsel %vm1738, %v1916, %v1918
      %v1920 = vrot.slane %v575, 2
      %v1921 = vsel %vm1738, %v1918, %v1920
      %v1922 = vrot.slane %v576, 2
      %v1923 = vsel %vm1738, %v1920, %v1922
      %v1924 = vrot.slane %v577, 2
      %v1925 = vsel %vm1738, %v1922, %v1924
      %v1926 = vrot.slane %v578, 2
      %v1927 = vsel %vm1738, %v1924, %v1926
      %v1928 = vrot.slane %v579, 2
      %v1929 = vsel %vm1738, %v1926, %v1928
      %v1930 = vrot.slane %v580, 2
      %v1931 = vsel %vm1738, %v1928, %v1930
      %v1932 = vrot.slane %v581, 2
      %v1933 = vsel %vm1738, %v1930, %v1932
      %v1934 = vrot.slane %v582, 2
      %v1935 = vsel %vm1738, %v1932, %v1934
      %v1936 = vrot.slane %v583, 2
      %v1937 = vsel %vm1738, %v1934, %v1936
      %v1938 = vrot.slane %v584, 2
      %v1939 = vsel %vm1738, %v1936, %v1938
      %v1940 = vrot.slane %v585, 2
      %v1941 = vsel %vm1738, %v1938, %v1940
      %v1942 = vrot.slane %v586, 2
      %v1943 = vsel %vm1738, %v1940, %v1942
      %v1944 = vrot.slane %v587, 2
      %v1945 = vsel %vm1738, %v1942, %v1944
      %v1946 = vrot.slane %v588, 2
      %v1947 = vsel %vm1738, %v1944, %v1946
      %v1948 = vrot.slane %v589, 2
      %v1949 = vsel %vm1738, %v1946, %v1948
      %v1950 = vrot.slane %v590, 2
      %v1951 = vsel %vm1738, %v1948, %v1950
      %v1952 = vrot.slane %v591, 2
      %v1953 = vsel %vm1738, %v1950, %v1952
      %v1954 = vrot.slane %v592, 2
      %v1955 = vsel %vm1738, %v1952, %v1954
      %v1956 = vrot.slane %v593, 2
      %v1957 = vsel %vm1738, %v1954, %v1956
      %v1958 = vrot.slane %v594, 2
      %v1959 = vsel %vm1738, %v1956, %v1958
      %v1960 = vrot.slane %v595, 2
      %v1961 = vsel %vm1738, %v1958, %v1960
      %v1962 = vrot.slane %v596, 2
      %v1963 = vsel %vm1738, %v1960, %v1962
      %v1964 = vrot.slane %v597, 2
      %v1965 = vsel %vm1738, %v1962, %v1964
      %v1966 = vrot.slane %v598, 2
      %v1967 = vsel %vm1738, %v1964, %v1966
      %v1968 = vrot.slane %v599, 2
      %v1969 = vsel %vm1738, %v1966, %v1968
      %v1970 = vrot.slane %v600, 2
      %v1971 = vsel %vm1738, %v1968, %v1970
      %v1972 = vrot.slane %v601, 2
      %v1973 = vsel %vm1738, %v1970, %v1972
      %v1974 = vrot.slane %v602, 2
      %v1975 = vsel %vm1738, %v1972, %v1974
      %v1976 = vrot.slane %v603, 2
      %v1977 = vsel %vm1738, %v1974, %v1976
      %v1978 = vrot.slane %v604, 2
      %v1979 = vsel %vm1738, %v1976, %v1978
      %v1980 = vrot.slane %v605, 2
      %v1981 = vsel %vm1738, %v1978, %v1980
      %v1982 = vrot.slane %v1907, 2
      %v1983 = vsel %vm1738, %v1980, %v1982
      %v1984 = vrot.slane %v1908, 2
      %v1985 = vsel %vm1738, %v1982, %v1984
      %v1986 = vrot.slane %v1909, 2
      %v1987 = vsel %vm1738, %v1984, %v1986
      %v1988 = vrot.slane %v1910, 2
      %v1989 = vsel %vm1738, %v1986, %v1988
      %1990 = vrot.lane.b32.xlu0 %v1913, 64
      %v1991 = vpop.permute.xlu0 %1990
      %1992 = vrot.lane.b32.xlu0 %v1915, 64
      %v1993 = vpop.permute.xlu0 %1992
      %1994 = vrot.lane.b32.xlu0 %v1917, 64
      %v1995 = vpop.permute.xlu0 %1994
      %1996 = vrot.lane.b32.xlu0 %v1919, 64
      %v1997 = vpop.permute.xlu0 %1996
      %1998 = vrot.lane.b32.xlu0 %v1921, 64
      %v1999 = vpop.permute.xlu0 %1998
      %2000 = vrot.lane.b32.xlu0 %v1923, 64
      %v2001 = vpop.permute.xlu0 %2000
      %2002 = vrot.lane.b32.xlu0 %v1925, 64
      %v2003 = vpop.permute.xlu0 %2002
      %2004 = vrot.lane.b32.xlu0 %v1927, 64
      %v2005 = vpop.permute.xlu0 %2004
      %2006 = vrot.lane.b32.xlu0 %v1929, 64
      %v2007 = vpop.permute.xlu0 %2006
      %2008 = vrot.lane.b32.xlu0 %v1931, 64
      %v2009 = vpop.permute.xlu0 %2008
      %2010 = vrot.lane.b32.xlu0 %v1933, 64
      %v2011 = vpop.permute.xlu0 %2010
      %2012 = vrot.lane.b32.xlu0 %v1935, 64
      %v2013 = vpop.permute.xlu0 %2012
      %2014 = vrot.lane.b32.xlu0 %v1937, 64
      %v2015 = vpop.permute.xlu0 %2014
      %2016 = vrot.lane.b32.xlu0 %v1939, 64
      %v2017 = vpop.permute.xlu0 %2016
      %2018 = vrot.lane.b32.xlu0 %v1941, 64
      %v2019 = vpop.permute.xlu0 %2018
      %2020 = vrot.lane.b32.xlu0 %v1943, 64
      %v2021 = vpop.permute.xlu0 %2020
      %2022 = vrot.lane.b32.xlu0 %v1945, 64
      %v2023 = vpop.permute.xlu0 %2022
      %2024 = vrot.lane.b32.xlu0 %v1947, 64
      %v2025 = vpop.permute.xlu0 %2024
      %2026 = vrot.lane.b32.xlu0 %v1949, 64
      %v2027 = vpop.permute.xlu0 %2026
      %2028 = vrot.lane.b32.xlu0 %v1951, 64
      %v2029 = vpop.permute.xlu0 %2028
      %2030 = vrot.lane.b32.xlu0 %v1953, 64
      %v2031 = vpop.permute.xlu0 %2030
      %2032 = vrot.lane.b32.xlu0 %v1955, 64
      %v2033 = vpop.permute.xlu0 %2032
      %2034 = vrot.lane.b32.xlu0 %v1957, 64
      %v2035 = vpop.permute.xlu0 %2034
      %2036 = vrot.lane.b32.xlu0 %v1959, 64
      %v2037 = vpop.permute.xlu0 %2036
      %2038 = vrot.lane.b32.xlu0 %v1961, 64
      %v2039 = vpop.permute.xlu0 %2038
      %2040 = vrot.lane.b32.xlu0 %v1963, 64
      %v2041 = vpop.permute.xlu0 %2040
      %2042 = vrot.lane.b32.xlu0 %v1965, 64
      %v2043 = vpop.permute.xlu0 %2042
      %2044 = vrot.lane.b32.xlu0 %v1967, 64
      %v2045 = vpop.permute.xlu0 %2044
      %2046 = vrot.lane.b32.xlu0 %v1969, 64
      %v2047 = vpop.permute.xlu0 %2046
      %2048 = vrot.lane.b32.xlu0 %v1971, 64
      %v2049 = vpop.permute.xlu0 %2048
      %2050 = vrot.lane.b32.xlu0 %v1973, 64
      %v2051 = vpop.permute.xlu0 %2050
      %2052 = vrot.lane.b32.xlu0 %v1975, 64
      %v2053 = vpop.permute.xlu0 %2052
      %2054 = vrot.lane.b32.xlu0 %v1977, 64
      %v2055 = vpop.permute.xlu0 %2054
      %2056 = vrot.lane.b32.xlu0 %v1979, 64
      %v2057 = vpop.permute.xlu0 %2056
      %2058 = vrot.lane.b32.xlu0 %v1981, 64
      %v2059 = vpop.permute.xlu0 %2058
      %2060 = vrot.lane.b32.xlu0 %v1983, 64
      %v2061 = vpop.permute.xlu0 %2060
      %2062 = vrot.lane.b32.xlu0 %v1985, 64
      %v2063 = vpop.permute.xlu0 %2062
      %2064 = vrot.lane.b32.xlu0 %v1987, 64
      %v2065 = vpop.permute.xlu0 %2064
      %2066 = vrot.lane.b32.xlu0 %v1989, 64
      %v2067 = vpop.permute.xlu0 %2066
      %v2069 = vunpack.c.l.b16 %v409
      %v2070 = vpack.c.b16 %v2069, %v2069
      %vm2071 = vsmask.f32 5376
      %v2073 = vshrl.u32 %v1906, 16
      %v2075 = vrot.slane %v2073, 2
      %v2076 = vshll.u32 %v1906, 16
      %v2078 = vrot.slane %v2076, 3
      %v2079 = vor.u32 %v2075, %v2078
      %v2080 = vrot.slane %v646, 2
      %v2081 = vrot.slane %v642, 3
      %v2082 = vor.u32 %v2080, %v2081
      %v2083 = vsel %vm2071, %v2079, %v2082
      %v2084 = vrot.slane %v654, 2
      %v2085 = vrot.slane %v650, 3
      %v2086 = vor.u32 %v2084, %v2085
      %v2087 = vsel %vm2071, %v2082, %v2086
      %v2088 = vrot.slane %v662, 2
      %v2089 = vrot.slane %v658, 3
      %v2090 = vor.u32 %v2088, %v2089
      %v2091 = vsel %vm2071, %v2086, %v2090
      %v2092 = vrot.slane %v670, 2
      %v2093 = vrot.slane %v666, 3
      %v2094 = vor.u32 %v2092, %v2093
      %v2095 = vsel %vm2071, %v2090, %v2094
      %v2096 = vrot.slane %v678, 2
      %v2097 = vrot.slane %v674, 3
      %v2098 = vor.u32 %v2096, %v2097
      %v2099 = vsel %vm2071, %v2094, %v2098
      %v2100 = vrot.slane %v686, 2
      %v2101 = vrot.slane %v682, 3
      %v2102 = vor.u32 %v2100, %v2101
      %v2103 = vsel %vm2071, %v2098, %v2102
      %v2104 = vrot.slane %v694, 2
      %v2105 = vrot.slane %v690, 3
      %v2106 = vor.u32 %v2104, %v2105
      %v2107 = vsel %vm2071, %v2102, %v2106
      %v2108 = vrot.slane %v702, 2
      %v2109 = vrot.slane %v698, 3
      %v2110 = vor.u32 %v2108, %v2109
      %v2111 = vsel %vm2071, %v2106, %v2110
      %v2112 = vrot.slane %v710, 2
      %v2113 = vrot.slane %v706, 3
      %v2114 = vor.u32 %v2112, %v2113
      %v2115 = vsel %vm2071, %v2110, %v2114
      %v2116 = vrot.slane %v718, 2
      %v2117 = vrot.slane %v714, 3
      %v2118 = vor.u32 %v2116, %v2117
      %v2119 = vsel %vm2071, %v2114, %v2118
      %v2120 = vrot.slane %v726, 2
      %v2121 = vrot.slane %v722, 3
      %v2122 = vor.u32 %v2120, %v2121
      %v2123 = vsel %vm2071, %v2118, %v2122
      %v2124 = vrot.slane %v734, 2
      %v2125 = vrot.slane %v730, 3
      %v2126 = vor.u32 %v2124, %v2125
      %v2127 = vsel %vm2071, %v2122, %v2126
      %v2128 = vrot.slane %v742, 2
      %v2129 = vrot.slane %v738, 3
      %v2130 = vor.u32 %v2128, %v2129
      %v2131 = vsel %vm2071, %v2126, %v2130
      %v2132 = vrot.slane %v750, 2
      %v2133 = vrot.slane %v746, 3
      %v2134 = vor.u32 %v2132, %v2133
      %v2135 = vsel %vm2071, %v2130, %v2134
      %v2136 = vrot.slane %v758, 2
      %v2137 = vrot.slane %v754, 3
      %v2138 = vor.u32 %v2136, %v2137
      %v2139 = vsel %vm2071, %v2134, %v2138
      %v2140 = vrot.slane %v766, 2
      %v2141 = vrot.slane %v762, 3
      %v2142 = vor.u32 %v2140, %v2141
      %v2143 = vsel %vm2071, %v2138, %v2142
      %v2144 = vrot.slane %v774, 2
      %v2145 = vrot.slane %v770, 3
      %v2146 = vor.u32 %v2144, %v2145
      %v2147 = vsel %vm2071, %v2142, %v2146
      %v2148 = vrot.slane %v782, 2
      %v2149 = vrot.slane %v778, 3
      %v2150 = vor.u32 %v2148, %v2149
      %v2151 = vsel %vm2071, %v2146, %v2150
      %v2152 = vrot.slane %v790, 2
      %v2153 = vrot.slane %v786, 3
      %v2154 = vor.u32 %v2152, %v2153
      %v2155 = vsel %vm2071, %v2150, %v2154
      %v2156 = vrot.slane %v798, 2
      %v2157 = vrot.slane %v794, 3
      %v2158 = vor.u32 %v2156, %v2157
      %v2159 = vsel %vm2071, %v2154, %v2158
      %v2160 = vrot.slane %v806, 2
      %v2161 = vrot.slane %v802, 3
      %v2162 = vor.u32 %v2160, %v2161
      %v2163 = vsel %vm2071, %v2158, %v2162
      %v2164 = vrot.slane %v814, 2
      %v2165 = vrot.slane %v810, 3
      %v2166 = vor.u32 %v2164, %v2165
      %v2167 = vsel %vm2071, %v2162, %v2166
      %v2168 = vrot.slane %v822, 2
      %v2169 = vrot.slane %v818, 3
      %v2170 = vor.u32 %v2168, %v2169
      %v2171 = vsel %vm2071, %v2166, %v2170
      %v2172 = vrot.slane %v830, 2
      %v2173 = vrot.slane %v826, 3
      %v2174 = vor.u32 %v2172, %v2173
      %v2175 = vsel %vm2071, %v2170, %v2174
      %v2176 = vrot.slane %v838, 2
      %v2177 = vrot.slane %v834, 3
      %v2178 = vor.u32 %v2176, %v2177
      %v2179 = vsel %vm2071, %v2174, %v2178
      %v2180 = vrot.slane %v846, 2
      %v2181 = vrot.slane %v842, 3
      %v2182 = vor.u32 %v2180, %v2181
      %v2183 = vsel %vm2071, %v2178, %v2182
      %v2184 = vrot.slane %v854, 2
      %v2185 = vrot.slane %v850, 3
      %v2186 = vor.u32 %v2184, %v2185
      %v2187 = vsel %vm2071, %v2182, %v2186
      %v2188 = vrot.slane %v862, 2
      %v2189 = vrot.slane %v858, 3
      %v2190 = vor.u32 %v2188, %v2189
      %v2191 = vsel %vm2071, %v2186, %v2190
      %v2192 = vrot.slane %v870, 2
      %v2193 = vrot.slane %v866, 3
      %v2194 = vor.u32 %v2192, %v2193
      %v2195 = vsel %vm2071, %v2190, %v2194
      %v2196 = vrot.slane %v878, 2
      %v2197 = vrot.slane %v874, 3
      %v2198 = vor.u32 %v2196, %v2197
      %v2199 = vsel %vm2071, %v2194, %v2198
      %v2200 = vrot.slane %v886, 2
      %v2201 = vrot.slane %v882, 3
      %v2202 = vor.u32 %v2200, %v2201
      %v2203 = vsel %vm2071, %v2198, %v2202
      %v2204 = vrot.slane %v894, 2
      %v2205 = vrot.slane %v890, 3
      %v2206 = vor.u32 %v2204, %v2205
      %v2207 = vsel %vm2071, %v2202, %v2206
      %v2208 = vrot.slane %v902, 2
      %v2209 = vrot.slane %v898, 3
      %v2210 = vor.u32 %v2208, %v2209
      %v2211 = vsel %vm2071, %v2206, %v2210
      %v2212 = vrot.slane %v910, 2
      %v2213 = vrot.slane %v906, 3
      %v2214 = vor.u32 %v2212, %v2213
      %v2215 = vsel %vm2071, %v2210, %v2214
      %v2216 = vrot.slane %v918, 2
      %v2217 = vrot.slane %v914, 3
      %v2218 = vor.u32 %v2216, %v2217
      %v2219 = vsel %vm2071, %v2214, %v2218
      %v2221 = vshrl.u32 %v1907, 16
      %v2223 = vrot.slane %v2221, 2
      %v2224 = vshll.u32 %v1907, 16
      %v2226 = vrot.slane %v2224, 3
      %v2227 = vor.u32 %v2223, %v2226
      %v2228 = vsel %vm2071, %v2218, %v2227
      %v2230 = vshrl.u32 %v1908, 16
      %v2232 = vrot.slane %v2230, 2
      %v2233 = vshll.u32 %v1908, 16
      %v2235 = vrot.slane %v2233, 3
      %v2236 = vor.u32 %v2232, %v2235
      %v2237 = vsel %vm2071, %v2227, %v2236
      %v2239 = vshrl.u32 %v1909, 16
      %v2241 = vrot.slane %v2239, 2
      %v2242 = vshll.u32 %v1909, 16
      %v2244 = vrot.slane %v2242, 3
      %v2245 = vor.u32 %v2241, %v2244
      %v2246 = vsel %vm2071, %v2236, %v2245
      %v2248 = vshrl.u32 %v2070, 16
      %v2250 = vrot.slane %v2248, 2
      %v2251 = vshll.u32 %v2070, 16
      %v2253 = vrot.slane %v2251, 3
      %v2254 = vor.u32 %v2250, %v2253
      %v2255 = vsel %vm2071, %v2245, %v2254
      %2256 = vrot.lane.b32.xlu0 %v2083, 96
      %v2257 = vpop.permute.xlu0 %2256
      %2258 = vrot.lane.b32.xlu0 %v2087, 96
      %v2259 = vpop.permute.xlu0 %2258
      %2260 = vrot.lane.b32.xlu0 %v2091, 96
      %v2261 = vpop.permute.xlu0 %2260
      %2262 = vrot.lane.b32.xlu0 %v2095, 96
      %v2263 = vpop.permute.xlu0 %2262
      %2264 = vrot.lane.b32.xlu0 %v2099, 96
      %v2265 = vpop.permute.xlu0 %2264
      %2266 = vrot.lane.b32.xlu0 %v2103, 96
      %v2267 = vpop.permute.xlu0 %2266
      %2268 = vrot.lane.b32.xlu0 %v2107, 96
      %v2269 = vpop.permute.xlu0 %2268
      %2270 = vrot.lane.b32.xlu0 %v2111, 96
      %v2271 = vpop.permute.xlu0 %2270
      %2272 = vrot.lane.b32.xlu0 %v2115, 96
      %v2273 = vpop.permute.xlu0 %2272
      %2274 = vrot.lane.b32.xlu0 %v2119, 96
      %v2275 = vpop.permute.xlu0 %2274
      %2276 = vrot.lane.b32.xlu0 %v2123, 96
      %v2277 = vpop.permute.xlu0 %2276
      %2278 = vrot.lane.b32.xlu0 %v2127, 96
      %v2279 = vpop.permute.xlu0 %2278
      %2280 = vrot.lane.b32.xlu0 %v2131, 96
      %v2281 = vpop.permute.xlu0 %2280
      %2282 = vrot.lane.b32.xlu0 %v2135, 96
      %v2283 = vpop.permute.xlu0 %2282
      %2284 = vrot.lane.b32.xlu0 %v2139, 96
      %v2285 = vpop.permute.xlu0 %2284
      %2286 = vrot.lane.b32.xlu0 %v2143, 96
      %v2287 = vpop.permute.xlu0 %2286
      %2288 = vrot.lane.b32.xlu0 %v2147, 96
      %v2289 = vpop.permute.xlu0 %2288
      %2290 = vrot.lane.b32.xlu0 %v2151, 96
      %v2291 = vpop.permute.xlu0 %2290
      %2292 = vrot.lane.b32.xlu0 %v2155, 96
      %v2293 = vpop.permute.xlu0 %2292
      %2294 = vrot.lane.b32.xlu0 %v2159, 96
      %v2295 = vpop.permute.xlu0 %2294
      %2296 = vrot.lane.b32.xlu0 %v2163, 96
      %v2297 = vpop.permute.xlu0 %2296
      %2298 = vrot.lane.b32.xlu0 %v2167, 96
      %v2299 = vpop.permute.xlu0 %2298
      %2300 = vrot.lane.b32.xlu0 %v2171, 96
      %v2301 = vpop.permute.xlu0 %2300
      %2302 = vrot.lane.b32.xlu0 %v2175, 96
      %v2303 = vpop.permute.xlu0 %2302
      %2304 = vrot.lane.b32.xlu0 %v2179, 96
      %v2305 = vpop.permute.xlu0 %2304
      %2306 = vrot.lane.b32.xlu0 %v2183, 96
      %v2307 = vpop.permute.xlu0 %2306
      %2308 = vrot.lane.b32.xlu0 %v2187, 96
      %v2309 = vpop.permute.xlu0 %2308
      %2310 = vrot.lane.b32.xlu0 %v2191, 96
      %v2311 = vpop.permute.xlu0 %2310
      %2312 = vrot.lane.b32.xlu0 %v2195, 96
      %v2313 = vpop.permute.xlu0 %2312
      %2314 = vrot.lane.b32.xlu0 %v2199, 96
      %v2315 = vpop.permute.xlu0 %2314
      %2316 = vrot.lane.b32.xlu0 %v2203, 96
      %v2317 = vpop.permute.xlu0 %2316
      %2318 = vrot.lane.b32.xlu0 %v2207, 96
      %v2319 = vpop.permute.xlu0 %2318
      %2320 = vrot.lane.b32.xlu0 %v2211, 96
      %v2321 = vpop.permute.xlu0 %2320
      %2322 = vrot.lane.b32.xlu0 %v2215, 96
      %v2323 = vpop.permute.xlu0 %2322
      %2324 = vrot.lane.b32.xlu0 %v2219, 96
      %v2325 = vpop.permute.xlu0 %2324
      %2326 = vrot.lane.b32.xlu0 %v2228, 96
      %v2327 = vpop.permute.xlu0 %2326
      %2328 = vrot.lane.b32.xlu0 %v2237, 96
      %v2329 = vpop.permute.xlu0 %2328
      %2330 = vrot.lane.b32.xlu0 %v2246, 96
      %v2331 = vpop.permute.xlu0 %2330
      %2332 = vrot.lane.b32.xlu0 %v2255, 96
      %v2333 = vpop.permute.xlu0 %2332
      %v2335 = vunpack.c.l.b16 %v410
      %v2336 = vpack.c.b16 %v496, %v2335
      %vm2337 = vcmask 1044480
      %v2338 = vrot.slane %v2336, 3
      %v2339 = vrot.slane %v571, 3
      %v2340 = vsel %vm2337, %v2338, %v2339
      %v2341 = vrot.slane %v572, 3
      %v2342 = vsel %vm2337, %v2339, %v2341
      %v2343 = vrot.slane %v573, 3
      %v2344 = vsel %vm2337, %v2341, %v2343
      %v2345 = vrot.slane %v574, 3
      %v2346 = vsel %vm2337, %v2343, %v2345
      %v2347 = vrot.slane %v575, 3
      %v2348 = vsel %vm2337, %v2345, %v2347
      %v2349 = vrot.slane %v576, 3
      %v2350 = vsel %vm2337, %v2347, %v2349
      %v2351 = vrot.slane %v577, 3
      %v2352 = vsel %vm2337, %v2349, %v2351
      %v2353 = vrot.slane %v578, 3
      %v2354 = vsel %vm2337, %v2351, %v2353
      %v2355 = vrot.slane %v579, 3
      %v2356 = vsel %vm2337, %v2353, %v2355
      %v2357 = vrot.slane %v580, 3
      %v2358 = vsel %vm2337, %v2355, %v2357
      %v2359 = vrot.slane %v581, 3
      %v2360 = vsel %vm2337, %v2357, %v2359
      %v2361 = vrot.slane %v582, 3
      %v2362 = vsel %vm2337, %v2359, %v2361
      %v2363 = vrot.slane %v583, 3
      %v2364 = vsel %vm2337, %v2361, %v2363
      %v2365 = vrot.slane %v584, 3
      %v2366 = vsel %vm2337, %v2363, %v2365
      %v2367 = vrot.slane %v585, 3
      %v2368 = vsel %vm2337, %v2365, %v2367
      %v2369 = vrot.slane %v586, 3
      %v2370 = vsel %vm2337, %v2367, %v2369
      %v2371 = vrot.slane %v587, 3
      %v2372 = vsel %vm2337, %v2369, %v2371
      %v2373 = vrot.slane %v588, 3
      %v2374 = vsel %vm2337, %v2371, %v2373
      %v2375 = vrot.slane %v589, 3
      %v2376 = vsel %vm2337, %v2373, %v2375
      %v2377 = vrot.slane %v590, 3
      %v2378 = vsel %vm2337, %v2375, %v2377
      %v2379 = vrot.slane %v591, 3
      %v2380 = vsel %vm2337, %v2377, %v2379
      %v2381 = vrot.slane %v592, 3
      %v2382 = vsel %vm2337, %v2379, %v2381
      %v2383 = vrot.slane %v593, 3
      %v2384 = vsel %vm2337, %v2381, %v2383
      %v2385 = vrot.slane %v594, 3
      %v2386 = vsel %vm2337, %v2383, %v2385
      %v2387 = vrot.slane %v595, 3
      %v2388 = vsel %vm2337, %v2385, %v2387
      %v2389 = vrot.slane %v596, 3
      %v2390 = vsel %vm2337, %v2387, %v2389
      %v2391 = vrot.slane %v597, 3
      %v2392 = vsel %vm2337, %v2389, %v2391
      %v2393 = vrot.slane %v598, 3
      %v2394 = vsel %vm2337, %v2391, %v2393
      %v2395 = vrot.slane %v599, 3
      %v2396 = vsel %vm2337, %v2393, %v2395
      %v2397 = vrot.slane %v600, 3
      %v2398 = vsel %vm2337, %v2395, %v2397
      %v2399 = vrot.slane %v601, 3
      %v2400 = vsel %vm2337, %v2397, %v2399
      %v2401 = vrot.slane %v602, 3
      %v2402 = vsel %vm2337, %v2399, %v2401
      %v2403 = vrot.slane %v603, 3
      %v2404 = vsel %vm2337, %v2401, %v2403
      %v2405 = vrot.slane %v604, 3
      %v2406 = vsel %vm2337, %v2403, %v2405
      %v2407 = vrot.slane %v605, 3
      %v2408 = vsel %vm2337, %v2405, %v2407
      %v2409 = vrot.slane %v1907, 3
      %v2410 = vsel %vm2337, %v2407, %v2409
      %v2411 = vrot.slane %v1908, 3
      %v2412 = vsel %vm2337, %v2409, %v2411
      %v2413 = vrot.slane %v1909, 3
      %v2414 = vsel %vm2337, %v2411, %v2413
      %v2415 = vrot.slane %v2070, 3
      %v2416 = vsel %vm2337, %v2413, %v2415
      %vm2417 = vcmask 261120
      %v2419 = vsel %vm2417, %v567, %v927
      %v2421 = vsel %vm2417, %v568, %v929
      %v2423 = vsel %vm2417, %v569, %v931
      %v2425 = vsel %vm2417, %v570, %v933
      %v2427 = vsel %vm2417, %v571, %v935
      %v2429 = vsel %vm2417, %v572, %v937
      %v2431 = vsel %vm2417, %v573, %v939
      %v2433 = vsel %vm2417, %v574, %v941
      %v2435 = vsel %vm2417, %v575, %v943
      %v2437 = vsel %vm2417, %v576, %v945
      %v2439 = vsel %vm2417, %v577, %v947
      %v2441 = vsel %vm2417, %v578, %v949
      %v2443 = vsel %vm2417, %v579, %v951
      %v2445 = vsel %vm2417, %v580, %v953
      %v2447 = vsel %vm2417, %v581, %v955
      %v2449 = vsel %vm2417, %v582, %v957
      %v2451 = vsel %vm2417, %v583, %v959
      %v2453 = vsel %vm2417, %v584, %v961
      %v2455 = vsel %vm2417, %v585, %v963
      %v2457 = vsel %vm2417, %v586, %v965
      %v2459 = vsel %vm2417, %v587, %v967
      %v2461 = vsel %vm2417, %v588, %v969
      %v2463 = vsel %vm2417, %v589, %v971
      %v2465 = vsel %vm2417, %v590, %v973
      %v2467 = vsel %vm2417, %v591, %v975
      %v2469 = vsel %vm2417, %v592, %v977
      %v2471 = vsel %vm2417, %v593, %v979
      %v2473 = vsel %vm2417, %v594, %v981
      %v2475 = vsel %vm2417, %v595, %v983
      %v2477 = vsel %vm2417, %v596, %v985
      %v2479 = vsel %vm2417, %v597, %v987
      %v2481 = vsel %vm2417, %v598, %v989
      %v2483 = vsel %vm2417, %v599, %v991
      %v2485 = vsel %vm2417, %v600, %v993
      %v2487 = vsel %vm2417, %v601, %v995
      %v2489 = vsel %vm2417, %v602, %v997
      %v2491 = vsel %vm2417, %v603, %v999
      %v2493 = vsel %vm2417, %v604, %v1001
      %v2495 = vsel %vm2417, %v605, %v1003
      %vm2496 = vcmask 523264
      %v2498 = vsel %vm2496, %v2419, %v1088
      %v2500 = vsel %vm2496, %v2421, %v1090
      %v2502 = vsel %vm2496, %v2423, %v1092
      %v2504 = vsel %vm2496, %v2425, %v1094
      %v2506 = vsel %vm2496, %v2427, %v1096
      %v2508 = vsel %vm2496, %v2429, %v1098
      %v2510 = vsel %vm2496, %v2431, %v1100
      %v2512 = vsel %vm2496, %v2433, %v1102
      %v2514 = vsel %vm2496, %v2435, %v1104
      %v2516 = vsel %vm2496, %v2437, %v1106
      %v2518 = vsel %vm2496, %v2439, %v1108
      %v2520 = vsel %vm2496, %v2441, %v1110
      %v2522 = vsel %vm2496, %v2443, %v1112
      %v2524 = vsel %vm2496, %v2445, %v1114
      %v2526 = vsel %vm2496, %v2447, %v1116
      %v2528 = vsel %vm2496, %v2449, %v1118
      %v2530 = vsel %vm2496, %v2451, %v1120
      %v2532 = vsel %vm2496, %v2453, %v1122
      %v2534 = vsel %vm2496, %v2455, %v1124
      %v2536 = vsel %vm2496, %v2457, %v1126
      %v2538 = vsel %vm2496, %v2459, %v1128
      %v2540 = vsel %vm2496, %v2461, %v1130
      %v2542 = vsel %vm2496, %v2463, %v1132
      %v2544 = vsel %vm2496, %v2465, %v1134
      %v2546 = vsel %vm2496, %v2467, %v1136
      %v2548 = vsel %vm2496, %v2469, %v1138
      %v2550 = vsel %vm2496, %v2471, %v1140
      %v2552 = vsel %vm2496, %v2473, %v1142
      %v2554 = vsel %vm2496, %v2475, %v1144
      %v2556 = vsel %vm2496, %v2477, %v1146
      %v2558 = vsel %vm2496, %v2479, %v1148
      %v2560 = vsel %vm2496, %v2481, %v1150
      %v2562 = vsel %vm2496, %v2483, %v1152
      %v2564 = vsel %vm2496, %v2485, %v1154
      %v2566 = vsel %vm2496, %v2487, %v1156
      %v2568 = vsel %vm2496, %v2489, %v1158
      %v2570 = vsel %vm2496, %v2491, %v1160
      %v2572 = vsel %vm2496, %v2493, %v1162
      %v2574 = vsel %vm2496, %v2495, %v1164
      %vm2575 = vcmask 785408
      %v2577 = vsel %vm2575, %v2498, %v1295
      %v2580 = vsel %vm2575, %v2500, %v1297
      %v2583 = vsel %vm2575, %v2502, %v1299
      %v2586 = vsel %vm2575, %v2504, %v1301
      %v2589 = vsel %vm2575, %v2506, %v1303
      %v2592 = vsel %vm2575, %v2508, %v1305
      %v2595 = vsel %vm2575, %v2510, %v1307
      %v2598 = vsel %vm2575, %v2512, %v1309
      %v2601 = vsel %vm2575, %v2514, %v1311
      %v2604 = vsel %vm2575, %v2516, %v1313
      %v2607 = vsel %vm2575, %v2518, %v1315
      %v2610 = vsel %vm2575, %v2520, %v1317
      %v2613 = vsel %vm2575, %v2522, %v1319
      %v2616 = vsel %vm2575, %v2524, %v1321
      %v2619 = vsel %vm2575, %v2526, %v1323
      %v2622 = vsel %vm2575, %v2528, %v1325
      %v2625 = vsel %vm2575, %v2530, %v1327
      %v2628 = vsel %vm2575, %v2532, %v1329
      %v2631 = vsel %vm2575, %v2534, %v1331
      %v2634 = vsel %vm2575, %v2536, %v1333
      %v2637 = vsel %vm2575, %v2538, %v1335
      %v2640 = vsel %vm2575, %v2540, %v1337
      %v2643 = vsel %vm2575, %v2542, %v1339
      %v2646 = vsel %vm2575, %v2544, %v1341
      %v2649 = vsel %vm2575, %v2546, %v1343
      %v2652 = vsel %vm2575, %v2548, %v1345
      %v2655 = vsel %vm2575, %v2550, %v1347
      %v2658 = vsel %vm2575, %v2552, %v1349
      %v2661 = vsel %vm2575, %v2554, %v1351
      %v2664 = vsel %vm2575, %v2556, %v1353
      %v2667 = vsel %vm2575, %v2558, %v1355
      %v2670 = vsel %vm2575, %v2560, %v1357
      %v2673 = vsel %vm2575, %v2562, %v1359
      %v2676 = vsel %vm2575, %v2564, %v1361
      %v2679 = vsel %vm2575, %v2566, %v1363
      %v2682 = vsel %vm2575, %v2568, %v1365
      %v2685 = vsel %vm2575, %v2570, %v1367
      %v2688 = vsel %vm2575, %v2572, %v1369
      %v2691 = vsel %vm2575, %v2574, %v1371
      %v2695 = vsel %vm2417, %v1392, %v1819
      %v2698 = vsel %vm2417, %v1401, %v1821
      %v2701 = vsel %vm2417, %v1410, %v1823
      %v2704 = vsel %vm2417, %v1419, %v1825
      %v2707 = vsel %vm2417, %v1428, %v1827
      %v2710 = vsel %vm2417, %v1437, %v1829
      %v2713 = vsel %vm2417, %v1446, %v1831
      %v2716 = vsel %vm2417, %v1455, %v1833
      %v2719 = vsel %vm2417, %v1464, %v1835
      %v2722 = vsel %vm2417, %v1473, %v1837
      %v2725 = vsel %vm2417, %v1482, %v1839
      %v2728 = vsel %vm2417, %v1491, %v1841
      %v2731 = vsel %vm2417, %v1500, %v1843
      %v2734 = vsel %vm2417, %v1509, %v1845
      %v2737 = vsel %vm2417, %v1518, %v1847
      %v2740 = vsel %vm2417, %v1527, %v1849
      %v2743 = vsel %vm2417, %v1536, %v1851
      %v2746 = vsel %vm2417, %v1545, %v1853
      %v2749 = vsel %vm2417, %v1554, %v1855
      %v2752 = vsel %vm2417, %v1563, %v1857
      %v2755 = vsel %vm2417, %v1572, %v1859
      %v2758 = vsel %vm2417, %v1581, %v1861
      %v2761 = vsel %vm2417, %v1590, %v1863
      %v2764 = vsel %vm2417, %v1599, %v1865
      %v2767 = vsel %vm2417, %v1608, %v1867
      %v2770 = vsel %vm2417, %v1617, %v1869
      %v2773 = vsel %vm2417, %v1626, %v1871
      %v2776 = vsel %vm2417, %v1635, %v1873
      %v2779 = vsel %vm2417, %v1644, %v1875
      %v2782 = vsel %vm2417, %v1653, %v1877
      %v2785 = vsel %vm2417, %v1662, %v1879
      %v2788 = vsel %vm2417, %v1671, %v1881
      %v2791 = vsel %vm2417, %v1680, %v1883
      %v2794 = vsel %vm2417, %v1689, %v1885
      %v2797 = vsel %vm2417, %v1698, %v1887
      %v2800 = vsel %vm2417, %v1707, %v1889
      %v2803 = vsel %vm2417, %v1716, %v1891
      %v2806 = vsel %vm2417, %v1725, %v1893
      %v2809 = vsel %vm2417, %v1734, %v1895
      %v2811 = vsel %vm2496, %v2695, %v1991
      %v2813 = vsel %vm2496, %v2698, %v1993
      %v2815 = vsel %vm2496, %v2701, %v1995
      %v2817 = vsel %vm2496, %v2704, %v1997
      %v2819 = vsel %vm2496, %v2707, %v1999
      %v2821 = vsel %vm2496, %v2710, %v2001
      %v2823 = vsel %vm2496, %v2713, %v2003
      %v2825 = vsel %vm2496, %v2716, %v2005
      %v2827 = vsel %vm2496, %v2719, %v2007
      %v2829 = vsel %vm2496, %v2722, %v2009
      %v2831 = vsel %vm2496, %v2725, %v2011
      %v2833 = vsel %vm2496, %v2728, %v2013
      %v2835 = vsel %vm2496, %v2731, %v2015
      %v2837 = vsel %vm2496, %v2734, %v2017
      %v2839 = vsel %vm2496, %v2737, %v2019
      %v2841 = vsel %vm2496, %v2740, %v2021
      %v2843 = vsel %vm2496, %v2743, %v2023
      %v2845 = vsel %vm2496, %v2746, %v2025
      %v2847 = vsel %vm2496, %v2749, %v2027
      %v2849 = vsel %vm2496, %v2752, %v2029
      %v2851 = vsel %vm2496, %v2755, %v2031
      %v2853 = vsel %vm2496, %v2758, %v2033
      %v2855 = vsel %vm2496, %v2761, %v2035
      %v2857 = vsel %vm2496, %v2764, %v2037
      %v2859 = vsel %vm2496, %v2767, %v2039
      %v2861 = vsel %vm2496, %v2770, %v2041
      %v2863 = vsel %vm2496, %v2773, %v2043
      %v2865 = vsel %vm2496, %v2776, %v2045
      %v2867 = vsel %vm2496, %v2779, %v2047
      %v2869 = vsel %vm2496, %v2782, %v2049
      %v2871 = vsel %vm2496, %v2785, %v2051
      %v2873 = vsel %vm2496, %v2788, %v2053
      %v2875 = vsel %vm2496, %v2791, %v2055
      %v2877 = vsel %vm2496, %v2794, %v2057
      %v2879 = vsel %vm2496, %v2797, %v2059
      %v2881 = vsel %vm2496, %v2800, %v2061
      %v2883 = vsel %vm2496, %v2803, %v2063
      %v2885 = vsel %vm2496, %v2806, %v2065
      %v2887 = vsel %vm2496, %v2809, %v2067
      %v2889 = vsel %vm2575, %v2811, %v2257
      %v2892 = vsel %vm2575, %v2813, %v2259
      %v2895 = vsel %vm2575, %v2815, %v2261
      %v2898 = vsel %vm2575, %v2817, %v2263
      %v2901 = vsel %vm2575, %v2819, %v2265
      %v2904 = vsel %vm2575, %v2821, %v2267
      %v2907 = vsel %vm2575, %v2823, %v2269
      %v2910 = vsel %vm2575, %v2825, %v2271
      %v2913 = vsel %vm2575, %v2827, %v2273
      %v2916 = vsel %vm2575, %v2829, %v2275
      %v2919 = vsel %vm2575, %v2831, %v2277
      %v2922 = vsel %vm2575, %v2833, %v2279
      %v2925 = vsel %vm2575, %v2835, %v2281
      %v2928 = vsel %vm2575, %v2837, %v2283
      %v2931 = vsel %vm2575, %v2839, %v2285
      %v2934 = vsel %vm2575, %v2841, %v2287
      %v2937 = vsel %vm2575, %v2843, %v2289
      %v2940 = vsel %vm2575, %v2845, %v2291
      %v2943 = vsel %vm2575, %v2847, %v2293
      %v2946 = vsel %vm2575, %v2849, %v2295
      %v2949 = vsel %vm2575, %v2851, %v2297
      %v2952 = vsel %vm2575, %v2853, %v2299
      %v2955 = vsel %vm2575, %v2855, %v2301
      %v2958 = vsel %vm2575, %v2857, %v2303
      %v2961 = vsel %vm2575, %v2859, %v2305
      %v2964 = vsel %vm2575, %v2861, %v2307
      %v2967 = vsel %vm2575, %v2863, %v2309
      %v2970 = vsel %vm2575, %v2865, %v2311
      %v2973 = vsel %vm2575, %v2867, %v2313
      %v2976 = vsel %vm2575, %v2869, %v2315
      %v2979 = vsel %vm2575, %v2871, %v2317
      %v2982 = vsel %vm2575, %v2873, %v2319
      %v2985 = vsel %vm2575, %v2875, %v2321
      %v2988 = vsel %vm2575, %v2877, %v2323
      %v2991 = vsel %vm2575, %v2879, %v2325
      %v2994 = vsel %vm2575, %v2881, %v2327
      %v2997 = vsel %vm2575, %v2883, %v2329
      %v3000 = vsel %vm2575, %v2885, %v2331
      %v3003 = vsel %vm2575, %v2887, %v2333
      %v3006 = vlaneseq
      %v3007 = vshrl.u32 %v3006, 7
      %v3008 = vsub.s32 0, %v3007
      %v3009 = vrot.slane %v262, %v3008
      %v3047 = vunpack.c.l.b16 %v226
      %v3048 = vunpack.c.l.b16 %v227
      %v3049 = vunpack.c.l.b16 %v228
      %v3050 = vunpack.c.l.b16 %v229
      %v3051 = vunpack.c.l.b16 %v230
      %v3052 = vunpack.c.l.b16 %v231
      %v3053 = vunpack.c.l.b16 %v232
      %v3054 = vunpack.c.l.b16 %v233
      %v3055 = vunpack.c.l.b16 %v234
      %v3056 = vunpack.c.l.b16 %v235
      %v3057 = vunpack.c.l.b16 %v236
      %v3058 = vunpack.c.l.b16 %v237
      %v3059 = vunpack.c.l.b16 %v238
      %v3060 = vunpack.c.l.b16 %v239
      %v3061 = vunpack.c.l.b16 %v240
      %v3062 = vunpack.c.l.b16 %v241
      %v3063 = vunpack.c.l.b16 %v242
      %v3064 = vunpack.c.l.b16 %v243
      %v3065 = vunpack.c.l.b16 %v244
      %v3066 = vunpack.c.l.b16 %v245
      %v3067 = vunpack.c.l.b16 %v246
      %v3068 = vunpack.c.l.b16 %v247
      %v3069 = vunpack.c.l.b16 %v248
      %v3070 = vunpack.c.l.b16 %v249
      %v3071 = vunpack.c.l.b16 %v250
      %v3072 = vunpack.c.l.b16 %v251
      %v3073 = vunpack.c.l.b16 %v252
      %v3074 = vunpack.c.l.b16 %v253
      %v3075 = vunpack.c.l.b16 %v254
      %v3076 = vunpack.c.l.b16 %v255
      %v3077 = vunpack.c.l.b16 %v256
      %v3078 = vunpack.c.l.b16 %v257
      %v3079 = vunpack.c.l.b16 %v258
      %v3080 = vunpack.c.l.b16 %v259
      %v3081 = vunpack.c.l.b16 %v260
      %v3082 = vunpack.c.l.b16 %v261
      %v3083 = vpack.c.b16 %v3048, %v3047
      %v3084 = vpack.c.b16 %v3050, %v3049
      %v3085 = vpack.c.b16 %v3052, %v3051
      %v3086 = vpack.c.b16 %v3054, %v3053
      %v3087 = vpack.c.b16 %v3056, %v3055
      %v3088 = vpack.c.b16 %v3058, %v3057
      %v3089 = vpack.c.b16 %v3060, %v3059
      %v3090 = vpack.c.b16 %v3062, %v3061
      %v3091 = vpack.c.b16 %v3064, %v3063
      %v3092 = vpack.c.b16 %v3066, %v3065
      %v3093 = vpack.c.b16 %v3068, %v3067
      %v3094 = vpack.c.b16 %v3070, %v3069
      %v3095 = vpack.c.b16 %v3072, %v3071
      %v3096 = vpack.c.b16 %v3074, %v3073
      %v3097 = vpack.c.b16 %v3076, %v3075
      %v3098 = vpack.c.b16 %v3078, %v3077
      %v3099 = vpack.c.b16 %v3080, %v3079
      %v3100 = vpack.c.b16 %v3082, %v3081
      %v3120 = vsel %vm2417, %v2340, 0
      %v3123 = vsel %vm2417, %v2342, 0
      %v3126 = vsel %vm2417, %v2344, 0
      %v3129 = vsel %vm2417, %v2346, 0
      %v3132 = vsel %vm2417, %v2348, 0
      %v3135 = vsel %vm2417, %v2350, 0
      %v3138 = vsel %vm2417, %v2352, 0
      %v3141 = vsel %vm2417, %v2354, 0
      %v3144 = vsel %vm2417, %v2356, 0
      %v3147 = vsel %vm2417, %v2358, 0
      %v3150 = vsel %vm2417, %v2360, 0
      %v3153 = vsel %vm2417, %v2362, 0
      %v3156 = vsel %vm2417, %v2364, 0
      %v3159 = vsel %vm2417, %v2366, 0
      %v3162 = vsel %vm2417, %v2368, 0
      %v3165 = vsel %vm2417, %v2370, 0
      %v3168 = vsel %vm2417, %v2372, 0
      %v3171 = vsel %vm2417, %v2374, 0
      %v3174 = vsel %vm2417, %v2376, 0
      %v3177 = vsel %vm2417, %v2378, 0
      %v3180 = vsel %vm2417, %v2380, 0
      %v3183 = vsel %vm2417, %v2382, 0
      %v3186 = vsel %vm2417, %v2384, 0
      %v3189 = vsel %vm2417, %v2386, 0
      %v3192 = vsel %vm2417, %v2388, 0
      %v3195 = vsel %vm2417, %v2390, 0
      %v3198 = vsel %vm2417, %v2392, 0
      %v3201 = vsel %vm2417, %v2394, 0
      %v3204 = vsel %vm2417, %v2396, 0
      %v3207 = vsel %vm2417, %v2398, 0
      %v3210 = vsel %vm2417, %v2400, 0
      %v3213 = vsel %vm2417, %v2402, 0
      %v3216 = vsel %vm2417, %v2404, 0
      %v3219 = vsel %vm2417, %v2406, 0
      %v3222 = vsel %vm2417, %v2408, 0
      %v3225 = vsel %vm2417, %v2410, 0
      %v3228 = vsel %vm2417, %v2412, 0
      %v3231 = vsel %vm2417, %v2414, 0
      %v3234 = vsel %vm2417, %v2416, 0
      %3236 = vmatprep.subr.bf16.mxu0 0
      %3237 = vmatpush1.bf16.msra.mxu0 %v3083
      %3238 = vmatprep.subr.bf16.mxu0 0
      %3239 = vmatpush1.bf16.msra.mxu0 %v3084
      %3240 = vmatprep.subr.bf16.mxu0 0
      %3241 = vmatpush1.bf16.msra.mxu0 %v3085
      %3242 = vmatprep.subr.bf16.mxu0 0
      %3243 = vmatpush1.bf16.msra.mxu0 %v3086
      %3244 = vmatprep.subr.bf16.mxu0 0
      %3245 = vmatpush1.bf16.msra.mxu0 %v3087
      %3246 = vmatprep.subr.bf16.mxu0 0
      %3247 = vmatpush1.bf16.msra.mxu0 %v3088
      %3248 = vmatprep.subr.bf16.mxu0 0
      %3249 = vmatpush1.bf16.msra.mxu0 %v3089
      %3250 = vmatprep.subr.bf16.mxu0 0
      %3251 = vmatpush1.bf16.msra.mxu0 %v3090
      %3252 = vmatprep.subr.bf16.mxu0 0
      %3253 = vmatpush1.bf16.msra.mxu0 %v3091
      %3254 = vmatprep.subr.bf16.mxu0 0
      %3255 = vmatpush1.bf16.msra.mxu0 %v3092
      %3256 = vmatprep.subr.bf16.mxu0 0
      %3257 = vmatpush1.bf16.msra.mxu0 %v3093
      %3258 = vmatprep.subr.bf16.mxu0 0
      %3259 = vmatpush1.bf16.msra.mxu0 %v3094
      %3260 = vmatprep.subr.bf16.mxu0 0
      %3261 = vmatpush1.bf16.msra.mxu0 %v3095
      %3262 = vmatprep.subr.bf16.mxu0 0
      %3263 = vmatpush1.bf16.msra.mxu0 %v3096
      %3264 = vmatprep.subr.bf16.mxu0 0
      %3265 = vmatpush1.bf16.msra.mxu0 %v3097
      %3266 = vmatprep.subr.bf16.mxu0 0
      %3267 = vmatpush1.bf16.msra.mxu0 %v3098
      %3268 = vmatprep.mubr.bf16.mxu0 %v2889
      %3269 = vmatmul.mubr.bf16.gmra.mrb[0].mxu0 %v2577
      %v3270 = vpop.f32.mrb[0].mxu0
      %v3271 = vadd.f32 %v3009, %v3270
      %v3272 = vpop.f32.mrb[0].mxu0
      %v3273 = vpop.f32.mrb[0].mxu0
      %v3274 = vadd.f32 %v3009, %v3273
      %v3275 = vpop.f32.mrb[0].mxu0
      %3276 = vmatprep.mubr.bf16.mxu0 %v2892
      %3277 = vmatmul.mubr.bf16.gmra.mrb[0].mxu0 %v2580
      %v3278 = vpop.f32.mrb[0].mxu0
      %v3279 = vadd.f32 %v3009, %v3278
      %v3280 = vpop.f32.mrb[0].mxu0
      %v3281 = vpop.f32.mrb[0].mxu0
      %v3282 = vadd.f32 %v3009, %v3281
      %v3283 = vpop.f32.mrb[0].mxu0
      %3284 = vmatprep.mubr.bf16.mxu0 %v2895
      %3285 = vmatmul.mubr.bf16.gmra.mrb[0].mxu0 %v2583
      %v3286 = vpop.f32.mrb[0].mxu0
      %v3287 = vadd.f32 %v3009, %v3286
      %v3288 = vpop.f32.mrb[0].mxu0
      %v3289 = vpop.f32.mrb[0].mxu0
      %v3290 = vadd.f32 %v3009, %v3289
      %v3291 = vpop.f32.mrb[0].mxu0
      %3292 = vmatprep.mubr.bf16.mxu0 %v2898
      %3293 = vmatmul.mubr.bf16.gmra.mrb[0].mxu0 %v2586
      %v3294 = vpop.f32.mrb[0].mxu0
      %v3295 = vadd.f32 %v3009, %v3294
      %v3296 = vpop.f32.mrb[0].mxu0
      %v3297 = vpop.f32.mrb[0].mxu0
      %v3298 = vadd.f32 %v3009, %v3297
      %v3299 = vpop.f32.mrb[0].mxu0
      %3300 = vmatprep.mubr.bf16.mxu0 %v2901
      %3301 = vmatmul.mubr.bf16.gmra.mrb[0].mxu0 %v2589
      %v3302 = vpop.f32.mrb[0].mxu0
      %v3303 = vadd.f32 %v3009, %v3302
      %v3304 = vpop.f32.mrb[0].mxu0
      %v3305 = vpop.f32.mrb[0].mxu0
      %v3306 = vadd.f32 %v3009, %v3305
      %v3307 = vpop.f32.mrb[0].mxu0
      %3308 = vmatprep.mubr.bf16.mxu0 %v2904
      %3309 = vmatmul.mubr.bf16.gmra.mrb[0].mxu0 %v2592
      %v3310 = vpop.f32.mrb[0].mxu0
      %v3311 = vadd.f32 %v3009, %v3310
      %v3312 = vpop.f32.mrb[0].mxu0
      %v3313 = vpop.f32.mrb[0].mxu0
      %v3314 = vadd.f32 %v3009, %v3313
      %v3315 = vpop.f32.mrb[0].mxu0
      %3316 = vmatprep.mubr.bf16.mxu0 %v2907
      %3317 = vmatmul.mubr.bf16.gmra.mrb[0].mxu0 %v2595
      %v3318 = vpop.f32.mrb[0].mxu0
      %v3319 = vadd.f32 %v3009, %v3318
      %v3320 = vpop.f32.mrb[0].mxu0
      %v3321 = vpop.f32.mrb[0].mxu0
      %v3322 = vadd.f32 %v3009, %v3321
      %v3323 = vpop.f32.mrb[0].mxu0
      %3324 = vmatprep.mubr.bf16.mxu0 %v2910
      %3325 = vmatmul.mubr.bf16.gmra.mrb[0].mxu0 %v2598
      %v3326 = vpop.f32.mrb[0].mxu0
      %v3327 = vadd.f32 %v3009, %v3326
      %v3328 = vpop.f32.mrb[0].mxu0
      %v3329 = vpop.f32.mrb[0].mxu0
      %v3330 = vadd.f32 %v3009, %v3329
      %v3331 = vpop.f32.mrb[0].mxu0
      %3332 = vmatprep.mubr.bf16.mxu0 %v2913
      %3333 = vmatmul.mubr.bf16.gmra.mrb[0].mxu0 %v2601
      %v3334 = vpop.f32.mrb[0].mxu0
      %v3335 = vadd.f32 %v3009, %v3334
      %v3336 = vpop.f32.mrb[0].mxu0
      %v3337 = vpop.f32.mrb[0].mxu0
      %v3338 = vadd.f32 %v3009, %v3337
      %v3339 = vpop.f32.mrb[0].mxu0
      %3340 = vmatprep.mubr.bf16.mxu0 %v2916
      %3341 = vmatmul.mubr.bf16.gmra.mrb[0].mxu0 %v2604
      %v3342 = vpop.f32.mrb[0].mxu0
      %v3343 = vadd.f32 %v3009, %v3342
      %v3344 = vpop.f32.mrb[0].mxu0
      %v3345 = vpop.f32.mrb[0].mxu0
      %v3346 = vadd.f32 %v3009, %v3345
      %v3347 = vpop.f32.mrb[0].mxu0
      %3348 = vmatprep.mubr.bf16.mxu0 %v2919
      %3349 = vmatmul.mubr.bf16.gmra.mrb[0].mxu0 %v2607
      %v3350 = vpop.f32.mrb[0].mxu0
      %v3351 = vadd.f32 %v3009, %v3350
      %v3352 = vpop.f32.mrb[0].mxu0
      %v3353 = vpop.f32.mrb[0].mxu0
      %v3354 = vadd.f32 %v3009, %v3353
      %v3355 = vpop.f32.mrb[0].mxu0
      %3356 = vmatprep.mubr.bf16.mxu0 %v2922
      %3357 = vmatmul.mubr.bf16.gmra.mrb[0].mxu0 %v2610
      %v3358 = vpop.f32.mrb[0].mxu0
      %v3359 = vadd.f32 %v3009, %v3358
      %v3360 = vpop.f32.mrb[0].mxu0
      %v3361 = vpop.f32.mrb[0].mxu0
      %v3362 = vadd.f32 %v3009, %v3361
      %v3363 = vpop.f32.mrb[0].mxu0
      %3364 = vmatprep.mubr.bf16.mxu0 %v2925
      %3365 = vmatmul.mubr.bf16.gmra.mrb[0].mxu0 %v2613
      %v3366 = vpop.f32.mrb[0].mxu0
      %v3367 = vadd.f32 %v3009, %v3366
      %v3368 = vpop.f32.mrb[0].mxu0
      %v3369 = vpop.f32.mrb[0].mxu0
      %v3370 = vadd.f32 %v3009, %v3369
      %v3371 = vpop.f32.mrb[0].mxu0
      %3372 = vmatprep.mubr.bf16.mxu0 %v2928
      %3373 = vmatmul.mubr.bf16.gmra.mrb[0].mxu0 %v2616
      %v3374 = vpop.f32.mrb[0].mxu0
      %v3375 = vadd.f32 %v3009, %v3374
      %v3376 = vpop.f32.mrb[0].mxu0
      %v3377 = vpop.f32.mrb[0].mxu0
      %v3378 = vadd.f32 %v3009, %v3377
      %v3379 = vpop.f32.mrb[0].mxu0
      %3380 = vmatprep.mubr.bf16.mxu0 %v2931
      %3381 = vmatmul.mubr.bf16.gmra.mrb[0].mxu0 %v2619
      %v3382 = vpop.f32.mrb[0].mxu0
      %v3383 = vadd.f32 %v3009, %v3382
      %v3384 = vpop.f32.mrb[0].mxu0
      %v3385 = vpop.f32.mrb[0].mxu0
      %v3386 = vadd.f32 %v3009, %v3385
      %v3387 = vpop.f32.mrb[0].mxu0
      %3388 = vmatprep.mubr.bf16.mxu0 %v2934
      %3389 = vmatmul.mubr.bf16.gmra.mrb[0].mxu0 %v2622
      %v3390 = vpop.f32.mrb[0].mxu0
      %v3391 = vadd.f32 %v3009, %v3390
      %v3392 = vpop.f32.mrb[0].mxu0
      %v3393 = vpop.f32.mrb[0].mxu0
      %v3394 = vadd.f32 %v3009, %v3393
      %v3395 = vpop.f32.mrb[0].mxu0
      %3396 = vmatprep.mubr.bf16.mxu0 %v2937
      %3397 = vmatmul.mubr.bf16.gmra.mrb[0].mxu0 %v2625
      %v3398 = vpop.f32.mrb[0].mxu0
      %v3399 = vadd.f32 %v3009, %v3398
      %v3400 = vpop.f32.mrb[0].mxu0
      %v3401 = vpop.f32.mrb[0].mxu0
      %v3402 = vadd.f32 %v3009, %v3401
      %v3403 = vpop.f32.mrb[0].mxu0
      %3404 = vmatprep.mubr.bf16.mxu0 %v2940
      %3405 = vmatmul.mubr.bf16.gmra.mrb[0].mxu0 %v2628
      %v3406 = vpop.f32.mrb[0].mxu0
      %v3407 = vadd.f32 %v3009, %v3406
      %v3408 = vpop.f32.mrb[0].mxu0
      %v3409 = vpop.f32.mrb[0].mxu0
      %v3410 = vadd.f32 %v3009, %v3409
      %v3411 = vpop.f32.mrb[0].mxu0
      %3412 = vmatprep.mubr.bf16.mxu0 %v2943
      %3413 = vmatmul.mubr.bf16.gmra.mrb[0].mxu0 %v2631
      %v3414 = vpop.f32.mrb[0].mxu0
      %v3415 = vadd.f32 %v3009, %v3414
      %v3416 = vpop.f32.mrb[0].mxu0
      %v3417 = vpop.f32.mrb[0].mxu0
      %v3418 = vadd.f32 %v3009, %v3417
      %v3419 = vpop.f32.mrb[0].mxu0
      %3420 = vmatprep.mubr.bf16.mxu0 %v2946
      %3421 = vmatmul.mubr.bf16.gmra.mrb[0].mxu0 %v2634
      %v3422 = vpop.f32.mrb[0].mxu0
      %v3423 = vadd.f32 %v3009, %v3422
      %v3424 = vpop.f32.mrb[0].mxu0
      %v3425 = vpop.f32.mrb[0].mxu0
      %v3426 = vadd.f32 %v3009, %v3425
      %v3427 = vpop.f32.mrb[0].mxu0
      %3428 = vmatprep.mubr.bf16.mxu0 %v2949
      %3429 = vmatmul.mubr.bf16.gmra.mrb[0].mxu0 %v2637
      %v3430 = vpop.f32.mrb[0].mxu0
      %v3431 = vadd.f32 %v3009, %v3430
      %v3432 = vpop.f32.mrb[0].mxu0
      %v3433 = vpop.f32.mrb[0].mxu0
      %v3434 = vadd.f32 %v3009, %v3433
      %v3435 = vpop.f32.mrb[0].mxu0
      %3436 = vmatprep.mubr.bf16.mxu0 %v2952
      %3437 = vmatmul.mubr.bf16.gmra.mrb[0].mxu0 %v2640
      %v3438 = vpop.f32.mrb[0].mxu0
      %v3439 = vadd.f32 %v3009, %v3438
      %v3440 = vpop.f32.mrb[0].mxu0
      %v3441 = vpop.f32.mrb[0].mxu0
      %v3442 = vadd.f32 %v3009, %v3441
      %v3443 = vpop.f32.mrb[0].mxu0
      %3444 = vmatprep.mubr.bf16.mxu0 %v2955
      %3445 = vmatmul.mubr.bf16.gmra.mrb[0].mxu0 %v2643
      %v3446 = vpop.f32.mrb[0].mxu0
      %v3447 = vadd.f32 %v3009, %v3446
      %v3448 = vpop.f32.mrb[0].mxu0
      %v3449 = vpop.f32.mrb[0].mxu0
      %v3450 = vadd.f32 %v3009, %v3449
      %v3451 = vpop.f32.mrb[0].mxu0
      %3452 = vmatprep.mubr.bf16.mxu0 %v2958
      %3453 = vmatmul.mubr.bf16.gmra.mrb[0].mxu0 %v2646
      %v3454 = vpop.f32.mrb[0].mxu0
      %v3455 = vadd.f32 %v3009, %v3454
      %v3456 = vpop.f32.mrb[0].mxu0
      %v3457 = vpop.f32.mrb[0].mxu0
      %v3458 = vadd.f32 %v3009, %v3457
      %v3459 = vpop.f32.mrb[0].mxu0
      %3460 = vmatprep.mubr.bf16.mxu0 %v2961
      %3461 = vmatmul.mubr.bf16.gmra.mrb[0].mxu0 %v2649
      %v3462 = vpop.f32.mrb[0].mxu0
      %v3463 = vadd.f32 %v3009, %v3462
      %v3464 = vpop.f32.mrb[0].mxu0
      %v3465 = vpop.f32.mrb[0].mxu0
      %v3466 = vadd.f32 %v3009, %v3465
      %v3467 = vpop.f32.mrb[0].mxu0
      %3468 = vmatprep.mubr.bf16.mxu0 %v2964
      %3469 = vmatmul.mubr.bf16.gmra.mrb[0].mxu0 %v2652
      %v3470 = vpop.f32.mrb[0].mxu0
      %v3471 = vadd.f32 %v3009, %v3470
      %v3472 = vpop.f32.mrb[0].mxu0
      %v3473 = vpop.f32.mrb[0].mxu0
      %v3474 = vadd.f32 %v3009, %v3473
      %v3475 = vpop.f32.mrb[0].mxu0
      %3476 = vmatprep.mubr.bf16.mxu0 %v2967
      %3477 = vmatmul.mubr.bf16.gmra.mrb[0].mxu0 %v2655
      %v3478 = vpop.f32.mrb[0].mxu0
      %v3479 = vadd.f32 %v3009, %v3478
      %v3480 = vpop.f32.mrb[0].mxu0
      %v3481 = vpop.f32.mrb[0].mxu0
      %v3482 = vadd.f32 %v3009, %v3481
      %v3483 = vpop.f32.mrb[0].mxu0
      %3484 = vmatprep.mubr.bf16.mxu0 %v2970
      %3485 = vmatmul.mubr.bf16.gmra.mrb[0].mxu0 %v2658
      %v3486 = vpop.f32.mrb[0].mxu0
      %v3487 = vadd.f32 %v3009, %v3486
      %v3488 = vpop.f32.mrb[0].mxu0
      %v3489 = vpop.f32.mrb[0].mxu0
      %v3490 = vadd.f32 %v3009, %v3489
      %v3491 = vpop.f32.mrb[0].mxu0
      %3492 = vmatprep.mubr.bf16.mxu0 %v2973
      %3493 = vmatmul.mubr.bf16.gmra.mrb[0].mxu0 %v2661
      %v3494 = vpop.f32.mrb[0].mxu0
      %v3495 = vadd.f32 %v3009, %v3494
      %v3496 = vpop.f32.mrb[0].mxu0
      %v3497 = vpop.f32.mrb[0].mxu0
      %v3498 = vadd.f32 %v3009, %v3497
      %v3499 = vpop.f32.mrb[0].mxu0
      %3500 = vmatprep.mubr.bf16.mxu0 %v2976
      %3501 = vmatmul.mubr.bf16.gmra.mrb[0].mxu0 %v2664
      %v3502 = vpop.f32.mrb[0].mxu0
      %v3503 = vadd.f32 %v3009, %v3502
      %v3504 = vpop.f32.mrb[0].mxu0
      %v3505 = vpop.f32.mrb[0].mxu0
      %v3506 = vadd.f32 %v3009, %v3505
      %v3507 = vpop.f32.mrb[0].mxu0
      %3508 = vmatprep.mubr.bf16.mxu0 %v2979
      %3509 = vmatmul.mubr.bf16.gmra.mrb[0].mxu0 %v2667
      %v3510 = vpop.f32.mrb[0].mxu0
      %v3511 = vadd.f32 %v3009, %v3510
      %v3512 = vpop.f32.mrb[0].mxu0
      %v3513 = vpop.f32.mrb[0].mxu0
      %v3514 = vadd.f32 %v3009, %v3513
      %v3515 = vpop.f32.mrb[0].mxu0
      %3516 = vmatprep.mubr.bf16.mxu0 %v2982
      %3517 = vmatmul.mubr.bf16.gmra.mrb[0].mxu0 %v2670
      %v3518 = vpop.f32.mrb[0].mxu0
      %v3519 = vadd.f32 %v3009, %v3518
      %v3520 = vpop.f32.mrb[0].mxu0
      %v3521 = vpop.f32.mrb[0].mxu0
      %v3522 = vadd.f32 %v3009, %v3521
      %v3523 = vpop.f32.mrb[0].mxu0
      %3524 = vmatprep.mubr.bf16.mxu0 %v2985
      %3525 = vmatmul.mubr.bf16.gmra.mrb[0].mxu0 %v2673
      %v3526 = vpop.f32.mrb[0].mxu0
      %v3527 = vadd.f32 %v3009, %v3526
      %v3528 = vpop.f32.mrb[0].mxu0
      %v3529 = vpop.f32.mrb[0].mxu0
      %v3530 = vadd.f32 %v3009, %v3529
      %v3531 = vpop.f32.mrb[0].mxu0
      %3532 = vmatprep.mubr.bf16.mxu0 %v2988
      %3533 = vmatmul.mubr.bf16.gmra.mrb[0].mxu0 %v2676
      %v3534 = vpop.f32.mrb[0].mxu0
      %v3535 = vadd.f32 %v3009, %v3534
      %v3536 = vpop.f32.mrb[0].mxu0
      %v3537 = vpop.f32.mrb[0].mxu0
      %v3538 = vadd.f32 %v3009, %v3537
      %v3539 = vpop.f32.mrb[0].mxu0
      %3540 = vmatprep.mubr.bf16.mxu0 %v2991
      %3541 = vmatmul.mubr.bf16.gmra.mrb[0].mxu0 %v2679
      %v3542 = vpop.f32.mrb[0].mxu0
      %v3543 = vadd.f32 %v3009, %v3542
      %v3544 = vpop.f32.mrb[0].mxu0
      %v3545 = vpop.f32.mrb[0].mxu0
      %v3546 = vadd.f32 %v3009, %v3545
      %v3547 = vpop.f32.mrb[0].mxu0
      %3548 = vmatprep.mubr.bf16.mxu0 %v2994
      %3549 = vmatmul.mubr.bf16.gmra.mrb[0].mxu0 %v2682
      %v3550 = vpop.f32.mrb[0].mxu0
      %v3551 = vadd.f32 %v3009, %v3550
      %v3552 = vpop.f32.mrb[0].mxu0
      %v3553 = vpop.f32.mrb[0].mxu0
      %v3554 = vadd.f32 %v3009, %v3553
      %v3555 = vpop.f32.mrb[0].mxu0
      %3556 = vmatprep.mubr.bf16.mxu0 %v2997
      %3557 = vmatmul.mubr.bf16.gmra.mrb[0].mxu0 %v2685
      %v3558 = vpop.f32.mrb[0].mxu0
      %v3559 = vadd.f32 %v3009, %v3558
      %v3560 = vpop.f32.mrb[0].mxu0
      %v3561 = vpop.f32.mrb[0].mxu0
      %v3562 = vadd.f32 %v3009, %v3561
      %v3563 = vpop.f32.mrb[0].mxu0
      %3564 = vmatprep.mubr.bf16.mxu0 %v3000
      %3565 = vmatmul.mubr.bf16.gmra.mrb[0].mxu0 %v2688
      %v3566 = vpop.f32.mrb[0].mxu0
      %v3567 = vadd.f32 %v3009, %v3566
      %v3568 = vpop.f32.mrb[0].mxu0
      %v3569 = vpop.f32.mrb[0].mxu0
      %v3570 = vadd.f32 %v3009, %v3569
      %v3571 = vpop.f32.mrb[0].mxu0
      %3572 = vmatprep.mubr.bf16.mxu0 %v3003
      %3573 = vmatmul.mubr.bf16.gmra.mrb[0].mxu0 %v2691
      %v3574 = vpop.f32.mrb[0].mxu0
      %v3575 = vadd.f32 %v3009, %v3574
      %v3576 = vpop.f32.mrb[0].mxu0
      %v3577 = vpop.f32.mrb[0].mxu0
      %v3578 = vadd.f32 %v3009, %v3577
      %v3579 = vpop.f32.mrb[0].mxu0
      %3580 = vdwg.mxu0
      %3581 = vmatprep.subr.bf16.mxu0 0
      %3582 = vmatpush1.bf16.msra.mxu0 %v3099
      %3583 = vmatprep.subr.bf16.mxu0 0
      %3584 = vmatpush1.bf16.msra.mxu0 %v3100
      %3585 = vmatprep.subr.bf16.mxu0 0
      %3586 = vmatpush1.bf16.msra.mxu0 0
      %3587 = vmatprep.subr.bf16.mxu0 0
      %3588 = vmatpush1.bf16.msra.mxu0 0
      %3589 = vmatprep.subr.bf16.mxu0 0
      %3590 = vmatpush1.bf16.msra.mxu0 0
      %3591 = vmatprep.subr.bf16.mxu0 0
      %3592 = vmatpush1.bf16.msra.mxu0 0
      %3593 = vmatprep.subr.bf16.mxu0 0
      %3594 = vmatpush1.bf16.msra.mxu0 0
      %3595 = vmatprep.subr.bf16.mxu0 0
      %3596 = vmatpush1.bf16.msra.mxu0 0
      %3597 = vmatprep.subr.bf16.mxu0 0
      %3598 = vmatpush1.bf16.msra.mxu0 0
      %3599 = vmatprep.subr.bf16.mxu0 0
      %3600 = vmatpush1.bf16.msra.mxu0 0
      %3601 = vmatprep.subr.bf16.mxu0 0
      %3602 = vmatpush1.bf16.msra.mxu0 0
      %3603 = vmatprep.subr.bf16.mxu0 0
      %3604 = vmatpush1.bf16.msra.mxu0 0
      %3605 = vmatprep.subr.bf16.mxu0 0
      %3606 = vmatpush1.bf16.msra.mxu0 0
      %3607 = vmatprep.subr.bf16.mxu0 0
      %3608 = vmatpush1.bf16.msra.mxu0 0
      %3609 = vmatprep.subr.bf16.mxu0 0
      %3610 = vmatpush1.bf16.msra.mxu0 0
      %3611 = vmatprep.subr.bf16.mxu0 0
      %3612 = vmatpush1.bf16.msra.mxu0 0
      %3613 = vmatprep.mubr.bf16.mxu0 0
      %3614 = vmatmul.mubr.bf16.gmra.mrb[0].mxu0 %v3120
      %v3615 = vpop.f32.mrb[0].mxu0
      %v3616 = vadd.f32 %v3271, %v3615
      %v3617 = vpop.f32.mrb[0].mxu0
      %v3618 = vpop.f32.mrb[0].mxu0
      %v3619 = vadd.f32 %v3274, %v3618
      %v3620 = vpop.f32.mrb[0].mxu0
      %3621 = vmatprep.mubr.bf16.mxu0 0
      %3622 = vmatmul.mubr.bf16.gmra.mrb[0].mxu0 %v3123
      %v3623 = vpop.f32.mrb[0].mxu0
      %v3624 = vadd.f32 %v3279, %v3623
      %v3625 = vpop.f32.mrb[0].mxu0
      %v3626 = vpop.f32.mrb[0].mxu0
      %v3627 = vadd.f32 %v3282, %v3626
      %v3628 = vpop.f32.mrb[0].mxu0
      %3629 = vmatprep.mubr.bf16.mxu0 0
      %3630 = vmatmul.mubr.bf16.gmra.mrb[0].mxu0 %v3126
      %v3631 = vpop.f32.mrb[0].mxu0
      %v3632 = vadd.f32 %v3287, %v3631
      %v3633 = vpop.f32.mrb[0].mxu0
      %v3634 = vpop.f32.mrb[0].mxu0
      %v3635 = vadd.f32 %v3290, %v3634
      %v3636 = vpop.f32.mrb[0].mxu0
      %3637 = vmatprep.mubr.bf16.mxu0 0
      %3638 = vmatmul.mubr.bf16.gmra.mrb[0].mxu0 %v3129
      %v3639 = vpop.f32.mrb[0].mxu0
      %v3640 = vadd.f32 %v3295, %v3639
      %v3641 = vpop.f32.mrb[0].mxu0
      %v3642 = vpop.f32.mrb[0].mxu0
      %v3643 = vadd.f32 %v3298, %v3642
      %v3644 = vpop.f32.mrb[0].mxu0
      %3645 = vmatprep.mubr.bf16.mxu0 0
      %3646 = vmatmul.mubr.bf16.gmra.mrb[0].mxu0 %v3132
      %v3647 = vpop.f32.mrb[0].mxu0
      %v3648 = vadd.f32 %v3303, %v3647
      %v3649 = vpop.f32.mrb[0].mxu0
      %v3650 = vpop.f32.mrb[0].mxu0
      %v3651 = vadd.f32 %v3306, %v3650
      %v3652 = vpop.f32.mrb[0].mxu0
      %3653 = vmatprep.mubr.bf16.mxu0 0
      %3654 = vmatmul.mubr.bf16.gmra.mrb[0].mxu0 %v3135
      %v3655 = vpop.f32.mrb[0].mxu0
      %v3656 = vadd.f32 %v3311, %v3655
      %v3657 = vpop.f32.mrb[0].mxu0
      %v3658 = vpop.f32.mrb[0].mxu0
      %v3659 = vadd.f32 %v3314, %v3658
      %v3660 = vpop.f32.mrb[0].mxu0
      %3661 = vmatprep.mubr.bf16.mxu0 0
      %3662 = vmatmul.mubr.bf16.gmra.mrb[0].mxu0 %v3138
      %v3663 = vpop.f32.mrb[0].mxu0
      %v3664 = vadd.f32 %v3319, %v3663
      %v3665 = vpop.f32.mrb[0].mxu0
      %v3666 = vpop.f32.mrb[0].mxu0
      %v3667 = vadd.f32 %v3322, %v3666
      %v3668 = vpop.f32.mrb[0].mxu0
      %3669 = vmatprep.mubr.bf16.mxu0 0
      %3670 = vmatmul.mubr.bf16.gmra.mrb[0].mxu0 %v3141
      %v3671 = vpop.f32.mrb[0].mxu0
      %v3672 = vadd.f32 %v3327, %v3671
      %v3673 = vpop.f32.mrb[0].mxu0
      %v3674 = vpop.f32.mrb[0].mxu0
      %v3675 = vadd.f32 %v3330, %v3674
      %v3676 = vpop.f32.mrb[0].mxu0
      %3677 = vmatprep.mubr.bf16.mxu0 0
      %3678 = vmatmul.mubr.bf16.gmra.mrb[0].mxu0 %v3144
      %v3679 = vpop.f32.mrb[0].mxu0
      %v3680 = vadd.f32 %v3335, %v3679
      %v3681 = vpop.f32.mrb[0].mxu0
      %v3682 = vpop.f32.mrb[0].mxu0
      %v3683 = vadd.f32 %v3338, %v3682
      %v3684 = vpop.f32.mrb[0].mxu0
      %3685 = vmatprep.mubr.bf16.mxu0 0
      %3686 = vmatmul.mubr.bf16.gmra.mrb[0].mxu0 %v3147
      %v3687 = vpop.f32.mrb[0].mxu0
      %v3688 = vadd.f32 %v3343, %v3687
      %v3689 = vpop.f32.mrb[0].mxu0
      %v3690 = vpop.f32.mrb[0].mxu0
      %v3691 = vadd.f32 %v3346, %v3690
      %v3692 = vpop.f32.mrb[0].mxu0
      %3693 = vmatprep.mubr.bf16.mxu0 0
      %3694 = vmatmul.mubr.bf16.gmra.mrb[0].mxu0 %v3150
      %v3695 = vpop.f32.mrb[0].mxu0
      %v3696 = vadd.f32 %v3351, %v3695
      %v3697 = vpop.f32.mrb[0].mxu0
      %v3698 = vpop.f32.mrb[0].mxu0
      %v3699 = vadd.f32 %v3354, %v3698
      %v3700 = vpop.f32.mrb[0].mxu0
      %3701 = vmatprep.mubr.bf16.mxu0 0
      %3702 = vmatmul.mubr.bf16.gmra.mrb[0].mxu0 %v3153
      %v3703 = vpop.f32.mrb[0].mxu0
      %v3704 = vadd.f32 %v3359, %v3703
      %v3705 = vpop.f32.mrb[0].mxu0
      %v3706 = vpop.f32.mrb[0].mxu0
      %v3707 = vadd.f32 %v3362, %v3706
      %v3708 = vpop.f32.mrb[0].mxu0
      %3709 = vmatprep.mubr.bf16.mxu0 0
      %3710 = vmatmul.mubr.bf16.gmra.mrb[0].mxu0 %v3156
      %v3711 = vpop.f32.mrb[0].mxu0
      %v3712 = vadd.f32 %v3367, %v3711
      %v3713 = vpop.f32.mrb[0].mxu0
      %v3714 = vpop.f32.mrb[0].mxu0
      %v3715 = vadd.f32 %v3370, %v3714
      %v3716 = vpop.f32.mrb[0].mxu0
      %3717 = vmatprep.mubr.bf16.mxu0 0
      %3718 = vmatmul.mubr.bf16.gmra.mrb[0].mxu0 %v3159
      %v3719 = vpop.f32.mrb[0].mxu0
      %v3720 = vadd.f32 %v3375, %v3719
      %v3721 = vpop.f32.mrb[0].mxu0
      %v3722 = vpop.f32.mrb[0].mxu0
      %v3723 = vadd.f32 %v3378, %v3722
      %v3724 = vpop.f32.mrb[0].mxu0
      %3725 = vmatprep.mubr.bf16.mxu0 0
      %3726 = vmatmul.mubr.bf16.gmra.mrb[0].mxu0 %v3162
      %v3727 = vpop.f32.mrb[0].mxu0
      %v3728 = vadd.f32 %v3383, %v3727
      %v3729 = vpop.f32.mrb[0].mxu0
      %v3730 = vpop.f32.mrb[0].mxu0
      %v3731 = vadd.f32 %v3386, %v3730
      %v3732 = vpop.f32.mrb[0].mxu0
      %3733 = vmatprep.mubr.bf16.mxu0 0
      %3734 = vmatmul.mubr.bf16.gmra.mrb[0].mxu0 %v3165
      %v3735 = vpop.f32.mrb[0].mxu0
      %v3736 = vadd.f32 %v3391, %v3735
      %v3737 = vpop.f32.mrb[0].mxu0
      %v3738 = vpop.f32.mrb[0].mxu0
      %v3739 = vadd.f32 %v3394, %v3738
      %v3740 = vpop.f32.mrb[0].mxu0
      %3741 = vmatprep.mubr.bf16.mxu0 0
      %3742 = vmatmul.mubr.bf16.gmra.mrb[0].mxu0 %v3168
      %v3743 = vpop.f32.mrb[0].mxu0
      %v3744 = vadd.f32 %v3399, %v3743
      %v3745 = vpop.f32.mrb[0].mxu0
      %v3746 = vpop.f32.mrb[0].mxu0
      %v3747 = vadd.f32 %v3402, %v3746
      %v3748 = vpop.f32.mrb[0].mxu0
      %3749 = vmatprep.mubr.bf16.mxu0 0
      %3750 = vmatmul.mubr.bf16.gmra.mrb[0].mxu0 %v3171
      %v3751 = vpop.f32.mrb[0].mxu0
      %v3752 = vadd.f32 %v3407, %v3751
      %v3753 = vpop.f32.mrb[0].mxu0
      %v3754 = vpop.f32.mrb[0].mxu0
      %v3755 = vadd.f32 %v3410, %v3754
      %v3756 = vpop.f32.mrb[0].mxu0
      %3757 = vmatprep.mubr.bf16.mxu0 0
      %3758 = vmatmul.mubr.bf16.gmra.mrb[0].mxu0 %v3174
      %v3759 = vpop.f32.mrb[0].mxu0
      %v3760 = vadd.f32 %v3415, %v3759
      %v3761 = vpop.f32.mrb[0].mxu0
      %v3762 = vpop.f32.mrb[0].mxu0
      %v3763 = vadd.f32 %v3418, %v3762
      %v3764 = vpop.f32.mrb[0].mxu0
      %3765 = vmatprep.mubr.bf16.mxu0 0
      %3766 = vmatmul.mubr.bf16.gmra.mrb[0].mxu0 %v3177
      %v3767 = vpop.f32.mrb[0].mxu0
      %v3768 = vadd.f32 %v3423, %v3767
      %v3769 = vpop.f32.mrb[0].mxu0
      %v3770 = vpop.f32.mrb[0].mxu0
      %v3771 = vadd.f32 %v3426, %v3770
      %v3772 = vpop.f32.mrb[0].mxu0
      %3773 = vmatprep.mubr.bf16.mxu0 0
      %3774 = vmatmul.mubr.bf16.gmra.mrb[0].mxu0 %v3180
      %v3775 = vpop.f32.mrb[0].mxu0
      %v3776 = vadd.f32 %v3431, %v3775
      %v3777 = vpop.f32.mrb[0].mxu0
      %v3778 = vpop.f32.mrb[0].mxu0
      %v3779 = vadd.f32 %v3434, %v3778
      %v3780 = vpop.f32.mrb[0].mxu0
      %3781 = vmatprep.mubr.bf16.mxu0 0
      %3782 = vmatmul.mubr.bf16.gmra.mrb[0].mxu0 %v3183
      %v3783 = vpop.f32.mrb[0].mxu0
      %v3784 = vadd.f32 %v3439, %v3783
      %v3785 = vpop.f32.mrb[0].mxu0
      %v3786 = vpop.f32.mrb[0].mxu0
      %v3787 = vadd.f32 %v3442, %v3786
      %v3788 = vpop.f32.mrb[0].mxu0
      %3789 = vmatprep.mubr.bf16.mxu0 0
      %3790 = vmatmul.mubr.bf16.gmra.mrb[0].mxu0 %v3186
      %v3791 = vpop.f32.mrb[0].mxu0
      %v3792 = vadd.f32 %v3447, %v3791
      %v3793 = vpop.f32.mrb[0].mxu0
      %v3794 = vpop.f32.mrb[0].mxu0
      %v3795 = vadd.f32 %v3450, %v3794
      %v3796 = vpop.f32.mrb[0].mxu0
      %3797 = vmatprep.mubr.bf16.mxu0 0
      %3798 = vmatmul.mubr.bf16.gmra.mrb[0].mxu0 %v3189
      %v3799 = vpop.f32.mrb[0].mxu0
      %v3800 = vadd.f32 %v3455, %v3799
      %v3801 = vpop.f32.mrb[0].mxu0
      %v3802 = vpop.f32.mrb[0].mxu0
      %v3803 = vadd.f32 %v3458, %v3802
      %v3804 = vpop.f32.mrb[0].mxu0
      %3805 = vmatprep.mubr.bf16.mxu0 0
      %3806 = vmatmul.mubr.bf16.gmra.mrb[0].mxu0 %v3192
      %v3807 = vpop.f32.mrb[0].mxu0
      %v3808 = vadd.f32 %v3463, %v3807
      %v3809 = vpop.f32.mrb[0].mxu0
      %v3810 = vpop.f32.mrb[0].mxu0
      %v3811 = vadd.f32 %v3466, %v3810
      %v3812 = vpop.f32.mrb[0].mxu0
      %3813 = vmatprep.mubr.bf16.mxu0 0
      %3814 = vmatmul.mubr.bf16.gmra.mrb[0].mxu0 %v3195
      %v3815 = vpop.f32.mrb[0].mxu0
      %v3816 = vadd.f32 %v3471, %v3815
      %v3817 = vpop.f32.mrb[0].mxu0
      %v3818 = vpop.f32.mrb[0].mxu0
      %v3819 = vadd.f32 %v3474, %v3818
      %v3820 = vpop.f32.mrb[0].mxu0
      %3821 = vmatprep.mubr.bf16.mxu0 0
      %3822 = vmatmul.mubr.bf16.gmra.mrb[0].mxu0 %v3198
      %v3823 = vpop.f32.mrb[0].mxu0
      %v3824 = vadd.f32 %v3479, %v3823
      %v3825 = vpop.f32.mrb[0].mxu0
      %v3826 = vpop.f32.mrb[0].mxu0
      %v3827 = vadd.f32 %v3482, %v3826
      %v3828 = vpop.f32.mrb[0].mxu0
      %3829 = vmatprep.mubr.bf16.mxu0 0
      %3830 = vmatmul.mubr.bf16.gmra.mrb[0].mxu0 %v3201
      %v3831 = vpop.f32.mrb[0].mxu0
      %v3832 = vadd.f32 %v3487, %v3831
      %v3833 = vpop.f32.mrb[0].mxu0
      %v3834 = vpop.f32.mrb[0].mxu0
      %v3835 = vadd.f32 %v3490, %v3834
      %v3836 = vpop.f32.mrb[0].mxu0
      %3837 = vmatprep.mubr.bf16.mxu0 0
      %3838 = vmatmul.mubr.bf16.gmra.mrb[0].mxu0 %v3204
      %v3839 = vpop.f32.mrb[0].mxu0
      %v3840 = vadd.f32 %v3495, %v3839
      %v3841 = vpop.f32.mrb[0].mxu0
      %v3842 = vpop.f32.mrb[0].mxu0
      %v3843 = vadd.f32 %v3498, %v3842
      %v3844 = vpop.f32.mrb[0].mxu0
      %3845 = vmatprep.mubr.bf16.mxu0 0
      %3846 = vmatmul.mubr.bf16.gmra.mrb[0].mxu0 %v3207
      %v3847 = vpop.f32.mrb[0].mxu0
      %v3848 = vadd.f32 %v3503, %v3847
      %v3849 = vpop.f32.mrb[0].mxu0
      %v3850 = vpop.f32.mrb[0].mxu0
      %v3851 = vadd.f32 %v3506, %v3850
      %v3852 = vpop.f32.mrb[0].mxu0
      %3853 = vmatprep.mubr.bf16.mxu0 0
      %3854 = vmatmul.mubr.bf16.gmra.mrb[0].mxu0 %v3210
      %v3855 = vpop.f32.mrb[0].mxu0
      %v3856 = vadd.f32 %v3511, %v3855
      %v3857 = vpop.f32.mrb[0].mxu0
      %v3858 = vpop.f32.mrb[0].mxu0
      %v3859 = vadd.f32 %v3514, %v3858
      %v3860 = vpop.f32.mrb[0].mxu0
      %3861 = vmatprep.mubr.bf16.mxu0 0
      %3862 = vmatmul.mubr.bf16.gmra.mrb[0].mxu0 %v3213
      %v3863 = vpop.f32.mrb[0].mxu0
      %v3864 = vadd.f32 %v3519, %v3863
      %v3865 = vpop.f32.mrb[0].mxu0
      %v3866 = vpop.f32.mrb[0].mxu0
      %v3867 = vadd.f32 %v3522, %v3866
      %v3868 = vpop.f32.mrb[0].mxu0
      %3869 = vmatprep.mubr.bf16.mxu0 0
      %3870 = vmatmul.mubr.bf16.gmra.mrb[0].mxu0 %v3216
      %v3871 = vpop.f32.mrb[0].mxu0
      %v3872 = vadd.f32 %v3527, %v3871
      %v3873 = vpop.f32.mrb[0].mxu0
      %v3874 = vpop.f32.mrb[0].mxu0
      %v3875 = vadd.f32 %v3530, %v3874
      %v3876 = vpop.f32.mrb[0].mxu0
      %3877 = vmatprep.mubr.bf16.mxu0 0
      %3878 = vmatmul.mubr.bf16.gmra.mrb[0].mxu0 %v3219
      %v3879 = vpop.f32.mrb[0].mxu0
      %v3880 = vadd.f32 %v3535, %v3879
      %v3881 = vpop.f32.mrb[0].mxu0
      %v3882 = vpop.f32.mrb[0].mxu0
      %v3883 = vadd.f32 %v3538, %v3882
      %v3884 = vpop.f32.mrb[0].mxu0
      %3885 = vmatprep.mubr.bf16.mxu0 0
      %3886 = vmatmul.mubr.bf16.gmra.mrb[0].mxu0 %v3222
      %v3887 = vpop.f32.mrb[0].mxu0
      %v3888 = vadd.f32 %v3543, %v3887
      %v3889 = vpop.f32.mrb[0].mxu0
      %v3890 = vpop.f32.mrb[0].mxu0
      %v3891 = vadd.f32 %v3546, %v3890
      %v3892 = vpop.f32.mrb[0].mxu0
      %3893 = vmatprep.mubr.bf16.mxu0 0
      %3894 = vmatmul.mubr.bf16.gmra.mrb[0].mxu0 %v3225
      %v3895 = vpop.f32.mrb[0].mxu0
      %v3896 = vadd.f32 %v3551, %v3895
      %v3897 = vpop.f32.mrb[0].mxu0
      %v3898 = vpop.f32.mrb[0].mxu0
      %v3899 = vadd.f32 %v3554, %v3898
      %v3900 = vpop.f32.mrb[0].mxu0
      %3901 = vmatprep.mubr.bf16.mxu0 0
      %3902 = vmatmul.mubr.bf16.gmra.mrb[0].mxu0 %v3228
      %v3903 = vpop.f32.mrb[0].mxu0
      %v3904 = vadd.f32 %v3559, %v3903
      %v3905 = vpop.f32.mrb[0].mxu0
      %v3906 = vpop.f32.mrb[0].mxu0
      %v3907 = vadd.f32 %v3562, %v3906
      %v3908 = vpop.f32.mrb[0].mxu0
      %3909 = vmatprep.mubr.bf16.mxu0 0
      %3910 = vmatmul.mubr.bf16.gmra.mrb[0].mxu0 %v3231
      %v3911 = vpop.f32.mrb[0].mxu0
      %v3912 = vadd.f32 %v3567, %v3911
      %v3913 = vpop.f32.mrb[0].mxu0
      %v3914 = vpop.f32.mrb[0].mxu0
      %v3915 = vadd.f32 %v3570, %v3914
      %v3916 = vpop.f32.mrb[0].mxu0
      %3917 = vmatprep.mubr.bf16.mxu0 0
      %3918 = vmatmul.mubr.bf16.gmra.mrb[0].mxu0 %v3234
      %v3919 = vpop.f32.mrb[0].mxu0
      %v3920 = vadd.f32 %v3575, %v3919
      %v3921 = vpop.f32.mrb[0].mxu0
      %v3922 = vpop.f32.mrb[0].mxu0
      %v3923 = vadd.f32 %v3578, %v3922
      %v3924 = vpop.f32.mrb[0].mxu0
      %3925 = vdwg.mxu0
      %v3926 = vmax.f32 %v3616, 0.0
      %v3927 = vmax.f32 %v3619, 0.0
      %v3928 = vmax.f32 %v3624, 0.0
      %v3929 = vmax.f32 %v3627, 0.0
      %v3930 = vmax.f32 %v3632, 0.0
      %v3931 = vmax.f32 %v3635, 0.0
      %v3932 = vmax.f32 %v3640, 0.0
      %v3933 = vmax.f32 %v3643, 0.0
      %v3934 = vmax.f32 %v3648, 0.0
      %v3935 = vmax.f32 %v3651, 0.0
      %v3936 = vmax.f32 %v3656, 0.0
      %v3937 = vmax.f32 %v3659, 0.0
      %v3938 = vmax.f32 %v3664, 0.0
      %v3939 = vmax.f32 %v3667, 0.0
      %v3940 = vmax.f32 %v3672, 0.0
      %v3941 = vmax.f32 %v3675, 0.0
      %v3942 = vmax.f32 %v3680, 0.0
      %v3943 = vmax.f32 %v3683, 0.0
      %v3944 = vmax.f32 %v3688, 0.0
      %v3945 = vmax.f32 %v3691, 0.0
      %v3946 = vmax.f32 %v3696, 0.0
      %v3947 = vmax.f32 %v3699, 0.0
      %v3948 = vmax.f32 %v3704, 0.0
      %v3949 = vmax.f32 %v3707, 0.0
      %v3950 = vmax.f32 %v3712, 0.0
      %v3951 = vmax.f32 %v3715, 0.0
      %v3952 = vmax.f32 %v3720, 0.0
      %v3953 = vmax.f32 %v3723, 0.0
      %v3954 = vmax.f32 %v3728, 0.0
      %v3955 = vmax.f32 %v3731, 0.0
      %v3956 = vmax.f32 %v3736, 0.0
      %v3957 = vmax.f32 %v3739, 0.0
      %v3958 = vmax.f32 %v3744, 0.0
      %v3959 = vmax.f32 %v3747, 0.0
      %v3960 = vmax.f32 %v3752, 0.0
      %v3961 = vmax.f32 %v3755, 0.0
      %v3962 = vmax.f32 %v3760, 0.0
      %v3963 = vmax.f32 %v3763, 0.0
      %v3964 = vmax.f32 %v3768, 0.0
      %v3965 = vmax.f32 %v3771, 0.0
      %v3966 = vmax.f32 %v3776, 0.0
      %v3967 = vmax.f32 %v3779, 0.0
      %v3968 = vmax.f32 %v3784, 0.0
      %v3969 = vmax.f32 %v3787, 0.0
      %v3970 = vmax.f32 %v3792, 0.0
      %v3971 = vmax.f32 %v3795, 0.0
      %v3972 = vmax.f32 %v3800, 0.0
      %v3973 = vmax.f32 %v3803, 0.0
      %v3974 = vmax.f32 %v3808, 0.0
      %v3975 = vmax.f32 %v3811, 0.0
      %v3976 = vmax.f32 %v3816, 0.0
      %v3977 = vmax.f32 %v3819, 0.0
      %v3978 = vmax.f32 %v3824, 0.0
      %v3979 = vmax.f32 %v3827, 0.0
      %v3980 = vmax.f32 %v3832, 0.0
      %v3981 = vmax.f32 %v3835, 0.0
      %v3982 = vmax.f32 %v3840, 0.0
      %v3983 = vmax.f32 %v3843, 0.0
      %v3984 = vmax.f32 %v3848, 0.0
      %v3985 = vmax.f32 %v3851, 0.0
      %v3986 = vmax.f32 %v3856, 0.0
      %v3987 = vmax.f32 %v3859, 0.0
      %v3988 = vmax.f32 %v3864, 0.0
      %v3989 = vmax.f32 %v3867, 0.0
      %v3990 = vmax.f32 %v3872, 0.0
      %v3991 = vmax.f32 %v3875, 0.0
      %v3992 = vmax.f32 %v3880, 0.0
      %v3993 = vmax.f32 %v3883, 0.0
      %v3994 = vmax.f32 %v3888, 0.0
      %v3995 = vmax.f32 %v3891, 0.0
      %v3996 = vmax.f32 %v3896, 0.0
      %v3997 = vmax.f32 %v3899, 0.0
      %v3998 = vmax.f32 %v3904, 0.0
      %v3999 = vmax.f32 %v3907, 0.0
      %v4000 = vmax.f32 %v3912, 0.0
      %v4001 = vmax.f32 %v3915, 0.0
      %v4002 = vmax.f32 %v3920, 0.0
      %v4003 = vmax.f32 %v3923, 0.0
      %v4004 = vpack.c.bf16 %v3927, %v3926
      %v4005 = vpack.c.bf16 %v3929, %v3928
      %v4006 = vpack.c.bf16 %v3931, %v3930
      %v4007 = vpack.c.bf16 %v3933, %v3932
      %v4008 = vpack.c.bf16 %v3935, %v3934
      %v4009 = vpack.c.bf16 %v3937, %v3936
      %v4010 = vpack.c.bf16 %v3939, %v3938
      %v4011 = vpack.c.bf16 %v3941, %v3940
      %v4012 = vpack.c.bf16 %v3943, %v3942
      %v4013 = vpack.c.bf16 %v3945, %v3944
      %v4014 = vpack.c.bf16 %v3947, %v3946
      %v4015 = vpack.c.bf16 %v3949, %v3948
      %v4016 = vpack.c.bf16 %v3951, %v3950
      %v4017 = vpack.c.bf16 %v3953, %v3952
      %v4018 = vpack.c.bf16 %v3955, %v3954
      %v4019 = vpack.c.bf16 %v3957, %v3956
      %v4020 = vpack.c.bf16 %v3959, %v3958
      %v4021 = vpack.c.bf16 %v3961, %v3960
      %v4022 = vpack.c.bf16 %v3963, %v3962
      %v4023 = vpack.c.bf16 %v3965, %v3964
      %v4024 = vpack.c.bf16 %v3967, %v3966
      %v4025 = vpack.c.bf16 %v3969, %v3968
      %v4026 = vpack.c.bf16 %v3971, %v3970
      %v4027 = vpack.c.bf16 %v3973, %v3972
      %v4028 = vpack.c.bf16 %v3975, %v3974
      %v4029 = vpack.c.bf16 %v3977, %v3976
      %v4030 = vpack.c.bf16 %v3979, %v3978
      %v4031 = vpack.c.bf16 %v3981, %v3980
      %v4032 = vpack.c.bf16 %v3983, %v3982
      %v4033 = vpack.c.bf16 %v3985, %v3984
      %v4034 = vpack.c.bf16 %v3987, %v3986
      %v4035 = vpack.c.bf16 %v3989, %v3988
      %v4036 = vpack.c.bf16 %v3991, %v3990
      %v4037 = vpack.c.bf16 %v3993, %v3992
      %v4038 = vpack.c.bf16 %v3995, %v3994
      %v4039 = vpack.c.bf16 %v3997, %v3996
      %v4040 = vpack.c.bf16 %v3999, %v3998
      %v4041 = vpack.c.bf16 %v4001, %v4000
      %v4042 = vpack.c.bf16 %v4003, %v4002
      %v4044 = vshrl.u32 %v4004, 16
      %v4046 = vshll.u32 %v4004, 16
      %v4048 = vrot.slane %v4046, 1
      %v4049 = vor.u32 %v4044, %v4048
      %v4051 = vshll.u32 %v4005, 16
      %v4053 = vrot.slane %v4051, 1
      %v4054 = vsel %vm609, %v4049, %v4053
      %v4055 = vshrl.u32 %v4005, 16
      %v4057 = vor.u32 %v4055, %v4053
      %v4059 = vshll.u32 %v4006, 16
      %v4061 = vrot.slane %v4059, 1
      %v4062 = vsel %vm609, %v4057, %v4061
      %v4063 = vshrl.u32 %v4006, 16
      %v4065 = vor.u32 %v4063, %v4061
      %v4067 = vshll.u32 %v4007, 16
      %v4069 = vrot.slane %v4067, 1
      %v4070 = vsel %vm609, %v4065, %v4069
      %v4071 = vshrl.u32 %v4007, 16
      %v4073 = vor.u32 %v4071, %v4069
      %v4075 = vshll.u32 %v4008, 16
      %v4077 = vrot.slane %v4075, 1
      %v4078 = vsel %vm609, %v4073, %v4077
      %v4079 = vshrl.u32 %v4008, 16
      %v4081 = vor.u32 %v4079, %v4077
      %v4083 = vshll.u32 %v4009, 16
      %v4085 = vrot.slane %v4083, 1
      %v4086 = vsel %vm609, %v4081, %v4085
      %v4087 = vshrl.u32 %v4009, 16
      %v4089 = vor.u32 %v4087, %v4085
      %v4091 = vshll.u32 %v4010, 16
      %v4093 = vrot.slane %v4091, 1
      %v4094 = vsel %vm609, %v4089, %v4093
      %v4095 = vshrl.u32 %v4010, 16
      %v4097 = vor.u32 %v4095, %v4093
      %v4099 = vshll.u32 %v4011, 16
      %v4101 = vrot.slane %v4099, 1
      %v4102 = vsel %vm609, %v4097, %v4101
      %v4103 = vshrl.u32 %v4011, 16
      %v4105 = vor.u32 %v4103, %v4101
      %v4107 = vshll.u32 %v4012, 16
      %v4109 = vrot.slane %v4107, 1
      %v4110 = vsel %vm609, %v4105, %v4109
      %v4111 = vshrl.u32 %v4012, 16
      %v4113 = vor.u32 %v4111, %v4109
      %v4115 = vshll.u32 %v4013, 16
      %v4117 = vrot.slane %v4115, 1
      %v4118 = vsel %vm609, %v4113, %v4117
      %v4119 = vshrl.u32 %v4013, 16
      %v4121 = vor.u32 %v4119, %v4117
      %v4123 = vshll.u32 %v4014, 16
      %v4125 = vrot.slane %v4123, 1
      %v4126 = vsel %vm609, %v4121, %v4125
      %v4127 = vshrl.u32 %v4014, 16
      %v4129 = vor.u32 %v4127, %v4125
      %v4131 = vshll.u32 %v4015, 16
      %v4133 = vrot.slane %v4131, 1
      %v4134 = vsel %vm609, %v4129, %v4133
      %v4135 = vshrl.u32 %v4015, 16
      %v4137 = vor.u32 %v4135, %v4133
      %v4139 = vshll.u32 %v4016, 16
      %v4141 = vrot.slane %v4139, 1
      %v4142 = vsel %vm609, %v4137, %v4141
      %v4143 = vshrl.u32 %v4016, 16
      %v4145 = vor.u32 %v4143, %v4141
      %v4147 = vshll.u32 %v4017, 16
      %v4149 = vrot.slane %v4147, 1
      %v4150 = vsel %vm609, %v4145, %v4149
      %v4151 = vshrl.u32 %v4017, 16
      %v4153 = vor.u32 %v4151, %v4149
      %v4155 = vshll.u32 %v4018, 16
      %v4157 = vrot.slane %v4155, 1
      %v4158 = vsel %vm609, %v4153, %v4157
      %v4159 = vshrl.u32 %v4018, 16
      %v4161 = vor.u32 %v4159, %v4157
      %v4163 = vshll.u32 %v4019, 16
      %v4165 = vrot.slane %v4163, 1
      %v4166 = vsel %vm609, %v4161, %v4165
      %v4167 = vshrl.u32 %v4019, 16
      %v4169 = vor.u32 %v4167, %v4165
      %v4171 = vshll.u32 %v4020, 16
      %v4173 = vrot.slane %v4171, 1
      %v4174 = vsel %vm609, %v4169, %v4173
      %v4175 = vshrl.u32 %v4020, 16
      %v4177 = vor.u32 %v4175, %v4173
      %v4179 = vshll.u32 %v4021, 16
      %v4181 = vrot.slane %v4179, 1
      %v4182 = vsel %vm609, %v4177, %v4181
      %v4183 = vshrl.u32 %v4021, 16
      %v4185 = vor.u32 %v4183, %v4181
      %v4187 = vshll.u32 %v4022, 16
      %v4189 = vrot.slane %v4187, 1
      %v4190 = vsel %vm609, %v4185, %v4189
      %v4191 = vshrl.u32 %v4022, 16
      %v4193 = vor.u32 %v4191, %v4189
      %v4195 = vshll.u32 %v4023, 16
      %v4197 = vrot.slane %v4195, 1
      %v4198 = vsel %vm609, %v4193, %v4197
      %v4199 = vshrl.u32 %v4023, 16
      %v4201 = vor.u32 %v4199, %v4197
      %v4203 = vshll.u32 %v4024, 16
      %v4205 = vrot.slane %v4203, 1
      %v4206 = vsel %vm609, %v4201, %v4205
      %v4207 = vshrl.u32 %v4024, 16
      %v4209 = vor.u32 %v4207, %v4205
      %v4211 = vshll.u32 %v4025, 16
      %v4213 = vrot.slane %v4211, 1
      %v4214 = vsel %vm609, %v4209, %v4213
      %v4215 = vshrl.u32 %v4025, 16
      %v4217 = vor.u32 %v4215, %v4213
      %v4219 = vshll.u32 %v4026, 16
      %v4221 = vrot.slane %v4219, 1
      %v4222 = vsel %vm609, %v4217, %v4221
      %v4223 = vshrl.u32 %v4026, 16
      %v4225 = vor.u32 %v4223, %v4221
      %v4227 = vshll.u32 %v4027, 16
      %v4229 = vrot.slane %v4227, 1
      %v4230 = vsel %vm609, %v4225, %v4229
      %v4231 = vshrl.u32 %v4027, 16
      %v4233 = vor.u32 %v4231, %v4229
      %v4235 = vshll.u32 %v4028, 16
      %v4237 = vrot.slane %v4235, 1
      %v4238 = vsel %vm609, %v4233, %v4237
      %v4239 = vshrl.u32 %v4028, 16
      %v4241 = vor.u32 %v4239, %v4237
      %v4243 = vshll.u32 %v4029, 16
      %v4245 = vrot.slane %v4243, 1
      %v4246 = vsel %vm609, %v4241, %v4245
      %v4247 = vshrl.u32 %v4029, 16
      %v4249 = vor.u32 %v4247, %v4245
      %v4251 = vshll.u32 %v4030, 16
      %v4253 = vrot.slane %v4251, 1
      %v4254 = vsel %vm609, %v4249, %v4253
      %v4255 = vshrl.u32 %v4030, 16
      %v4257 = vor.u32 %v4255, %v4253
      %v4259 = vshll.u32 %v4031, 16
      %v4261 = vrot.slane %v4259, 1
      %v4262 = vsel %vm609, %v4257, %v4261
      %v4263 = vshrl.u32 %v4031, 16
      %v4265 = vor.u32 %v4263, %v4261
      %v4267 = vshll.u32 %v4032, 16
      %v4269 = vrot.slane %v4267, 1
      %v4270 = vsel %vm609, %v4265, %v4269
      %v4271 = vshrl.u32 %v4032, 16
      %v4273 = vor.u32 %v4271, %v4269
      %v4275 = vshll.u32 %v4033, 16
      %v4277 = vrot.slane %v4275, 1
      %v4278 = vsel %vm609, %v4273, %v4277
      %v4279 = vshrl.u32 %v4033, 16
      %v4281 = vor.u32 %v4279, %v4277
      %v4283 = vshll.u32 %v4034, 16
      %v4285 = vrot.slane %v4283, 1
      %v4286 = vsel %vm609, %v4281, %v4285
      %v4287 = vshrl.u32 %v4034, 16
      %v4289 = vor.u32 %v4287, %v4285
      %v4291 = vshll.u32 %v4035, 16
      %v4293 = vrot.slane %v4291, 1
      %v4294 = vsel %vm609, %v4289, %v4293
      %v4295 = vshrl.u32 %v4035, 16
      %v4297 = vor.u32 %v4295, %v4293
      %v4299 = vshll.u32 %v4036, 16
      %v4301 = vrot.slane %v4299, 1
      %v4302 = vsel %vm609, %v4297, %v4301
      %v4303 = vshrl.u32 %v4036, 16
      %v4305 = vor.u32 %v4303, %v4301
      %v4307 = vshll.u32 %v4037, 16
      %v4309 = vrot.slane %v4307, 1
      %v4310 = vsel %vm609, %v4305, %v4309
      %v4311 = vshrl.u32 %v4037, 16
      %v4313 = vor.u32 %v4311, %v4309
      %v4315 = vshll.u32 %v4038, 16
      %v4317 = vrot.slane %v4315, 1
      %v4318 = vsel %vm609, %v4313, %v4317
      %v4319 = vshrl.u32 %v4038, 16
      %v4321 = vor.u32 %v4319, %v4317
      %v4323 = vshll.u32 %v4039, 16
      %v4325 = vrot.slane %v4323, 1
      %v4326 = vsel %vm609, %v4321, %v4325
      %v4327 = vshrl.u32 %v4039, 16
      %v4329 = vor.u32 %v4327, %v4325
      %v4331 = vshll.u32 %v4040, 16
      %v4333 = vrot.slane %v4331, 1
      %v4334 = vsel %vm609, %v4329, %v4333
      %v4335 = vshrl.u32 %v4040, 16
      %v4337 = vor.u32 %v4335, %v4333
      %v4339 = vshll.u32 %v4041, 16
      %v4341 = vrot.slane %v4339, 1
      %v4342 = vsel %vm609, %v4337, %v4341
      %v4343 = vshrl.u32 %v4041, 16
      %v4345 = vor.u32 %v4343, %v4341
      %v4347 = vshll.u32 %v4042, 16
      %v4349 = vrot.slane %v4347, 1
      %v4350 = vsel %vm609, %v4345, %v4349
      %v4351 = vshrl.u32 %v4042, 16
      %v4353 = vor.u32 %v4351, %v4349
      %v4393 = vmax.bf16 %v4004, %v4054
      %v4394 = vmax.bf16 %v4005, %v4062
      %v4395 = vmax.bf16 %v4006, %v4070
      %v4396 = vmax.bf16 %v4007, %v4078
      %v4397 = vmax.bf16 %v4008, %v4086
      %v4398 = vmax.bf16 %v4009, %v4094
      %v4399 = vmax.bf16 %v4010, %v4102
      %v4400 = vmax.bf16 %v4011, %v4110
      %v4401 = vmax.bf16 %v4012, %v4118
      %v4402 = vmax.bf16 %v4013, %v4126
      %v4403 = vmax.bf16 %v4014, %v4134
      %v4404 = vmax.bf16 %v4015, %v4142
      %v4405 = vmax.bf16 %v4016, %v4150
      %v4406 = vmax.bf16 %v4017, %v4158
      %v4407 = vmax.bf16 %v4018, %v4166
      %v4408 = vmax.bf16 %v4019, %v4174
      %v4409 = vmax.bf16 %v4020, %v4182
      %v4410 = vmax.bf16 %v4021, %v4190
      %v4411 = vmax.bf16 %v4022, %v4198
      %v4412 = vmax.bf16 %v4023, %v4206
      %v4413 = vmax.bf16 %v4024, %v4214
      %v4414 = vmax.bf16 %v4025, %v4222
      %v4415 = vmax.bf16 %v4026, %v4230
      %v4416 = vmax.bf16 %v4027, %v4238
      %v4417 = vmax.bf16 %v4028, %v4246
      %v4418 = vmax.bf16 %v4029, %v4254
      %v4419 = vmax.bf16 %v4030, %v4262
      %v4420 = vmax.bf16 %v4031, %v4270
      %v4421 = vmax.bf16 %v4032, %v4278
      %v4422 = vmax.bf16 %v4033, %v4286
      %v4423 = vmax.bf16 %v4034, %v4294
      %v4424 = vmax.bf16 %v4035, %v4302
      %v4425 = vmax.bf16 %v4036, %v4310
      %v4426 = vmax.bf16 %v4037, %v4318
      %v4427 = vmax.bf16 %v4038, %v4326
      %v4428 = vmax.bf16 %v4039, %v4334
      %v4429 = vmax.bf16 %v4040, %v4342
      %v4430 = vmax.bf16 %v4041, %v4350
      %v4431 = vmax.bf16 %v4042, %v4353
      %vm4470 = vcmask 1042432
      %v4471 = vrot.slane %v4394, 5
      %v4472 = vrot.slane %v4395, 5
      %v4473 = vsel %vm4470, %v4471, %v4472
      %v4474 = vrot.slane %v4396, 5
      %v4475 = vsel %vm4470, %v4472, %v4474
      %v4476 = vrot.slane %v4397, 5
      %v4477 = vsel %vm4470, %v4474, %v4476
      %v4478 = vrot.slane %v4398, 5
      %v4479 = vsel %vm4470, %v4476, %v4478
      %v4480 = vrot.slane %v4399, 5
      %v4481 = vsel %vm4470, %v4478, %v4480
      %v4482 = vrot.slane %v4400, 5
      %v4483 = vsel %vm4470, %v4480, %v4482
      %v4484 = vrot.slane %v4401, 5
      %v4485 = vsel %vm4470, %v4482, %v4484
      %v4486 = vrot.slane %v4402, 5
      %v4487 = vsel %vm4470, %v4484, %v4486
      %v4488 = vrot.slane %v4403, 5
      %v4489 = vsel %vm4470, %v4486, %v4488
      %v4490 = vrot.slane %v4404, 5
      %v4491 = vsel %vm4470, %v4488, %v4490
      %v4492 = vrot.slane %v4405, 5
      %v4493 = vsel %vm4470, %v4490, %v4492
      %v4494 = vrot.slane %v4406, 5
      %v4495 = vsel %vm4470, %v4492, %v4494
      %v4496 = vrot.slane %v4407, 5
      %v4497 = vsel %vm4470, %v4494, %v4496
      %v4498 = vrot.slane %v4408, 5
      %v4499 = vsel %vm4470, %v4496, %v4498
      %v4500 = vrot.slane %v4409, 5
      %v4501 = vsel %vm4470, %v4498, %v4500
      %v4502 = vrot.slane %v4410, 5
      %v4503 = vsel %vm4470, %v4500, %v4502
      %v4504 = vrot.slane %v4411, 5
      %v4505 = vsel %vm4470, %v4502, %v4504
      %v4506 = vrot.slane %v4412, 5
      %v4507 = vsel %vm4470, %v4504, %v4506
      %v4508 = vrot.slane %v4413, 5
      %v4509 = vsel %vm4470, %v4506, %v4508
      %v4510 = vrot.slane %v4414, 5
      %v4511 = vsel %vm4470, %v4508, %v4510
      %v4512 = vrot.slane %v4415, 5
      %v4513 = vsel %vm4470, %v4510, %v4512
      %v4514 = vrot.slane %v4416, 5
      %v4515 = vsel %vm4470, %v4512, %v4514
      %v4516 = vrot.slane %v4417, 5
      %v4517 = vsel %vm4470, %v4514, %v4516
      %v4518 = vrot.slane %v4418, 5
      %v4519 = vsel %vm4470, %v4516, %v4518
      %v4520 = vrot.slane %v4419, 5
      %v4521 = vsel %vm4470, %v4518, %v4520
      %v4522 = vrot.slane %v4420, 5
      %v4523 = vsel %vm4470, %v4520, %v4522
      %v4524 = vrot.slane %v4421, 5
      %v4525 = vsel %vm4470, %v4522, %v4524
      %v4526 = vrot.slane %v4422, 5
      %v4527 = vsel %vm4470, %v4524, %v4526
      %v4528 = vrot.slane %v4423, 5
      %v4529 = vsel %vm4470, %v4526, %v4528
      %v4530 = vrot.slane %v4424, 5
      %v4531 = vsel %vm4470, %v4528, %v4530
      %v4532 = vrot.slane %v4425, 5
      %v4533 = vsel %vm4470, %v4530, %v4532
      %v4534 = vrot.slane %v4426, 5
      %v4535 = vsel %vm4470, %v4532, %v4534
      %v4536 = vrot.slane %v4427, 5
      %v4537 = vsel %vm4470, %v4534, %v4536
      %v4538 = vrot.slane %v4428, 5
      %v4539 = vsel %vm4470, %v4536, %v4538
      %v4540 = vrot.slane %v4429, 5
      %v4541 = vsel %vm4470, %v4538, %v4540
      %v4542 = vrot.slane %v4430, 5
      %v4543 = vsel %vm4470, %v4540, %v4542
      %v4544 = vrot.slane %v4431, 5
      %v4545 = vsel %vm4470, %v4542, %v4544
      %v4584 = vmax.bf16 %v4393, %v4473
      %v4585 = vmax.bf16 %v4394, %v4475
      %v4586 = vmax.bf16 %v4395, %v4477
      %v4587 = vmax.bf16 %v4396, %v4479
      %v4588 = vmax.bf16 %v4397, %v4481
      %v4589 = vmax.bf16 %v4398, %v4483
      %v4590 = vmax.bf16 %v4399, %v4485
      %v4591 = vmax.bf16 %v4400, %v4487
      %v4592 = vmax.bf16 %v4401, %v4489
      %v4593 = vmax.bf16 %v4402, %v4491
      %v4594 = vmax.bf16 %v4403, %v4493
      %v4595 = vmax.bf16 %v4404, %v4495
      %v4596 = vmax.bf16 %v4405, %v4497
      %v4597 = vmax.bf16 %v4406, %v4499
      %v4598 = vmax.bf16 %v4407, %v4501
      %v4599 = vmax.bf16 %v4408, %v4503
      %v4600 = vmax.bf16 %v4409, %v4505
      %v4601 = vmax.bf16 %v4410, %v4507
      %v4602 = vmax.bf16 %v4411, %v4509
      %v4603 = vmax.bf16 %v4412, %v4511
      %v4604 = vmax.bf16 %v4413, %v4513
      %v4605 = vmax.bf16 %v4414, %v4515
      %v4606 = vmax.bf16 %v4415, %v4517
      %v4607 = vmax.bf16 %v4416, %v4519
      %v4608 = vmax.bf16 %v4417, %v4521
      %v4609 = vmax.bf16 %v4418, %v4523
      %v4610 = vmax.bf16 %v4419, %v4525
      %v4611 = vmax.bf16 %v4420, %v4527
      %v4612 = vmax.bf16 %v4421, %v4529
      %v4613 = vmax.bf16 %v4422, %v4531
      %v4614 = vmax.bf16 %v4423, %v4533
      %v4615 = vmax.bf16 %v4424, %v4535
      %v4616 = vmax.bf16 %v4425, %v4537
      %v4617 = vmax.bf16 %v4426, %v4539
      %v4618 = vmax.bf16 %v4427, %v4541
      %v4619 = vmax.bf16 %v4428, %v4543
      %v4620 = vmax.bf16 %v4429, %v4545
      %v4621 = vmax.bf16 %v4430, %v4544
      %v4649 = vunpack.c.l.b16 %v263
      %v4650 = vunpack.c.h.b16 %v263
      %v4651 = vunpack.c.l.b16 %v264
      %v4652 = vunpack.c.h.b16 %v264
      %v4653 = vunpack.c.l.b16 %v265
      %v4654 = vunpack.c.l.b16 %v266
      %v4655 = vunpack.c.h.b16 %v266
      %v4656 = vunpack.c.l.b16 %v267
      %v4657 = vunpack.c.h.b16 %v267
      %v4658 = vunpack.c.l.b16 %v268
      %v4659 = vunpack.c.l.b16 %v269
      %v4660 = vunpack.c.h.b16 %v269
      %v4661 = vunpack.c.l.b16 %v270
      %v4662 = vunpack.c.h.b16 %v270
      %v4663 = vunpack.c.l.b16 %v271
      %v4664 = vunpack.c.l.b16 %v272
      %v4665 = vunpack.c.h.b16 %v272
      %v4666 = vunpack.c.l.b16 %v273
      %v4667 = vunpack.c.h.b16 %v273
      %v4668 = vunpack.c.l.b16 %v274
      %v4669 = vunpack.c.l.b16 %v275
      %v4670 = vunpack.c.h.b16 %v275
      %v4671 = vunpack.c.l.b16 %v276
      %v4672 = vunpack.c.h.b16 %v276
      %v4673 = vunpack.c.l.b16 %v277
      %v4674 = vunpack.c.l.b16 %v278
      %v4675 = vunpack.c.h.b16 %v278
      %v4676 = vunpack.c.l.b16 %v279
      %v4677 = vunpack.c.h.b16 %v279
      %v4678 = vunpack.c.l.b16 %v280
      %v4679 = vunpack.c.l.b16 %v281
      %v4680 = vunpack.c.h.b16 %v281
      %v4681 = vunpack.c.l.b16 %v282
      %v4682 = vunpack.c.h.b16 %v282
      %v4683 = vunpack.c.l.b16 %v283
      %v4684 = vunpack.c.l.b16 %v284
      %v4685 = vunpack.c.h.b16 %v284
      %v4686 = vunpack.c.l.b16 %v285
      %v4687 = vunpack.c.h.b16 %v285
      %v4688 = vunpack.c.l.b16 %v286
      %v4689 = vunpack.c.l.b16 %v287
      %v4690 = vunpack.c.h.b16 %v287
      %v4691 = vunpack.c.l.b16 %v288
      %v4692 = vunpack.c.h.b16 %v288
      %v4693 = vunpack.c.l.b16 %v289
      %v4694 = vpack.c.b16 %v4654, %v4649
      %v4695 = vpack.c.b16 %v4655, %v4650
      %v4696 = vpack.c.b16 %v4656, %v4651
      %v4697 = vpack.c.b16 %v4657, %v4652
      %v4698 = vpack.c.b16 %v4658, %v4653
      %v4699 = vpack.c.b16 %v4664, %v4659
      %v4700 = vpack.c.b16 %v4665, %v4660
      %v4701 = vpack.c.b16 %v4666, %v4661
      %v4702 = vpack.c.b16 %v4667, %v4662
      %v4703 = vpack.c.b16 %v4668, %v4663
      %v4704 = vpack.c.b16 %v4674, %v4669
      %v4705 = vpack.c.b16 %v4675, %v4670
      %v4706 = vpack.c.b16 %v4676, %v4671
      %v4707 = vpack.c.b16 %v4677, %v4672
      %v4708 = vpack.c.b16 %v4678, %v4673
      %v4709 = vpack.c.b16 %v4684, %v4679
      %v4710 = vpack.c.b16 %v4685, %v4680
      %v4711 = vpack.c.b16 %v4686, %v4681
      %v4712 = vpack.c.b16 %v4687, %v4682
      %v4713 = vpack.c.b16 %v4688, %v4683
      %v4714 = vpack.c.b16 %v4689, %v4689
      %v4715 = vpack.c.b16 %v4690, %v4690
      %v4716 = vpack.c.b16 %v4691, %v4691
      %v4717 = vpack.c.b16 %v4692, %v4692
      %v4718 = vpack.c.b16 %v4693, %v4693
      %vm4739 = vcmask 678912
      %v4741 = vsel %vm4739, %v4698, 0
      %v4744 = vsel %vm4739, %v4703, 0
      %v4747 = vsel %vm4739, %v4708, 0
      %v4750 = vsel %vm4739, %v4713, 0
      %v4753 = vsel %vm4739, %v4718, 0
      %vm4755 = vcmask 1040384
      %vm4756 = vcmask 1041408
      %v4757 = vsel %vm4755, 4294967295, 65535
      %v4758 = vsel %vm4756, %v4757, 0
      %v4760 = vand.u32 %v4621, %v4758
      %4762 = vmatprep.subr.bf16.mxu0 0
      %4763 = vmatpush1.bf16.msra.mxu0 %v4584
      %4764 = vmatprep.subr.bf16.mxu0 0
      %4765 = vmatpush1.bf16.msra.mxu0 %v4585
      %4766 = vmatprep.subr.bf16.mxu0 0
      %4767 = vmatpush1.bf16.msra.mxu0 %v4586
      %4768 = vmatprep.subr.bf16.mxu0 0
      %4769 = vmatpush1.bf16.msra.mxu0 %v4587
      %4770 = vmatprep.subr.bf16.mxu0 0
      %4771 = vmatpush1.bf16.msra.mxu0 %v4588
      %4772 = vmatprep.subr.bf16.mxu0 0
      %4773 = vmatpush1.bf16.msra.mxu0 %v4589
      %4774 = vmatprep.subr.bf16.mxu0 0
      %4775 = vmatpush1.bf16.msra.mxu0 %v4590
      %4776 = vmatprep.subr.bf16.mxu0 0
      %4777 = vmatpush1.bf16.msra.mxu0 %v4591
      %4778 = vmatprep.subr.bf16.mxu0 0
      %4779 = vmatpush1.bf16.msra.mxu0 %v4592
      %4780 = vmatprep.subr.bf16.mxu0 0
      %4781 = vmatpush1.bf16.msra.mxu0 %v4593
      %4782 = vmatprep.subr.bf16.mxu0 0
      %4783 = vmatpush1.bf16.msra.mxu0 %v4594
      %4784 = vmatprep.subr.bf16.mxu0 0
      %4785 = vmatpush1.bf16.msra.mxu0 %v4595
      %4786 = vmatprep.subr.bf16.mxu0 0
      %4787 = vmatpush1.bf16.msra.mxu0 %v4596
      %4788 = vmatprep.subr.bf16.mxu0 0
      %4789 = vmatpush1.bf16.msra.mxu0 %v4597
      %4790 = vmatprep.subr.bf16.mxu0 0
      %4791 = vmatpush1.bf16.msra.mxu0 %v4598
      %4792 = vmatprep.subr.bf16.mxu0 0
      %4793 = vmatpush1.bf16.msra.mxu0 %v4599
      %4794 = vmatprep.mubr.bf16.mxu0 %v4695
      %4795 = vmatmul.mubr.bf16.gmra.mrb[0].mxu0 %v4694
      %v4796 = vpop.f32.mrb[0].mxu0
      %v4797 = vadd.f32 0.0, %v4796
      %v4798 = vpop.f32.mrb[0].mxu0
      %v4799 = vpop.f32.mrb[0].mxu0
      %v4800 = vadd.f32 0.0, %v4799
      %v4801 = vpop.f32.mrb[0].mxu0
      %4802 = vmatprep.mubr.bf16.mxu0 %v4700
      %4803 = vmatmul.mubr.bf16.gmra.mrb[0].mxu0 %v4699
      %v4804 = vpop.f32.mrb[0].mxu0
      %v4805 = vadd.f32 0.0, %v4804
      %v4806 = vpop.f32.mrb[0].mxu0
      %v4807 = vpop.f32.mrb[0].mxu0
      %v4808 = vadd.f32 0.0, %v4807
      %v4809 = vpop.f32.mrb[0].mxu0
      %4810 = vmatprep.mubr.bf16.mxu0 %v4705
      %4811 = vmatmul.mubr.bf16.gmra.mrb[0].mxu0 %v4704
      %v4812 = vpop.f32.mrb[0].mxu0
      %v4813 = vadd.f32 0.0, %v4812
      %v4814 = vpop.f32.mrb[0].mxu0
      %v4815 = vpop.f32.mrb[0].mxu0
      %v4816 = vadd.f32 0.0, %v4815
      %v4817 = vpop.f32.mrb[0].mxu0
      %4818 = vmatprep.mubr.bf16.mxu0 %v4710
      %4819 = vmatmul.mubr.bf16.gmra.mrb[0].mxu0 %v4709
      %v4820 = vpop.f32.mrb[0].mxu0
      %v4821 = vadd.f32 0.0, %v4820
      %v4822 = vpop.f32.mrb[0].mxu0
      %v4823 = vpop.f32.mrb[0].mxu0
      %v4824 = vadd.f32 0.0, %v4823
      %v4825 = vpop.f32.mrb[0].mxu0
      %4826 = vmatprep.mubr.bf16.mxu0 %v4715
      %4827 = vmatmul.mubr.bf16.gmra.mrb[0].mxu0 %v4714
      %v4828 = vpop.f32.mrb[0].mxu0
      %v4829 = vadd.f32 0.0, %v4828
      %v4830 = vpop.f32.mrb[0].mxu0
      %v4831 = vpop.f32.mrb[0].mxu0
      %v4832 = vpop.f32.mrb[0].mxu0
      %4833 = vdwg.mxu0
      %4834 = vmatprep.subr.bf16.mxu0 0
      %4835 = vmatpush1.bf16.msra.mxu0 %v4600
      %4836 = vmatprep.subr.bf16.mxu0 0
      %4837 = vmatpush1.bf16.msra.mxu0 %v4601
      %4838 = vmatprep.subr.bf16.mxu0 0
      %4839 = vmatpush1.bf16.msra.mxu0 %v4602
      %4840 = vmatprep.subr.bf16.mxu0 0
      %4841 = vmatpush1.bf16.msra.mxu0 %v4603
      %4842 = vmatprep.subr.bf16.mxu0 0
      %4843 = vmatpush1.bf16.msra.mxu0 %v4604
      %4844 = vmatprep.subr.bf16.mxu0 0
      %4845 = vmatpush1.bf16.msra.mxu0 %v4605
      %4846 = vmatprep.subr.bf16.mxu0 0
      %4847 = vmatpush1.bf16.msra.mxu0 %v4606
      %4848 = vmatprep.subr.bf16.mxu0 0
      %4849 = vmatpush1.bf16.msra.mxu0 %v4607
      %4850 = vmatprep.subr.bf16.mxu0 0
      %4851 = vmatpush1.bf16.msra.mxu0 %v4608
      %4852 = vmatprep.subr.bf16.mxu0 0
      %4853 = vmatpush1.bf16.msra.mxu0 %v4609
      %4854 = vmatprep.subr.bf16.mxu0 0
      %4855 = vmatpush1.bf16.msra.mxu0 %v4610
      %4856 = vmatprep.subr.bf16.mxu0 0
      %4857 = vmatpush1.bf16.msra.mxu0 %v4611
      %4858 = vmatprep.subr.bf16.mxu0 0
      %4859 = vmatpush1.bf16.msra.mxu0 %v4612
      %4860 = vmatprep.subr.bf16.mxu0 0
      %4861 = vmatpush1.bf16.msra.mxu0 %v4613
      %4862 = vmatprep.subr.bf16.mxu0 0
      %4863 = vmatpush1.bf16.msra.mxu0 %v4614
      %4864 = vmatprep.subr.bf16.mxu0 0
      %4865 = vmatpush1.bf16.msra.mxu0 %v4615
      %4866 = vmatprep.mubr.bf16.mxu0 %v4697
      %4867 = vmatmul.mubr.bf16.gmra.mrb[0].mxu0 %v4696
      %v4868 = vpop.f32.mrb[0].mxu0
      %v4869 = vadd.f32 %v4797, %v4868
      %v4870 = vpop.f32.mrb[0].mxu0
      %v4871 = vpop.f32.mrb[0].mxu0
      %v4872 = vadd.f32 %v4800, %v4871
      %v4873 = vpop.f32.mrb[0].mxu0
      %4874 = vmatprep.mubr.bf16.mxu0 %v4702
      %4875 = vmatmul.mubr.bf16.gmra.mrb[0].mxu0 %v4701
      %v4876 = vpop.f32.mrb[0].mxu0
      %v4877 = vadd.f32 %v4805, %v4876
      %v4878 = vpop.f32.mrb[0].mxu0
      %v4879 = vpop.f32.mrb[0].mxu0
      %v4880 = vadd.f32 %v4808, %v4879
      %v4881 = vpop.f32.mrb[0].mxu0
      %4882 = vmatprep.mubr.bf16.mxu0 %v4707
      %4883 = vmatmul.mubr.bf16.gmra.mrb[0].mxu0 %v4706
      %v4884 = vpop.f32.mrb[0].mxu0
      %v4885 = vadd.f32 %v4813, %v4884
      %v4886 = vpop.f32.mrb[0].mxu0
      %v4887 = vpop.f32.mrb[0].mxu0
      %v4888 = vadd.f32 %v4816, %v4887
      %v4889 = vpop.f32.mrb[0].mxu0
      %4890 = vmatprep.mubr.bf16.mxu0 %v4712
      %4891 = vmatmul.mubr.bf16.gmra.mrb[0].mxu0 %v4711
      %v4892 = vpop.f32.mrb[0].mxu0
      %v4893 = vadd.f32 %v4821, %v4892
      %v4894 = vpop.f32.mrb[0].mxu0
      %v4895 = vpop.f32.mrb[0].mxu0
      %v4896 = vadd.f32 %v4824, %v4895
      %v4897 = vpop.f32.mrb[0].mxu0
      %4898 = vmatprep.mubr.bf16.mxu0 %v4717
      %4899 = vmatmul.mubr.bf16.gmra.mrb[0].mxu0 %v4716
      %v4900 = vpop.f32.mrb[0].mxu0
      %v4901 = vadd.f32 %v4829, %v4900
      %v4902 = vpop.f32.mrb[0].mxu0
      %v4903 = vpop.f32.mrb[0].mxu0
      %v4904 = vpop.f32.mrb[0].mxu0
      %4905 = vdwg.mxu0
      %4906 = vmatprep.subr.bf16.mxu0 0
      %4907 = vmatpush1.bf16.msra.mxu0 %v4616
      %4908 = vmatprep.subr.bf16.mxu0 0
      %4909 = vmatpush1.bf16.msra.mxu0 %v4617
      %4910 = vmatprep.subr.bf16.mxu0 0
      %4911 = vmatpush1.bf16.msra.mxu0 %v4618
      %4912 = vmatprep.subr.bf16.mxu0 0
      %4913 = vmatpush1.bf16.msra.mxu0 %v4619
      %4914 = vmatprep.subr.bf16.mxu0 0
      %4915 = vmatpush1.bf16.msra.mxu0 %v4620
      %4916 = vmatprep.subr.bf16.mxu0 0
      %4917 = vmatpush1.bf16.msra.mxu0 %v4760
      %4918 = vmatprep.subr.bf16.mxu0 0
      %4919 = vmatpush1.bf16.msra.mxu0 0
      %4920 = vmatprep.subr.bf16.mxu0 0
      %4921 = vmatpush1.bf16.msra.mxu0 0
      %4922 = vmatprep.subr.bf16.mxu0 0
      %4923 = vmatpush1.bf16.msra.mxu0 0
      %4924 = vmatprep.subr.bf16.mxu0 0
      %4925 = vmatpush1.bf16.msra.mxu0 0
      %4926 = vmatprep.subr.bf16.mxu0 0
      %4927 = vmatpush1.bf16.msra.mxu0 0
      %4928 = vmatprep.subr.bf16.mxu0 0
      %4929 = vmatpush1.bf16.msra.mxu0 0
      %4930 = vmatprep.subr.bf16.mxu0 0
      %4931 = vmatpush1.bf16.msra.mxu0 0
      %4932 = vmatprep.subr.bf16.mxu0 0
      %4933 = vmatpush1.bf16.msra.mxu0 0
      %4934 = vmatprep.subr.bf16.mxu0 0
      %4935 = vmatpush1.bf16.msra.mxu0 0
      %4936 = vmatprep.subr.bf16.mxu0 0
      %4937 = vmatpush1.bf16.msra.mxu0 0
      %4938 = vmatprep.mubr.bf16.mxu0 0
      %4939 = vmatmul.mubr.bf16.gmra.mrb[0].mxu0 %v4741
      %v4940 = vpop.f32.mrb[0].mxu0
      %v4941 = vadd.f32 %v4869, %v4940
      %v4942 = vpop.f32.mrb[0].mxu0
      %v4943 = vpop.f32.mrb[0].mxu0
      %v4944 = vadd.f32 %v4872, %v4943
      %v4945 = vpop.f32.mrb[0].mxu0
      %4946 = vmatprep.mubr.bf16.mxu0 0
      %4947 = vmatmul.mubr.bf16.gmra.mrb[0].mxu0 %v4744
      %v4948 = vpop.f32.mrb[0].mxu0
      %v4949 = vadd.f32 %v4877, %v4948
      %v4950 = vpop.f32.mrb[0].mxu0
      %v4951 = vpop.f32.mrb[0].mxu0
      %v4952 = vadd.f32 %v4880, %v4951
      %v4953 = vpop.f32.mrb[0].mxu0
      %4954 = vmatprep.mubr.bf16.mxu0 0
      %4955 = vmatmul.mubr.bf16.gmra.mrb[0].mxu0 %v4747
      %v4956 = vpop.f32.mrb[0].mxu0
      %v4957 = vadd.f32 %v4885, %v4956
      %v4958 = vpop.f32.mrb[0].mxu0
      %v4959 = vpop.f32.mrb[0].mxu0
      %v4960 = vadd.f32 %v4888, %v4959
      %v4961 = vpop.f32.mrb[0].mxu0
      %4962 = vmatprep.mubr.bf16.mxu0 0
      %4963 = vmatmul.mubr.bf16.gmra.mrb[0].mxu0 %v4750
      %v4964 = vpop.f32.mrb[0].mxu0
      %v4965 = vadd.f32 %v4893, %v4964
      %v4966 = vpop.f32.mrb[0].mxu0
      %v4967 = vpop.f32.mrb[0].mxu0
      %v4968 = vadd.f32 %v4896, %v4967
      %v4969 = vpop.f32.mrb[0].mxu0
      %4970 = vmatprep.mubr.bf16.mxu0 0
      %4971 = vmatmul.mubr.bf16.gmra.mrb[0].mxu0 %v4753
      %v4972 = vpop.f32.mrb[0].mxu0
      %v4973 = vadd.f32 %v4901, %v4972
      %v4974 = vpop.f32.mrb[0].mxu0
      %v4975 = vpop.f32.mrb[0].mxu0
      %v4976 = vpop.f32.mrb[0].mxu0
      %4977 = vdwg.mxu0
      %v5005 = vunpack.c.l.b16 %v290
      %v5006 = vunpack.c.h.b16 %v290
      %v5007 = vunpack.c.l.b16 %v291
      %v5008 = vunpack.c.h.b16 %v291
      %v5009 = vunpack.c.l.b16 %v292
      %v5010 = vunpack.c.l.b16 %v293
      %v5011 = vunpack.c.h.b16 %v293
      %v5012 = vunpack.c.l.b16 %v294
      %v5013 = vunpack.c.h.b16 %v294
      %v5014 = vunpack.c.l.b16 %v295
      %v5015 = vunpack.c.l.b16 %v296
      %v5016 = vunpack.c.h.b16 %v296
      %v5017 = vunpack.c.l.b16 %v297
      %v5018 = vunpack.c.h.b16 %v297
      %v5019 = vunpack.c.l.b16 %v298
      %v5020 = vunpack.c.l.b16 %v299
      %v5021 = vunpack.c.h.b16 %v299
      %v5022 = vunpack.c.l.b16 %v300
      %v5023 = vunpack.c.h.b16 %v300
      %v5024 = vunpack.c.l.b16 %v301
      %v5025 = vunpack.c.l.b16 %v302
      %v5026 = vunpack.c.h.b16 %v302
      %v5027 = vunpack.c.l.b16 %v303
      %v5028 = vunpack.c.h.b16 %v303
      %v5029 = vunpack.c.l.b16 %v304
      %v5030 = vunpack.c.l.b16 %v305
      %v5031 = vunpack.c.h.b16 %v305
      %v5032 = vunpack.c.l.b16 %v306
      %v5033 = vunpack.c.h.b16 %v306
      %v5034 = vunpack.c.l.b16 %v307
      %v5035 = vunpack.c.l.b16 %v308
      %v5036 = vunpack.c.h.b16 %v308
      %v5037 = vunpack.c.l.b16 %v309
      %v5038 = vunpack.c.h.b16 %v309
      %v5039 = vunpack.c.l.b16 %v310
      %v5040 = vunpack.c.l.b16 %v311
      %v5041 = vunpack.c.h.b16 %v311
      %v5042 = vunpack.c.l.b16 %v312
      %v5043 = vunpack.c.h.b16 %v312
      %v5044 = vunpack.c.l.b16 %v313
      %v5045 = vunpack.c.l.b16 %v314
      %v5046 = vunpack.c.h.b16 %v314
      %v5047 = vunpack.c.l.b16 %v315
      %v5048 = vunpack.c.h.b16 %v315
      %v5049 = vunpack.c.l.b16 %v316
      %v5050 = vpack.c.b16 %v5010, %v5005
      %v5051 = vpack.c.b16 %v5011, %v5006
      %v5052 = vpack.c.b16 %v5012, %v5007
      %v5053 = vpack.c.b16 %v5013, %v5008
      %v5054 = vpack.c.b16 %v5014, %v5009
      %v5055 = vpack.c.b16 %v5020, %v5015
      %v5056 = vpack.c.b16 %v5021, %v5016
      %v5057 = vpack.c.b16 %v5022, %v5017
      %v5058 = vpack.c.b16 %v5023, %v5018
      %v5059 = vpack.c.b16 %v5024, %v5019
      %v5060 = vpack.c.b16 %v5030, %v5025
      %v5061 = vpack.c.b16 %v5031, %v5026
      %v5062 = vpack.c.b16 %v5032, %v5027
      %v5063 = vpack.c.b16 %v5033, %v5028
      %v5064 = vpack.c.b16 %v5034, %v5029
      %v5065 = vpack.c.b16 %v5040, %v5035
      %v5066 = vpack.c.b16 %v5041, %v5036
      %v5067 = vpack.c.b16 %v5042, %v5037
      %v5068 = vpack.c.b16 %v5043, %v5038
      %v5069 = vpack.c.b16 %v5044, %v5039
      %v5070 = vpack.c.b16 %v5045, %v5045
      %v5071 = vpack.c.b16 %v5046, %v5046
      %v5072 = vpack.c.b16 %v5047, %v5047
      %v5073 = vpack.c.b16 %v5048, %v5048
      %v5074 = vpack.c.b16 %v5049, %v5049
      %v5096 = vsel %vm4739, %v5054, 0
      %v5099 = vsel %vm4739, %v5059, 0
      %v5102 = vsel %vm4739, %v5064, 0
      %v5105 = vsel %vm4739, %v5069, 0
      %v5108 = vsel %vm4739, %v5074, 0
      %5110 = vmatprep.subr.bf16.mxu0 0
      %5111 = vmatpush1.bf16.msra.mxu0 %v4584
      %5112 = vmatprep.subr.bf16.mxu0 0
      %5113 = vmatpush1.bf16.msra.mxu0 %v4585
      %5114 = vmatprep.subr.bf16.mxu0 0
      %5115 = vmatpush1.bf16.msra.mxu0 %v4586
      %5116 = vmatprep.subr.bf16.mxu0 0
      %5117 = vmatpush1.bf16.msra.mxu0 %v4587
      %5118 = vmatprep.subr.bf16.mxu0 0
      %5119 = vmatpush1.bf16.msra.mxu0 %v4588
      %5120 = vmatprep.subr.bf16.mxu0 0
      %5121 = vmatpush1.bf16.msra.mxu0 %v4589
      %5122 = vmatprep.subr.bf16.mxu0 0
      %5123 = vmatpush1.bf16.msra.mxu0 %v4590
      %5124 = vmatprep.subr.bf16.mxu0 0
      %5125 = vmatpush1.bf16.msra.mxu0 %v4591
      %5126 = vmatprep.subr.bf16.mxu0 0
      %5127 = vmatpush1.bf16.msra.mxu0 %v4592
      %5128 = vmatprep.subr.bf16.mxu0 0
      %5129 = vmatpush1.bf16.msra.mxu0 %v4593
      %5130 = vmatprep.subr.bf16.mxu0 0
      %5131 = vmatpush1.bf16.msra.mxu0 %v4594
      %5132 = vmatprep.subr.bf16.mxu0 0
      %5133 = vmatpush1.bf16.msra.mxu0 %v4595
      %5134 = vmatprep.subr.bf16.mxu0 0
      %5135 = vmatpush1.bf16.msra.mxu0 %v4596
      %5136 = vmatprep.subr.bf16.mxu0 0
      %5137 = vmatpush1.bf16.msra.mxu0 %v4597
      %5138 = vmatprep.subr.bf16.mxu0 0
      %5139 = vmatpush1.bf16.msra.mxu0 %v4598
      %5140 = vmatprep.subr.bf16.mxu0 0
      %5141 = vmatpush1.bf16.msra.mxu0 %v4599
      %5142 = vmatprep.mubr.bf16.mxu0 %v5051
      %5143 = vmatmul.mubr.bf16.gmra.mrb[0].mxu0 %v5050
      %v5144 = vpop.f32.mrb[0].mxu0
      %v5145 = vadd.f32 0.0, %v5144
      %v5146 = vpop.f32.mrb[0].mxu0
      %v5147 = vpop.f32.mrb[0].mxu0
      %v5148 = vadd.f32 0.0, %v5147
      %v5149 = vpop.f32.mrb[0].mxu0
      %5150 = vmatprep.mubr.bf16.mxu0 %v5056
      %5151 = vmatmul.mubr.bf16.gmra.mrb[0].mxu0 %v5055
      %v5152 = vpop.f32.mrb[0].mxu0
      %v5153 = vadd.f32 0.0, %v5152
      %v5154 = vpop.f32.mrb[0].mxu0
      %v5155 = vpop.f32.mrb[0].mxu0
      %v5156 = vadd.f32 0.0, %v5155
      %v5157 = vpop.f32.mrb[0].mxu0
      %5158 = vmatprep.mubr.bf16.mxu0 %v5061
      %5159 = vmatmul.mubr.bf16.gmra.mrb[0].mxu0 %v5060
      %v5160 = vpop.f32.mrb[0].mxu0
      %v5161 = vadd.f32 0.0, %v5160
      %v5162 = vpop.f32.mrb[0].mxu0
      %v5163 = vpop.f32.mrb[0].mxu0
      %v5164 = vadd.f32 0.0, %v5163
      %v5165 = vpop.f32.mrb[0].mxu0
      %5166 = vmatprep.mubr.bf16.mxu0 %v5066
      %5167 = vmatmul.mubr.bf16.gmra.mrb[0].mxu0 %v5065
      %v5168 = vpop.f32.mrb[0].mxu0
      %v5169 = vadd.f32 0.0, %v5168
      %v5170 = vpop.f32.mrb[0].mxu0
      %v5171 = vpop.f32.mrb[0].mxu0
      %v5172 = vadd.f32 0.0, %v5171
      %v5173 = vpop.f32.mrb[0].mxu0
      %5174 = vmatprep.mubr.bf16.mxu0 %v5071
      %5175 = vmatmul.mubr.bf16.gmra.mrb[0].mxu0 %v5070
      %v5176 = vpop.f32.mrb[0].mxu0
      %v5177 = vadd.f32 0.0, %v5176
      %v5178 = vpop.f32.mrb[0].mxu0
      %v5179 = vpop.f32.mrb[0].mxu0
      %v5180 = vpop.f32.mrb[0].mxu0
      %5181 = vdwg.mxu0
      %5182 = vmatprep.subr.bf16.mxu0 0
      %5183 = vmatpush1.bf16.msra.mxu0 %v4600
      %5184 = vmatprep.subr.bf16.mxu0 0
      %5185 = vmatpush1.bf16.msra.mxu0 %v4601
      %5186 = vmatprep.subr.bf16.mxu0 0
      %5187 = vmatpush1.bf16.msra.mxu0 %v4602
      %5188 = vmatprep.subr.bf16.mxu0 0
      %5189 = vmatpush1.bf16.msra.mxu0 %v4603
      %5190 = vmatprep.subr.bf16.mxu0 0
      %5191 = vmatpush1.bf16.msra.mxu0 %v4604
      %5192 = vmatprep.subr.bf16.mxu0 0
      %5193 = vmatpush1.bf16.msra.mxu0 %v4605
      %5194 = vmatprep.subr.bf16.mxu0 0
      %5195 = vmatpush1.bf16.msra.mxu0 %v4606
      %5196 = vmatprep.subr.bf16.mxu0 0
      %5197 = vmatpush1.bf16.msra.mxu0 %v4607
      %5198 = vmatprep.subr.bf16.mxu0 0
      %5199 = vmatpush1.bf16.msra.mxu0 %v4608
      %5200 = vmatprep.subr.bf16.mxu0 0
      %5201 = vmatpush1.bf16.msra.mxu0 %v4609
      %5202 = vmatprep.subr.bf16.mxu0 0
      %5203 = vmatpush1.bf16.msra.mxu0 %v4610
      %5204 = vmatprep.subr.bf16.mxu0 0
      %5205 = vmatpush1.bf16.msra.mxu0 %v4611
      %5206 = vmatprep.subr.bf16.mxu0 0
      %5207 = vmatpush1.bf16.msra.mxu0 %v4612
      %5208 = vmatprep.subr.bf16.mxu0 0
      %5209 = vmatpush1.bf16.msra.mxu0 %v4613
      %5210 = vmatprep.subr.bf16.mxu0 0
      %5211 = vmatpush1.bf16.msra.mxu0 %v4614
      %5212 = vmatprep.subr.bf16.mxu0 0
      %5213 = vmatpush1.bf16.msra.mxu0 %v4615
      %5214 = vmatprep.mubr.bf16.mxu0 %v5053
      %5215 = vmatmul.mubr.bf16.gmra.mrb[0].mxu0 %v5052
      %v5216 = vpop.f32.mrb[0].mxu0
      %v5217 = vadd.f32 %v5145, %v5216
      %v5218 = vpop.f32.mrb[0].mxu0
      %v5219 = vpop.f32.mrb[0].mxu0
      %v5220 = vadd.f32 %v5148, %v5219
      %v5221 = vpop.f32.mrb[0].mxu0
      %5222 = vmatprep.mubr.bf16.mxu0 %v5058
      %5223 = vmatmul.mubr.bf16.gmra.mrb[0].mxu0 %v5057
      %v5224 = vpop.f32.mrb[0].mxu0
      %v5225 = vadd.f32 %v5153, %v5224
      %v5226 = vpop.f32.mrb[0].mxu0
      %v5227 = vpop.f32.mrb[0].mxu0
      %v5228 = vadd.f32 %v5156, %v5227
      %v5229 = vpop.f32.mrb[0].mxu0
      %5230 = vmatprep.mubr.bf16.mxu0 %v5063
      %5231 = vmatmul.mubr.bf16.gmra.mrb[0].mxu0 %v5062
      %v5232 = vpop.f32.mrb[0].mxu0
      %v5233 = vadd.f32 %v5161, %v5232
      %v5234 = vpop.f32.mrb[0].mxu0
      %v5235 = vpop.f32.mrb[0].mxu0
      %v5236 = vadd.f32 %v5164, %v5235
      %v5237 = vpop.f32.mrb[0].mxu0
      %5238 = vmatprep.mubr.bf16.mxu0 %v5068
      %5239 = vmatmul.mubr.bf16.gmra.mrb[0].mxu0 %v5067
      %v5240 = vpop.f32.mrb[0].mxu0
      %v5241 = vadd.f32 %v5169, %v5240
      %v5242 = vpop.f32.mrb[0].mxu0
      %v5243 = vpop.f32.mrb[0].mxu0
      %v5244 = vadd.f32 %v5172, %v5243
      %v5245 = vpop.f32.mrb[0].mxu0
      %5246 = vmatprep.mubr.bf16.mxu0 %v5073
      %5247 = vmatmul.mubr.bf16.gmra.mrb[0].mxu0 %v5072
      %v5248 = vpop.f32.mrb[0].mxu0
      %v5249 = vadd.f32 %v5177, %v5248
      %v5250 = vpop.f32.mrb[0].mxu0
      %v5251 = vpop.f32.mrb[0].mxu0
      %v5252 = vpop.f32.mrb[0].mxu0
      %5253 = vdwg.mxu0
      %5254 = vmatprep.subr.bf16.mxu0 0
      %5255 = vmatpush1.bf16.msra.mxu0 %v4616
      %5256 = vmatprep.subr.bf16.mxu0 0
      %5257 = vmatpush1.bf16.msra.mxu0 %v4617
      %5258 = vmatprep.subr.bf16.mxu0 0
      %5259 = vmatpush1.bf16.msra.mxu0 %v4618
      %5260 = vmatprep.subr.bf16.mxu0 0
      %5261 = vmatpush1.bf16.msra.mxu0 %v4619
      %5262 = vmatprep.subr.bf16.mxu0 0
      %5263 = vmatpush1.bf16.msra.mxu0 %v4620
      %5264 = vmatprep.subr.bf16.mxu0 0
      %5265 = vmatpush1.bf16.msra.mxu0 %v4760
      %5266 = vmatprep.subr.bf16.mxu0 0
      %5267 = vmatpush1.bf16.msra.mxu0 0
      %5268 = vmatprep.subr.bf16.mxu0 0
      %5269 = vmatpush1.bf16.msra.mxu0 0
      %5270 = vmatprep.subr.bf16.mxu0 0
      %5271 = vmatpush1.bf16.msra.mxu0 0
      %5272 = vmatprep.subr.bf16.mxu0 0
      %5273 = vmatpush1.bf16.msra.mxu0 0
      %5274 = vmatprep.subr.bf16.mxu0 0
      %5275 = vmatpush1.bf16.msra.mxu0 0
      %5276 = vmatprep.subr.bf16.mxu0 0
      %5277 = vmatpush1.bf16.msra.mxu0 0
      %5278 = vmatprep.subr.bf16.mxu0 0
      %5279 = vmatpush1.bf16.msra.mxu0 0
      %5280 = vmatprep.subr.bf16.mxu0 0
      %5281 = vmatpush1.bf16.msra.mxu0 0
      %5282 = vmatprep.subr.bf16.mxu0 0
      %5283 = vmatpush1.bf16.msra.mxu0 0
      %5284 = vmatprep.subr.bf16.mxu0 0
      %5285 = vmatpush1.bf16.msra.mxu0 0
      %5286 = vmatprep.mubr.bf16.mxu0 0
      %5287 = vmatmul.mubr.bf16.gmra.mrb[0].mxu0 %v5096
      %v5288 = vpop.f32.mrb[0].mxu0
      %v5289 = vadd.f32 %v5217, %v5288
      %v5290 = vpop.f32.mrb[0].mxu0
      %v5291 = vpop.f32.mrb[0].mxu0
      %v5292 = vadd.f32 %v5220, %v5291
      %v5293 = vpop.f32.mrb[0].mxu0
      %5294 = vmatprep.mubr.bf16.mxu0 0
      %5295 = vmatmul.mubr.bf16.gmra.mrb[0].mxu0 %v5099
      %v5296 = vpop.f32.mrb[0].mxu0
      %v5297 = vadd.f32 %v5225, %v5296
      %v5298 = vpop.f32.mrb[0].mxu0
      %v5299 = vpop.f32.mrb[0].mxu0
      %v5300 = vadd.f32 %v5228, %v5299
      %v5301 = vpop.f32.mrb[0].mxu0
      %5302 = vmatprep.mubr.bf16.mxu0 0
      %5303 = vmatmul.mubr.bf16.gmra.mrb[0].mxu0 %v5102
      %v5304 = vpop.f32.mrb[0].mxu0
      %v5305 = vadd.f32 %v5233, %v5304
      %v5306 = vpop.f32.mrb[0].mxu0
      %v5307 = vpop.f32.mrb[0].mxu0
      %v5308 = vadd.f32 %v5236, %v5307
      %v5309 = vpop.f32.mrb[0].mxu0
      %5310 = vmatprep.mubr.bf16.mxu0 0
      %5311 = vmatmul.mubr.bf16.gmra.mrb[0].mxu0 %v5105
      %v5312 = vpop.f32.mrb[0].mxu0
      %v5313 = vadd.f32 %v5241, %v5312
      %v5314 = vpop.f32.mrb[0].mxu0
      %v5315 = vpop.f32.mrb[0].mxu0
      %v5316 = vadd.f32 %v5244, %v5315
      %v5317 = vpop.f32.mrb[0].mxu0
      %5318 = vmatprep.mubr.bf16.mxu0 0
      %5319 = vmatmul.mubr.bf16.gmra.mrb[0].mxu0 %v5108
      %v5320 = vpop.f32.mrb[0].mxu0
      %v5321 = vadd.f32 %v5249, %v5320
      %v5322 = vpop.f32.mrb[0].mxu0
      %v5323 = vpop.f32.mrb[0].mxu0
      %v5324 = vpop.f32.mrb[0].mxu0
      %5325 = vdwg.mxu0
      %v5326 = vpack.c.bf16 %v4944, %v4941
      %v5327 = vpack.c.bf16 %v4952, %v4949
      %v5328 = vpack.c.bf16 %v4960, %v4957
      %v5329 = vpack.c.bf16 %v4968, %v4965
      %v5330 = vpack.c.bf16 %v4973, %v4973
      %v5331 = vpack.c.bf16 %v5292, %v5289
      %v5332 = vpack.c.bf16 %v5300, %v5297
      %v5333 = vpack.c.bf16 %v5308, %v5305
      %v5334 = vpack.c.bf16 %v5316, %v5313
      %v5335 = vpack.c.bf16 %v5321, %v5321
      %5341 = vrot.lane.b32.xlu0 %v5331, 64
      %v5342 = vpop.permute.xlu0 %5341
      %5343 = vrot.lane.b32.xlu0 %v5332, 64
      %v5344 = vpop.permute.xlu0 %5343
      %5345 = vrot.lane.b32.xlu0 %v5333, 64
      %v5346 = vpop.permute.xlu0 %5345
      %5347 = vrot.lane.b32.xlu0 %v5334, 64
      %v5348 = vpop.permute.xlu0 %5347
      %5349 = vrot.lane.b32.xlu0 %v5335, 64
      %v5350 = vpop.permute.xlu0 %5349
      %v5353 = vsel %vm2496, %v5326, %v5342
      %v5356 = vsel %vm2496, %v5327, %v5344
      %v5359 = vsel %vm2496, %v5328, %v5346
      %v5362 = vsel %vm2496, %v5329, %v5348
      %v5365 = vsel %vm2496, %v5330, %v5350
      %v5371 = vunpack.c.l.b16 %v5353
      %v5372 = vunpack.c.h.b16 %v5353
      %v5373 = vunpack.c.l.b16 %v5356
      %v5374 = vunpack.c.h.b16 %v5356
      %v5375 = vunpack.c.l.b16 %v5359
      %v5376 = vunpack.c.h.b16 %v5359
      %v5377 = vunpack.c.l.b16 %v5362
      %v5378 = vunpack.c.h.b16 %v5362
      %v5379 = vunpack.c.l.b16 %v5365
      %v5380 = vpack.c.b16 %v5371, %v5371
      %v5381 = vpack.c.b16 %v5372, %v5372
      %v5382 = vpack.c.b16 %v5373, %v5373
      %v5383 = vpack.c.b16 %v5374, %v5374
      %v5384 = vpack.c.b16 %v5375, %v5375
      %v5385 = vpack.c.b16 %v5376, %v5376
      %v5386 = vpack.c.b16 %v5377, %v5377
      %v5387 = vpack.c.b16 %v5378, %v5378
      %v5388 = vpack.c.b16 %v5379, %v5379
      %5398 = vst [vmem:[%s224] sm:$0xf] %v5380
      %5399 = vst [vmem:[%s224 + $0x4] sm:$0xf] %v5381
      %5400 = vst [vmem:[%s224 + $0x8] sm:$0xf] %v5382
      %5401 = vst [vmem:[%s224 + $0xc] sm:$0xf] %v5383
      %5402 = vst [vmem:[%s224 + $0x10] sm:$0xf] %v5384
      %5403 = vst [vmem:[%s224 + $0x14] sm:$0xf] %v5385
      %5404 = vst [vmem:[%s224 + $0x18] sm:$0xf] %v5386
      %5405 = vst [vmem:[%s224 + $0x1c] sm:$0xf] %v5387
      %5406 = vst [vmem:[%s224 + $0x20] sm:$0xf] %v5388
      %p5407 = scmp.lt.s32.totalorder %s16, 1
      %s5408 = scalar_select %p5407, %s16, 1
      %s5409 = smul.addr %s5408, 9
      %s5410 = smul.addr %s5409, 4
      %s5411 = scalar_lea.vmem %s5, %s5410
      // Predicated region
      $region41: #{cnn_net_forward.4} parent=39 // pred_check
        %p5412 = pneg %p144
      $region42: #{cnn_net_forward.4} parent=39 // pred_check_branch
        %5414 = sbr.rel (%p5412) target = $region44
      $region43: #{cnn_net_forward.4} parent=39 // pred_region
        _
      $region44: #{cnn_net_forward.4} parent=39 // pred_fallthru
        _
    $region40: #{cnn_net_forward.4} parent=5 // pred_fallthru
      _
    %p5415 = scmp.le.s32.totalorder 2, %s11
    // Predicated region
    $region45: #{cnn_net_forward.4} parent=5 // pred_check
      %p5416 = pneg %p5415
    $region46: #{cnn_net_forward.4} parent=5 // pred_check_branch
      %5418 = sbr.rel (%p5416) target = $region48
    $region47: #{cnn_net_forward.4} parent=5 // pred_region
      %s5419 = ssub.s32 %s11, 2
      // Predicated region
      $region49: #{cnn_net_forward.4} parent=47 // pred_check
        %p5420 = pneg %p150
      $region50: #{cnn_net_forward.4} parent=47 // pred_check_branch
        %5422 = sbr.rel (%p5420) target = $region52
      $region51: #{cnn_net_forward.4} parent=47 // pred_region
        %p5423 = scmp.lt.s32.totalorder %s17, 1
        %s5424 = scalar_select %p5423, %s17, 1
        %s5425 = smul.addr %s5424, 9
        %s5426 = smul.addr %s5425, 4
        %s5427 = scalar_lea.vmem %s5, %s5426
      $region52: #{cnn_net_forward.4} parent=47 // pred_fallthru
        _
    $region48: #{cnn_net_forward.4} parent=5 // pred_fallthru
      _
  $region6: #{cnn_net_forward.4} parent=0 // loop_footer
    %s15 = sadd.s32 1, %s11
  $region7: #{cnn_net_forward.4} parent=0 // loop_footer_branch
    %10 = sbr.rel target = $region3
  $region8: #{cnn_net_forward.4} parent=0 // loop_exit
    _

// kernel: cnn_net_forward.5
$region0: #{cnn_net_forward.5}
  #allocation0 [shape = 'u32[]', space=smem, size = 0x4, offset = 0x4, fixed_abs, tag = 'smem constant byte address 0x4 - core index']
  #allocation1 [shape = 'u32[144,128]{1,0:T(1,128)}', space=vmem, size = 0x12000, scoped, tag = 'internal scratch']
  %s0 = inlined_call_operand.vmem [shape: bf16[2,9216], index: 0, kind: input, shape index: {}]
  %s1 = inlined_call_operand.vmem [shape: bf16[9216,128], index: 1, kind: input, shape index: {}]
  %s2 = inlined_call_operand.vmem [shape: f32[1,128], index: 2, kind: input, shape index: {}]
  %s3 = inlined_call_operand.vmem [shape: bf16[128,10], index: 3, kind: input, shape index: {}]
  %s4 = inlined_call_operand.vmem [shape: f32[1,10], index: 4, kind: input, shape index: {}]
  %s5 = inlined_call_operand.hbm [shape: f32[2,10], index: 5, kind: output, shape index: {}]
  %s6 = sld [smem:[#allocation0]]
  $region30: #{cnn_net_forward.5} parent=0
    _
  %s8 = ssub.s32 1, %s6
  %s9 = scalar_select 0, %s8, %s6
  $region1: #{cnn_net_forward.5} parent=0
    #allocation2 [shape = 'u8[1024]{0}', space=vmem, size = 0x400, scoped, tag = 'output window, operand 0, single buffered']
    #allocation3 [shape = 's32[1]{0}', space=sflag, size = 0x4, scoped, tag = 'scoped memory for cnn_net_forward.5']
    %10 = vsyncpa [#allocation3], 0
    // Predicated region
    $region2: #{cnn_net_forward.5} parent=1 // pred_check
      _
    $region3: #{cnn_net_forward.5} parent=1 // pred_check_branch
      %12 = sbr.rel (0) target = $region5
    $region4: #{cnn_net_forward.5} parent=1 // pred_region
      _
    $region5: #{cnn_net_forward.5} parent=1 // pred_fallthru
      _
    // Predicated region
    $region6: #{cnn_net_forward.5} parent=1 // pred_check
      _
    $region7: #{cnn_net_forward.5} parent=1 // pred_check_branch
      %14 = sbr.rel (0) target = $region9
    $region8: #{cnn_net_forward.5} parent=1 // pred_region
      _
    $region9: #{cnn_net_forward.5} parent=1 // pred_fallthru
      _
    // Predicated region
    $region10: #{cnn_net_forward.5} parent=1 // pred_check
      _
    $region11: #{cnn_net_forward.5} parent=1 // pred_check_branch
      %16 = sbr.rel (0) target = $region13
    $region12: #{cnn_net_forward.5} parent=1 // pred_region
      _
    $region13: #{cnn_net_forward.5} parent=1 // pred_fallthru
      _
    // Predicated region
    $region14: #{cnn_net_forward.5} parent=1 // pred_check
      _
    $region15: #{cnn_net_forward.5} parent=1 // pred_check_branch
      %18 = sbr.rel (0) target = $region17
    $region16: #{cnn_net_forward.5} parent=1 // pred_region
      _
    $region17: #{cnn_net_forward.5} parent=1 // pred_fallthru
      _
    // Predicated region
    $region18: #{cnn_net_forward.5} parent=1 // pred_check
      _
    $region19: #{cnn_net_forward.5} parent=1 // pred_check_branch
      %20 = sbr.rel (0) target = $region21
    $region20: #{cnn_net_forward.5} parent=1 // pred_region
      _
    $region21: #{cnn_net_forward.5} parent=1 // pred_fallthru
      _
    %v22 = vld [vmem:[%s0] sm:$0xff]
    %v23 = vld [vmem:[%s0 + $0x8] sm:$0xff]
    %v24 = vld [vmem:[%s0 + $0x10] sm:$0xff]
    %v25 = vld [vmem:[%s0 + $0x18] sm:$0xff]
    %v26 = vld [vmem:[%s0 + $0x20] sm:$0xff]
    %v27 = vld [vmem:[%s0 + $0x28] sm:$0xff]
    %v28 = vld [vmem:[%s0 + $0x30] sm:$0xff]
    %v29 = vld [vmem:[%s0 + $0x38] sm:$0xff]
    %v30 = vld [vmem:[%s0 + $0x40] sm:$0xff]
    %v31 = vld [vmem:[%s1] sm:$0xf]
    %v32 = vld [vmem:[%s1 + $0x4] sm:$0xf]
    %v33 = vld [vmem:[%s1 + $0x8] sm:$0xf]
    %v34 = vld [vmem:[%s1 + $0xc] sm:$0xf]
    %v35 = vld [vmem:[%s1 + $0x10] sm:$0xf]
    %v36 = vld [vmem:[%s1 + $0x14] sm:$0xf]
    %v37 = vld [vmem:[%s1 + $0x18] sm:$0xf]
    %v38 = vld [vmem:[%s1 + $0x1c] sm:$0xf]
    %v39 = vld [vmem:[%s1 + $0x20] sm:$0xf]
    %v40 = vld [vmem:[%s1 + $0x24] sm:$0xf]
    %v41 = vld [vmem:[%s1 + $0x28] sm:$0xf]
    %v42 = vld [vmem:[%s1 + $0x2c] sm:$0xf]
    %v43 = vld [vmem:[%s1 + $0x30] sm:$0xf]
    %v44 = vld [vmem:[%s1 + $0x34] sm:$0xf]
    %v45 = vld [vmem:[%s1 + $0x38] sm:$0xf]
    %v46 = vld [vmem:[%s1 + $0x3c] sm:$0xf]
    %v47 = vld [vmem:[%s1 + $0x40] sm:$0xf]
    %v48 = vld [vmem:[%s1 + $0x44] sm:$0xf]
    %v49 = vld [vmem:[%s1 + $0x48] sm:$0xf]
    %v50 = vld [vmem:[%s1 + $0x4c] sm:$0xf]
    %v51 = vld [vmem:[%s1 + $0x50] sm:$0xf]
    %v52 = vld [vmem:[%s1 + $0x54] sm:$0xf]
    %v53 = vld [vmem:[%s1 + $0x58] sm:$0xf]
    %v54 = vld [vmem:[%s1 + $0x5c] sm:$0xf]
    %v55 = vld [vmem:[%s1 + $0x60] sm:$0xf]
    %v56 = vld [vmem:[%s1 + $0x64] sm:$0xf]
    %v57 = vld [vmem:[%s1 + $0x68] sm:$0xf]
    %v58 = vld [vmem:[%s1 + $0x6c] sm:$0xf]
    %v59 = vld [vmem:[%s1 + $0x70] sm:$0xf]
    %v60 = vld [vmem:[%s1 + $0x74] sm:$0xf]
    %v61 = vld [vmem:[%s1 + $0x78] sm:$0xf]
    %v62 = vld [vmem:[%s1 + $0x7c] sm:$0xf]
    %v63 = vld [vmem:[%s1 + $0x80] sm:$0xf]
    %v64 = vld [vmem:[%s1 + $0x84] sm:$0xf]
    %v65 = vld [vmem:[%s1 + $0x88] sm:$0xf]
    %v66 = vld [vmem:[%s1 + $0x8c] sm:$0xf]
    %v67 = vld [vmem:[%s1 + $0x90] sm:$0xf]
    %v68 = vld [vmem:[%s1 + $0x94] sm:$0xf]
    %v69 = vld [vmem:[%s1 + $0x98] sm:$0xf]
    %v70 = vld [vmem:[%s1 + $0x9c] sm:$0xf]
    %v71 = vld [vmem:[%s1 + $0xa0] sm:$0xf]
    %v72 = vld [vmem:[%s1 + $0xa4] sm:$0xf]
    %v73 = vld [vmem:[%s1 + $0xa8] sm:$0xf]
    %v74 = vld [vmem:[%s1 + $0xac] sm:$0xf]
    %v75 = vld [vmem:[%s1 + $0xb0] sm:$0xf]
    %v76 = vld [vmem:[%s1 + $0xb4] sm:$0xf]
    %v77 = vld [vmem:[%s1 + $0xb8] sm:$0xf]
    %v78 = vld [vmem:[%s1 + $0xbc] sm:$0xf]
    %v79 = vld [vmem:[%s1 + $0xc0] sm:$0xf]
    %v80 = vld [vmem:[%s1 + $0xc4] sm:$0xf]
    %v81 = vld [vmem:[%s1 + $0xc8] sm:$0xf]
    %v82 = vld [vmem:[%s1 + $0xcc] sm:$0xf]
    %v83 = vld [vmem:[%s1 + $0xd0] sm:$0xf]
    %v84 = vld [vmem:[%s1 + $0xd4] sm:$0xf]
    %v85 = vld [vmem:[%s1 + $0xd8] sm:$0xf]
    %v86 = vld [vmem:[%s1 + $0xdc] sm:$0xf]
    %v87 = vld [vmem:[%s1 + $0xe0] sm:$0xf]
    %v88 = vld [vmem:[%s1 + $0xe4] sm:$0xf]
    %v89 = vld [vmem:[%s1 + $0xe8] sm:$0xf]
    %v90 = vld [vmem:[%s1 + $0xec] sm:$0xf]
    %v91 = vld [vmem:[%s1 + $0xf0] sm:$0xf]
    %v92 = vld [vmem:[%s1 + $0xf4] sm:$0xf]
    %v93 = vld [vmem:[%s1 + $0xf8] sm:$0xf]
    %v94 = vld [vmem:[%s1 + $0xfc] sm:$0xf]
    %v95 = vld [vmem:[%s1 + $0x100] sm:$0xf]
    %v96 = vld [vmem:[%s1 + $0x104] sm:$0xf]
    %v97 = vld [vmem:[%s1 + $0x108] sm:$0xf]
    %v98 = vld [vmem:[%s1 + $0x10c] sm:$0xf]
    %v99 = vld [vmem:[%s1 + $0x110] sm:$0xf]
    %v100 = vld [vmem:[%s1 + $0x114] sm:$0xf]
    %v101 = vld [vmem:[%s1 + $0x118] sm:$0xf]
    %v102 = vld [vmem:[%s1 + $0x11c] sm:$0xf]
    %v103 = vld [vmem:[%s1 + $0x120] sm:$0xf]
    %v104 = vld [vmem:[%s1 + $0x124] sm:$0xf]
    %v105 = vld [vmem:[%s1 + $0x128] sm:$0xf]
    %v106 = vld [vmem:[%s1 + $0x12c] sm:$0xf]
    %v107 = vld [vmem:[%s1 + $0x130] sm:$0xf]
    %v108 = vld [vmem:[%s1 + $0x134] sm:$0xf]
    %v109 = vld [vmem:[%s1 + $0x138] sm:$0xf]
    %v110 = vld [vmem:[%s1 + $0x13c] sm:$0xf]
    %v111 = vld [vmem:[%s1 + $0x140] sm:$0xf]
    %v112 = vld [vmem:[%s1 + $0x144] sm:$0xf]
    %v113 = vld [vmem:[%s1 + $0x148] sm:$0xf]
    %v114 = vld [vmem:[%s1 + $0x14c] sm:$0xf]
    %v115 = vld [vmem:[%s1 + $0x150] sm:$0xf]
    %v116 = vld [vmem:[%s1 + $0x154] sm:$0xf]
    %v117 = vld [vmem:[%s1 + $0x158] sm:$0xf]
    %v118 = vld [vmem:[%s1 + $0x15c] sm:$0xf]
    %v119 = vld [vmem:[%s1 + $0x160] sm:$0xf]
    %v120 = vld [vmem:[%s1 + $0x164] sm:$0xf]
    %v121 = vld [vmem:[%s1 + $0x168] sm:$0xf]
    %v122 = vld [vmem:[%s1 + $0x16c] sm:$0xf]
    %v123 = vld [vmem:[%s1 + $0x170] sm:$0xf]
    %v124 = vld [vmem:[%s1 + $0x174] sm:$0xf]
    %v125 = vld [vmem:[%s1 + $0x178] sm:$0xf]
    %v126 = vld [vmem:[%s1 + $0x17c] sm:$0xf]
    %v127 = vld [vmem:[%s1 + $0x180] sm:$0xf]
    %v128 = vld [vmem:[%s1 + $0x184] sm:$0xf]
    %v129 = vld [vmem:[%s1 + $0x188] sm:$0xf]
    %v130 = vld [vmem:[%s1 + $0x18c] sm:$0xf]
    %v131 = vld [vmem:[%s1 + $0x190] sm:$0xf]
    %v132 = vld [vmem:[%s1 + $0x194] sm:$0xf]
    %v133 = vld [vmem:[%s1 + $0x198] sm:$0xf]
    %v134 = vld [vmem:[%s1 + $0x19c] sm:$0xf]
    %v135 = vld [vmem:[%s1 + $0x1a0] sm:$0xf]
    %v136 = vld [vmem:[%s1 + $0x1a4] sm:$0xf]
    %v137 = vld [vmem:[%s1 + $0x1a8] sm:$0xf]
    %v138 = vld [vmem:[%s1 + $0x1ac] sm:$0xf]
    %v139 = vld [vmem:[%s1 + $0x1b0] sm:$0xf]
    %v140 = vld [vmem:[%s1 + $0x1b4] sm:$0xf]
    %v141 = vld [vmem:[%s1 + $0x1b8] sm:$0xf]
    %v142 = vld [vmem:[%s1 + $0x1bc] sm:$0xf]
    %v143 = vld [vmem:[%s1 + $0x1c0] sm:$0xf]
    %v144 = vld [vmem:[%s1 + $0x1c4] sm:$0xf]
    %v145 = vld [vmem:[%s1 + $0x1c8] sm:$0xf]
    %v146 = vld [vmem:[%s1 + $0x1cc] sm:$0xf]
    %v147 = vld [vmem:[%s1 + $0x1d0] sm:$0xf]
    %v148 = vld [vmem:[%s1 + $0x1d4] sm:$0xf]
    %v149 = vld [vmem:[%s1 + $0x1d8] sm:$0xf]
    %v150 = vld [vmem:[%s1 + $0x1dc] sm:$0xf]
    %v151 = vld [vmem:[%s1 + $0x1e0] sm:$0xf]
    %v152 = vld [vmem:[%s1 + $0x1e4] sm:$0xf]
    %v153 = vld [vmem:[%s1 + $0x1e8] sm:$0xf]
    %v154 = vld [vmem:[%s1 + $0x1ec] sm:$0xf]
    %v155 = vld [vmem:[%s1 + $0x1f0] sm:$0xf]
    %v156 = vld [vmem:[%s1 + $0x1f4] sm:$0xf]
    %v157 = vld [vmem:[%s1 + $0x1f8] sm:$0xf]
    %v158 = vld [vmem:[%s1 + $0x1fc] sm:$0xf]
    %v159 = vld [vmem:[%s1 + $0x200] sm:$0xf]
    %v160 = vld [vmem:[%s1 + $0x204] sm:$0xf]
    %v161 = vld [vmem:[%s1 + $0x208] sm:$0xf]
    %v162 = vld [vmem:[%s1 + $0x20c] sm:$0xf]
    %v163 = vld [vmem:[%s1 + $0x210] sm:$0xf]
    %v164 = vld [vmem:[%s1 + $0x214] sm:$0xf]
    %v165 = vld [vmem:[%s1 + $0x218] sm:$0xf]
    %v166 = vld [vmem:[%s1 + $0x21c] sm:$0xf]
    %v167 = vld [vmem:[%s1 + $0x220] sm:$0xf]
    %v168 = vld [vmem:[%s1 + $0x224] sm:$0xf]
    %v169 = vld [vmem:[%s1 + $0x228] sm:$0xf]
    %v170 = vld [vmem:[%s1 + $0x22c] sm:$0xf]
    %v171 = vld [vmem:[%s1 + $0x230] sm:$0xf]
    %v172 = vld [vmem:[%s1 + $0x234] sm:$0xf]
    %v173 = vld [vmem:[%s1 + $0x238] sm:$0xf]
    %v174 = vld [vmem:[%s1 + $0x23c] sm:$0xf]
    %v175 = vld [vmem:[%s1 + $0x240] sm:$0xf]
    %v176 = vld [vmem:[%s1 + $0x244] sm:$0xf]
    %v177 = vld [vmem:[%s1 + $0x248] sm:$0xf]
    %v178 = vld [vmem:[%s1 + $0x24c] sm:$0xf]
    %v179 = vld [vmem:[%s1 + $0x250] sm:$0xf]
    %v180 = vld [vmem:[%s1 + $0x254] sm:$0xf]
    %v181 = vld [vmem:[%s1 + $0x258] sm:$0xf]
    %v182 = vld [vmem:[%s1 + $0x25c] sm:$0xf]
    %v183 = vld [vmem:[%s1 + $0x260] sm:$0xf]
    %v184 = vld [vmem:[%s1 + $0x264] sm:$0xf]
    %v185 = vld [vmem:[%s1 + $0x268] sm:$0xf]
    %v186 = vld [vmem:[%s1 + $0x26c] sm:$0xf]
    %v187 = vld [vmem:[%s1 + $0x270] sm:$0xf]
    %v188 = vld [vmem:[%s1 + $0x274] sm:$0xf]
    %v189 = vld [vmem:[%s1 + $0x278] sm:$0xf]
    %v190 = vld [vmem:[%s1 + $0x27c] sm:$0xf]
    %v191 = vld [vmem:[%s1 + $0x280] sm:$0xf]
    %v192 = vld [vmem:[%s1 + $0x284] sm:$0xf]
    %v193 = vld [vmem:[%s1 + $0x288] sm:$0xf]
    %v194 = vld [vmem:[%s1 + $0x28c] sm:$0xf]
    %v195 = vld [vmem:[%s1 + $0x290] sm:$0xf]
    %v196 = vld [vmem:[%s1 + $0x294] sm:$0xf]
    %v197 = vld [vmem:[%s1 + $0x298] sm:$0xf]
    %v198 = vld [vmem:[%s1 + $0x29c] sm:$0xf]
    %v199 = vld [vmem:[%s1 + $0x2a0] sm:$0xf]
    %v200 = vld [vmem:[%s1 + $0x2a4] sm:$0xf]
    %v201 = vld [vmem:[%s1 + $0x2a8] sm:$0xf]
    %v202 = vld [vmem:[%s1 + $0x2ac] sm:$0xf]
    %v203 = vld [vmem:[%s1 + $0x2b0] sm:$0xf]
    %v204 = vld [vmem:[%s1 + $0x2b4] sm:$0xf]
    %v205 = vld [vmem:[%s1 + $0x2b8] sm:$0xf]
    %v206 = vld [vmem:[%s1 + $0x2bc] sm:$0xf]
    %v207 = vld [vmem:[%s1 + $0x2c0] sm:$0xf]
    %v208 = vld [vmem:[%s1 + $0x2c4] sm:$0xf]
    %v209 = vld [vmem:[%s1 + $0x2c8] sm:$0xf]
    %v210 = vld [vmem:[%s1 + $0x2cc] sm:$0xf]
    %v211 = vld [vmem:[%s1 + $0x2d0] sm:$0xf]
    %v212 = vld [vmem:[%s1 + $0x2d4] sm:$0xf]
    %v213 = vld [vmem:[%s1 + $0x2d8] sm:$0xf]
    %v214 = vld [vmem:[%s1 + $0x2dc] sm:$0xf]
    %v215 = vld [vmem:[%s1 + $0x2e0] sm:$0xf]
    %v216 = vld [vmem:[%s1 + $0x2e4] sm:$0xf]
    %v217 = vld [vmem:[%s1 + $0x2e8] sm:$0xf]
    %v218 = vld [vmem:[%s1 + $0x2ec] sm:$0xf]
    %v219 = vld [vmem:[%s1 + $0x2f0] sm:$0xf]
    %v220 = vld [vmem:[%s1 + $0x2f4] sm:$0xf]
    %v221 = vld [vmem:[%s1 + $0x2f8] sm:$0xf]
    %v222 = vld [vmem:[%s1 + $0x2fc] sm:$0xf]
    %v223 = vld [vmem:[%s1 + $0x300] sm:$0xf]
    %v224 = vld [vmem:[%s1 + $0x304] sm:$0xf]
    %v225 = vld [vmem:[%s1 + $0x308] sm:$0xf]
    %v226 = vld [vmem:[%s1 + $0x30c] sm:$0xf]
    %v227 = vld [vmem:[%s1 + $0x310] sm:$0xf]
    %v228 = vld [vmem:[%s1 + $0x314] sm:$0xf]
    %v229 = vld [vmem:[%s1 + $0x318] sm:$0xf]
    %v230 = vld [vmem:[%s1 + $0x31c] sm:$0xf]
    %v231 = vld [vmem:[%s1 + $0x320] sm:$0xf]
    %v232 = vld [vmem:[%s1 + $0x324] sm:$0xf]
    %v233 = vld [vmem:[%s1 + $0x328] sm:$0xf]
    %v234 = vld [vmem:[%s1 + $0x32c] sm:$0xf]
    %v235 = vld [vmem:[%s1 + $0x330] sm:$0xf]
    %v236 = vld [vmem:[%s1 + $0x334] sm:$0xf]
    %v237 = vld [vmem:[%s1 + $0x338] sm:$0xf]
    %v238 = vld [vmem:[%s1 + $0x33c] sm:$0xf]
    %v239 = vld [vmem:[%s1 + $0x340] sm:$0xf]
    %v240 = vld [vmem:[%s1 + $0x344] sm:$0xf]
    %v241 = vld [vmem:[%s1 + $0x348] sm:$0xf]
    %v242 = vld [vmem:[%s1 + $0x34c] sm:$0xf]
    %v243 = vld [vmem:[%s1 + $0x350] sm:$0xf]
    %v244 = vld [vmem:[%s1 + $0x354] sm:$0xf]
    %v245 = vld [vmem:[%s1 + $0x358] sm:$0xf]
    %v246 = vld [vmem:[%s1 + $0x35c] sm:$0xf]
    %v247 = vld [vmem:[%s1 + $0x360] sm:$0xf]
    %v248 = vld [vmem:[%s1 + $0x364] sm:$0xf]
    %v249 = vld [vmem:[%s1 + $0x368] sm:$0xf]
    %v250 = vld [vmem:[%s1 + $0x36c] sm:$0xf]
    %v251 = vld [vmem:[%s1 + $0x370] sm:$0xf]
    %v252 = vld [vmem:[%s1 + $0x374] sm:$0xf]
    %v253 = vld [vmem:[%s1 + $0x378] sm:$0xf]
    %v254 = vld [vmem:[%s1 + $0x37c] sm:$0xf]
    %v255 = vld [vmem:[%s1 + $0x380] sm:$0xf]
    %v256 = vld [vmem:[%s1 + $0x384] sm:$0xf]
    %v257 = vld [vmem:[%s1 + $0x388] sm:$0xf]
    %v258 = vld [vmem:[%s1 + $0x38c] sm:$0xf]
    %v259 = vld [vmem:[%s1 + $0x390] sm:$0xf]
    %v260 = vld [vmem:[%s1 + $0x394] sm:$0xf]
    %v261 = vld [vmem:[%s1 + $0x398] sm:$0xf]
    %v262 = vld [vmem:[%s1 + $0x39c] sm:$0xf]
    %v263 = vld [vmem:[%s1 + $0x3a0] sm:$0xf]
    %v264 = vld [vmem:[%s1 + $0x3a4] sm:$0xf]
    %v265 = vld [vmem:[%s1 + $0x3a8] sm:$0xf]
    %v266 = vld [vmem:[%s1 + $0x3ac] sm:$0xf]
    %v267 = vld [vmem:[%s1 + $0x3b0] sm:$0xf]
    %v268 = vld [vmem:[%s1 + $0x3b4] sm:$0xf]
    %v269 = vld [vmem:[%s1 + $0x3b8] sm:$0xf]
    %v270 = vld [vmem:[%s1 + $0x3bc] sm:$0xf]
    %v271 = vld [vmem:[%s1 + $0x3c0] sm:$0xf]
    %v272 = vld [vmem:[%s1 + $0x3c4] sm:$0xf]
    %v273 = vld [vmem:[%s1 + $0x3c8] sm:$0xf]
    %v274 = vld [vmem:[%s1 + $0x3cc] sm:$0xf]
    %v275 = vld [vmem:[%s1 + $0x3d0] sm:$0xf]
    %v276 = vld [vmem:[%s1 + $0x3d4] sm:$0xf]
    %v277 = vld [vmem:[%s1 + $0x3d8] sm:$0xf]
    %v278 = vld [vmem:[%s1 + $0x3dc] sm:$0xf]
    %v279 = vld [vmem:[%s1 + $0x3e0] sm:$0xf]
    %v280 = vld [vmem:[%s1 + $0x3e4] sm:$0xf]
    %v281 = vld [vmem:[%s1 + $0x3e8] sm:$0xf]
    %v282 = vld [vmem:[%s1 + $0x3ec] sm:$0xf]
    %v283 = vld [vmem:[%s1 + $0x3f0] sm:$0xf]
    %v284 = vld [vmem:[%s1 + $0x3f4] sm:$0xf]
    %v285 = vld [vmem:[%s1 + $0x3f8] sm:$0xf]
    %v286 = vld [vmem:[%s1 + $0x3fc] sm:$0xf]
    %v287 = vld [vmem:[%s1 + $0x400] sm:$0xf]
    %v288 = vld [vmem:[%s1 + $0x404] sm:$0xf]
    %v289 = vld [vmem:[%s1 + $0x408] sm:$0xf]
    %v290 = vld [vmem:[%s1 + $0x40c] sm:$0xf]
    %v291 = vld [vmem:[%s1 + $0x410] sm:$0xf]
    %v292 = vld [vmem:[%s1 + $0x414] sm:$0xf]
    %v293 = vld [vmem:[%s1 + $0x418] sm:$0xf]
    %v294 = vld [vmem:[%s1 + $0x41c] sm:$0xf]
    %v295 = vld [vmem:[%s1 + $0x420] sm:$0xf]
    %v296 = vld [vmem:[%s1 + $0x424] sm:$0xf]
    %v297 = vld [vmem:[%s1 + $0x428] sm:$0xf]
    %v298 = vld [vmem:[%s1 + $0x42c] sm:$0xf]
    %v299 = vld [vmem:[%s1 + $0x430] sm:$0xf]
    %v300 = vld [vmem:[%s1 + $0x434] sm:$0xf]
    %v301 = vld [vmem:[%s1 + $0x438] sm:$0xf]
    %v302 = vld [vmem:[%s1 + $0x43c] sm:$0xf]
    %v303 = vld [vmem:[%s1 + $0x440] sm:$0xf]
    %v304 = vld [vmem:[%s1 + $0x444] sm:$0xf]
    %v305 = vld [vmem:[%s1 + $0x448] sm:$0xf]
    %v306 = vld [vmem:[%s1 + $0x44c] sm:$0xf]
    %v307 = vld [vmem:[%s1 + $0x450] sm:$0xf]
    %v308 = vld [vmem:[%s1 + $0x454] sm:$0xf]
    %v309 = vld [vmem:[%s1 + $0x458] sm:$0xf]
    %v310 = vld [vmem:[%s1 + $0x45c] sm:$0xf]
    %v311 = vld [vmem:[%s1 + $0x460] sm:$0xf]
    %v312 = vld [vmem:[%s1 + $0x464] sm:$0xf]
    %v313 = vld [vmem:[%s1 + $0x468] sm:$0xf]
    %v314 = vld [vmem:[%s1 + $0x46c] sm:$0xf]
    %v315 = vld [vmem:[%s1 + $0x470] sm:$0xf]
    %v316 = vld [vmem:[%s1 + $0x474] sm:$0xf]
    %v317 = vld [vmem:[%s1 + $0x478] sm:$0xf]
    %v318 = vld [vmem:[%s1 + $0x47c] sm:$0xf]
    %v319 = vld [vmem:[%s1 + $0x480] sm:$0xf]
    %v320 = vld [vmem:[%s1 + $0x484] sm:$0xf]
    %v321 = vld [vmem:[%s1 + $0x488] sm:$0xf]
    %v322 = vld [vmem:[%s1 + $0x48c] sm:$0xf]
    %v323 = vld [vmem:[%s1 + $0x490] sm:$0xf]
    %v324 = vld [vmem:[%s1 + $0x494] sm:$0xf]
    %v325 = vld [vmem:[%s1 + $0x498] sm:$0xf]
    %v326 = vld [vmem:[%s1 + $0x49c] sm:$0xf]
    %v327 = vld [vmem:[%s1 + $0x4a0] sm:$0xf]
    %v328 = vld [vmem:[%s1 + $0x4a4] sm:$0xf]
    %v329 = vld [vmem:[%s1 + $0x4a8] sm:$0xf]
    %v330 = vld [vmem:[%s1 + $0x4ac] sm:$0xf]
    %v331 = vld [vmem:[%s1 + $0x4b0] sm:$0xf]
    %v332 = vld [vmem:[%s1 + $0x4b4] sm:$0xf]
    %v333 = vld [vmem:[%s1 + $0x4b8] sm:$0xf]
    %v334 = vld [vmem:[%s1 + $0x4bc] sm:$0xf]
    %v335 = vld [vmem:[%s1 + $0x4c0] sm:$0xf]
    %v336 = vld [vmem:[%s1 + $0x4c4] sm:$0xf]
    %v337 = vld [vmem:[%s1 + $0x4c8] sm:$0xf]
    %v338 = vld [vmem:[%s1 + $0x4cc] sm:$0xf]
    %v339 = vld [vmem:[%s1 + $0x4d0] sm:$0xf]
    %v340 = vld [vmem:[%s1 + $0x4d4] sm:$0xf]
    %v341 = vld [vmem:[%s1 + $0x4d8] sm:$0xf]
    %v342 = vld [vmem:[%s1 + $0x4dc] sm:$0xf]
    %v343 = vld [vmem:[%s1 + $0x4e0] sm:$0xf]
    %v344 = vld [vmem:[%s1 + $0x4e4] sm:$0xf]
    %v345 = vld [vmem:[%s1 + $0x4e8] sm:$0xf]
    %v346 = vld [vmem:[%s1 + $0x4ec] sm:$0xf]
    %v347 = vld [vmem:[%s1 + $0x4f0] sm:$0xf]
    %v348 = vld [vmem:[%s1 + $0x4f4] sm:$0xf]
    %v349 = vld [vmem:[%s1 + $0x4f8] sm:$0xf]
    %v350 = vld [vmem:[%s1 + $0x4fc] sm:$0xf]
    %v351 = vld [vmem:[%s1 + $0x500] sm:$0xf]
    %v352 = vld [vmem:[%s1 + $0x504] sm:$0xf]
    %v353 = vld [vmem:[%s1 + $0x508] sm:$0xf]
    %v354 = vld [vmem:[%s1 + $0x50c] sm:$0xf]
    %v355 = vld [vmem:[%s1 + $0x510] sm:$0xf]
    %v356 = vld [vmem:[%s1 + $0x514] sm:$0xf]
    %v357 = vld [vmem:[%s1 + $0x518] sm:$0xf]
    %v358 = vld [vmem:[%s1 + $0x51c] sm:$0xf]
    %v359 = vld [vmem:[%s1 + $0x520] sm:$0xf]
    %v360 = vld [vmem:[%s1 + $0x524] sm:$0xf]
    %v361 = vld [vmem:[%s1 + $0x528] sm:$0xf]
    %v362 = vld [vmem:[%s1 + $0x52c] sm:$0xf]
    %v363 = vld [vmem:[%s1 + $0x530] sm:$0xf]
    %v364 = vld [vmem:[%s1 + $0x534] sm:$0xf]
    %v365 = vld [vmem:[%s1 + $0x538] sm:$0xf]
    %v366 = vld [vmem:[%s1 + $0x53c] sm:$0xf]
    %v367 = vld [vmem:[%s1 + $0x540] sm:$0xf]
    %v368 = vld [vmem:[%s1 + $0x544] sm:$0xf]
    %v369 = vld [vmem:[%s1 + $0x548] sm:$0xf]
    %v370 = vld [vmem:[%s1 + $0x54c] sm:$0xf]
    %v371 = vld [vmem:[%s1 + $0x550] sm:$0xf]
    %v372 = vld [vmem:[%s1 + $0x554] sm:$0xf]
    %v373 = vld [vmem:[%s1 + $0x558] sm:$0xf]
    %v374 = vld [vmem:[%s1 + $0x55c] sm:$0xf]
    %v375 = vld [vmem:[%s1 + $0x560] sm:$0xf]
    %v376 = vld [vmem:[%s1 + $0x564] sm:$0xf]
    %v377 = vld [vmem:[%s1 + $0x568] sm:$0xf]
    %v378 = vld [vmem:[%s1 + $0x56c] sm:$0xf]
    %v379 = vld [vmem:[%s1 + $0x570] sm:$0xf]
    %v380 = vld [vmem:[%s1 + $0x574] sm:$0xf]
    %v381 = vld [vmem:[%s1 + $0x578] sm:$0xf]
    %v382 = vld [vmem:[%s1 + $0x57c] sm:$0xf]
    %v383 = vld [vmem:[%s1 + $0x580] sm:$0xf]
    %v384 = vld [vmem:[%s1 + $0x584] sm:$0xf]
    %v385 = vld [vmem:[%s1 + $0x588] sm:$0xf]
    %v386 = vld [vmem:[%s1 + $0x58c] sm:$0xf]
    %v387 = vld [vmem:[%s1 + $0x590] sm:$0xf]
    %v388 = vld [vmem:[%s1 + $0x594] sm:$0xf]
    %v389 = vld [vmem:[%s1 + $0x598] sm:$0xf]
    %v390 = vld [vmem:[%s1 + $0x59c] sm:$0xf]
    %v391 = vld [vmem:[%s1 + $0x5a0] sm:$0xf]
    %v392 = vld [vmem:[%s1 + $0x5a4] sm:$0xf]
    %v393 = vld [vmem:[%s1 + $0x5a8] sm:$0xf]
    %v394 = vld [vmem:[%s1 + $0x5ac] sm:$0xf]
    %v395 = vld [vmem:[%s1 + $0x5b0] sm:$0xf]
    %v396 = vld [vmem:[%s1 + $0x5b4] sm:$0xf]
    %v397 = vld [vmem:[%s1 + $0x5b8] sm:$0xf]
    %v398 = vld [vmem:[%s1 + $0x5bc] sm:$0xf]
    %v399 = vld [vmem:[%s1 + $0x5c0] sm:$0xf]
    %v400 = vld [vmem:[%s1 + $0x5c4] sm:$0xf]
    %v401 = vld [vmem:[%s1 + $0x5c8] sm:$0xf]
    %v402 = vld [vmem:[%s1 + $0x5cc] sm:$0xf]
    %v403 = vld [vmem:[%s1 + $0x5d0] sm:$0xf]
    %v404 = vld [vmem:[%s1 + $0x5d4] sm:$0xf]
    %v405 = vld [vmem:[%s1 + $0x5d8] sm:$0xf]
    %v406 = vld [vmem:[%s1 + $0x5dc] sm:$0xf]
    %v407 = vld [vmem:[%s1 + $0x5e0] sm:$0xf]
    %v408 = vld [vmem:[%s1 + $0x5e4] sm:$0xf]
    %v409 = vld [vmem:[%s1 + $0x5e8] sm:$0xf]
    %v410 = vld [vmem:[%s1 + $0x5ec] sm:$0xf]
    %v411 = vld [vmem:[%s1 + $0x5f0] sm:$0xf]
    %v412 = vld [vmem:[%s1 + $0x5f4] sm:$0xf]
    %v413 = vld [vmem:[%s1 + $0x5f8] sm:$0xf]
    %v414 = vld [vmem:[%s1 + $0x5fc] sm:$0xf]
    %v415 = vld [vmem:[%s1 + $0x600] sm:$0xf]
    %v416 = vld [vmem:[%s1 + $0x604] sm:$0xf]
    %v417 = vld [vmem:[%s1 + $0x608] sm:$0xf]
    %v418 = vld [vmem:[%s1 + $0x60c] sm:$0xf]
    %v419 = vld [vmem:[%s1 + $0x610] sm:$0xf]
    %v420 = vld [vmem:[%s1 + $0x614] sm:$0xf]
    %v421 = vld [vmem:[%s1 + $0x618] sm:$0xf]
    %v422 = vld [vmem:[%s1 + $0x61c] sm:$0xf]
    %v423 = vld [vmem:[%s1 + $0x620] sm:$0xf]
    %v424 = vld [vmem:[%s1 + $0x624] sm:$0xf]
    %v425 = vld [vmem:[%s1 + $0x628] sm:$0xf]
    %v426 = vld [vmem:[%s1 + $0x62c] sm:$0xf]
    %v427 = vld [vmem:[%s1 + $0x630] sm:$0xf]
    %v428 = vld [vmem:[%s1 + $0x634] sm:$0xf]
    %v429 = vld [vmem:[%s1 + $0x638] sm:$0xf]
    %v430 = vld [vmem:[%s1 + $0x63c] sm:$0xf]
    %v431 = vld [vmem:[%s1 + $0x640] sm:$0xf]
    %v432 = vld [vmem:[%s1 + $0x644] sm:$0xf]
    %v433 = vld [vmem:[%s1 + $0x648] sm:$0xf]
    %v434 = vld [vmem:[%s1 + $0x64c] sm:$0xf]
    %v435 = vld [vmem:[%s1 + $0x650] sm:$0xf]
    %v436 = vld [vmem:[%s1 + $0x654] sm:$0xf]
    %v437 = vld [vmem:[%s1 + $0x658] sm:$0xf]
    %v438 = vld [vmem:[%s1 + $0x65c] sm:$0xf]
    %v439 = vld [vmem:[%s1 + $0x660] sm:$0xf]
    %v440 = vld [vmem:[%s1 + $0x664] sm:$0xf]
    %v441 = vld [vmem:[%s1 + $0x668] sm:$0xf]
    %v442 = vld [vmem:[%s1 + $0x66c] sm:$0xf]
    %v443 = vld [vmem:[%s1 + $0x670] sm:$0xf]
    %v444 = vld [vmem:[%s1 + $0x674] sm:$0xf]
    %v445 = vld [vmem:[%s1 + $0x678] sm:$0xf]
    %v446 = vld [vmem:[%s1 + $0x67c] sm:$0xf]
    %v447 = vld [vmem:[%s1 + $0x680] sm:$0xf]
    %v448 = vld [vmem:[%s1 + $0x684] sm:$0xf]
    %v449 = vld [vmem:[%s1 + $0x688] sm:$0xf]
    %v450 = vld [vmem:[%s1 + $0x68c] sm:$0xf]
    %v451 = vld [vmem:[%s1 + $0x690] sm:$0xf]
    %v452 = vld [vmem:[%s1 + $0x694] sm:$0xf]
    %v453 = vld [vmem:[%s1 + $0x698] sm:$0xf]
    %v454 = vld [vmem:[%s1 + $0x69c] sm:$0xf]
    %v455 = vld [vmem:[%s1 + $0x6a0] sm:$0xf]
    %v456 = vld [vmem:[%s1 + $0x6a4] sm:$0xf]
    %v457 = vld [vmem:[%s1 + $0x6a8] sm:$0xf]
    %v458 = vld [vmem:[%s1 + $0x6ac] sm:$0xf]
    %v459 = vld [vmem:[%s1 + $0x6b0] sm:$0xf]
    %v460 = vld [vmem:[%s1 + $0x6b4] sm:$0xf]
    %v461 = vld [vmem:[%s1 + $0x6b8] sm:$0xf]
    %v462 = vld [vmem:[%s1 + $0x6bc] sm:$0xf]
    %v463 = vld [vmem:[%s1 + $0x6c0] sm:$0xf]
    %v464 = vld [vmem:[%s1 + $0x6c4] sm:$0xf]
    %v465 = vld [vmem:[%s1 + $0x6c8] sm:$0xf]
    %v466 = vld [vmem:[%s1 + $0x6cc] sm:$0xf]
    %v467 = vld [vmem:[%s1 + $0x6d0] sm:$0xf]
    %v468 = vld [vmem:[%s1 + $0x6d4] sm:$0xf]
    %v469 = vld [vmem:[%s1 + $0x6d8] sm:$0xf]
    %v470 = vld [vmem:[%s1 + $0x6dc] sm:$0xf]
    %v471 = vld [vmem:[%s1 + $0x6e0] sm:$0xf]
    %v472 = vld [vmem:[%s1 + $0x6e4] sm:$0xf]
    %v473 = vld [vmem:[%s1 + $0x6e8] sm:$0xf]
    %v474 = vld [vmem:[%s1 + $0x6ec] sm:$0xf]
    %v475 = vld [vmem:[%s1 + $0x6f0] sm:$0xf]
    %v476 = vld [vmem:[%s1 + $0x6f4] sm:$0xf]
    %v477 = vld [vmem:[%s1 + $0x6f8] sm:$0xf]
    %v478 = vld [vmem:[%s1 + $0x6fc] sm:$0xf]
    %v479 = vld [vmem:[%s1 + $0x700] sm:$0xf]
    %v480 = vld [vmem:[%s1 + $0x704] sm:$0xf]
    %v481 = vld [vmem:[%s1 + $0x708] sm:$0xf]
    %v482 = vld [vmem:[%s1 + $0x70c] sm:$0xf]
    %v483 = vld [vmem:[%s1 + $0x710] sm:$0xf]
    %v484 = vld [vmem:[%s1 + $0x714] sm:$0xf]
    %v485 = vld [vmem:[%s1 + $0x718] sm:$0xf]
    %v486 = vld [vmem:[%s1 + $0x71c] sm:$0xf]
    %v487 = vld [vmem:[%s1 + $0x720] sm:$0xf]
    %v488 = vld [vmem:[%s1 + $0x724] sm:$0xf]
    %v489 = vld [vmem:[%s1 + $0x728] sm:$0xf]
    %v490 = vld [vmem:[%s1 + $0x72c] sm:$0xf]
    %v491 = vld [vmem:[%s1 + $0x730] sm:$0xf]
    %v492 = vld [vmem:[%s1 + $0x734] sm:$0xf]
    %v493 = vld [vmem:[%s1 + $0x738] sm:$0xf]
    %v494 = vld [vmem:[%s1 + $0x73c] sm:$0xf]
    %v495 = vld [vmem:[%s1 + $0x740] sm:$0xf]
    %v496 = vld [vmem:[%s1 + $0x744] sm:$0xf]
    %v497 = vld [vmem:[%s1 + $0x748] sm:$0xf]
    %v498 = vld [vmem:[%s1 + $0x74c] sm:$0xf]
    %v499 = vld [vmem:[%s1 + $0x750] sm:$0xf]
    %v500 = vld [vmem:[%s1 + $0x754] sm:$0xf]
    %v501 = vld [vmem:[%s1 + $0x758] sm:$0xf]
    %v502 = vld [vmem:[%s1 + $0x75c] sm:$0xf]
    %v503 = vld [vmem:[%s1 + $0x760] sm:$0xf]
    %v504 = vld [vmem:[%s1 + $0x764] sm:$0xf]
    %v505 = vld [vmem:[%s1 + $0x768] sm:$0xf]
    %v506 = vld [vmem:[%s1 + $0x76c] sm:$0xf]
    %v507 = vld [vmem:[%s1 + $0x770] sm:$0xf]
    %v508 = vld [vmem:[%s1 + $0x774] sm:$0xf]
    %v509 = vld [vmem:[%s1 + $0x778] sm:$0xf]
    %v510 = vld [vmem:[%s1 + $0x77c] sm:$0xf]
    %v511 = vld [vmem:[%s1 + $0x780] sm:$0xf]
    %v512 = vld [vmem:[%s1 + $0x784] sm:$0xf]
    %v513 = vld [vmem:[%s1 + $0x788] sm:$0xf]
    %v514 = vld [vmem:[%s1 + $0x78c] sm:$0xf]
    %v515 = vld [vmem:[%s1 + $0x790] sm:$0xf]
    %v516 = vld [vmem:[%s1 + $0x794] sm:$0xf]
    %v517 = vld [vmem:[%s1 + $0x798] sm:$0xf]
    %v518 = vld [vmem:[%s1 + $0x79c] sm:$0xf]
    %v519 = vld [vmem:[%s1 + $0x7a0] sm:$0xf]
    %v520 = vld [vmem:[%s1 + $0x7a4] sm:$0xf]
    %v521 = vld [vmem:[%s1 + $0x7a8] sm:$0xf]
    %v522 = vld [vmem:[%s1 + $0x7ac] sm:$0xf]
    %v523 = vld [vmem:[%s1 + $0x7b0] sm:$0xf]
    %v524 = vld [vmem:[%s1 + $0x7b4] sm:$0xf]
    %v525 = vld [vmem:[%s1 + $0x7b8] sm:$0xf]
    %v526 = vld [vmem:[%s1 + $0x7bc] sm:$0xf]
    %v527 = vld [vmem:[%s1 + $0x7c0] sm:$0xf]
    %v528 = vld [vmem:[%s1 + $0x7c4] sm:$0xf]
    %v529 = vld [vmem:[%s1 + $0x7c8] sm:$0xf]
    %v530 = vld [vmem:[%s1 + $0x7cc] sm:$0xf]
    %v531 = vld [vmem:[%s1 + $0x7d0] sm:$0xf]
    %v532 = vld [vmem:[%s1 + $0x7d4] sm:$0xf]
    %v533 = vld [vmem:[%s1 + $0x7d8] sm:$0xf]
    %v534 = vld [vmem:[%s1 + $0x7dc] sm:$0xf]
    %v535 = vld [vmem:[%s1 + $0x7e0] sm:$0xf]
    %v536 = vld [vmem:[%s1 + $0x7e4] sm:$0xf]
    %v537 = vld [vmem:[%s1 + $0x7e8] sm:$0xf]
    %v538 = vld [vmem:[%s1 + $0x7ec] sm:$0xf]
    %v539 = vld [vmem:[%s1 + $0x7f0] sm:$0xf]
    %v540 = vld [vmem:[%s1 + $0x7f4] sm:$0xf]
    %v541 = vld [vmem:[%s1 + $0x7f8] sm:$0xf]
    %v542 = vld [vmem:[%s1 + $0x7fc] sm:$0xf]
    %v543 = vld [vmem:[%s1 + $0x800] sm:$0xf]
    %v544 = vld [vmem:[%s1 + $0x804] sm:$0xf]
    %v545 = vld [vmem:[%s1 + $0x808] sm:$0xf]
    %v546 = vld [vmem:[%s1 + $0x80c] sm:$0xf]
    %v547 = vld [vmem:[%s1 + $0x810] sm:$0xf]
    %v548 = vld [vmem:[%s1 + $0x814] sm:$0xf]
    %v549 = vld [vmem:[%s1 + $0x818] sm:$0xf]
    %v550 = vld [vmem:[%s1 + $0x81c] sm:$0xf]
    %v551 = vld [vmem:[%s1 + $0x820] sm:$0xf]
    %v552 = vld [vmem:[%s1 + $0x824] sm:$0xf]
    %v553 = vld [vmem:[%s1 + $0x828] sm:$0xf]
    %v554 = vld [vmem:[%s1 + $0x82c] sm:$0xf]
    %v555 = vld [vmem:[%s1 + $0x830] sm:$0xf]
    %v556 = vld [vmem:[%s1 + $0x834] sm:$0xf]
    %v557 = vld [vmem:[%s1 + $0x838] sm:$0xf]
    %v558 = vld [vmem:[%s1 + $0x83c] sm:$0xf]
    %v559 = vld [vmem:[%s1 + $0x840] sm:$0xf]
    %v560 = vld [vmem:[%s1 + $0x844] sm:$0xf]
    %v561 = vld [vmem:[%s1 + $0x848] sm:$0xf]
    %v562 = vld [vmem:[%s1 + $0x84c] sm:$0xf]
    %v563 = vld [vmem:[%s1 + $0x850] sm:$0xf]
    %v564 = vld [vmem:[%s1 + $0x854] sm:$0xf]
    %v565 = vld [vmem:[%s1 + $0x858] sm:$0xf]
    %v566 = vld [vmem:[%s1 + $0x85c] sm:$0xf]
    %v567 = vld [vmem:[%s1 + $0x860] sm:$0xf]
    %v568 = vld [vmem:[%s1 + $0x864] sm:$0xf]
    %v569 = vld [vmem:[%s1 + $0x868] sm:$0xf]
    %v570 = vld [vmem:[%s1 + $0x86c] sm:$0xf]
    %v571 = vld [vmem:[%s1 + $0x870] sm:$0xf]
    %v572 = vld [vmem:[%s1 + $0x874] sm:$0xf]
    %v573 = vld [vmem:[%s1 + $0x878] sm:$0xf]
    %v574 = vld [vmem:[%s1 + $0x87c] sm:$0xf]
    %v575 = vld [vmem:[%s1 + $0x880] sm:$0xf]
    %v576 = vld [vmem:[%s1 + $0x884] sm:$0xf]
    %v577 = vld [vmem:[%s1 + $0x888] sm:$0xf]
    %v578 = vld [vmem:[%s1 + $0x88c] sm:$0xf]
    %v579 = vld [vmem:[%s1 + $0x890] sm:$0xf]
    %v580 = vld [vmem:[%s1 + $0x894] sm:$0xf]
    %v581 = vld [vmem:[%s1 + $0x898] sm:$0xf]
    %v582 = vld [vmem:[%s1 + $0x89c] sm:$0xf]
    %v583 = vld [vmem:[%s1 + $0x8a0] sm:$0xf]
    %v584 = vld [vmem:[%s1 + $0x8a4] sm:$0xf]
    %v585 = vld [vmem:[%s1 + $0x8a8] sm:$0xf]
    %v586 = vld [vmem:[%s1 + $0x8ac] sm:$0xf]
    %v587 = vld [vmem:[%s1 + $0x8b0] sm:$0xf]
    %v588 = vld [vmem:[%s1 + $0x8b4] sm:$0xf]
    %v589 = vld [vmem:[%s1 + $0x8b8] sm:$0xf]
    %v590 = vld [vmem:[%s1 + $0x8bc] sm:$0xf]
    %v591 = vld [vmem:[%s1 + $0x8c0] sm:$0xf]
    %v592 = vld [vmem:[%s1 + $0x8c4] sm:$0xf]
    %v593 = vld [vmem:[%s1 + $0x8c8] sm:$0xf]
    %v594 = vld [vmem:[%s1 + $0x8cc] sm:$0xf]
    %v595 = vld [vmem:[%s1 + $0x8d0] sm:$0xf]
    %v596 = vld [vmem:[%s1 + $0x8d4] sm:$0xf]
    %v597 = vld [vmem:[%s1 + $0x8d8] sm:$0xf]
    %v598 = vld [vmem:[%s1 + $0x8dc] sm:$0xf]
    %v599 = vld [vmem:[%s1 + $0x8e0] sm:$0xf]
    %v600 = vld [vmem:[%s1 + $0x8e4] sm:$0xf]
    %v601 = vld [vmem:[%s1 + $0x8e8] sm:$0xf]
    %v602 = vld [vmem:[%s1 + $0x8ec] sm:$0xf]
    %v603 = vld [vmem:[%s1 + $0x8f0] sm:$0xf]
    %v604 = vld [vmem:[%s1 + $0x8f4] sm:$0xf]
    %v605 = vld [vmem:[%s1 + $0x8f8] sm:$0xf]
    %v606 = vld [vmem:[%s1 + $0x8fc] sm:$0xf]
    %v607 = vld [vmem:[%s1 + $0x900] sm:$0xf]
    %v608 = vld [vmem:[%s1 + $0x904] sm:$0xf]
    %v609 = vld [vmem:[%s1 + $0x908] sm:$0xf]
    %v610 = vld [vmem:[%s1 + $0x90c] sm:$0xf]
    %v611 = vld [vmem:[%s1 + $0x910] sm:$0xf]
    %v612 = vld [vmem:[%s1 + $0x914] sm:$0xf]
    %v613 = vld [vmem:[%s1 + $0x918] sm:$0xf]
    %v614 = vld [vmem:[%s1 + $0x91c] sm:$0xf]
    %v615 = vld [vmem:[%s1 + $0x920] sm:$0xf]
    %v616 = vld [vmem:[%s1 + $0x924] sm:$0xf]
    %v617 = vld [vmem:[%s1 + $0x928] sm:$0xf]
    %v618 = vld [vmem:[%s1 + $0x92c] sm:$0xf]
    %v619 = vld [vmem:[%s1 + $0x930] sm:$0xf]
    %v620 = vld [vmem:[%s1 + $0x934] sm:$0xf]
    %v621 = vld [vmem:[%s1 + $0x938] sm:$0xf]
    %v622 = vld [vmem:[%s1 + $0x93c] sm:$0xf]
    %v623 = vld [vmem:[%s1 + $0x940] sm:$0xf]
    %v624 = vld [vmem:[%s1 + $0x944] sm:$0xf]
    %v625 = vld [vmem:[%s1 + $0x948] sm:$0xf]
    %v626 = vld [vmem:[%s1 + $0x94c] sm:$0xf]
    %v627 = vld [vmem:[%s1 + $0x950] sm:$0xf]
    %v628 = vld [vmem:[%s1 + $0x954] sm:$0xf]
    %v629 = vld [vmem:[%s1 + $0x958] sm:$0xf]
    %v630 = vld [vmem:[%s1 + $0x95c] sm:$0xf]
    %v631 = vld [vmem:[%s1 + $0x960] sm:$0xf]
    %v632 = vld [vmem:[%s1 + $0x964] sm:$0xf]
    %v633 = vld [vmem:[%s1 + $0x968] sm:$0xf]
    %v634 = vld [vmem:[%s1 + $0x96c] sm:$0xf]
    %v635 = vld [vmem:[%s1 + $0x970] sm:$0xf]
    %v636 = vld [vmem:[%s1 + $0x974] sm:$0xf]
    %v637 = vld [vmem:[%s1 + $0x978] sm:$0xf]
    %v638 = vld [vmem:[%s1 + $0x97c] sm:$0xf]
    %v639 = vld [vmem:[%s1 + $0x980] sm:$0xf]
    %v640 = vld [vmem:[%s1 + $0x984] sm:$0xf]
    %v641 = vld [vmem:[%s1 + $0x988] sm:$0xf]
    %v642 = vld [vmem:[%s1 + $0x98c] sm:$0xf]
    %v643 = vld [vmem:[%s1 + $0x990] sm:$0xf]
    %v644 = vld [vmem:[%s1 + $0x994] sm:$0xf]
    %v645 = vld [vmem:[%s1 + $0x998] sm:$0xf]
    %v646 = vld [vmem:[%s1 + $0x99c] sm:$0xf]
    %v647 = vld [vmem:[%s1 + $0x9a0] sm:$0xf]
    %v648 = vld [vmem:[%s1 + $0x9a4] sm:$0xf]
    %v649 = vld [vmem:[%s1 + $0x9a8] sm:$0xf]
    %v650 = vld [vmem:[%s1 + $0x9ac] sm:$0xf]
    %v651 = vld [vmem:[%s1 + $0x9b0] sm:$0xf]
    %v652 = vld [vmem:[%s1 + $0x9b4] sm:$0xf]
    %v653 = vld [vmem:[%s1 + $0x9b8] sm:$0xf]
    %v654 = vld [vmem:[%s1 + $0x9bc] sm:$0xf]
    %v655 = vld [vmem:[%s1 + $0x9c0] sm:$0xf]
    %v656 = vld [vmem:[%s1 + $0x9c4] sm:$0xf]
    %v657 = vld [vmem:[%s1 + $0x9c8] sm:$0xf]
    %v658 = vld [vmem:[%s1 + $0x9cc] sm:$0xf]
    %v659 = vld [vmem:[%s1 + $0x9d0] sm:$0xf]
    %v660 = vld [vmem:[%s1 + $0x9d4] sm:$0xf]
    %v661 = vld [vmem:[%s1 + $0x9d8] sm:$0xf]
    %v662 = vld [vmem:[%s1 + $0x9dc] sm:$0xf]
    %v663 = vld [vmem:[%s1 + $0x9e0] sm:$0xf]
    %v664 = vld [vmem:[%s1 + $0x9e4] sm:$0xf]
    %v665 = vld [vmem:[%s1 + $0x9e8] sm:$0xf]
    %v666 = vld [vmem:[%s1 + $0x9ec] sm:$0xf]
    %v667 = vld [vmem:[%s1 + $0x9f0] sm:$0xf]
    %v668 = vld [vmem:[%s1 + $0x9f4] sm:$0xf]
    %v669 = vld [vmem:[%s1 + $0x9f8] sm:$0xf]
    %v670 = vld [vmem:[%s1 + $0x9fc] sm:$0xf]
    %v671 = vld [vmem:[%s1 + $0xa00] sm:$0xf]
    %v672 = vld [vmem:[%s1 + $0xa04] sm:$0xf]
    %v673 = vld [vmem:[%s1 + $0xa08] sm:$0xf]
    %v674 = vld [vmem:[%s1 + $0xa0c] sm:$0xf]
    %v675 = vld [vmem:[%s1 + $0xa10] sm:$0xf]
    %v676 = vld [vmem:[%s1 + $0xa14] sm:$0xf]
    %v677 = vld [vmem:[%s1 + $0xa18] sm:$0xf]
    %v678 = vld [vmem:[%s1 + $0xa1c] sm:$0xf]
    %v679 = vld [vmem:[%s1 + $0xa20] sm:$0xf]
    %v680 = vld [vmem:[%s1 + $0xa24] sm:$0xf]
    %v681 = vld [vmem:[%s1 + $0xa28] sm:$0xf]
    %v682 = vld [vmem:[%s1 + $0xa2c] sm:$0xf]
    %v683 = vld [vmem:[%s1 + $0xa30] sm:$0xf]
    %v684 = vld [vmem:[%s1 + $0xa34] sm:$0xf]
    %v685 = vld [vmem:[%s1 + $0xa38] sm:$0xf]
    %v686 = vld [vmem:[%s1 + $0xa3c] sm:$0xf]
    %v687 = vld [vmem:[%s1 + $0xa40] sm:$0xf]
    %v688 = vld [vmem:[%s1 + $0xa44] sm:$0xf]
    %v689 = vld [vmem:[%s1 + $0xa48] sm:$0xf]
    %v690 = vld [vmem:[%s1 + $0xa4c] sm:$0xf]
    %v691 = vld [vmem:[%s1 + $0xa50] sm:$0xf]
    %v692 = vld [vmem:[%s1 + $0xa54] sm:$0xf]
    %v693 = vld [vmem:[%s1 + $0xa58] sm:$0xf]
    %v694 = vld [vmem:[%s1 + $0xa5c] sm:$0xf]
    %v695 = vld [vmem:[%s1 + $0xa60] sm:$0xf]
    %v696 = vld [vmem:[%s1 + $0xa64] sm:$0xf]
    %v697 = vld [vmem:[%s1 + $0xa68] sm:$0xf]
    %v698 = vld [vmem:[%s1 + $0xa6c] sm:$0xf]
    %v699 = vld [vmem:[%s1 + $0xa70] sm:$0xf]
    %v700 = vld [vmem:[%s1 + $0xa74] sm:$0xf]
    %v701 = vld [vmem:[%s1 + $0xa78] sm:$0xf]
    %v702 = vld [vmem:[%s1 + $0xa7c] sm:$0xf]
    %v703 = vld [vmem:[%s1 + $0xa80] sm:$0xf]
    %v704 = vld [vmem:[%s1 + $0xa84] sm:$0xf]
    %v705 = vld [vmem:[%s1 + $0xa88] sm:$0xf]
    %v706 = vld [vmem:[%s1 + $0xa8c] sm:$0xf]
    %v707 = vld [vmem:[%s1 + $0xa90] sm:$0xf]
    %v708 = vld [vmem:[%s1 + $0xa94] sm:$0xf]
    %v709 = vld [vmem:[%s1 + $0xa98] sm:$0xf]
    %v710 = vld [vmem:[%s1 + $0xa9c] sm:$0xf]
    %v711 = vld [vmem:[%s1 + $0xaa0] sm:$0xf]
    %v712 = vld [vmem:[%s1 + $0xaa4] sm:$0xf]
    %v713 = vld [vmem:[%s1 + $0xaa8] sm:$0xf]
    %v714 = vld [vmem:[%s1 + $0xaac] sm:$0xf]
    %v715 = vld [vmem:[%s1 + $0xab0] sm:$0xf]
    %v716 = vld [vmem:[%s1 + $0xab4] sm:$0xf]
    %v717 = vld [vmem:[%s1 + $0xab8] sm:$0xf]
    %v718 = vld [vmem:[%s1 + $0xabc] sm:$0xf]
    %v719 = vld [vmem:[%s1 + $0xac0] sm:$0xf]
    %v720 = vld [vmem:[%s1 + $0xac4] sm:$0xf]
    %v721 = vld [vmem:[%s1 + $0xac8] sm:$0xf]
    %v722 = vld [vmem:[%s1 + $0xacc] sm:$0xf]
    %v723 = vld [vmem:[%s1 + $0xad0] sm:$0xf]
    %v724 = vld [vmem:[%s1 + $0xad4] sm:$0xf]
    %v725 = vld [vmem:[%s1 + $0xad8] sm:$0xf]
    %v726 = vld [vmem:[%s1 + $0xadc] sm:$0xf]
    %v727 = vld [vmem:[%s1 + $0xae0] sm:$0xf]
    %v728 = vld [vmem:[%s1 + $0xae4] sm:$0xf]
    %v729 = vld [vmem:[%s1 + $0xae8] sm:$0xf]
    %v730 = vld [vmem:[%s1 + $0xaec] sm:$0xf]
    %v731 = vld [vmem:[%s1 + $0xaf0] sm:$0xf]
    %v732 = vld [vmem:[%s1 + $0xaf4] sm:$0xf]
    %v733 = vld [vmem:[%s1 + $0xaf8] sm:$0xf]
    %v734 = vld [vmem:[%s1 + $0xafc] sm:$0xf]
    %v735 = vld [vmem:[%s1 + $0xb00] sm:$0xf]
    %v736 = vld [vmem:[%s1 + $0xb04] sm:$0xf]
    %v737 = vld [vmem:[%s1 + $0xb08] sm:$0xf]
    %v738 = vld [vmem:[%s1 + $0xb0c] sm:$0xf]
    %v739 = vld [vmem:[%s1 + $0xb10] sm:$0xf]
    %v740 = vld [vmem:[%s1 + $0xb14] sm:$0xf]
    %v741 = vld [vmem:[%s1 + $0xb18] sm:$0xf]
    %v742 = vld [vmem:[%s1 + $0xb1c] sm:$0xf]
    %v743 = vld [vmem:[%s1 + $0xb20] sm:$0xf]
    %v744 = vld [vmem:[%s1 + $0xb24] sm:$0xf]
    %v745 = vld [vmem:[%s1 + $0xb28] sm:$0xf]
    %v746 = vld [vmem:[%s1 + $0xb2c] sm:$0xf]
    %v747 = vld [vmem:[%s1 + $0xb30] sm:$0xf]
    %v748 = vld [vmem:[%s1 + $0xb34] sm:$0xf]
    %v749 = vld [vmem:[%s1 + $0xb38] sm:$0xf]
    %v750 = vld [vmem:[%s1 + $0xb3c] sm:$0xf]
    %v751 = vld [vmem:[%s1 + $0xb40] sm:$0xf]
    %v752 = vld [vmem:[%s1 + $0xb44] sm:$0xf]
    %v753 = vld [vmem:[%s1 + $0xb48] sm:$0xf]
    %v754 = vld [vmem:[%s1 + $0xb4c] sm:$0xf]
    %v755 = vld [vmem:[%s1 + $0xb50] sm:$0xf]
    %v756 = vld [vmem:[%s1 + $0xb54] sm:$0xf]
    %v757 = vld [vmem:[%s1 + $0xb58] sm:$0xf]
    %v758 = vld [vmem:[%s1 + $0xb5c] sm:$0xf]
    %v759 = vld [vmem:[%s1 + $0xb60] sm:$0xf]
    %v760 = vld [vmem:[%s1 + $0xb64] sm:$0xf]
    %v761 = vld [vmem:[%s1 + $0xb68] sm:$0xf]
    %v762 = vld [vmem:[%s1 + $0xb6c] sm:$0xf]
    %v763 = vld [vmem:[%s1 + $0xb70] sm:$0xf]
    %v764 = vld [vmem:[%s1 + $0xb74] sm:$0xf]
    %v765 = vld [vmem:[%s1 + $0xb78] sm:$0xf]
    %v766 = vld [vmem:[%s1 + $0xb7c] sm:$0xf]
    %v767 = vld [vmem:[%s1 + $0xb80] sm:$0xf]
    %v768 = vld [vmem:[%s1 + $0xb84] sm:$0xf]
    %v769 = vld [vmem:[%s1 + $0xb88] sm:$0xf]
    %v770 = vld [vmem:[%s1 + $0xb8c] sm:$0xf]
    %v771 = vld [vmem:[%s1 + $0xb90] sm:$0xf]
    %v772 = vld [vmem:[%s1 + $0xb94] sm:$0xf]
    %v773 = vld [vmem:[%s1 + $0xb98] sm:$0xf]
    %v774 = vld [vmem:[%s1 + $0xb9c] sm:$0xf]
    %v775 = vld [vmem:[%s1 + $0xba0] sm:$0xf]
    %v776 = vld [vmem:[%s1 + $0xba4] sm:$0xf]
    %v777 = vld [vmem:[%s1 + $0xba8] sm:$0xf]
    %v778 = vld [vmem:[%s1 + $0xbac] sm:$0xf]
    %v779 = vld [vmem:[%s1 + $0xbb0] sm:$0xf]
    %v780 = vld [vmem:[%s1 + $0xbb4] sm:$0xf]
    %v781 = vld [vmem:[%s1 + $0xbb8] sm:$0xf]
    %v782 = vld [vmem:[%s1 + $0xbbc] sm:$0xf]
    %v783 = vld [vmem:[%s1 + $0xbc0] sm:$0xf]
    %v784 = vld [vmem:[%s1 + $0xbc4] sm:$0xf]
    %v785 = vld [vmem:[%s1 + $0xbc8] sm:$0xf]
    %v786 = vld [vmem:[%s1 + $0xbcc] sm:$0xf]
    %v787 = vld [vmem:[%s1 + $0xbd0] sm:$0xf]
    %v788 = vld [vmem:[%s1 + $0xbd4] sm:$0xf]
    %v789 = vld [vmem:[%s1 + $0xbd8] sm:$0xf]
    %v790 = vld [vmem:[%s1 + $0xbdc] sm:$0xf]
    %v791 = vld [vmem:[%s1 + $0xbe0] sm:$0xf]
    %v792 = vld [vmem:[%s1 + $0xbe4] sm:$0xf]
    %v793 = vld [vmem:[%s1 + $0xbe8] sm:$0xf]
    %v794 = vld [vmem:[%s1 + $0xbec] sm:$0xf]
    %v795 = vld [vmem:[%s1 + $0xbf0] sm:$0xf]
    %v796 = vld [vmem:[%s1 + $0xbf4] sm:$0xf]
    %v797 = vld [vmem:[%s1 + $0xbf8] sm:$0xf]
    %v798 = vld [vmem:[%s1 + $0xbfc] sm:$0xf]
    %v799 = vld [vmem:[%s1 + $0xc00] sm:$0xf]
    %v800 = vld [vmem:[%s1 + $0xc04] sm:$0xf]
    %v801 = vld [vmem:[%s1 + $0xc08] sm:$0xf]
    %v802 = vld [vmem:[%s1 + $0xc0c] sm:$0xf]
    %v803 = vld [vmem:[%s1 + $0xc10] sm:$0xf]
    %v804 = vld [vmem:[%s1 + $0xc14] sm:$0xf]
    %v805 = vld [vmem:[%s1 + $0xc18] sm:$0xf]
    %v806 = vld [vmem:[%s1 + $0xc1c] sm:$0xf]
    %v807 = vld [vmem:[%s1 + $0xc20] sm:$0xf]
    %v808 = vld [vmem:[%s1 + $0xc24] sm:$0xf]
    %v809 = vld [vmem:[%s1 + $0xc28] sm:$0xf]
    %v810 = vld [vmem:[%s1 + $0xc2c] sm:$0xf]
    %v811 = vld [vmem:[%s1 + $0xc30] sm:$0xf]
    %v812 = vld [vmem:[%s1 + $0xc34] sm:$0xf]
    %v813 = vld [vmem:[%s1 + $0xc38] sm:$0xf]
    %v814 = vld [vmem:[%s1 + $0xc3c] sm:$0xf]
    %v815 = vld [vmem:[%s1 + $0xc40] sm:$0xf]
    %v816 = vld [vmem:[%s1 + $0xc44] sm:$0xf]
    %v817 = vld [vmem:[%s1 + $0xc48] sm:$0xf]
    %v818 = vld [vmem:[%s1 + $0xc4c] sm:$0xf]
    %v819 = vld [vmem:[%s1 + $0xc50] sm:$0xf]
    %v820 = vld [vmem:[%s1 + $0xc54] sm:$0xf]
    %v821 = vld [vmem:[%s1 + $0xc58] sm:$0xf]
    %v822 = vld [vmem:[%s1 + $0xc5c] sm:$0xf]
    %v823 = vld [vmem:[%s1 + $0xc60] sm:$0xf]
    %v824 = vld [vmem:[%s1 + $0xc64] sm:$0xf]
    %v825 = vld [vmem:[%s1 + $0xc68] sm:$0xf]
    %v826 = vld [vmem:[%s1 + $0xc6c] sm:$0xf]
    %v827 = vld [vmem:[%s1 + $0xc70] sm:$0xf]
    %v828 = vld [vmem:[%s1 + $0xc74] sm:$0xf]
    %v829 = vld [vmem:[%s1 + $0xc78] sm:$0xf]
    %v830 = vld [vmem:[%s1 + $0xc7c] sm:$0xf]
    %v831 = vld [vmem:[%s1 + $0xc80] sm:$0xf]
    %v832 = vld [vmem:[%s1 + $0xc84] sm:$0xf]
    %v833 = vld [vmem:[%s1 + $0xc88] sm:$0xf]
    %v834 = vld [vmem:[%s1 + $0xc8c] sm:$0xf]
    %v835 = vld [vmem:[%s1 + $0xc90] sm:$0xf]
    %v836 = vld [vmem:[%s1 + $0xc94] sm:$0xf]
    %v837 = vld [vmem:[%s1 + $0xc98] sm:$0xf]
    %v838 = vld [vmem:[%s1 + $0xc9c] sm:$0xf]
    %v839 = vld [vmem:[%s1 + $0xca0] sm:$0xf]
    %v840 = vld [vmem:[%s1 + $0xca4] sm:$0xf]
    %v841 = vld [vmem:[%s1 + $0xca8] sm:$0xf]
    %v842 = vld [vmem:[%s1 + $0xcac] sm:$0xf]
    %v843 = vld [vmem:[%s1 + $0xcb0] sm:$0xf]
    %v844 = vld [vmem:[%s1 + $0xcb4] sm:$0xf]
    %v845 = vld [vmem:[%s1 + $0xcb8] sm:$0xf]
    %v846 = vld [vmem:[%s1 + $0xcbc] sm:$0xf]
    %v847 = vld [vmem:[%s1 + $0xcc0] sm:$0xf]
    %v848 = vld [vmem:[%s1 + $0xcc4] sm:$0xf]
    %v849 = vld [vmem:[%s1 + $0xcc8] sm:$0xf]
    %v850 = vld [vmem:[%s1 + $0xccc] sm:$0xf]
    %v851 = vld [vmem:[%s1 + $0xcd0] sm:$0xf]
    %v852 = vld [vmem:[%s1 + $0xcd4] sm:$0xf]
    %v853 = vld [vmem:[%s1 + $0xcd8] sm:$0xf]
    %v854 = vld [vmem:[%s1 + $0xcdc] sm:$0xf]
    %v855 = vld [vmem:[%s1 + $0xce0] sm:$0xf]
    %v856 = vld [vmem:[%s1 + $0xce4] sm:$0xf]
    %v857 = vld [vmem:[%s1 + $0xce8] sm:$0xf]
    %v858 = vld [vmem:[%s1 + $0xcec] sm:$0xf]
    %v859 = vld [vmem:[%s1 + $0xcf0] sm:$0xf]
    %v860 = vld [vmem:[%s1 + $0xcf4] sm:$0xf]
    %v861 = vld [vmem:[%s1 + $0xcf8] sm:$0xf]
    %v862 = vld [vmem:[%s1 + $0xcfc] sm:$0xf]
    %v863 = vld [vmem:[%s1 + $0xd00] sm:$0xf]
    %v864 = vld [vmem:[%s1 + $0xd04] sm:$0xf]
    %v865 = vld [vmem:[%s1 + $0xd08] sm:$0xf]
    %v866 = vld [vmem:[%s1 + $0xd0c] sm:$0xf]
    %v867 = vld [vmem:[%s1 + $0xd10] sm:$0xf]
    %v868 = vld [vmem:[%s1 + $0xd14] sm:$0xf]
    %v869 = vld [vmem:[%s1 + $0xd18] sm:$0xf]
    %v870 = vld [vmem:[%s1 + $0xd1c] sm:$0xf]
    %v871 = vld [vmem:[%s1 + $0xd20] sm:$0xf]
    %v872 = vld [vmem:[%s1 + $0xd24] sm:$0xf]
    %v873 = vld [vmem:[%s1 + $0xd28] sm:$0xf]
    %v874 = vld [vmem:[%s1 + $0xd2c] sm:$0xf]
    %v875 = vld [vmem:[%s1 + $0xd30] sm:$0xf]
    %v876 = vld [vmem:[%s1 + $0xd34] sm:$0xf]
    %v877 = vld [vmem:[%s1 + $0xd38] sm:$0xf]
    %v878 = vld [vmem:[%s1 + $0xd3c] sm:$0xf]
    %v879 = vld [vmem:[%s1 + $0xd40] sm:$0xf]
    %v880 = vld [vmem:[%s1 + $0xd44] sm:$0xf]
    %v881 = vld [vmem:[%s1 + $0xd48] sm:$0xf]
    %v882 = vld [vmem:[%s1 + $0xd4c] sm:$0xf]
    %v883 = vld [vmem:[%s1 + $0xd50] sm:$0xf]
    %v884 = vld [vmem:[%s1 + $0xd54] sm:$0xf]
    %v885 = vld [vmem:[%s1 + $0xd58] sm:$0xf]
    %v886 = vld [vmem:[%s1 + $0xd5c] sm:$0xf]
    %v887 = vld [vmem:[%s1 + $0xd60] sm:$0xf]
    %v888 = vld [vmem:[%s1 + $0xd64] sm:$0xf]
    %v889 = vld [vmem:[%s1 + $0xd68] sm:$0xf]
    %v890 = vld [vmem:[%s1 + $0xd6c] sm:$0xf]
    %v891 = vld [vmem:[%s1 + $0xd70] sm:$0xf]
    %v892 = vld [vmem:[%s1 + $0xd74] sm:$0xf]
    %v893 = vld [vmem:[%s1 + $0xd78] sm:$0xf]
    %v894 = vld [vmem:[%s1 + $0xd7c] sm:$0xf]
    %v895 = vld [vmem:[%s1 + $0xd80] sm:$0xf]
    %v896 = vld [vmem:[%s1 + $0xd84] sm:$0xf]
    %v897 = vld [vmem:[%s1 + $0xd88] sm:$0xf]
    %v898 = vld [vmem:[%s1 + $0xd8c] sm:$0xf]
    %v899 = vld [vmem:[%s1 + $0xd90] sm:$0xf]
    %v900 = vld [vmem:[%s1 + $0xd94] sm:$0xf]
    %v901 = vld [vmem:[%s1 + $0xd98] sm:$0xf]
    %v902 = vld [vmem:[%s1 + $0xd9c] sm:$0xf]
    %v903 = vld [vmem:[%s1 + $0xda0] sm:$0xf]
    %v904 = vld [vmem:[%s1 + $0xda4] sm:$0xf]
    %v905 = vld [vmem:[%s1 + $0xda8] sm:$0xf]
    %v906 = vld [vmem:[%s1 + $0xdac] sm:$0xf]
    %v907 = vld [vmem:[%s1 + $0xdb0] sm:$0xf]
    %v908 = vld [vmem:[%s1 + $0xdb4] sm:$0xf]
    %v909 = vld [vmem:[%s1 + $0xdb8] sm:$0xf]
    %v910 = vld [vmem:[%s1 + $0xdbc] sm:$0xf]
    %v911 = vld [vmem:[%s1 + $0xdc0] sm:$0xf]
    %v912 = vld [vmem:[%s1 + $0xdc4] sm:$0xf]
    %v913 = vld [vmem:[%s1 + $0xdc8] sm:$0xf]
    %v914 = vld [vmem:[%s1 + $0xdcc] sm:$0xf]
    %v915 = vld [vmem:[%s1 + $0xdd0] sm:$0xf]
    %v916 = vld [vmem:[%s1 + $0xdd4] sm:$0xf]
    %v917 = vld [vmem:[%s1 + $0xdd8] sm:$0xf]
    %v918 = vld [vmem:[%s1 + $0xddc] sm:$0xf]
    %v919 = vld [vmem:[%s1 + $0xde0] sm:$0xf]
    %v920 = vld [vmem:[%s1 + $0xde4] sm:$0xf]
    %v921 = vld [vmem:[%s1 + $0xde8] sm:$0xf]
    %v922 = vld [vmem:[%s1 + $0xdec] sm:$0xf]
    %v923 = vld [vmem:[%s1 + $0xdf0] sm:$0xf]
    %v924 = vld [vmem:[%s1 + $0xdf4] sm:$0xf]
    %v925 = vld [vmem:[%s1 + $0xdf8] sm:$0xf]
    %v926 = vld [vmem:[%s1 + $0xdfc] sm:$0xf]
    %v927 = vld [vmem:[%s1 + $0xe00] sm:$0xf]
    %v928 = vld [vmem:[%s1 + $0xe04] sm:$0xf]
    %v929 = vld [vmem:[%s1 + $0xe08] sm:$0xf]
    %v930 = vld [vmem:[%s1 + $0xe0c] sm:$0xf]
    %v931 = vld [vmem:[%s1 + $0xe10] sm:$0xf]
    %v932 = vld [vmem:[%s1 + $0xe14] sm:$0xf]
    %v933 = vld [vmem:[%s1 + $0xe18] sm:$0xf]
    %v934 = vld [vmem:[%s1 + $0xe1c] sm:$0xf]
    %v935 = vld [vmem:[%s1 + $0xe20] sm:$0xf]
    %v936 = vld [vmem:[%s1 + $0xe24] sm:$0xf]
    %v937 = vld [vmem:[%s1 + $0xe28] sm:$0xf]
    %v938 = vld [vmem:[%s1 + $0xe2c] sm:$0xf]
    %v939 = vld [vmem:[%s1 + $0xe30] sm:$0xf]
    %v940 = vld [vmem:[%s1 + $0xe34] sm:$0xf]
    %v941 = vld [vmem:[%s1 + $0xe38] sm:$0xf]
    %v942 = vld [vmem:[%s1 + $0xe3c] sm:$0xf]
    %v943 = vld [vmem:[%s1 + $0xe40] sm:$0xf]
    %v944 = vld [vmem:[%s1 + $0xe44] sm:$0xf]
    %v945 = vld [vmem:[%s1 + $0xe48] sm:$0xf]
    %v946 = vld [vmem:[%s1 + $0xe4c] sm:$0xf]
    %v947 = vld [vmem:[%s1 + $0xe50] sm:$0xf]
    %v948 = vld [vmem:[%s1 + $0xe54] sm:$0xf]
    %v949 = vld [vmem:[%s1 + $0xe58] sm:$0xf]
    %v950 = vld [vmem:[%s1 + $0xe5c] sm:$0xf]
    %v951 = vld [vmem:[%s1 + $0xe60] sm:$0xf]
    %v952 = vld [vmem:[%s1 + $0xe64] sm:$0xf]
    %v953 = vld [vmem:[%s1 + $0xe68] sm:$0xf]
    %v954 = vld [vmem:[%s1 + $0xe6c] sm:$0xf]
    %v955 = vld [vmem:[%s1 + $0xe70] sm:$0xf]
    %v956 = vld [vmem:[%s1 + $0xe74] sm:$0xf]
    %v957 = vld [vmem:[%s1 + $0xe78] sm:$0xf]
    %v958 = vld [vmem:[%s1 + $0xe7c] sm:$0xf]
    %v959 = vld [vmem:[%s1 + $0xe80] sm:$0xf]
    %v960 = vld [vmem:[%s1 + $0xe84] sm:$0xf]
    %v961 = vld [vmem:[%s1 + $0xe88] sm:$0xf]
    %v962 = vld [vmem:[%s1 + $0xe8c] sm:$0xf]
    %v963 = vld [vmem:[%s1 + $0xe90] sm:$0xf]
    %v964 = vld [vmem:[%s1 + $0xe94] sm:$0xf]
    %v965 = vld [vmem:[%s1 + $0xe98] sm:$0xf]
    %v966 = vld [vmem:[%s1 + $0xe9c] sm:$0xf]
    %v967 = vld [vmem:[%s1 + $0xea0] sm:$0xf]
    %v968 = vld [vmem:[%s1 + $0xea4] sm:$0xf]
    %v969 = vld [vmem:[%s1 + $0xea8] sm:$0xf]
    %v970 = vld [vmem:[%s1 + $0xeac] sm:$0xf]
    %v971 = vld [vmem:[%s1 + $0xeb0] sm:$0xf]
    %v972 = vld [vmem:[%s1 + $0xeb4] sm:$0xf]
    %v973 = vld [vmem:[%s1 + $0xeb8] sm:$0xf]
    %v974 = vld [vmem:[%s1 + $0xebc] sm:$0xf]
    %v975 = vld [vmem:[%s1 + $0xec0] sm:$0xf]
    %v976 = vld [vmem:[%s1 + $0xec4] sm:$0xf]
    %v977 = vld [vmem:[%s1 + $0xec8] sm:$0xf]
    %v978 = vld [vmem:[%s1 + $0xecc] sm:$0xf]
    %v979 = vld [vmem:[%s1 + $0xed0] sm:$0xf]
    %v980 = vld [vmem:[%s1 + $0xed4] sm:$0xf]
    %v981 = vld [vmem:[%s1 + $0xed8] sm:$0xf]
    %v982 = vld [vmem:[%s1 + $0xedc] sm:$0xf]
    %v983 = vld [vmem:[%s1 + $0xee0] sm:$0xf]
    %v984 = vld [vmem:[%s1 + $0xee4] sm:$0xf]
    %v985 = vld [vmem:[%s1 + $0xee8] sm:$0xf]
    %v986 = vld [vmem:[%s1 + $0xeec] sm:$0xf]
    %v987 = vld [vmem:[%s1 + $0xef0] sm:$0xf]
    %v988 = vld [vmem:[%s1 + $0xef4] sm:$0xf]
    %v989 = vld [vmem:[%s1 + $0xef8] sm:$0xf]
    %v990 = vld [vmem:[%s1 + $0xefc] sm:$0xf]
    %v991 = vld [vmem:[%s1 + $0xf00] sm:$0xf]
    %v992 = vld [vmem:[%s1 + $0xf04] sm:$0xf]
    %v993 = vld [vmem:[%s1 + $0xf08] sm:$0xf]
    %v994 = vld [vmem:[%s1 + $0xf0c] sm:$0xf]
    %v995 = vld [vmem:[%s1 + $0xf10] sm:$0xf]
    %v996 = vld [vmem:[%s1 + $0xf14] sm:$0xf]
    %v997 = vld [vmem:[%s1 + $0xf18] sm:$0xf]
    %v998 = vld [vmem:[%s1 + $0xf1c] sm:$0xf]
    %v999 = vld [vmem:[%s1 + $0xf20] sm:$0xf]
    %v1000 = vld [vmem:[%s1 + $0xf24] sm:$0xf]
    %v1001 = vld [vmem:[%s1 + $0xf28] sm:$0xf]
    %v1002 = vld [vmem:[%s1 + $0xf2c] sm:$0xf]
    %v1003 = vld [vmem:[%s1 + $0xf30] sm:$0xf]
    %v1004 = vld [vmem:[%s1 + $0xf34] sm:$0xf]
    %v1005 = vld [vmem:[%s1 + $0xf38] sm:$0xf]
    %v1006 = vld [vmem:[%s1 + $0xf3c] sm:$0xf]
    %v1007 = vld [vmem:[%s1 + $0xf40] sm:$0xf]
    %v1008 = vld [vmem:[%s1 + $0xf44] sm:$0xf]
    %v1009 = vld [vmem:[%s1 + $0xf48] sm:$0xf]
    %v1010 = vld [vmem:[%s1 + $0xf4c] sm:$0xf]
    %v1011 = vld [vmem:[%s1 + $0xf50] sm:$0xf]
    %v1012 = vld [vmem:[%s1 + $0xf54] sm:$0xf]
    %v1013 = vld [vmem:[%s1 + $0xf58] sm:$0xf]
    %v1014 = vld [vmem:[%s1 + $0xf5c] sm:$0xf]
    %v1015 = vld [vmem:[%s1 + $0xf60] sm:$0xf]
    %v1016 = vld [vmem:[%s1 + $0xf64] sm:$0xf]
    %v1017 = vld [vmem:[%s1 + $0xf68] sm:$0xf]
    %v1018 = vld [vmem:[%s1 + $0xf6c] sm:$0xf]
    %v1019 = vld [vmem:[%s1 + $0xf70] sm:$0xf]
    %v1020 = vld [vmem:[%s1 + $0xf74] sm:$0xf]
    %v1021 = vld [vmem:[%s1 + $0xf78] sm:$0xf]
    %v1022 = vld [vmem:[%s1 + $0xf7c] sm:$0xf]
    %v1023 = vld [vmem:[%s1 + $0xf80] sm:$0xf]
    %v1024 = vld [vmem:[%s1 + $0xf84] sm:$0xf]
    %v1025 = vld [vmem:[%s1 + $0xf88] sm:$0xf]
    %v1026 = vld [vmem:[%s1 + $0xf8c] sm:$0xf]
    %v1027 = vld [vmem:[%s1 + $0xf90] sm:$0xf]
    %v1028 = vld [vmem:[%s1 + $0xf94] sm:$0xf]
    %v1029 = vld [vmem:[%s1 + $0xf98] sm:$0xf]
    %v1030 = vld [vmem:[%s1 + $0xf9c] sm:$0xf]
    %v1031 = vld [vmem:[%s1 + $0xfa0] sm:$0xf]
    %v1032 = vld [vmem:[%s1 + $0xfa4] sm:$0xf]
    %v1033 = vld [vmem:[%s1 + $0xfa8] sm:$0xf]
    %v1034 = vld [vmem:[%s1 + $0xfac] sm:$0xf]
    %v1035 = vld [vmem:[%s1 + $0xfb0] sm:$0xf]
    %v1036 = vld [vmem:[%s1 + $0xfb4] sm:$0xf]
    %v1037 = vld [vmem:[%s1 + $0xfb8] sm:$0xf]
    %v1038 = vld [vmem:[%s1 + $0xfbc] sm:$0xf]
    %v1039 = vld [vmem:[%s1 + $0xfc0] sm:$0xf]
    %v1040 = vld [vmem:[%s1 + $0xfc4] sm:$0xf]
    %v1041 = vld [vmem:[%s1 + $0xfc8] sm:$0xf]
    %v1042 = vld [vmem:[%s1 + $0xfcc] sm:$0xf]
    %v1043 = vld [vmem:[%s1 + $0xfd0] sm:$0xf]
    %v1044 = vld [vmem:[%s1 + $0xfd4] sm:$0xf]
    %v1045 = vld [vmem:[%s1 + $0xfd8] sm:$0xf]
    %v1046 = vld [vmem:[%s1 + $0xfdc] sm:$0xf]
    %v1047 = vld [vmem:[%s1 + $0xfe0] sm:$0xf]
    %v1048 = vld [vmem:[%s1 + $0xfe4] sm:$0xf]
    %v1049 = vld [vmem:[%s1 + $0xfe8] sm:$0xf]
    %v1050 = vld [vmem:[%s1 + $0xfec] sm:$0xf]
    %v1051 = vld [vmem:[%s1 + $0xff0] sm:$0xf]
    %v1052 = vld [vmem:[%s1 + $0xff4] sm:$0xf]
    %v1053 = vld [vmem:[%s1 + $0xff8] sm:$0xf]
    %v1054 = vld [vmem:[%s1 + $0xffc] sm:$0xf]
    %v1055 = vld [vmem:[%s1 + $0x1000] sm:$0xf]
    %v1056 = vld [vmem:[%s1 + $0x1004] sm:$0xf]
    %v1057 = vld [vmem:[%s1 + $0x1008] sm:$0xf]
    %v1058 = vld [vmem:[%s1 + $0x100c] sm:$0xf]
    %v1059 = vld [vmem:[%s1 + $0x1010] sm:$0xf]
    %v1060 = vld [vmem:[%s1 + $0x1014] sm:$0xf]
    %v1061 = vld [vmem:[%s1 + $0x1018] sm:$0xf]
    %v1062 = vld [vmem:[%s1 + $0x101c] sm:$0xf]
    %v1063 = vld [vmem:[%s1 + $0x1020] sm:$0xf]
    %v1064 = vld [vmem:[%s1 + $0x1024] sm:$0xf]
    %v1065 = vld [vmem:[%s1 + $0x1028] sm:$0xf]
    %v1066 = vld [vmem:[%s1 + $0x102c] sm:$0xf]
    %v1067 = vld [vmem:[%s1 + $0x1030] sm:$0xf]
    %v1068 = vld [vmem:[%s1 + $0x1034] sm:$0xf]
    %v1069 = vld [vmem:[%s1 + $0x1038] sm:$0xf]
    %v1070 = vld [vmem:[%s1 + $0x103c] sm:$0xf]
    %v1071 = vld [vmem:[%s1 + $0x1040] sm:$0xf]
    %v1072 = vld [vmem:[%s1 + $0x1044] sm:$0xf]
    %v1073 = vld [vmem:[%s1 + $0x1048] sm:$0xf]
    %v1074 = vld [vmem:[%s1 + $0x104c] sm:$0xf]
    %v1075 = vld [vmem:[%s1 + $0x1050] sm:$0xf]
    %v1076 = vld [vmem:[%s1 + $0x1054] sm:$0xf]
    %v1077 = vld [vmem:[%s1 + $0x1058] sm:$0xf]
    %v1078 = vld [vmem:[%s1 + $0x105c] sm:$0xf]
    %v1079 = vld [vmem:[%s1 + $0x1060] sm:$0xf]
    %v1080 = vld [vmem:[%s1 + $0x1064] sm:$0xf]
    %v1081 = vld [vmem:[%s1 + $0x1068] sm:$0xf]
    %v1082 = vld [vmem:[%s1 + $0x106c] sm:$0xf]
    %v1083 = vld [vmem:[%s1 + $0x1070] sm:$0xf]
    %v1084 = vld [vmem:[%s1 + $0x1074] sm:$0xf]
    %v1085 = vld [vmem:[%s1 + $0x1078] sm:$0xf]
    %v1086 = vld [vmem:[%s1 + $0x107c] sm:$0xf]
    %v1087 = vld [vmem:[%s1 + $0x1080] sm:$0xf]
    %v1088 = vld [vmem:[%s1 + $0x1084] sm:$0xf]
    %v1089 = vld [vmem:[%s1 + $0x1088] sm:$0xf]
    %v1090 = vld [vmem:[%s1 + $0x108c] sm:$0xf]
    %v1091 = vld [vmem:[%s1 + $0x1090] sm:$0xf]
    %v1092 = vld [vmem:[%s1 + $0x1094] sm:$0xf]
    %v1093 = vld [vmem:[%s1 + $0x1098] sm:$0xf]
    %v1094 = vld [vmem:[%s1 + $0x109c] sm:$0xf]
    %v1095 = vld [vmem:[%s1 + $0x10a0] sm:$0xf]
    %v1096 = vld [vmem:[%s1 + $0x10a4] sm:$0xf]
    %v1097 = vld [vmem:[%s1 + $0x10a8] sm:$0xf]
    %v1098 = vld [vmem:[%s1 + $0x10ac] sm:$0xf]
    %v1099 = vld [vmem:[%s1 + $0x10b0] sm:$0xf]
    %v1100 = vld [vmem:[%s1 + $0x10b4] sm:$0xf]
    %v1101 = vld [vmem:[%s1 + $0x10b8] sm:$0xf]
    %v1102 = vld [vmem:[%s1 + $0x10bc] sm:$0xf]
    %v1103 = vld [vmem:[%s1 + $0x10c0] sm:$0xf]
    %v1104 = vld [vmem:[%s1 + $0x10c4] sm:$0xf]
    %v1105 = vld [vmem:[%s1 + $0x10c8] sm:$0xf]
    %v1106 = vld [vmem:[%s1 + $0x10cc] sm:$0xf]
    %v1107 = vld [vmem:[%s1 + $0x10d0] sm:$0xf]
    %v1108 = vld [vmem:[%s1 + $0x10d4] sm:$0xf]
    %v1109 = vld [vmem:[%s1 + $0x10d8] sm:$0xf]
    %v1110 = vld [vmem:[%s1 + $0x10dc] sm:$0xf]
    %v1111 = vld [vmem:[%s1 + $0x10e0] sm:$0xf]
    %v1112 = vld [vmem:[%s1 + $0x10e4] sm:$0xf]
    %v1113 = vld [vmem:[%s1 + $0x10e8] sm:$0xf]
    %v1114 = vld [vmem:[%s1 + $0x10ec] sm:$0xf]
    %v1115 = vld [vmem:[%s1 + $0x10f0] sm:$0xf]
    %v1116 = vld [vmem:[%s1 + $0x10f4] sm:$0xf]
    %v1117 = vld [vmem:[%s1 + $0x10f8] sm:$0xf]
    %v1118 = vld [vmem:[%s1 + $0x10fc] sm:$0xf]
    %v1119 = vld [vmem:[%s1 + $0x1100] sm:$0xf]
    %v1120 = vld [vmem:[%s1 + $0x1104] sm:$0xf]
    %v1121 = vld [vmem:[%s1 + $0x1108] sm:$0xf]
    %v1122 = vld [vmem:[%s1 + $0x110c] sm:$0xf]
    %v1123 = vld [vmem:[%s1 + $0x1110] sm:$0xf]
    %v1124 = vld [vmem:[%s1 + $0x1114] sm:$0xf]
    %v1125 = vld [vmem:[%s1 + $0x1118] sm:$0xf]
    %v1126 = vld [vmem:[%s1 + $0x111c] sm:$0xf]
    %v1127 = vld [vmem:[%s1 + $0x1120] sm:$0xf]
    %v1128 = vld [vmem:[%s1 + $0x1124] sm:$0xf]
    %v1129 = vld [vmem:[%s1 + $0x1128] sm:$0xf]
    %v1130 = vld [vmem:[%s1 + $0x112c] sm:$0xf]
    %v1131 = vld [vmem:[%s1 + $0x1130] sm:$0xf]
    %v1132 = vld [vmem:[%s1 + $0x1134] sm:$0xf]
    %v1133 = vld [vmem:[%s1 + $0x1138] sm:$0xf]
    %v1134 = vld [vmem:[%s1 + $0x113c] sm:$0xf]
    %v1135 = vld [vmem:[%s1 + $0x1140] sm:$0xf]
    %v1136 = vld [vmem:[%s1 + $0x1144] sm:$0xf]
    %v1137 = vld [vmem:[%s1 + $0x1148] sm:$0xf]
    %v1138 = vld [vmem:[%s1 + $0x114c] sm:$0xf]
    %v1139 = vld [vmem:[%s1 + $0x1150] sm:$0xf]
    %v1140 = vld [vmem:[%s1 + $0x1154] sm:$0xf]
    %v1141 = vld [vmem:[%s1 + $0x1158] sm:$0xf]
    %v1142 = vld [vmem:[%s1 + $0x115c] sm:$0xf]
    %v1143 = vld [vmem:[%s1 + $0x1160] sm:$0xf]
    %v1144 = vld [vmem:[%s1 + $0x1164] sm:$0xf]
    %v1145 = vld [vmem:[%s1 + $0x1168] sm:$0xf]
    %v1146 = vld [vmem:[%s1 + $0x116c] sm:$0xf]
    %v1147 = vld [vmem:[%s1 + $0x1170] sm:$0xf]
    %v1148 = vld [vmem:[%s1 + $0x1174] sm:$0xf]
    %v1149 = vld [vmem:[%s1 + $0x1178] sm:$0xf]
    %v1150 = vld [vmem:[%s1 + $0x117c] sm:$0xf]
    %v1151 = vld [vmem:[%s1 + $0x1180] sm:$0xf]
    %v1152 = vld [vmem:[%s1 + $0x1184] sm:$0xf]
    %v1153 = vld [vmem:[%s1 + $0x1188] sm:$0xf]
    %v1154 = vld [vmem:[%s1 + $0x118c] sm:$0xf]
    %v1155 = vld [vmem:[%s1 + $0x1190] sm:$0xf]
    %v1156 = vld [vmem:[%s1 + $0x1194] sm:$0xf]
    %v1157 = vld [vmem:[%s1 + $0x1198] sm:$0xf]
    %v1158 = vld [vmem:[%s1 + $0x119c] sm:$0xf]
    %v1159 = vld [vmem:[%s1 + $0x11a0] sm:$0xf]
    %v1160 = vld [vmem:[%s1 + $0x11a4] sm:$0xf]
    %v1161 = vld [vmem:[%s1 + $0x11a8] sm:$0xf]
    %v1162 = vld [vmem:[%s1 + $0x11ac] sm:$0xf]
    %v1163 = vld [vmem:[%s1 + $0x11b0] sm:$0xf]
    %v1164 = vld [vmem:[%s1 + $0x11b4] sm:$0xf]
    %v1165 = vld [vmem:[%s1 + $0x11b8] sm:$0xf]
    %v1166 = vld [vmem:[%s1 + $0x11bc] sm:$0xf]
    %v1167 = vld [vmem:[%s1 + $0x11c0] sm:$0xf]
    %v1168 = vld [vmem:[%s1 + $0x11c4] sm:$0xf]
    %v1169 = vld [vmem:[%s1 + $0x11c8] sm:$0xf]
    %v1170 = vld [vmem:[%s1 + $0x11cc] sm:$0xf]
    %v1171 = vld [vmem:[%s1 + $0x11d0] sm:$0xf]
    %v1172 = vld [vmem:[%s1 + $0x11d4] sm:$0xf]
    %v1173 = vld [vmem:[%s1 + $0x11d8] sm:$0xf]
    %v1174 = vld [vmem:[%s1 + $0x11dc] sm:$0xf]
    %v1175 = vld [vmem:[%s1 + $0x11e0] sm:$0xf]
    %v1176 = vld [vmem:[%s1 + $0x11e4] sm:$0xf]
    %v1177 = vld [vmem:[%s1 + $0x11e8] sm:$0xf]
    %v1178 = vld [vmem:[%s1 + $0x11ec] sm:$0xf]
    %v1179 = vld [vmem:[%s1 + $0x11f0] sm:$0xf]
    %v1180 = vld [vmem:[%s1 + $0x11f4] sm:$0xf]
    %v1181 = vld [vmem:[%s1 + $0x11f8] sm:$0xf]
    %v1182 = vld [vmem:[%s1 + $0x11fc] sm:$0xf]
    %v1183 = vld [vmem:[%s2] sm:$0x1]
    %v1185 = vlaneseq
    %v1186 = vshrl.u32 %v1185, 7
    %v1187 = vsub.s32 0, %v1186
    %v1188 = vrot.slane %v1183, %v1187
    %v1199 = vcombine.high %v22, %v22
    %v1201 = vunpack.c.l.s4 1966171168
    %v1202 = vunpack.c.0.s8 %v1201
    %v1203 = vlaneseq
    %v1204 = vshrl.u32 %v1203, 7
    %v1205 = vsub.s32 %v1202, %v1204
    %v1206 = vrot.slane %v22, %v1205
    %v1208 = vunpack.c.l.s4 1966171168
    %v1209 = vunpack.c.0.s8 %v1208
    %v1210 = vlaneseq
    %v1211 = vshrl.u32 %v1210, 7
    %v1212 = vsub.s32 %v1209, %v1211
    %v1213 = vrot.slane %v1199, %v1212
    %v1214 = vcombine.high %v1206, %v1206
    %v1215 = vcombine.high %v1213, %v1213
    %v1217 = vunpack.c.l.s4 1966171168
    %v1218 = vunpack.c.0.s8 %v1217
    %v1219 = vlaneseq
    %v1220 = vshrl.u32 %v1219, 7
    %v1221 = vsub.s32 %v1218, %v1220
    %v1222 = vrot.slane %v1206, %v1221
    %v1224 = vunpack.c.l.s4 1966171168
    %v1225 = vunpack.c.0.s8 %v1224
    %v1226 = vlaneseq
    %v1227 = vshrl.u32 %v1226, 7
    %v1228 = vsub.s32 %v1225, %v1227
    %v1229 = vrot.slane %v1213, %v1228
    %v1231 = vunpack.c.l.s4 1966171168
    %v1232 = vunpack.c.0.s8 %v1231
    %v1233 = vlaneseq
    %v1234 = vshrl.u32 %v1233, 7
    %v1235 = vsub.s32 %v1232, %v1234
    %v1236 = vrot.slane %v1214, %v1235
    %v1238 = vunpack.c.l.s4 1966171168
    %v1239 = vunpack.c.0.s8 %v1238
    %v1240 = vlaneseq
    %v1241 = vshrl.u32 %v1240, 7
    %v1242 = vsub.s32 %v1239, %v1241
    %v1243 = vrot.slane %v1215, %v1242
    %v1244 = vcombine.high %v1222, %v1222
    %v1245 = vcombine.high %v1229, %v1229
    %v1246 = vcombine.high %v1236, %v1236
    %v1247 = vcombine.high %v1243, %v1243
    %v1248 = vcombine.high %v23, %v23
    %v1250 = vunpack.c.l.s4 1966171168
    %v1251 = vunpack.c.0.s8 %v1250
    %v1252 = vlaneseq
    %v1253 = vshrl.u32 %v1252, 7
    %v1254 = vsub.s32 %v1251, %v1253
    %v1255 = vrot.slane %v23, %v1254
    %v1257 = vunpack.c.l.s4 1966171168
    %v1258 = vunpack.c.0.s8 %v1257
    %v1259 = vlaneseq
    %v1260 = vshrl.u32 %v1259, 7
    %v1261 = vsub.s32 %v1258, %v1260
    %v1262 = vrot.slane %v1248, %v1261
    %v1263 = vcombine.high %v1255, %v1255
    %v1264 = vcombine.high %v1262, %v1262
    %v1266 = vunpack.c.l.s4 1966171168
    %v1267 = vunpack.c.0.s8 %v1266
    %v1268 = vlaneseq
    %v1269 = vshrl.u32 %v1268, 7
    %v1270 = vsub.s32 %v1267, %v1269
    %v1271 = vrot.slane %v1255, %v1270
    %v1273 = vunpack.c.l.s4 1966171168
    %v1274 = vunpack.c.0.s8 %v1273
    %v1275 = vlaneseq
    %v1276 = vshrl.u32 %v1275, 7
    %v1277 = vsub.s32 %v1274, %v1276
    %v1278 = vrot.slane %v1262, %v1277
    %v1280 = vunpack.c.l.s4 1966171168
    %v1281 = vunpack.c.0.s8 %v1280
    %v1282 = vlaneseq
    %v1283 = vshrl.u32 %v1282, 7
    %v1284 = vsub.s32 %v1281, %v1283
    %v1285 = vrot.slane %v1263, %v1284
    %v1287 = vunpack.c.l.s4 1966171168
    %v1288 = vunpack.c.0.s8 %v1287
    %v1289 = vlaneseq
    %v1290 = vshrl.u32 %v1289, 7
    %v1291 = vsub.s32 %v1288, %v1290
    %v1292 = vrot.slane %v1264, %v1291
    %v1293 = vcombine.high %v1271, %v1271
    %v1294 = vcombine.high %v1278, %v1278
    %v1295 = vcombine.high %v1285, %v1285
    %v1296 = vcombine.high %v1292, %v1292
    %v1297 = vcombine.high %v24, %v24
    %v1299 = vunpack.c.l.s4 1966171168
    %v1300 = vunpack.c.0.s8 %v1299
    %v1301 = vlaneseq
    %v1302 = vshrl.u32 %v1301, 7
    %v1303 = vsub.s32 %v1300, %v1302
    %v1304 = vrot.slane %v24, %v1303
    %v1306 = vunpack.c.l.s4 1966171168
    %v1307 = vunpack.c.0.s8 %v1306
    %v1308 = vlaneseq
    %v1309 = vshrl.u32 %v1308, 7
    %v1310 = vsub.s32 %v1307, %v1309
    %v1311 = vrot.slane %v1297, %v1310
    %v1312 = vcombine.high %v1304, %v1304
    %v1313 = vcombine.high %v1311, %v1311
    %v1315 = vunpack.c.l.s4 1966171168
    %v1316 = vunpack.c.0.s8 %v1315
    %v1317 = vlaneseq
    %v1318 = vshrl.u32 %v1317, 7
    %v1319 = vsub.s32 %v1316, %v1318
    %v1320 = vrot.slane %v1304, %v1319
    %v1322 = vunpack.c.l.s4 1966171168
    %v1323 = vunpack.c.0.s8 %v1322
    %v1324 = vlaneseq
    %v1325 = vshrl.u32 %v1324, 7
    %v1326 = vsub.s32 %v1323, %v1325
    %v1327 = vrot.slane %v1311, %v1326
    %v1329 = vunpack.c.l.s4 1966171168
    %v1330 = vunpack.c.0.s8 %v1329
    %v1331 = vlaneseq
    %v1332 = vshrl.u32 %v1331, 7
    %v1333 = vsub.s32 %v1330, %v1332
    %v1334 = vrot.slane %v1312, %v1333
    %v1336 = vunpack.c.l.s4 1966171168
    %v1337 = vunpack.c.0.s8 %v1336
    %v1338 = vlaneseq
    %v1339 = vshrl.u32 %v1338, 7
    %v1340 = vsub.s32 %v1337, %v1339
    %v1341 = vrot.slane %v1313, %v1340
    %v1342 = vcombine.high %v1320, %v1320
    %v1343 = vcombine.high %v1327, %v1327
    %v1344 = vcombine.high %v1334, %v1334
    %v1345 = vcombine.high %v1341, %v1341
    %v1346 = vcombine.high %v25, %v25
    %v1348 = vunpack.c.l.s4 1966171168
    %v1349 = vunpack.c.0.s8 %v1348
    %v1350 = vlaneseq
    %v1351 = vshrl.u32 %v1350, 7
    %v1352 = vsub.s32 %v1349, %v1351
    %v1353 = vrot.slane %v25, %v1352
    %v1355 = vunpack.c.l.s4 1966171168
    %v1356 = vunpack.c.0.s8 %v1355
    %v1357 = vlaneseq
    %v1358 = vshrl.u32 %v1357, 7
    %v1359 = vsub.s32 %v1356, %v1358
    %v1360 = vrot.slane %v1346, %v1359
    %v1361 = vcombine.high %v1353, %v1353
    %v1362 = vcombine.high %v1360, %v1360
    %v1364 = vunpack.c.l.s4 1966171168
    %v1365 = vunpack.c.0.s8 %v1364
    %v1366 = vlaneseq
    %v1367 = vshrl.u32 %v1366, 7
    %v1368 = vsub.s32 %v1365, %v1367
    %v1369 = vrot.slane %v1353, %v1368
    %v1371 = vunpack.c.l.s4 1966171168
    %v1372 = vunpack.c.0.s8 %v1371
    %v1373 = vlaneseq
    %v1374 = vshrl.u32 %v1373, 7
    %v1375 = vsub.s32 %v1372, %v1374
    %v1376 = vrot.slane %v1360, %v1375
    %v1378 = vunpack.c.l.s4 1966171168
    %v1379 = vunpack.c.0.s8 %v1378
    %v1380 = vlaneseq
    %v1381 = vshrl.u32 %v1380, 7
    %v1382 = vsub.s32 %v1379, %v1381
    %v1383 = vrot.slane %v1361, %v1382
    %v1385 = vunpack.c.l.s4 1966171168
    %v1386 = vunpack.c.0.s8 %v1385
    %v1387 = vlaneseq
    %v1388 = vshrl.u32 %v1387, 7
    %v1389 = vsub.s32 %v1386, %v1388
    %v1390 = vrot.slane %v1362, %v1389
    %v1391 = vcombine.high %v1369, %v1369
    %v1392 = vcombine.high %v1376, %v1376
    %v1393 = vcombine.high %v1383, %v1383
    %v1394 = vcombine.high %v1390, %v1390
    %v1395 = vcombine.high %v26, %v26
    %v1397 = vunpack.c.l.s4 1966171168
    %v1398 = vunpack.c.0.s8 %v1397
    %v1399 = vlaneseq
    %v1400 = vshrl.u32 %v1399, 7
    %v1401 = vsub.s32 %v1398, %v1400
    %v1402 = vrot.slane %v26, %v1401
    %v1404 = vunpack.c.l.s4 1966171168
    %v1405 = vunpack.c.0.s8 %v1404
    %v1406 = vlaneseq
    %v1407 = vshrl.u32 %v1406, 7
    %v1408 = vsub.s32 %v1405, %v1407
    %v1409 = vrot.slane %v1395, %v1408
    %v1410 = vcombine.high %v1402, %v1402
    %v1411 = vcombine.high %v1409, %v1409
    %v1413 = vunpack.c.l.s4 1966171168
    %v1414 = vunpack.c.0.s8 %v1413
    %v1415 = vlaneseq
    %v1416 = vshrl.u32 %v1415, 7
    %v1417 = vsub.s32 %v1414, %v1416
    %v1418 = vrot.slane %v1402, %v1417
    %v1420 = vunpack.c.l.s4 1966171168
    %v1421 = vunpack.c.0.s8 %v1420
    %v1422 = vlaneseq
    %v1423 = vshrl.u32 %v1422, 7
    %v1424 = vsub.s32 %v1421, %v1423
    %v1425 = vrot.slane %v1409, %v1424
    %v1427 = vunpack.c.l.s4 1966171168
    %v1428 = vunpack.c.0.s8 %v1427
    %v1429 = vlaneseq
    %v1430 = vshrl.u32 %v1429, 7
    %v1431 = vsub.s32 %v1428, %v1430
    %v1432 = vrot.slane %v1410, %v1431
    %v1434 = vunpack.c.l.s4 1966171168
    %v1435 = vunpack.c.0.s8 %v1434
    %v1436 = vlaneseq
    %v1437 = vshrl.u32 %v1436, 7
    %v1438 = vsub.s32 %v1435, %v1437
    %v1439 = vrot.slane %v1411, %v1438
    %v1440 = vcombine.high %v1418, %v1418
    %v1441 = vcombine.high %v1425, %v1425
    %v1442 = vcombine.high %v1432, %v1432
    %v1443 = vcombine.high %v1439, %v1439
    %v1444 = vcombine.high %v27, %v27
    %v1446 = vunpack.c.l.s4 1966171168
    %v1447 = vunpack.c.0.s8 %v1446
    %v1448 = vlaneseq
    %v1449 = vshrl.u32 %v1448, 7
    %v1450 = vsub.s32 %v1447, %v1449
    %v1451 = vrot.slane %v27, %v1450
    %v1453 = vunpack.c.l.s4 1966171168
    %v1454 = vunpack.c.0.s8 %v1453
    %v1455 = vlaneseq
    %v1456 = vshrl.u32 %v1455, 7
    %v1457 = vsub.s32 %v1454, %v1456
    %v1458 = vrot.slane %v1444, %v1457
    %v1459 = vcombine.high %v1451, %v1451
    %v1460 = vcombine.high %v1458, %v1458
    %v1462 = vunpack.c.l.s4 1966171168
    %v1463 = vunpack.c.0.s8 %v1462
    %v1464 = vlaneseq
    %v1465 = vshrl.u32 %v1464, 7
    %v1466 = vsub.s32 %v1463, %v1465
    %v1467 = vrot.slane %v1451, %v1466
    %v1469 = vunpack.c.l.s4 1966171168
    %v1470 = vunpack.c.0.s8 %v1469
    %v1471 = vlaneseq
    %v1472 = vshrl.u32 %v1471, 7
    %v1473 = vsub.s32 %v1470, %v1472
    %v1474 = vrot.slane %v1458, %v1473
    %v1476 = vunpack.c.l.s4 1966171168
    %v1477 = vunpack.c.0.s8 %v1476
    %v1478 = vlaneseq
    %v1479 = vshrl.u32 %v1478, 7
    %v1480 = vsub.s32 %v1477, %v1479
    %v1481 = vrot.slane %v1459, %v1480
    %v1483 = vunpack.c.l.s4 1966171168
    %v1484 = vunpack.c.0.s8 %v1483
    %v1485 = vlaneseq
    %v1486 = vshrl.u32 %v1485, 7
    %v1487 = vsub.s32 %v1484, %v1486
    %v1488 = vrot.slane %v1460, %v1487
    %v1489 = vcombine.high %v1467, %v1467
    %v1490 = vcombine.high %v1474, %v1474
    %v1491 = vcombine.high %v1481, %v1481
    %v1492 = vcombine.high %v1488, %v1488
    %v1493 = vcombine.high %v28, %v28
    %v1495 = vunpack.c.l.s4 1966171168
    %v1496 = vunpack.c.0.s8 %v1495
    %v1497 = vlaneseq
    %v1498 = vshrl.u32 %v1497, 7
    %v1499 = vsub.s32 %v1496, %v1498
    %v1500 = vrot.slane %v28, %v1499
    %v1502 = vunpack.c.l.s4 1966171168
    %v1503 = vunpack.c.0.s8 %v1502
    %v1504 = vlaneseq
    %v1505 = vshrl.u32 %v1504, 7
    %v1506 = vsub.s32 %v1503, %v1505
    %v1507 = vrot.slane %v1493, %v1506
    %v1508 = vcombine.high %v1500, %v1500
    %v1509 = vcombine.high %v1507, %v1507
    %v1511 = vunpack.c.l.s4 1966171168
    %v1512 = vunpack.c.0.s8 %v1511
    %v1513 = vlaneseq
    %v1514 = vshrl.u32 %v1513, 7
    %v1515 = vsub.s32 %v1512, %v1514
    %v1516 = vrot.slane %v1500, %v1515
    %v1518 = vunpack.c.l.s4 1966171168
    %v1519 = vunpack.c.0.s8 %v1518
    %v1520 = vlaneseq
    %v1521 = vshrl.u32 %v1520, 7
    %v1522 = vsub.s32 %v1519, %v1521
    %v1523 = vrot.slane %v1507, %v1522
    %v1525 = vunpack.c.l.s4 1966171168
    %v1526 = vunpack.c.0.s8 %v1525
    %v1527 = vlaneseq
    %v1528 = vshrl.u32 %v1527, 7
    %v1529 = vsub.s32 %v1526, %v1528
    %v1530 = vrot.slane %v1508, %v1529
    %v1532 = vunpack.c.l.s4 1966171168
    %v1533 = vunpack.c.0.s8 %v1532
    %v1534 = vlaneseq
    %v1535 = vshrl.u32 %v1534, 7
    %v1536 = vsub.s32 %v1533, %v1535
    %v1537 = vrot.slane %v1509, %v1536
    %v1538 = vcombine.high %v1516, %v1516
    %v1539 = vcombine.high %v1523, %v1523
    %v1540 = vcombine.high %v1530, %v1530
    %v1541 = vcombine.high %v1537, %v1537
    %v1542 = vcombine.high %v29, %v29
    %v1544 = vunpack.c.l.s4 1966171168
    %v1545 = vunpack.c.0.s8 %v1544
    %v1546 = vlaneseq
    %v1547 = vshrl.u32 %v1546, 7
    %v1548 = vsub.s32 %v1545, %v1547
    %v1549 = vrot.slane %v29, %v1548
    %v1551 = vunpack.c.l.s4 1966171168
    %v1552 = vunpack.c.0.s8 %v1551
    %v1553 = vlaneseq
    %v1554 = vshrl.u32 %v1553, 7
    %v1555 = vsub.s32 %v1552, %v1554
    %v1556 = vrot.slane %v1542, %v1555
    %v1557 = vcombine.high %v1549, %v1549
    %v1558 = vcombine.high %v1556, %v1556
    %v1560 = vunpack.c.l.s4 1966171168
    %v1561 = vunpack.c.0.s8 %v1560
    %v1562 = vlaneseq
    %v1563 = vshrl.u32 %v1562, 7
    %v1564 = vsub.s32 %v1561, %v1563
    %v1565 = vrot.slane %v1549, %v1564
    %v1567 = vunpack.c.l.s4 1966171168
    %v1568 = vunpack.c.0.s8 %v1567
    %v1569 = vlaneseq
    %v1570 = vshrl.u32 %v1569, 7
    %v1571 = vsub.s32 %v1568, %v1570
    %v1572 = vrot.slane %v1556, %v1571
    %v1574 = vunpack.c.l.s4 1966171168
    %v1575 = vunpack.c.0.s8 %v1574
    %v1576 = vlaneseq
    %v1577 = vshrl.u32 %v1576, 7
    %v1578 = vsub.s32 %v1575, %v1577
    %v1579 = vrot.slane %v1557, %v1578
    %v1581 = vunpack.c.l.s4 1966171168
    %v1582 = vunpack.c.0.s8 %v1581
    %v1583 = vlaneseq
    %v1584 = vshrl.u32 %v1583, 7
    %v1585 = vsub.s32 %v1582, %v1584
    %v1586 = vrot.slane %v1558, %v1585
    %v1587 = vcombine.high %v1565, %v1565
    %v1588 = vcombine.high %v1572, %v1572
    %v1589 = vcombine.high %v1579, %v1579
    %v1590 = vcombine.high %v1586, %v1586
    %v1591 = vcombine.high %v30, %v30
    %v1593 = vunpack.c.l.s4 1966171168
    %v1594 = vunpack.c.0.s8 %v1593
    %v1595 = vlaneseq
    %v1596 = vshrl.u32 %v1595, 7
    %v1597 = vsub.s32 %v1594, %v1596
    %v1598 = vrot.slane %v30, %v1597
    %v1600 = vunpack.c.l.s4 1966171168
    %v1601 = vunpack.c.0.s8 %v1600
    %v1602 = vlaneseq
    %v1603 = vshrl.u32 %v1602, 7
    %v1604 = vsub.s32 %v1601, %v1603
    %v1605 = vrot.slane %v1591, %v1604
    %v1606 = vcombine.high %v1598, %v1598
    %v1607 = vcombine.high %v1605, %v1605
    %v1609 = vunpack.c.l.s4 1966171168
    %v1610 = vunpack.c.0.s8 %v1609
    %v1611 = vlaneseq
    %v1612 = vshrl.u32 %v1611, 7
    %v1613 = vsub.s32 %v1610, %v1612
    %v1614 = vrot.slane %v1598, %v1613
    %v1616 = vunpack.c.l.s4 1966171168
    %v1617 = vunpack.c.0.s8 %v1616
    %v1618 = vlaneseq
    %v1619 = vshrl.u32 %v1618, 7
    %v1620 = vsub.s32 %v1617, %v1619
    %v1621 = vrot.slane %v1605, %v1620
    %v1623 = vunpack.c.l.s4 1966171168
    %v1624 = vunpack.c.0.s8 %v1623
    %v1625 = vlaneseq
    %v1626 = vshrl.u32 %v1625, 7
    %v1627 = vsub.s32 %v1624, %v1626
    %v1628 = vrot.slane %v1606, %v1627
    %v1630 = vunpack.c.l.s4 1966171168
    %v1631 = vunpack.c.0.s8 %v1630
    %v1632 = vlaneseq
    %v1633 = vshrl.u32 %v1632, 7
    %v1634 = vsub.s32 %v1631, %v1633
    %v1635 = vrot.slane %v1607, %v1634
    %v1636 = vcombine.high %v1614, %v1614
    %v1637 = vcombine.high %v1621, %v1621
    %v1638 = vcombine.high %v1628, %v1628
    %v1639 = vcombine.high %v1635, %v1635
    %v2864 = vunpack.c.l.b16 %v31
    %v2865 = vunpack.c.l.b16 %v32
    %v2866 = vunpack.c.l.b16 %v33
    %v2867 = vunpack.c.l.b16 %v34
    %v2868 = vunpack.c.l.b16 %v35
    %v2869 = vunpack.c.l.b16 %v36
    %v2870 = vunpack.c.l.b16 %v37
    %v2871 = vunpack.c.l.b16 %v38
    %v2872 = vunpack.c.l.b16 %v39
    %v2873 = vunpack.c.l.b16 %v40
    %v2874 = vunpack.c.l.b16 %v41
    %v2875 = vunpack.c.l.b16 %v42
    %v2876 = vunpack.c.l.b16 %v43
    %v2877 = vunpack.c.l.b16 %v44
    %v2878 = vunpack.c.l.b16 %v45
    %v2879 = vunpack.c.l.b16 %v46
    %v2880 = vunpack.c.l.b16 %v47
    %v2881 = vunpack.c.l.b16 %v48
    %v2882 = vunpack.c.l.b16 %v49
    %v2883 = vunpack.c.l.b16 %v50
    %v2884 = vunpack.c.l.b16 %v51
    %v2885 = vunpack.c.l.b16 %v52
    %v2886 = vunpack.c.l.b16 %v53
    %v2887 = vunpack.c.l.b16 %v54
    %v2888 = vunpack.c.l.b16 %v55
    %v2889 = vunpack.c.l.b16 %v56
    %v2890 = vunpack.c.l.b16 %v57
    %v2891 = vunpack.c.l.b16 %v58
    %v2892 = vunpack.c.l.b16 %v59
    %v2893 = vunpack.c.l.b16 %v60
    %v2894 = vunpack.c.l.b16 %v61
    %v2895 = vunpack.c.l.b16 %v62
    %v2896 = vunpack.c.l.b16 %v63
    %v2897 = vunpack.c.l.b16 %v64
    %v2898 = vunpack.c.l.b16 %v65
    %v2899 = vunpack.c.l.b16 %v66
    %v2900 = vunpack.c.l.b16 %v67
    %v2901 = vunpack.c.l.b16 %v68
    %v2902 = vunpack.c.l.b16 %v69
    %v2903 = vunpack.c.l.b16 %v70
    %v2904 = vunpack.c.l.b16 %v71
    %v2905 = vunpack.c.l.b16 %v72
    %v2906 = vunpack.c.l.b16 %v73
    %v2907 = vunpack.c.l.b16 %v74
    %v2908 = vunpack.c.l.b16 %v75
    %v2909 = vunpack.c.l.b16 %v76
    %v2910 = vunpack.c.l.b16 %v77
    %v2911 = vunpack.c.l.b16 %v78
    %v2912 = vunpack.c.l.b16 %v79
    %v2913 = vunpack.c.l.b16 %v80
    %v2914 = vunpack.c.l.b16 %v81
    %v2915 = vunpack.c.l.b16 %v82
    %v2916 = vunpack.c.l.b16 %v83
    %v2917 = vunpack.c.l.b16 %v84
    %v2918 = vunpack.c.l.b16 %v85
    %v2919 = vunpack.c.l.b16 %v86
    %v2920 = vunpack.c.l.b16 %v87
    %v2921 = vunpack.c.l.b16 %v88
    %v2922 = vunpack.c.l.b16 %v89
    %v2923 = vunpack.c.l.b16 %v90
    %v2924 = vunpack.c.l.b16 %v91
    %v2925 = vunpack.c.l.b16 %v92
    %v2926 = vunpack.c.l.b16 %v93
    %v2927 = vunpack.c.l.b16 %v94
    %v2928 = vunpack.c.l.b16 %v95
    %v2929 = vunpack.c.l.b16 %v96
    %v2930 = vunpack.c.l.b16 %v97
    %v2931 = vunpack.c.l.b16 %v98
    %v2932 = vunpack.c.l.b16 %v99
    %v2933 = vunpack.c.l.b16 %v100
    %v2934 = vunpack.c.l.b16 %v101
    %v2935 = vunpack.c.l.b16 %v102
    %v2936 = vunpack.c.l.b16 %v103
    %v2937 = vunpack.c.l.b16 %v104
    %v2938 = vunpack.c.l.b16 %v105
    %v2939 = vunpack.c.l.b16 %v106
    %v2940 = vunpack.c.l.b16 %v107
    %v2941 = vunpack.c.l.b16 %v108
    %v2942 = vunpack.c.l.b16 %v109
    %v2943 = vunpack.c.l.b16 %v110
    %v2944 = vunpack.c.l.b16 %v111
    %v2945 = vunpack.c.l.b16 %v112
    %v2946 = vunpack.c.l.b16 %v113
    %v2947 = vunpack.c.l.b16 %v114
    %v2948 = vunpack.c.l.b16 %v115
    %v2949 = vunpack.c.l.b16 %v116
    %v2950 = vunpack.c.l.b16 %v117
    %v2951 = vunpack.c.l.b16 %v118
    %v2952 = vunpack.c.l.b16 %v119
    %v2953 = vunpack.c.l.b16 %v120
    %v2954 = vunpack.c.l.b16 %v121
    %v2955 = vunpack.c.l.b16 %v122
    %v2956 = vunpack.c.l.b16 %v123
    %v2957 = vunpack.c.l.b16 %v124
    %v2958 = vunpack.c.l.b16 %v125
    %v2959 = vunpack.c.l.b16 %v126
    %v2960 = vunpack.c.l.b16 %v127
    %v2961 = vunpack.c.l.b16 %v128
    %v2962 = vunpack.c.l.b16 %v129
    %v2963 = vunpack.c.l.b16 %v130
    %v2964 = vunpack.c.l.b16 %v131
    %v2965 = vunpack.c.l.b16 %v132
    %v2966 = vunpack.c.l.b16 %v133
    %v2967 = vunpack.c.l.b16 %v134
    %v2968 = vunpack.c.l.b16 %v135
    %v2969 = vunpack.c.l.b16 %v136
    %v2970 = vunpack.c.l.b16 %v137
    %v2971 = vunpack.c.l.b16 %v138
    %v2972 = vunpack.c.l.b16 %v139
    %v2973 = vunpack.c.l.b16 %v140
    %v2974 = vunpack.c.l.b16 %v141
    %v2975 = vunpack.c.l.b16 %v142
    %v2976 = vunpack.c.l.b16 %v143
    %v2977 = vunpack.c.l.b16 %v144
    %v2978 = vunpack.c.l.b16 %v145
    %v2979 = vunpack.c.l.b16 %v146
    %v2980 = vunpack.c.l.b16 %v147
    %v2981 = vunpack.c.l.b16 %v148
    %v2982 = vunpack.c.l.b16 %v149
    %v2983 = vunpack.c.l.b16 %v150
    %v2984 = vunpack.c.l.b16 %v151
    %v2985 = vunpack.c.l.b16 %v152
    %v2986 = vunpack.c.l.b16 %v153
    %v2987 = vunpack.c.l.b16 %v154
    %v2988 = vunpack.c.l.b16 %v155
    %v2989 = vunpack.c.l.b16 %v156
    %v2990 = vunpack.c.l.b16 %v157
    %v2991 = vunpack.c.l.b16 %v158
    %v2992 = vunpack.c.l.b16 %v159
    %v2993 = vunpack.c.l.b16 %v160
    %v2994 = vunpack.c.l.b16 %v161
    %v2995 = vunpack.c.l.b16 %v162
    %v2996 = vunpack.c.l.b16 %v163
    %v2997 = vunpack.c.l.b16 %v164
    %v2998 = vunpack.c.l.b16 %v165
    %v2999 = vunpack.c.l.b16 %v166
    %v3000 = vunpack.c.l.b16 %v167
    %v3001 = vunpack.c.l.b16 %v168
    %v3002 = vunpack.c.l.b16 %v169
    %v3003 = vunpack.c.l.b16 %v170
    %v3004 = vunpack.c.l.b16 %v171
    %v3005 = vunpack.c.l.b16 %v172
    %v3006 = vunpack.c.l.b16 %v173
    %v3007 = vunpack.c.l.b16 %v174
    %v3008 = vunpack.c.l.b16 %v175
    %v3009 = vunpack.c.l.b16 %v176
    %v3010 = vunpack.c.l.b16 %v177
    %v3011 = vunpack.c.l.b16 %v178
    %v3012 = vunpack.c.l.b16 %v179
    %v3013 = vunpack.c.l.b16 %v180
    %v3014 = vunpack.c.l.b16 %v181
    %v3015 = vunpack.c.l.b16 %v182
    %v3016 = vunpack.c.l.b16 %v183
    %v3017 = vunpack.c.l.b16 %v184
    %v3018 = vunpack.c.l.b16 %v185
    %v3019 = vunpack.c.l.b16 %v186
    %v3020 = vunpack.c.l.b16 %v187
    %v3021 = vunpack.c.l.b16 %v188
    %v3022 = vunpack.c.l.b16 %v189
    %v3023 = vunpack.c.l.b16 %v190
    %v3024 = vunpack.c.l.b16 %v191
    %v3025 = vunpack.c.l.b16 %v192
    %v3026 = vunpack.c.l.b16 %v193
    %v3027 = vunpack.c.l.b16 %v194
    %v3028 = vunpack.c.l.b16 %v195
    %v3029 = vunpack.c.l.b16 %v196
    %v3030 = vunpack.c.l.b16 %v197
    %v3031 = vunpack.c.l.b16 %v198
    %v3032 = vunpack.c.l.b16 %v199
    %v3033 = vunpack.c.l.b16 %v200
    %v3034 = vunpack.c.l.b16 %v201
    %v3035 = vunpack.c.l.b16 %v202
    %v3036 = vunpack.c.l.b16 %v203
    %v3037 = vunpack.c.l.b16 %v204
    %v3038 = vunpack.c.l.b16 %v205
    %v3039 = vunpack.c.l.b16 %v206
    %v3040 = vunpack.c.l.b16 %v207
    %v3041 = vunpack.c.l.b16 %v208
    %v3042 = vunpack.c.l.b16 %v209
    %v3043 = vunpack.c.l.b16 %v210
    %v3044 = vunpack.c.l.b16 %v211
    %v3045 = vunpack.c.l.b16 %v212
    %v3046 = vunpack.c.l.b16 %v213
    %v3047 = vunpack.c.l.b16 %v214
    %v3048 = vunpack.c.l.b16 %v215
    %v3049 = vunpack.c.l.b16 %v216
    %v3050 = vunpack.c.l.b16 %v217
    %v3051 = vunpack.c.l.b16 %v218
    %v3052 = vunpack.c.l.b16 %v219
    %v3053 = vunpack.c.l.b16 %v220
    %v3054 = vunpack.c.l.b16 %v221
    %v3055 = vunpack.c.l.b16 %v222
    %v3056 = vunpack.c.l.b16 %v223
    %v3057 = vunpack.c.l.b16 %v224
    %v3058 = vunpack.c.l.b16 %v225
    %v3059 = vunpack.c.l.b16 %v226
    %v3060 = vunpack.c.l.b16 %v227
    %v3061 = vunpack.c.l.b16 %v228
    %v3062 = vunpack.c.l.b16 %v229
    %v3063 = vunpack.c.l.b16 %v230
    %v3064 = vunpack.c.l.b16 %v231
    %v3065 = vunpack.c.l.b16 %v232
    %v3066 = vunpack.c.l.b16 %v233
    %v3067 = vunpack.c.l.b16 %v234
    %v3068 = vunpack.c.l.b16 %v235
    %v3069 = vunpack.c.l.b16 %v236
    %v3070 = vunpack.c.l.b16 %v237
    %v3071 = vunpack.c.l.b16 %v238
    %v3072 = vunpack.c.l.b16 %v239
    %v3073 = vunpack.c.l.b16 %v240
    %v3074 = vunpack.c.l.b16 %v241
    %v3075 = vunpack.c.l.b16 %v242
    %v3076 = vunpack.c.l.b16 %v243
    %v3077 = vunpack.c.l.b16 %v244
    %v3078 = vunpack.c.l.b16 %v245
    %v3079 = vunpack.c.l.b16 %v246
    %v3080 = vunpack.c.l.b16 %v247
    %v3081 = vunpack.c.l.b16 %v248
    %v3082 = vunpack.c.l.b16 %v249
    %v3083 = vunpack.c.l.b16 %v250
    %v3084 = vunpack.c.l.b16 %v251
    %v3085 = vunpack.c.l.b16 %v252
    %v3086 = vunpack.c.l.b16 %v253
    %v3087 = vunpack.c.l.b16 %v254
    %v3088 = vunpack.c.l.b16 %v255
    %v3089 = vunpack.c.l.b16 %v256
    %v3090 = vunpack.c.l.b16 %v257
    %v3091 = vunpack.c.l.b16 %v258
    %v3092 = vunpack.c.l.b16 %v259
    %v3093 = vunpack.c.l.b16 %v260
    %v3094 = vunpack.c.l.b16 %v261
    %v3095 = vunpack.c.l.b16 %v262
    %v3096 = vunpack.c.l.b16 %v263
    %v3097 = vunpack.c.l.b16 %v264
    %v3098 = vunpack.c.l.b16 %v265
    %v3099 = vunpack.c.l.b16 %v266
    %v3100 = vunpack.c.l.b16 %v267
    %v3101 = vunpack.c.l.b16 %v268
    %v3102 = vunpack.c.l.b16 %v269
    %v3103 = vunpack.c.l.b16 %v270
    %v3104 = vunpack.c.l.b16 %v271
    %v3105 = vunpack.c.l.b16 %v272
    %v3106 = vunpack.c.l.b16 %v273
    %v3107 = vunpack.c.l.b16 %v274
    %v3108 = vunpack.c.l.b16 %v275
    %v3109 = vunpack.c.l.b16 %v276
    %v3110 = vunpack.c.l.b16 %v277
    %v3111 = vunpack.c.l.b16 %v278
    %v3112 = vunpack.c.l.b16 %v279
    %v3113 = vunpack.c.l.b16 %v280
    %v3114 = vunpack.c.l.b16 %v281
    %v3115 = vunpack.c.l.b16 %v282
    %v3116 = vunpack.c.l.b16 %v283
    %v3117 = vunpack.c.l.b16 %v284
    %v3118 = vunpack.c.l.b16 %v285
    %v3119 = vunpack.c.l.b16 %v286
    %v3120 = vunpack.c.l.b16 %v287
    %v3121 = vunpack.c.l.b16 %v288
    %v3122 = vunpack.c.l.b16 %v289
    %v3123 = vunpack.c.l.b16 %v290
    %v3124 = vunpack.c.l.b16 %v291
    %v3125 = vunpack.c.l.b16 %v292
    %v3126 = vunpack.c.l.b16 %v293
    %v3127 = vunpack.c.l.b16 %v294
    %v3128 = vunpack.c.l.b16 %v295
    %v3129 = vunpack.c.l.b16 %v296
    %v3130 = vunpack.c.l.b16 %v297
    %v3131 = vunpack.c.l.b16 %v298
    %v3132 = vunpack.c.l.b16 %v299
    %v3133 = vunpack.c.l.b16 %v300
    %v3134 = vunpack.c.l.b16 %v301
    %v3135 = vunpack.c.l.b16 %v302
    %v3136 = vunpack.c.l.b16 %v303
    %v3137 = vunpack.c.l.b16 %v304
    %v3138 = vunpack.c.l.b16 %v305
    %v3139 = vunpack.c.l.b16 %v306
    %v3140 = vunpack.c.l.b16 %v307
    %v3141 = vunpack.c.l.b16 %v308
    %v3142 = vunpack.c.l.b16 %v309
    %v3143 = vunpack.c.l.b16 %v310
    %v3144 = vunpack.c.l.b16 %v311
    %v3145 = vunpack.c.l.b16 %v312
    %v3146 = vunpack.c.l.b16 %v313
    %v3147 = vunpack.c.l.b16 %v314
    %v3148 = vunpack.c.l.b16 %v315
    %v3149 = vunpack.c.l.b16 %v316
    %v3150 = vunpack.c.l.b16 %v317
    %v3151 = vunpack.c.l.b16 %v318
    %v3152 = vunpack.c.l.b16 %v319
    %v3153 = vunpack.c.l.b16 %v320
    %v3154 = vunpack.c.l.b16 %v321
    %v3155 = vunpack.c.l.b16 %v322
    %v3156 = vunpack.c.l.b16 %v323
    %v3157 = vunpack.c.l.b16 %v324
    %v3158 = vunpack.c.l.b16 %v325
    %v3159 = vunpack.c.l.b16 %v326
    %v3160 = vunpack.c.l.b16 %v327
    %v3161 = vunpack.c.l.b16 %v328
    %v3162 = vunpack.c.l.b16 %v329
    %v3163 = vunpack.c.l.b16 %v330
    %v3164 = vunpack.c.l.b16 %v331
    %v3165 = vunpack.c.l.b16 %v332
    %v3166 = vunpack.c.l.b16 %v333
    %v3167 = vunpack.c.l.b16 %v334
    %v3168 = vunpack.c.l.b16 %v335
    %v3169 = vunpack.c.l.b16 %v336
    %v3170 = vunpack.c.l.b16 %v337
    %v3171 = vunpack.c.l.b16 %v338
    %v3172 = vunpack.c.l.b16 %v339
    %v3173 = vunpack.c.l.b16 %v340
    %v3174 = vunpack.c.l.b16 %v341
    %v3175 = vunpack.c.l.b16 %v342
    %v3176 = vunpack.c.l.b16 %v343
    %v3177 = vunpack.c.l.b16 %v344
    %v3178 = vunpack.c.l.b16 %v345
    %v3179 = vunpack.c.l.b16 %v346
    %v3180 = vunpack.c.l.b16 %v347
    %v3181 = vunpack.c.l.b16 %v348
    %v3182 = vunpack.c.l.b16 %v349
    %v3183 = vunpack.c.l.b16 %v350
    %v3184 = vunpack.c.l.b16 %v351
    %v3185 = vunpack.c.l.b16 %v352
    %v3186 = vunpack.c.l.b16 %v353
    %v3187 = vunpack.c.l.b16 %v354
    %v3188 = vunpack.c.l.b16 %v355
    %v3189 = vunpack.c.l.b16 %v356
    %v3190 = vunpack.c.l.b16 %v357
    %v3191 = vunpack.c.l.b16 %v358
    %v3192 = vunpack.c.l.b16 %v359
    %v3193 = vunpack.c.l.b16 %v360
    %v3194 = vunpack.c.l.b16 %v361
    %v3195 = vunpack.c.l.b16 %v362
    %v3196 = vunpack.c.l.b16 %v363
    %v3197 = vunpack.c.l.b16 %v364
    %v3198 = vunpack.c.l.b16 %v365
    %v3199 = vunpack.c.l.b16 %v366
    %v3200 = vunpack.c.l.b16 %v367
    %v3201 = vunpack.c.l.b16 %v368
    %v3202 = vunpack.c.l.b16 %v369
    %v3203 = vunpack.c.l.b16 %v370
    %v3204 = vunpack.c.l.b16 %v371
    %v3205 = vunpack.c.l.b16 %v372
    %v3206 = vunpack.c.l.b16 %v373
    %v3207 = vunpack.c.l.b16 %v374
    %v3208 = vunpack.c.l.b16 %v375
    %v3209 = vunpack.c.l.b16 %v376
    %v3210 = vunpack.c.l.b16 %v377
    %v3211 = vunpack.c.l.b16 %v378
    %v3212 = vunpack.c.l.b16 %v379
    %v3213 = vunpack.c.l.b16 %v380
    %v3214 = vunpack.c.l.b16 %v381
    %v3215 = vunpack.c.l.b16 %v382
    %v3216 = vunpack.c.l.b16 %v383
    %v3217 = vunpack.c.l.b16 %v384
    %v3218 = vunpack.c.l.b16 %v385
    %v3219 = vunpack.c.l.b16 %v386
    %v3220 = vunpack.c.l.b16 %v387
    %v3221 = vunpack.c.l.b16 %v388
    %v3222 = vunpack.c.l.b16 %v389
    %v3223 = vunpack.c.l.b16 %v390
    %v3224 = vunpack.c.l.b16 %v391
    %v3225 = vunpack.c.l.b16 %v392
    %v3226 = vunpack.c.l.b16 %v393
    %v3227 = vunpack.c.l.b16 %v394
    %v3228 = vunpack.c.l.b16 %v395
    %v3229 = vunpack.c.l.b16 %v396
    %v3230 = vunpack.c.l.b16 %v397
    %v3231 = vunpack.c.l.b16 %v398
    %v3232 = vunpack.c.l.b16 %v399
    %v3233 = vunpack.c.l.b16 %v400
    %v3234 = vunpack.c.l.b16 %v401
    %v3235 = vunpack.c.l.b16 %v402
    %v3236 = vunpack.c.l.b16 %v403
    %v3237 = vunpack.c.l.b16 %v404
    %v3238 = vunpack.c.l.b16 %v405
    %v3239 = vunpack.c.l.b16 %v406
    %v3240 = vunpack.c.l.b16 %v407
    %v3241 = vunpack.c.l.b16 %v408
    %v3242 = vunpack.c.l.b16 %v409
    %v3243 = vunpack.c.l.b16 %v410
    %v3244 = vunpack.c.l.b16 %v411
    %v3245 = vunpack.c.l.b16 %v412
    %v3246 = vunpack.c.l.b16 %v413
    %v3247 = vunpack.c.l.b16 %v414
    %v3248 = vunpack.c.l.b16 %v415
    %v3249 = vunpack.c.l.b16 %v416
    %v3250 = vunpack.c.l.b16 %v417
    %v3251 = vunpack.c.l.b16 %v418
    %v3252 = vunpack.c.l.b16 %v419
    %v3253 = vunpack.c.l.b16 %v420
    %v3254 = vunpack.c.l.b16 %v421
    %v3255 = vunpack.c.l.b16 %v422
    %v3256 = vunpack.c.l.b16 %v423
    %v3257 = vunpack.c.l.b16 %v424
    %v3258 = vunpack.c.l.b16 %v425
    %v3259 = vunpack.c.l.b16 %v426
    %v3260 = vunpack.c.l.b16 %v427
    %v3261 = vunpack.c.l.b16 %v428
    %v3262 = vunpack.c.l.b16 %v429
    %v3263 = vunpack.c.l.b16 %v430
    %v3264 = vunpack.c.l.b16 %v431
    %v3265 = vunpack.c.l.b16 %v432
    %v3266 = vunpack.c.l.b16 %v433
    %v3267 = vunpack.c.l.b16 %v434
    %v3268 = vunpack.c.l.b16 %v435
    %v3269 = vunpack.c.l.b16 %v436
    %v3270 = vunpack.c.l.b16 %v437
    %v3271 = vunpack.c.l.b16 %v438
    %v3272 = vunpack.c.l.b16 %v439
    %v3273 = vunpack.c.l.b16 %v440
    %v3274 = vunpack.c.l.b16 %v441
    %v3275 = vunpack.c.l.b16 %v442
    %v3276 = vunpack.c.l.b16 %v443
    %v3277 = vunpack.c.l.b16 %v444
    %v3278 = vunpack.c.l.b16 %v445
    %v3279 = vunpack.c.l.b16 %v446
    %v3280 = vunpack.c.l.b16 %v447
    %v3281 = vunpack.c.l.b16 %v448
    %v3282 = vunpack.c.l.b16 %v449
    %v3283 = vunpack.c.l.b16 %v450
    %v3284 = vunpack.c.l.b16 %v451
    %v3285 = vunpack.c.l.b16 %v452
    %v3286 = vunpack.c.l.b16 %v453
    %v3287 = vunpack.c.l.b16 %v454
    %v3288 = vunpack.c.l.b16 %v455
    %v3289 = vunpack.c.l.b16 %v456
    %v3290 = vunpack.c.l.b16 %v457
    %v3291 = vunpack.c.l.b16 %v458
    %v3292 = vunpack.c.l.b16 %v459
    %v3293 = vunpack.c.l.b16 %v460
    %v3294 = vunpack.c.l.b16 %v461
    %v3295 = vunpack.c.l.b16 %v462
    %v3296 = vunpack.c.l.b16 %v463
    %v3297 = vunpack.c.l.b16 %v464
    %v3298 = vunpack.c.l.b16 %v465
    %v3299 = vunpack.c.l.b16 %v466
    %v3300 = vunpack.c.l.b16 %v467
    %v3301 = vunpack.c.l.b16 %v468
    %v3302 = vunpack.c.l.b16 %v469
    %v3303 = vunpack.c.l.b16 %v470
    %v3304 = vunpack.c.l.b16 %v471
    %v3305 = vunpack.c.l.b16 %v472
    %v3306 = vunpack.c.l.b16 %v473
    %v3307 = vunpack.c.l.b16 %v474
    %v3308 = vunpack.c.l.b16 %v475
    %v3309 = vunpack.c.l.b16 %v476
    %v3310 = vunpack.c.l.b16 %v477
    %v3311 = vunpack.c.l.b16 %v478
    %v3312 = vunpack.c.l.b16 %v479
    %v3313 = vunpack.c.l.b16 %v480
    %v3314 = vunpack.c.l.b16 %v481
    %v3315 = vunpack.c.l.b16 %v482
    %v3316 = vunpack.c.l.b16 %v483
    %v3317 = vunpack.c.l.b16 %v484
    %v3318 = vunpack.c.l.b16 %v485
    %v3319 = vunpack.c.l.b16 %v486
    %v3320 = vunpack.c.l.b16 %v487
    %v3321 = vunpack.c.l.b16 %v488
    %v3322 = vunpack.c.l.b16 %v489
    %v3323 = vunpack.c.l.b16 %v490
    %v3324 = vunpack.c.l.b16 %v491
    %v3325 = vunpack.c.l.b16 %v492
    %v3326 = vunpack.c.l.b16 %v493
    %v3327 = vunpack.c.l.b16 %v494
    %v3328 = vunpack.c.l.b16 %v495
    %v3329 = vunpack.c.l.b16 %v496
    %v3330 = vunpack.c.l.b16 %v497
    %v3331 = vunpack.c.l.b16 %v498
    %v3332 = vunpack.c.l.b16 %v499
    %v3333 = vunpack.c.l.b16 %v500
    %v3334 = vunpack.c.l.b16 %v501
    %v3335 = vunpack.c.l.b16 %v502
    %v3336 = vunpack.c.l.b16 %v503
    %v3337 = vunpack.c.l.b16 %v504
    %v3338 = vunpack.c.l.b16 %v505
    %v3339 = vunpack.c.l.b16 %v506
    %v3340 = vunpack.c.l.b16 %v507
    %v3341 = vunpack.c.l.b16 %v508
    %v3342 = vunpack.c.l.b16 %v509
    %v3343 = vunpack.c.l.b16 %v510
    %v3344 = vunpack.c.l.b16 %v511
    %v3345 = vunpack.c.l.b16 %v512
    %v3346 = vunpack.c.l.b16 %v513
    %v3347 = vunpack.c.l.b16 %v514
    %v3348 = vunpack.c.l.b16 %v515
    %v3349 = vunpack.c.l.b16 %v516
    %v3350 = vunpack.c.l.b16 %v517
    %v3351 = vunpack.c.l.b16 %v518
    %v3352 = vunpack.c.l.b16 %v519
    %v3353 = vunpack.c.l.b16 %v520
    %v3354 = vunpack.c.l.b16 %v521
    %v3355 = vunpack.c.l.b16 %v522
    %v3356 = vunpack.c.l.b16 %v523
    %v3357 = vunpack.c.l.b16 %v524
    %v3358 = vunpack.c.l.b16 %v525
    %v3359 = vunpack.c.l.b16 %v526
    %v3360 = vunpack.c.l.b16 %v527
    %v3361 = vunpack.c.l.b16 %v528
    %v3362 = vunpack.c.l.b16 %v529
    %v3363 = vunpack.c.l.b16 %v530
    %v3364 = vunpack.c.l.b16 %v531
    %v3365 = vunpack.c.l.b16 %v532
    %v3366 = vunpack.c.l.b16 %v533
    %v3367 = vunpack.c.l.b16 %v534
    %v3368 = vunpack.c.l.b16 %v535
    %v3369 = vunpack.c.l.b16 %v536
    %v3370 = vunpack.c.l.b16 %v537
    %v3371 = vunpack.c.l.b16 %v538
    %v3372 = vunpack.c.l.b16 %v539
    %v3373 = vunpack.c.l.b16 %v540
    %v3374 = vunpack.c.l.b16 %v541
    %v3375 = vunpack.c.l.b16 %v542
    %v3376 = vunpack.c.l.b16 %v543
    %v3377 = vunpack.c.l.b16 %v544
    %v3378 = vunpack.c.l.b16 %v545
    %v3379 = vunpack.c.l.b16 %v546
    %v3380 = vunpack.c.l.b16 %v547
    %v3381 = vunpack.c.l.b16 %v548
    %v3382 = vunpack.c.l.b16 %v549
    %v3383 = vunpack.c.l.b16 %v550
    %v3384 = vunpack.c.l.b16 %v551
    %v3385 = vunpack.c.l.b16 %v552
    %v3386 = vunpack.c.l.b16 %v553
    %v3387 = vunpack.c.l.b16 %v554
    %v3388 = vunpack.c.l.b16 %v555
    %v3389 = vunpack.c.l.b16 %v556
    %v3390 = vunpack.c.l.b16 %v557
    %v3391 = vunpack.c.l.b16 %v558
    %v3392 = vunpack.c.l.b16 %v559
    %v3393 = vunpack.c.l.b16 %v560
    %v3394 = vunpack.c.l.b16 %v561
    %v3395 = vunpack.c.l.b16 %v562
    %v3396 = vunpack.c.l.b16 %v563
    %v3397 = vunpack.c.l.b16 %v564
    %v3398 = vunpack.c.l.b16 %v565
    %v3399 = vunpack.c.l.b16 %v566
    %v3400 = vunpack.c.l.b16 %v567
    %v3401 = vunpack.c.l.b16 %v568
    %v3402 = vunpack.c.l.b16 %v569
    %v3403 = vunpack.c.l.b16 %v570
    %v3404 = vunpack.c.l.b16 %v571
    %v3405 = vunpack.c.l.b16 %v572
    %v3406 = vunpack.c.l.b16 %v573
    %v3407 = vunpack.c.l.b16 %v574
    %v3408 = vunpack.c.l.b16 %v575
    %v3409 = vunpack.c.l.b16 %v576
    %v3410 = vunpack.c.l.b16 %v577
    %v3411 = vunpack.c.l.b16 %v578
    %v3412 = vunpack.c.l.b16 %v579
    %v3413 = vunpack.c.l.b16 %v580
    %v3414 = vunpack.c.l.b16 %v581
    %v3415 = vunpack.c.l.b16 %v582
    %v3416 = vunpack.c.l.b16 %v583
    %v3417 = vunpack.c.l.b16 %v584
    %v3418 = vunpack.c.l.b16 %v585
    %v3419 = vunpack.c.l.b16 %v586
    %v3420 = vunpack.c.l.b16 %v587
    %v3421 = vunpack.c.l.b16 %v588
    %v3422 = vunpack.c.l.b16 %v589
    %v3423 = vunpack.c.l.b16 %v590
    %v3424 = vunpack.c.l.b16 %v591
    %v3425 = vunpack.c.l.b16 %v592
    %v3426 = vunpack.c.l.b16 %v593
    %v3427 = vunpack.c.l.b16 %v594
    %v3428 = vunpack.c.l.b16 %v595
    %v3429 = vunpack.c.l.b16 %v596
    %v3430 = vunpack.c.l.b16 %v597
    %v3431 = vunpack.c.l.b16 %v598
    %v3432 = vunpack.c.l.b16 %v599
    %v3433 = vunpack.c.l.b16 %v600
    %v3434 = vunpack.c.l.b16 %v601
    %v3435 = vunpack.c.l.b16 %v602
    %v3436 = vunpack.c.l.b16 %v603
    %v3437 = vunpack.c.l.b16 %v604
    %v3438 = vunpack.c.l.b16 %v605
    %v3439 = vunpack.c.l.b16 %v606
    %v3440 = vunpack.c.l.b16 %v607
    %v3441 = vunpack.c.l.b16 %v608
    %v3442 = vunpack.c.l.b16 %v609
    %v3443 = vunpack.c.l.b16 %v610
    %v3444 = vunpack.c.l.b16 %v611
    %v3445 = vunpack.c.l.b16 %v612
    %v3446 = vunpack.c.l.b16 %v613
    %v3447 = vunpack.c.l.b16 %v614
    %v3448 = vunpack.c.l.b16 %v615
    %v3449 = vunpack.c.l.b16 %v616
    %v3450 = vunpack.c.l.b16 %v617
    %v3451 = vunpack.c.l.b16 %v618
    %v3452 = vunpack.c.l.b16 %v619
    %v3453 = vunpack.c.l.b16 %v620
    %v3454 = vunpack.c.l.b16 %v621
    %v3455 = vunpack.c.l.b16 %v622
    %v3456 = vunpack.c.l.b16 %v623
    %v3457 = vunpack.c.l.b16 %v624
    %v3458 = vunpack.c.l.b16 %v625
    %v3459 = vunpack.c.l.b16 %v626
    %v3460 = vunpack.c.l.b16 %v627
    %v3461 = vunpack.c.l.b16 %v628
    %v3462 = vunpack.c.l.b16 %v629
    %v3463 = vunpack.c.l.b16 %v630
    %v3464 = vunpack.c.l.b16 %v631
    %v3465 = vunpack.c.l.b16 %v632
    %v3466 = vunpack.c.l.b16 %v633
    %v3467 = vunpack.c.l.b16 %v634
    %v3468 = vunpack.c.l.b16 %v635
    %v3469 = vunpack.c.l.b16 %v636
    %v3470 = vunpack.c.l.b16 %v637
    %v3471 = vunpack.c.l.b16 %v638
    %v3472 = vunpack.c.l.b16 %v639
    %v3473 = vunpack.c.l.b16 %v640
    %v3474 = vunpack.c.l.b16 %v641
    %v3475 = vunpack.c.l.b16 %v642
    %v3476 = vunpack.c.l.b16 %v643
    %v3477 = vunpack.c.l.b16 %v644
    %v3478 = vunpack.c.l.b16 %v645
    %v3479 = vunpack.c.l.b16 %v646
    %v3480 = vunpack.c.l.b16 %v647
    %v3481 = vunpack.c.l.b16 %v648
    %v3482 = vunpack.c.l.b16 %v649
    %v3483 = vunpack.c.l.b16 %v650
    %v3484 = vunpack.c.l.b16 %v651
    %v3485 = vunpack.c.l.b16 %v652
    %v3486 = vunpack.c.l.b16 %v653
    %v3487 = vunpack.c.l.b16 %v654
    %v3488 = vunpack.c.l.b16 %v655
    %v3489 = vunpack.c.l.b16 %v656
    %v3490 = vunpack.c.l.b16 %v657
    %v3491 = vunpack.c.l.b16 %v658
    %v3492 = vunpack.c.l.b16 %v659
    %v3493 = vunpack.c.l.b16 %v660
    %v3494 = vunpack.c.l.b16 %v661
    %v3495 = vunpack.c.l.b16 %v662
    %v3496 = vunpack.c.l.b16 %v663
    %v3497 = vunpack.c.l.b16 %v664
    %v3498 = vunpack.c.l.b16 %v665
    %v3499 = vunpack.c.l.b16 %v666
    %v3500 = vunpack.c.l.b16 %v667
    %v3501 = vunpack.c.l.b16 %v668
    %v3502 = vunpack.c.l.b16 %v669
    %v3503 = vunpack.c.l.b16 %v670
    %v3504 = vunpack.c.l.b16 %v671
    %v3505 = vunpack.c.l.b16 %v672
    %v3506 = vunpack.c.l.b16 %v673
    %v3507 = vunpack.c.l.b16 %v674
    %v3508 = vunpack.c.l.b16 %v675
    %v3509 = vunpack.c.l.b16 %v676
    %v3510 = vunpack.c.l.b16 %v677
    %v3511 = vunpack.c.l.b16 %v678
    %v3512 = vunpack.c.l.b16 %v679
    %v3513 = vunpack.c.l.b16 %v680
    %v3514 = vunpack.c.l.b16 %v681
    %v3515 = vunpack.c.l.b16 %v682
    %v3516 = vunpack.c.l.b16 %v683
    %v3517 = vunpack.c.l.b16 %v684
    %v3518 = vunpack.c.l.b16 %v685
    %v3519 = vunpack.c.l.b16 %v686
    %v3520 = vunpack.c.l.b16 %v687
    %v3521 = vunpack.c.l.b16 %v688
    %v3522 = vunpack.c.l.b16 %v689
    %v3523 = vunpack.c.l.b16 %v690
    %v3524 = vunpack.c.l.b16 %v691
    %v3525 = vunpack.c.l.b16 %v692
    %v3526 = vunpack.c.l.b16 %v693
    %v3527 = vunpack.c.l.b16 %v694
    %v3528 = vunpack.c.l.b16 %v695
    %v3529 = vunpack.c.l.b16 %v696
    %v3530 = vunpack.c.l.b16 %v697
    %v3531 = vunpack.c.l.b16 %v698
    %v3532 = vunpack.c.l.b16 %v699
    %v3533 = vunpack.c.l.b16 %v700
    %v3534 = vunpack.c.l.b16 %v701
    %v3535 = vunpack.c.l.b16 %v702
    %v3536 = vunpack.c.l.b16 %v703
    %v3537 = vunpack.c.l.b16 %v704
    %v3538 = vunpack.c.l.b16 %v705
    %v3539 = vunpack.c.l.b16 %v706
    %v3540 = vunpack.c.l.b16 %v707
    %v3541 = vunpack.c.l.b16 %v708
    %v3542 = vunpack.c.l.b16 %v709
    %v3543 = vunpack.c.l.b16 %v710
    %v3544 = vunpack.c.l.b16 %v711
    %v3545 = vunpack.c.l.b16 %v712
    %v3546 = vunpack.c.l.b16 %v713
    %v3547 = vunpack.c.l.b16 %v714
    %v3548 = vunpack.c.l.b16 %v715
    %v3549 = vunpack.c.l.b16 %v716
    %v3550 = vunpack.c.l.b16 %v717
    %v3551 = vunpack.c.l.b16 %v718
    %v3552 = vunpack.c.l.b16 %v719
    %v3553 = vunpack.c.l.b16 %v720
    %v3554 = vunpack.c.l.b16 %v721
    %v3555 = vunpack.c.l.b16 %v722
    %v3556 = vunpack.c.l.b16 %v723
    %v3557 = vunpack.c.l.b16 %v724
    %v3558 = vunpack.c.l.b16 %v725
    %v3559 = vunpack.c.l.b16 %v726
    %v3560 = vunpack.c.l.b16 %v727
    %v3561 = vunpack.c.l.b16 %v728
    %v3562 = vunpack.c.l.b16 %v729
    %v3563 = vunpack.c.l.b16 %v730
    %v3564 = vunpack.c.l.b16 %v731
    %v3565 = vunpack.c.l.b16 %v732
    %v3566 = vunpack.c.l.b16 %v733
    %v3567 = vunpack.c.l.b16 %v734
    %v3568 = vunpack.c.l.b16 %v735
    %v3569 = vunpack.c.l.b16 %v736
    %v3570 = vunpack.c.l.b16 %v737
    %v3571 = vunpack.c.l.b16 %v738
    %v3572 = vunpack.c.l.b16 %v739
    %v3573 = vunpack.c.l.b16 %v740
    %v3574 = vunpack.c.l.b16 %v741
    %v3575 = vunpack.c.l.b16 %v742
    %v3576 = vunpack.c.l.b16 %v743
    %v3577 = vunpack.c.l.b16 %v744
    %v3578 = vunpack.c.l.b16 %v745
    %v3579 = vunpack.c.l.b16 %v746
    %v3580 = vunpack.c.l.b16 %v747
    %v3581 = vunpack.c.l.b16 %v748
    %v3582 = vunpack.c.l.b16 %v749
    %v3583 = vunpack.c.l.b16 %v750
    %v3584 = vunpack.c.l.b16 %v751
    %v3585 = vunpack.c.l.b16 %v752
    %v3586 = vunpack.c.l.b16 %v753
    %v3587 = vunpack.c.l.b16 %v754
    %v3588 = vunpack.c.l.b16 %v755
    %v3589 = vunpack.c.l.b16 %v756
    %v3590 = vunpack.c.l.b16 %v757
    %v3591 = vunpack.c.l.b16 %v758
    %v3592 = vunpack.c.l.b16 %v759
    %v3593 = vunpack.c.l.b16 %v760
    %v3594 = vunpack.c.l.b16 %v761
    %v3595 = vunpack.c.l.b16 %v762
    %v3596 = vunpack.c.l.b16 %v763
    %v3597 = vunpack.c.l.b16 %v764
    %v3598 = vunpack.c.l.b16 %v765
    %v3599 = vunpack.c.l.b16 %v766
    %v3600 = vunpack.c.l.b16 %v767
    %v3601 = vunpack.c.l.b16 %v768
    %v3602 = vunpack.c.l.b16 %v769
    %v3603 = vunpack.c.l.b16 %v770
    %v3604 = vunpack.c.l.b16 %v771
    %v3605 = vunpack.c.l.b16 %v772
    %v3606 = vunpack.c.l.b16 %v773
    %v3607 = vunpack.c.l.b16 %v774
    %v3608 = vunpack.c.l.b16 %v775
    %v3609 = vunpack.c.l.b16 %v776
    %v3610 = vunpack.c.l.b16 %v777
    %v3611 = vunpack.c.l.b16 %v778
    %v3612 = vunpack.c.l.b16 %v779
    %v3613 = vunpack.c.l.b16 %v780
    %v3614 = vunpack.c.l.b16 %v781
    %v3615 = vunpack.c.l.b16 %v782
    %v3616 = vunpack.c.l.b16 %v783
    %v3617 = vunpack.c.l.b16 %v784
    %v3618 = vunpack.c.l.b16 %v785
    %v3619 = vunpack.c.l.b16 %v786
    %v3620 = vunpack.c.l.b16 %v787
    %v3621 = vunpack.c.l.b16 %v788
    %v3622 = vunpack.c.l.b16 %v789
    %v3623 = vunpack.c.l.b16 %v790
    %v3624 = vunpack.c.l.b16 %v791
    %v3625 = vunpack.c.l.b16 %v792
    %v3626 = vunpack.c.l.b16 %v793
    %v3627 = vunpack.c.l.b16 %v794
    %v3628 = vunpack.c.l.b16 %v795
    %v3629 = vunpack.c.l.b16 %v796
    %v3630 = vunpack.c.l.b16 %v797
    %v3631 = vunpack.c.l.b16 %v798
    %v3632 = vunpack.c.l.b16 %v799
    %v3633 = vunpack.c.l.b16 %v800
    %v3634 = vunpack.c.l.b16 %v801
    %v3635 = vunpack.c.l.b16 %v802
    %v3636 = vunpack.c.l.b16 %v803
    %v3637 = vunpack.c.l.b16 %v804
    %v3638 = vunpack.c.l.b16 %v805
    %v3639 = vunpack.c.l.b16 %v806
    %v3640 = vunpack.c.l.b16 %v807
    %v3641 = vunpack.c.l.b16 %v808
    %v3642 = vunpack.c.l.b16 %v809
    %v3643 = vunpack.c.l.b16 %v810
    %v3644 = vunpack.c.l.b16 %v811
    %v3645 = vunpack.c.l.b16 %v812
    %v3646 = vunpack.c.l.b16 %v813
    %v3647 = vunpack.c.l.b16 %v814
    %v3648 = vunpack.c.l.b16 %v815
    %v3649 = vunpack.c.l.b16 %v816
    %v3650 = vunpack.c.l.b16 %v817
    %v3651 = vunpack.c.l.b16 %v818
    %v3652 = vunpack.c.l.b16 %v819
    %v3653 = vunpack.c.l.b16 %v820
    %v3654 = vunpack.c.l.b16 %v821
    %v3655 = vunpack.c.l.b16 %v822
    %v3656 = vunpack.c.l.b16 %v823
    %v3657 = vunpack.c.l.b16 %v824
    %v3658 = vunpack.c.l.b16 %v825
    %v3659 = vunpack.c.l.b16 %v826
    %v3660 = vunpack.c.l.b16 %v827
    %v3661 = vunpack.c.l.b16 %v828
    %v3662 = vunpack.c.l.b16 %v829
    %v3663 = vunpack.c.l.b16 %v830
    %v3664 = vunpack.c.l.b16 %v831
    %v3665 = vunpack.c.l.b16 %v832
    %v3666 = vunpack.c.l.b16 %v833
    %v3667 = vunpack.c.l.b16 %v834
    %v3668 = vunpack.c.l.b16 %v835
    %v3669 = vunpack.c.l.b16 %v836
    %v3670 = vunpack.c.l.b16 %v837
    %v3671 = vunpack.c.l.b16 %v838
    %v3672 = vunpack.c.l.b16 %v839
    %v3673 = vunpack.c.l.b16 %v840
    %v3674 = vunpack.c.l.b16 %v841
    %v3675 = vunpack.c.l.b16 %v842
    %v3676 = vunpack.c.l.b16 %v843
    %v3677 = vunpack.c.l.b16 %v844
    %v3678 = vunpack.c.l.b16 %v845
    %v3679 = vunpack.c.l.b16 %v846
    %v3680 = vunpack.c.l.b16 %v847
    %v3681 = vunpack.c.l.b16 %v848
    %v3682 = vunpack.c.l.b16 %v849
    %v3683 = vunpack.c.l.b16 %v850
    %v3684 = vunpack.c.l.b16 %v851
    %v3685 = vunpack.c.l.b16 %v852
    %v3686 = vunpack.c.l.b16 %v853
    %v3687 = vunpack.c.l.b16 %v854
    %v3688 = vunpack.c.l.b16 %v855
    %v3689 = vunpack.c.l.b16 %v856
    %v3690 = vunpack.c.l.b16 %v857
    %v3691 = vunpack.c.l.b16 %v858
    %v3692 = vunpack.c.l.b16 %v859
    %v3693 = vunpack.c.l.b16 %v860
    %v3694 = vunpack.c.l.b16 %v861
    %v3695 = vunpack.c.l.b16 %v862
    %v3696 = vunpack.c.l.b16 %v863
    %v3697 = vunpack.c.l.b16 %v864
    %v3698 = vunpack.c.l.b16 %v865
    %v3699 = vunpack.c.l.b16 %v866
    %v3700 = vunpack.c.l.b16 %v867
    %v3701 = vunpack.c.l.b16 %v868
    %v3702 = vunpack.c.l.b16 %v869
    %v3703 = vunpack.c.l.b16 %v870
    %v3704 = vunpack.c.l.b16 %v871
    %v3705 = vunpack.c.l.b16 %v872
    %v3706 = vunpack.c.l.b16 %v873
    %v3707 = vunpack.c.l.b16 %v874
    %v3708 = vunpack.c.l.b16 %v875
    %v3709 = vunpack.c.l.b16 %v876
    %v3710 = vunpack.c.l.b16 %v877
    %v3711 = vunpack.c.l.b16 %v878
    %v3712 = vunpack.c.l.b16 %v879
    %v3713 = vunpack.c.l.b16 %v880
    %v3714 = vunpack.c.l.b16 %v881
    %v3715 = vunpack.c.l.b16 %v882
    %v3716 = vunpack.c.l.b16 %v883
    %v3717 = vunpack.c.l.b16 %v884
    %v3718 = vunpack.c.l.b16 %v885
    %v3719 = vunpack.c.l.b16 %v886
    %v3720 = vunpack.c.l.b16 %v887
    %v3721 = vunpack.c.l.b16 %v888
    %v3722 = vunpack.c.l.b16 %v889
    %v3723 = vunpack.c.l.b16 %v890
    %v3724 = vunpack.c.l.b16 %v891
    %v3725 = vunpack.c.l.b16 %v892
    %v3726 = vunpack.c.l.b16 %v893
    %v3727 = vunpack.c.l.b16 %v894
    %v3728 = vunpack.c.l.b16 %v895
    %v3729 = vunpack.c.l.b16 %v896
    %v3730 = vunpack.c.l.b16 %v897
    %v3731 = vunpack.c.l.b16 %v898
    %v3732 = vunpack.c.l.b16 %v899
    %v3733 = vunpack.c.l.b16 %v900
    %v3734 = vunpack.c.l.b16 %v901
    %v3735 = vunpack.c.l.b16 %v902
    %v3736 = vunpack.c.l.b16 %v903
    %v3737 = vunpack.c.l.b16 %v904
    %v3738 = vunpack.c.l.b16 %v905
    %v3739 = vunpack.c.l.b16 %v906
    %v3740 = vunpack.c.l.b16 %v907
    %v3741 = vunpack.c.l.b16 %v908
    %v3742 = vunpack.c.l.b16 %v909
    %v3743 = vunpack.c.l.b16 %v910
    %v3744 = vunpack.c.l.b16 %v911
    %v3745 = vunpack.c.l.b16 %v912
    %v3746 = vunpack.c.l.b16 %v913
    %v3747 = vunpack.c.l.b16 %v914
    %v3748 = vunpack.c.l.b16 %v915
    %v3749 = vunpack.c.l.b16 %v916
    %v3750 = vunpack.c.l.b16 %v917
    %v3751 = vunpack.c.l.b16 %v918
    %v3752 = vunpack.c.l.b16 %v919
    %v3753 = vunpack.c.l.b16 %v920
    %v3754 = vunpack.c.l.b16 %v921
    %v3755 = vunpack.c.l.b16 %v922
    %v3756 = vunpack.c.l.b16 %v923
    %v3757 = vunpack.c.l.b16 %v924
    %v3758 = vunpack.c.l.b16 %v925
    %v3759 = vunpack.c.l.b16 %v926
    %v3760 = vunpack.c.l.b16 %v927
    %v3761 = vunpack.c.l.b16 %v928
    %v3762 = vunpack.c.l.b16 %v929
    %v3763 = vunpack.c.l.b16 %v930
    %v3764 = vunpack.c.l.b16 %v931
    %v3765 = vunpack.c.l.b16 %v932
    %v3766 = vunpack.c.l.b16 %v933
    %v3767 = vunpack.c.l.b16 %v934
    %v3768 = vunpack.c.l.b16 %v935
    %v3769 = vunpack.c.l.b16 %v936
    %v3770 = vunpack.c.l.b16 %v937
    %v3771 = vunpack.c.l.b16 %v938
    %v3772 = vunpack.c.l.b16 %v939
    %v3773 = vunpack.c.l.b16 %v940
    %v3774 = vunpack.c.l.b16 %v941
    %v3775 = vunpack.c.l.b16 %v942
    %v3776 = vunpack.c.l.b16 %v943
    %v3777 = vunpack.c.l.b16 %v944
    %v3778 = vunpack.c.l.b16 %v945
    %v3779 = vunpack.c.l.b16 %v946
    %v3780 = vunpack.c.l.b16 %v947
    %v3781 = vunpack.c.l.b16 %v948
    %v3782 = vunpack.c.l.b16 %v949
    %v3783 = vunpack.c.l.b16 %v950
    %v3784 = vunpack.c.l.b16 %v951
    %v3785 = vunpack.c.l.b16 %v952
    %v3786 = vunpack.c.l.b16 %v953
    %v3787 = vunpack.c.l.b16 %v954
    %v3788 = vunpack.c.l.b16 %v955
    %v3789 = vunpack.c.l.b16 %v956
    %v3790 = vunpack.c.l.b16 %v957
    %v3791 = vunpack.c.l.b16 %v958
    %v3792 = vunpack.c.l.b16 %v959
    %v3793 = vunpack.c.l.b16 %v960
    %v3794 = vunpack.c.l.b16 %v961
    %v3795 = vunpack.c.l.b16 %v962
    %v3796 = vunpack.c.l.b16 %v963
    %v3797 = vunpack.c.l.b16 %v964
    %v3798 = vunpack.c.l.b16 %v965
    %v3799 = vunpack.c.l.b16 %v966
    %v3800 = vunpack.c.l.b16 %v967
    %v3801 = vunpack.c.l.b16 %v968
    %v3802 = vunpack.c.l.b16 %v969
    %v3803 = vunpack.c.l.b16 %v970
    %v3804 = vunpack.c.l.b16 %v971
    %v3805 = vunpack.c.l.b16 %v972
    %v3806 = vunpack.c.l.b16 %v973
    %v3807 = vunpack.c.l.b16 %v974
    %v3808 = vunpack.c.l.b16 %v975
    %v3809 = vunpack.c.l.b16 %v976
    %v3810 = vunpack.c.l.b16 %v977
    %v3811 = vunpack.c.l.b16 %v978
    %v3812 = vunpack.c.l.b16 %v979
    %v3813 = vunpack.c.l.b16 %v980
    %v3814 = vunpack.c.l.b16 %v981
    %v3815 = vunpack.c.l.b16 %v982
    %v3816 = vunpack.c.l.b16 %v983
    %v3817 = vunpack.c.l.b16 %v984
    %v3818 = vunpack.c.l.b16 %v985
    %v3819 = vunpack.c.l.b16 %v986
    %v3820 = vunpack.c.l.b16 %v987
    %v3821 = vunpack.c.l.b16 %v988
    %v3822 = vunpack.c.l.b16 %v989
    %v3823 = vunpack.c.l.b16 %v990
    %v3824 = vunpack.c.l.b16 %v991
    %v3825 = vunpack.c.l.b16 %v992
    %v3826 = vunpack.c.l.b16 %v993
    %v3827 = vunpack.c.l.b16 %v994
    %v3828 = vunpack.c.l.b16 %v995
    %v3829 = vunpack.c.l.b16 %v996
    %v3830 = vunpack.c.l.b16 %v997
    %v3831 = vunpack.c.l.b16 %v998
    %v3832 = vunpack.c.l.b16 %v999
    %v3833 = vunpack.c.l.b16 %v1000
    %v3834 = vunpack.c.l.b16 %v1001
    %v3835 = vunpack.c.l.b16 %v1002
    %v3836 = vunpack.c.l.b16 %v1003
    %v3837 = vunpack.c.l.b16 %v1004
    %v3838 = vunpack.c.l.b16 %v1005
    %v3839 = vunpack.c.l.b16 %v1006
    %v3840 = vunpack.c.l.b16 %v1007
    %v3841 = vunpack.c.l.b16 %v1008
    %v3842 = vunpack.c.l.b16 %v1009
    %v3843 = vunpack.c.l.b16 %v1010
    %v3844 = vunpack.c.l.b16 %v1011
    %v3845 = vunpack.c.l.b16 %v1012
    %v3846 = vunpack.c.l.b16 %v1013
    %v3847 = vunpack.c.l.b16 %v1014
    %v3848 = vunpack.c.l.b16 %v1015
    %v3849 = vunpack.c.l.b16 %v1016
    %v3850 = vunpack.c.l.b16 %v1017
    %v3851 = vunpack.c.l.b16 %v1018
    %v3852 = vunpack.c.l.b16 %v1019
    %v3853 = vunpack.c.l.b16 %v1020
    %v3854 = vunpack.c.l.b16 %v1021
    %v3855 = vunpack.c.l.b16 %v1022
    %v3856 = vunpack.c.l.b16 %v1023
    %v3857 = vunpack.c.l.b16 %v1024
    %v3858 = vunpack.c.l.b16 %v1025
    %v3859 = vunpack.c.l.b16 %v1026
    %v3860 = vunpack.c.l.b16 %v1027
    %v3861 = vunpack.c.l.b16 %v1028
    %v3862 = vunpack.c.l.b16 %v1029
    %v3863 = vunpack.c.l.b16 %v1030
    %v3864 = vunpack.c.l.b16 %v1031
    %v3865 = vunpack.c.l.b16 %v1032
    %v3866 = vunpack.c.l.b16 %v1033
    %v3867 = vunpack.c.l.b16 %v1034
    %v3868 = vunpack.c.l.b16 %v1035
    %v3869 = vunpack.c.l.b16 %v1036
    %v3870 = vunpack.c.l.b16 %v1037
    %v3871 = vunpack.c.l.b16 %v1038
    %v3872 = vunpack.c.l.b16 %v1039
    %v3873 = vunpack.c.l.b16 %v1040
    %v3874 = vunpack.c.l.b16 %v1041
    %v3875 = vunpack.c.l.b16 %v1042
    %v3876 = vunpack.c.l.b16 %v1043
    %v3877 = vunpack.c.l.b16 %v1044
    %v3878 = vunpack.c.l.b16 %v1045
    %v3879 = vunpack.c.l.b16 %v1046
    %v3880 = vunpack.c.l.b16 %v1047
    %v3881 = vunpack.c.l.b16 %v1048
    %v3882 = vunpack.c.l.b16 %v1049
    %v3883 = vunpack.c.l.b16 %v1050
    %v3884 = vunpack.c.l.b16 %v1051
    %v3885 = vunpack.c.l.b16 %v1052
    %v3886 = vunpack.c.l.b16 %v1053
    %v3887 = vunpack.c.l.b16 %v1054
    %v3888 = vunpack.c.l.b16 %v1055
    %v3889 = vunpack.c.l.b16 %v1056
    %v3890 = vunpack.c.l.b16 %v1057
    %v3891 = vunpack.c.l.b16 %v1058
    %v3892 = vunpack.c.l.b16 %v1059
    %v3893 = vunpack.c.l.b16 %v1060
    %v3894 = vunpack.c.l.b16 %v1061
    %v3895 = vunpack.c.l.b16 %v1062
    %v3896 = vunpack.c.l.b16 %v1063
    %v3897 = vunpack.c.l.b16 %v1064
    %v3898 = vunpack.c.l.b16 %v1065
    %v3899 = vunpack.c.l.b16 %v1066
    %v3900 = vunpack.c.l.b16 %v1067
    %v3901 = vunpack.c.l.b16 %v1068
    %v3902 = vunpack.c.l.b16 %v1069
    %v3903 = vunpack.c.l.b16 %v1070
    %v3904 = vunpack.c.l.b16 %v1071
    %v3905 = vunpack.c.l.b16 %v1072
    %v3906 = vunpack.c.l.b16 %v1073
    %v3907 = vunpack.c.l.b16 %v1074
    %v3908 = vunpack.c.l.b16 %v1075
    %v3909 = vunpack.c.l.b16 %v1076
    %v3910 = vunpack.c.l.b16 %v1077
    %v3911 = vunpack.c.l.b16 %v1078
    %v3912 = vunpack.c.l.b16 %v1079
    %v3913 = vunpack.c.l.b16 %v1080
    %v3914 = vunpack.c.l.b16 %v1081
    %v3915 = vunpack.c.l.b16 %v1082
    %v3916 = vunpack.c.l.b16 %v1083
    %v3917 = vunpack.c.l.b16 %v1084
    %v3918 = vunpack.c.l.b16 %v1085
    %v3919 = vunpack.c.l.b16 %v1086
    %v3920 = vunpack.c.l.b16 %v1087
    %v3921 = vunpack.c.l.b16 %v1088
    %v3922 = vunpack.c.l.b16 %v1089
    %v3923 = vunpack.c.l.b16 %v1090
    %v3924 = vunpack.c.l.b16 %v1091
    %v3925 = vunpack.c.l.b16 %v1092
    %v3926 = vunpack.c.l.b16 %v1093
    %v3927 = vunpack.c.l.b16 %v1094
    %v3928 = vunpack.c.l.b16 %v1095
    %v3929 = vunpack.c.l.b16 %v1096
    %v3930 = vunpack.c.l.b16 %v1097
    %v3931 = vunpack.c.l.b16 %v1098
    %v3932 = vunpack.c.l.b16 %v1099
    %v3933 = vunpack.c.l.b16 %v1100
    %v3934 = vunpack.c.l.b16 %v1101
    %v3935 = vunpack.c.l.b16 %v1102
    %v3936 = vunpack.c.l.b16 %v1103
    %v3937 = vunpack.c.l.b16 %v1104
    %v3938 = vunpack.c.l.b16 %v1105
    %v3939 = vunpack.c.l.b16 %v1106
    %v3940 = vunpack.c.l.b16 %v1107
    %v3941 = vunpack.c.l.b16 %v1108
    %v3942 = vunpack.c.l.b16 %v1109
    %v3943 = vunpack.c.l.b16 %v1110
    %v3944 = vunpack.c.l.b16 %v1111
    %v3945 = vunpack.c.l.b16 %v1112
    %v3946 = vunpack.c.l.b16 %v1113
    %v3947 = vunpack.c.l.b16 %v1114
    %v3948 = vunpack.c.l.b16 %v1115
    %v3949 = vunpack.c.l.b16 %v1116
    %v3950 = vunpack.c.l.b16 %v1117
    %v3951 = vunpack.c.l.b16 %v1118
    %v3952 = vunpack.c.l.b16 %v1119
    %v3953 = vunpack.c.l.b16 %v1120
    %v3954 = vunpack.c.l.b16 %v1121
    %v3955 = vunpack.c.l.b16 %v1122
    %v3956 = vunpack.c.l.b16 %v1123
    %v3957 = vunpack.c.l.b16 %v1124
    %v3958 = vunpack.c.l.b16 %v1125
    %v3959 = vunpack.c.l.b16 %v1126
    %v3960 = vunpack.c.l.b16 %v1127
    %v3961 = vunpack.c.l.b16 %v1128
    %v3962 = vunpack.c.l.b16 %v1129
    %v3963 = vunpack.c.l.b16 %v1130
    %v3964 = vunpack.c.l.b16 %v1131
    %v3965 = vunpack.c.l.b16 %v1132
    %v3966 = vunpack.c.l.b16 %v1133
    %v3967 = vunpack.c.l.b16 %v1134
    %v3968 = vunpack.c.l.b16 %v1135
    %v3969 = vunpack.c.l.b16 %v1136
    %v3970 = vunpack.c.l.b16 %v1137
    %v3971 = vunpack.c.l.b16 %v1138
    %v3972 = vunpack.c.l.b16 %v1139
    %v3973 = vunpack.c.l.b16 %v1140
    %v3974 = vunpack.c.l.b16 %v1141
    %v3975 = vunpack.c.l.b16 %v1142
    %v3976 = vunpack.c.l.b16 %v1143
    %v3977 = vunpack.c.l.b16 %v1144
    %v3978 = vunpack.c.l.b16 %v1145
    %v3979 = vunpack.c.l.b16 %v1146
    %v3980 = vunpack.c.l.b16 %v1147
    %v3981 = vunpack.c.l.b16 %v1148
    %v3982 = vunpack.c.l.b16 %v1149
    %v3983 = vunpack.c.l.b16 %v1150
    %v3984 = vunpack.c.l.b16 %v1151
    %v3985 = vunpack.c.l.b16 %v1152
    %v3986 = vunpack.c.l.b16 %v1153
    %v3987 = vunpack.c.l.b16 %v1154
    %v3988 = vunpack.c.l.b16 %v1155
    %v3989 = vunpack.c.l.b16 %v1156
    %v3990 = vunpack.c.l.b16 %v1157
    %v3991 = vunpack.c.l.b16 %v1158
    %v3992 = vunpack.c.l.b16 %v1159
    %v3993 = vunpack.c.l.b16 %v1160
    %v3994 = vunpack.c.l.b16 %v1161
    %v3995 = vunpack.c.l.b16 %v1162
    %v3996 = vunpack.c.l.b16 %v1163
    %v3997 = vunpack.c.l.b16 %v1164
    %v3998 = vunpack.c.l.b16 %v1165
    %v3999 = vunpack.c.l.b16 %v1166
    %v4000 = vunpack.c.l.b16 %v1167
    %v4001 = vunpack.c.l.b16 %v1168
    %v4002 = vunpack.c.l.b16 %v1169
    %v4003 = vunpack.c.l.b16 %v1170
    %v4004 = vunpack.c.l.b16 %v1171
    %v4005 = vunpack.c.l.b16 %v1172
    %v4006 = vunpack.c.l.b16 %v1173
    %v4007 = vunpack.c.l.b16 %v1174
    %v4008 = vunpack.c.l.b16 %v1175
    %v4009 = vunpack.c.l.b16 %v1176
    %v4010 = vunpack.c.l.b16 %v1177
    %v4011 = vunpack.c.l.b16 %v1178
    %v4012 = vunpack.c.l.b16 %v1179
    %v4013 = vunpack.c.l.b16 %v1180
    %v4014 = vunpack.c.l.b16 %v1181
    %v4015 = vunpack.c.l.b16 %v1182
    %v4016 = vpack.c.b16 %v2865, %v2864
    %v4017 = vpack.c.b16 %v2867, %v2866
    %v4018 = vpack.c.b16 %v2869, %v2868
    %v4019 = vpack.c.b16 %v2871, %v2870
    %v4020 = vpack.c.b16 %v2873, %v2872
    %v4021 = vpack.c.b16 %v2875, %v2874
    %v4022 = vpack.c.b16 %v2877, %v2876
    %v4023 = vpack.c.b16 %v2879, %v2878
    %v4024 = vpack.c.b16 %v2881, %v2880
    %v4025 = vpack.c.b16 %v2883, %v2882
    %v4026 = vpack.c.b16 %v2885, %v2884
    %v4027 = vpack.c.b16 %v2887, %v2886
    %v4028 = vpack.c.b16 %v2889, %v2888
    %v4029 = vpack.c.b16 %v2891, %v2890
    %v4030 = vpack.c.b16 %v2893, %v2892
    %v4031 = vpack.c.b16 %v2895, %v2894
    %v4032 = vpack.c.b16 %v2897, %v2896
    %v4033 = vpack.c.b16 %v2899, %v2898
    %v4034 = vpack.c.b16 %v2901, %v2900
    %v4035 = vpack.c.b16 %v2903, %v2902
    %v4036 = vpack.c.b16 %v2905, %v2904
    %v4037 = vpack.c.b16 %v2907, %v2906
    %v4038 = vpack.c.b16 %v2909, %v2908
    %v4039 = vpack.c.b16 %v2911, %v2910
    %v4040 = vpack.c.b16 %v2913, %v2912
    %v4041 = vpack.c.b16 %v2915, %v2914
    %v4042 = vpack.c.b16 %v2917, %v2916
    %v4043 = vpack.c.b16 %v2919, %v2918
    %v4044 = vpack.c.b16 %v2921, %v2920
    %v4045 = vpack.c.b16 %v2923, %v2922
    %v4046 = vpack.c.b16 %v2925, %v2924
    %v4047 = vpack.c.b16 %v2927, %v2926
    %v4048 = vpack.c.b16 %v2929, %v2928
    %v4049 = vpack.c.b16 %v2931, %v2930
    %v4050 = vpack.c.b16 %v2933, %v2932
    %v4051 = vpack.c.b16 %v2935, %v2934
    %v4052 = vpack.c.b16 %v2937, %v2936
    %v4053 = vpack.c.b16 %v2939, %v2938
    %v4054 = vpack.c.b16 %v2941, %v2940
    %v4055 = vpack.c.b16 %v2943, %v2942
    %v4056 = vpack.c.b16 %v2945, %v2944
    %v4057 = vpack.c.b16 %v2947, %v2946
    %v4058 = vpack.c.b16 %v2949, %v2948
    %v4059 = vpack.c.b16 %v2951, %v2950
    %v4060 = vpack.c.b16 %v2953, %v2952
    %v4061 = vpack.c.b16 %v2955, %v2954
    %v4062 = vpack.c.b16 %v2957, %v2956
    %v4063 = vpack.c.b16 %v2959, %v2958
    %v4064 = vpack.c.b16 %v2961, %v2960
    %v4065 = vpack.c.b16 %v2963, %v2962
    %v4066 = vpack.c.b16 %v2965, %v2964
    %v4067 = vpack.c.b16 %v2967, %v2966
    %v4068 = vpack.c.b16 %v2969, %v2968
    %v4069 = vpack.c.b16 %v2971, %v2970
    %v4070 = vpack.c.b16 %v2973, %v2972
    %v4071 = vpack.c.b16 %v2975, %v2974
    %v4072 = vpack.c.b16 %v2977, %v2976
    %v4073 = vpack.c.b16 %v2979, %v2978
    %v4074 = vpack.c.b16 %v2981, %v2980
    %v4075 = vpack.c.b16 %v2983, %v2982
    %v4076 = vpack.c.b16 %v2985, %v2984
    %v4077 = vpack.c.b16 %v2987, %v2986
    %v4078 = vpack.c.b16 %v2989, %v2988
    %v4079 = vpack.c.b16 %v2991, %v2990
    %v4080 = vpack.c.b16 %v2993, %v2992
    %v4081 = vpack.c.b16 %v2995, %v2994
    %v4082 = vpack.c.b16 %v2997, %v2996
    %v4083 = vpack.c.b16 %v2999, %v2998
    %v4084 = vpack.c.b16 %v3001, %v3000
    %v4085 = vpack.c.b16 %v3003, %v3002
    %v4086 = vpack.c.b16 %v3005, %v3004
    %v4087 = vpack.c.b16 %v3007, %v3006
    %v4088 = vpack.c.b16 %v3009, %v3008
    %v4089 = vpack.c.b16 %v3011, %v3010
    %v4090 = vpack.c.b16 %v3013, %v3012
    %v4091 = vpack.c.b16 %v3015, %v3014
    %v4092 = vpack.c.b16 %v3017, %v3016
    %v4093 = vpack.c.b16 %v3019, %v3018
    %v4094 = vpack.c.b16 %v3021, %v3020
    %v4095 = vpack.c.b16 %v3023, %v3022
    %v4096 = vpack.c.b16 %v3025, %v3024
    %v4097 = vpack.c.b16 %v3027, %v3026
    %v4098 = vpack.c.b16 %v3029, %v3028
    %v4099 = vpack.c.b16 %v3031, %v3030
    %v4100 = vpack.c.b16 %v3033, %v3032
    %v4101 = vpack.c.b16 %v3035, %v3034
    %v4102 = vpack.c.b16 %v3037, %v3036
    %v4103 = vpack.c.b16 %v3039, %v3038
    %v4104 = vpack.c.b16 %v3041, %v3040
    %v4105 = vpack.c.b16 %v3043, %v3042
    %v4106 = vpack.c.b16 %v3045, %v3044
    %v4107 = vpack.c.b16 %v3047, %v3046
    %v4108 = vpack.c.b16 %v3049, %v3048
    %v4109 = vpack.c.b16 %v3051, %v3050
    %v4110 = vpack.c.b16 %v3053, %v3052
    %v4111 = vpack.c.b16 %v3055, %v3054
    %v4112 = vpack.c.b16 %v3057, %v3056
    %v4113 = vpack.c.b16 %v3059, %v3058
    %v4114 = vpack.c.b16 %v3061, %v3060
    %v4115 = vpack.c.b16 %v3063, %v3062
    %v4116 = vpack.c.b16 %v3065, %v3064
    %v4117 = vpack.c.b16 %v3067, %v3066
    %v4118 = vpack.c.b16 %v3069, %v3068
    %v4119 = vpack.c.b16 %v3071, %v3070
    %v4120 = vpack.c.b16 %v3073, %v3072
    %v4121 = vpack.c.b16 %v3075, %v3074
    %v4122 = vpack.c.b16 %v3077, %v3076
    %v4123 = vpack.c.b16 %v3079, %v3078
    %v4124 = vpack.c.b16 %v3081, %v3080
    %v4125 = vpack.c.b16 %v3083, %v3082
    %v4126 = vpack.c.b16 %v3085, %v3084
    %v4127 = vpack.c.b16 %v3087, %v3086
    %v4128 = vpack.c.b16 %v3089, %v3088
    %v4129 = vpack.c.b16 %v3091, %v3090
    %v4130 = vpack.c.b16 %v3093, %v3092
    %v4131 = vpack.c.b16 %v3095, %v3094
    %v4132 = vpack.c.b16 %v3097, %v3096
    %v4133 = vpack.c.b16 %v3099, %v3098
    %v4134 = vpack.c.b16 %v3101, %v3100
    %v4135 = vpack.c.b16 %v3103, %v3102
    %v4136 = vpack.c.b16 %v3105, %v3104
    %v4137 = vpack.c.b16 %v3107, %v3106
    %v4138 = vpack.c.b16 %v3109, %v3108
    %v4139 = vpack.c.b16 %v3111, %v3110
    %v4140 = vpack.c.b16 %v3113, %v3112
    %v4141 = vpack.c.b16 %v3115, %v3114
    %v4142 = vpack.c.b16 %v3117, %v3116
    %v4143 = vpack.c.b16 %v3119, %v3118
    %v4144 = vpack.c.b16 %v3121, %v3120
    %v4145 = vpack.c.b16 %v3123, %v3122
    %v4146 = vpack.c.b16 %v3125, %v3124
    %v4147 = vpack.c.b16 %v3127, %v3126
    %v4148 = vpack.c.b16 %v3129, %v3128
    %v4149 = vpack.c.b16 %v3131, %v3130
    %v4150 = vpack.c.b16 %v3133, %v3132
    %v4151 = vpack.c.b16 %v3135, %v3134
    %v4152 = vpack.c.b16 %v3137, %v3136
    %v4153 = vpack.c.b16 %v3139, %v3138
    %v4154 = vpack.c.b16 %v3141, %v3140
    %v4155 = vpack.c.b16 %v3143, %v3142
    %v4156 = vpack.c.b16 %v3145, %v3144
    %v4157 = vpack.c.b16 %v3147, %v3146
    %v4158 = vpack.c.b16 %v3149, %v3148
    %v4159 = vpack.c.b16 %v3151, %v3150
    %v4160 = vpack.c.b16 %v3153, %v3152
    %v4161 = vpack.c.b16 %v3155, %v3154
    %v4162 = vpack.c.b16 %v3157, %v3156
    %v4163 = vpack.c.b16 %v3159, %v3158
    %v4164 = vpack.c.b16 %v3161, %v3160
    %v4165 = vpack.c.b16 %v3163, %v3162
    %v4166 = vpack.c.b16 %v3165, %v3164
    %v4167 = vpack.c.b16 %v3167, %v3166
    %v4168 = vpack.c.b16 %v3169, %v3168
    %v4169 = vpack.c.b16 %v3171, %v3170
    %v4170 = vpack.c.b16 %v3173, %v3172
    %v4171 = vpack.c.b16 %v3175, %v3174
    %v4172 = vpack.c.b16 %v3177, %v3176
    %v4173 = vpack.c.b16 %v3179, %v3178
    %v4174 = vpack.c.b16 %v3181, %v3180
    %v4175 = vpack.c.b16 %v3183, %v3182
    %v4176 = vpack.c.b16 %v3185, %v3184
    %v4177 = vpack.c.b16 %v3187, %v3186
    %v4178 = vpack.c.b16 %v3189, %v3188
    %v4179 = vpack.c.b16 %v3191, %v3190
    %v4180 = vpack.c.b16 %v3193, %v3192
    %v4181 = vpack.c.b16 %v3195, %v3194
    %v4182 = vpack.c.b16 %v3197, %v3196
    %v4183 = vpack.c.b16 %v3199, %v3198
    %v4184 = vpack.c.b16 %v3201, %v3200
    %v4185 = vpack.c.b16 %v3203, %v3202
    %v4186 = vpack.c.b16 %v3205, %v3204
    %v4187 = vpack.c.b16 %v3207, %v3206
    %v4188 = vpack.c.b16 %v3209, %v3208
    %v4189 = vpack.c.b16 %v3211, %v3210
    %v4190 = vpack.c.b16 %v3213, %v3212
    %v4191 = vpack.c.b16 %v3215, %v3214
    %v4192 = vpack.c.b16 %v3217, %v3216
    %v4193 = vpack.c.b16 %v3219, %v3218
    %v4194 = vpack.c.b16 %v3221, %v3220
    %v4195 = vpack.c.b16 %v3223, %v3222
    %v4196 = vpack.c.b16 %v3225, %v3224
    %v4197 = vpack.c.b16 %v3227, %v3226
    %v4198 = vpack.c.b16 %v3229, %v3228
    %v4199 = vpack.c.b16 %v3231, %v3230
    %v4200 = vpack.c.b16 %v3233, %v3232
    %v4201 = vpack.c.b16 %v3235, %v3234
    %v4202 = vpack.c.b16 %v3237, %v3236
    %v4203 = vpack.c.b16 %v3239, %v3238
    %v4204 = vpack.c.b16 %v3241, %v3240
    %v4205 = vpack.c.b16 %v3243, %v3242
    %v4206 = vpack.c.b16 %v3245, %v3244
    %v4207 = vpack.c.b16 %v3247, %v3246
    %v4208 = vpack.c.b16 %v3249, %v3248
    %v4209 = vpack.c.b16 %v3251, %v3250
    %v4210 = vpack.c.b16 %v3253, %v3252
    %v4211 = vpack.c.b16 %v3255, %v3254
    %v4212 = vpack.c.b16 %v3257, %v3256
    %v4213 = vpack.c.b16 %v3259, %v3258
    %v4214 = vpack.c.b16 %v3261, %v3260
    %v4215 = vpack.c.b16 %v3263, %v3262
    %v4216 = vpack.c.b16 %v3265, %v3264
    %v4217 = vpack.c.b16 %v3267, %v3266
    %v4218 = vpack.c.b16 %v3269, %v3268
    %v4219 = vpack.c.b16 %v3271, %v3270
    %v4220 = vpack.c.b16 %v3273, %v3272
    %v4221 = vpack.c.b16 %v3275, %v3274
    %v4222 = vpack.c.b16 %v3277, %v3276
    %v4223 = vpack.c.b16 %v3279, %v3278
    %v4224 = vpack.c.b16 %v3281, %v3280
    %v4225 = vpack.c.b16 %v3283, %v3282
    %v4226 = vpack.c.b16 %v3285, %v3284
    %v4227 = vpack.c.b16 %v3287, %v3286
    %v4228 = vpack.c.b16 %v3289, %v3288
    %v4229 = vpack.c.b16 %v3291, %v3290
    %v4230 = vpack.c.b16 %v3293, %v3292
    %v4231 = vpack.c.b16 %v3295, %v3294
    %v4232 = vpack.c.b16 %v3297, %v3296
    %v4233 = vpack.c.b16 %v3299, %v3298
    %v4234 = vpack.c.b16 %v3301, %v3300
    %v4235 = vpack.c.b16 %v3303, %v3302
    %v4236 = vpack.c.b16 %v3305, %v3304
    %v4237 = vpack.c.b16 %v3307, %v3306
    %v4238 = vpack.c.b16 %v3309, %v3308
    %v4239 = vpack.c.b16 %v3311, %v3310
    %v4240 = vpack.c.b16 %v3313, %v3312
    %v4241 = vpack.c.b16 %v3315, %v3314
    %v4242 = vpack.c.b16 %v3317, %v3316
    %v4243 = vpack.c.b16 %v3319, %v3318
    %v4244 = vpack.c.b16 %v3321, %v3320
    %v4245 = vpack.c.b16 %v3323, %v3322
    %v4246 = vpack.c.b16 %v3325, %v3324
    %v4247 = vpack.c.b16 %v3327, %v3326
    %v4248 = vpack.c.b16 %v3329, %v3328
    %v4249 = vpack.c.b16 %v3331, %v3330
    %v4250 = vpack.c.b16 %v3333, %v3332
    %v4251 = vpack.c.b16 %v3335, %v3334
    %v4252 = vpack.c.b16 %v3337, %v3336
    %v4253 = vpack.c.b16 %v3339, %v3338
    %v4254 = vpack.c.b16 %v3341, %v3340
    %v4255 = vpack.c.b16 %v3343, %v3342
    %v4256 = vpack.c.b16 %v3345, %v3344
    %v4257 = vpack.c.b16 %v3347, %v3346
    %v4258 = vpack.c.b16 %v3349, %v3348
    %v4259 = vpack.c.b16 %v3351, %v3350
    %v4260 = vpack.c.b16 %v3353, %v3352
    %v4261 = vpack.c.b16 %v3355, %v3354
    %v4262 = vpack.c.b16 %v3357, %v3356
    %v4263 = vpack.c.b16 %v3359, %v3358
    %v4264 = vpack.c.b16 %v3361, %v3360
    %v4265 = vpack.c.b16 %v3363, %v3362
    %v4266 = vpack.c.b16 %v3365, %v3364
    %v4267 = vpack.c.b16 %v3367, %v3366
    %v4268 = vpack.c.b16 %v3369, %v3368
    %v4269 = vpack.c.b16 %v3371, %v3370
    %v4270 = vpack.c.b16 %v3373, %v3372
    %v4271 = vpack.c.b16 %v3375, %v3374
    %v4272 = vpack.c.b16 %v3377, %v3376
    %v4273 = vpack.c.b16 %v3379, %v3378
    %v4274 = vpack.c.b16 %v3381, %v3380
    %v4275 = vpack.c.b16 %v3383, %v3382
    %v4276 = vpack.c.b16 %v3385, %v3384
    %v4277 = vpack.c.b16 %v3387, %v3386
    %v4278 = vpack.c.b16 %v3389, %v3388
    %v4279 = vpack.c.b16 %v3391, %v3390
    %v4280 = vpack.c.b16 %v3393, %v3392
    %v4281 = vpack.c.b16 %v3395, %v3394
    %v4282 = vpack.c.b16 %v3397, %v3396
    %v4283 = vpack.c.b16 %v3399, %v3398
    %v4284 = vpack.c.b16 %v3401, %v3400
    %v4285 = vpack.c.b16 %v3403, %v3402
    %v4286 = vpack.c.b16 %v3405, %v3404
    %v4287 = vpack.c.b16 %v3407, %v3406
    %v4288 = vpack.c.b16 %v3409, %v3408
    %v4289 = vpack.c.b16 %v3411, %v3410
    %v4290 = vpack.c.b16 %v3413, %v3412
    %v4291 = vpack.c.b16 %v3415, %v3414
    %v4292 = vpack.c.b16 %v3417, %v3416
    %v4293 = vpack.c.b16 %v3419, %v3418
    %v4294 = vpack.c.b16 %v3421, %v3420
    %v4295 = vpack.c.b16 %v3423, %v3422
    %v4296 = vpack.c.b16 %v3425, %v3424
    %v4297 = vpack.c.b16 %v3427, %v3426
    %v4298 = vpack.c.b16 %v3429, %v3428
    %v4299 = vpack.c.b16 %v3431, %v3430
    %v4300 = vpack.c.b16 %v3433, %v3432
    %v4301 = vpack.c.b16 %v3435, %v3434
    %v4302 = vpack.c.b16 %v3437, %v3436
    %v4303 = vpack.c.b16 %v3439, %v3438
    %v4304 = vpack.c.b16 %v3441, %v3440
    %v4305 = vpack.c.b16 %v3443, %v3442
    %v4306 = vpack.c.b16 %v3445, %v3444
    %v4307 = vpack.c.b16 %v3447, %v3446
    %v4308 = vpack.c.b16 %v3449, %v3448
    %v4309 = vpack.c.b16 %v3451, %v3450
    %v4310 = vpack.c.b16 %v3453, %v3452
    %v4311 = vpack.c.b16 %v3455, %v3454
    %v4312 = vpack.c.b16 %v3457, %v3456
    %v4313 = vpack.c.b16 %v3459, %v3458
    %v4314 = vpack.c.b16 %v3461, %v3460
    %v4315 = vpack.c.b16 %v3463, %v3462
    %v4316 = vpack.c.b16 %v3465, %v3464
    %v4317 = vpack.c.b16 %v3467, %v3466
    %v4318 = vpack.c.b16 %v3469, %v3468
    %v4319 = vpack.c.b16 %v3471, %v3470
    %v4320 = vpack.c.b16 %v3473, %v3472
    %v4321 = vpack.c.b16 %v3475, %v3474
    %v4322 = vpack.c.b16 %v3477, %v3476
    %v4323 = vpack.c.b16 %v3479, %v3478
    %v4324 = vpack.c.b16 %v3481, %v3480
    %v4325 = vpack.c.b16 %v3483, %v3482
    %v4326 = vpack.c.b16 %v3485, %v3484
    %v4327 = vpack.c.b16 %v3487, %v3486
    %v4328 = vpack.c.b16 %v3489, %v3488
    %v4329 = vpack.c.b16 %v3491, %v3490
    %v4330 = vpack.c.b16 %v3493, %v3492
    %v4331 = vpack.c.b16 %v3495, %v3494
    %v4332 = vpack.c.b16 %v3497, %v3496
    %v4333 = vpack.c.b16 %v3499, %v3498
    %v4334 = vpack.c.b16 %v3501, %v3500
    %v4335 = vpack.c.b16 %v3503, %v3502
    %v4336 = vpack.c.b16 %v3505, %v3504
    %v4337 = vpack.c.b16 %v3507, %v3506
    %v4338 = vpack.c.b16 %v3509, %v3508
    %v4339 = vpack.c.b16 %v3511, %v3510
    %v4340 = vpack.c.b16 %v3513, %v3512
    %v4341 = vpack.c.b16 %v3515, %v3514
    %v4342 = vpack.c.b16 %v3517, %v3516
    %v4343 = vpack.c.b16 %v3519, %v3518
    %v4344 = vpack.c.b16 %v3521, %v3520
    %v4345 = vpack.c.b16 %v3523, %v3522
    %v4346 = vpack.c.b16 %v3525, %v3524
    %v4347 = vpack.c.b16 %v3527, %v3526
    %v4348 = vpack.c.b16 %v3529, %v3528
    %v4349 = vpack.c.b16 %v3531, %v3530
    %v4350 = vpack.c.b16 %v3533, %v3532
    %v4351 = vpack.c.b16 %v3535, %v3534
    %v4352 = vpack.c.b16 %v3537, %v3536
    %v4353 = vpack.c.b16 %v3539, %v3538
    %v4354 = vpack.c.b16 %v3541, %v3540
    %v4355 = vpack.c.b16 %v3543, %v3542
    %v4356 = vpack.c.b16 %v3545, %v3544
    %v4357 = vpack.c.b16 %v3547, %v3546
    %v4358 = vpack.c.b16 %v3549, %v3548
    %v4359 = vpack.c.b16 %v3551, %v3550
    %v4360 = vpack.c.b16 %v3553, %v3552
    %v4361 = vpack.c.b16 %v3555, %v3554
    %v4362 = vpack.c.b16 %v3557, %v3556
    %v4363 = vpack.c.b16 %v3559, %v3558
    %v4364 = vpack.c.b16 %v3561, %v3560
    %v4365 = vpack.c.b16 %v3563, %v3562
    %v4366 = vpack.c.b16 %v3565, %v3564
    %v4367 = vpack.c.b16 %v3567, %v3566
    %v4368 = vpack.c.b16 %v3569, %v3568
    %v4369 = vpack.c.b16 %v3571, %v3570
    %v4370 = vpack.c.b16 %v3573, %v3572
    %v4371 = vpack.c.b16 %v3575, %v3574
    %v4372 = vpack.c.b16 %v3577, %v3576
    %v4373 = vpack.c.b16 %v3579, %v3578
    %v4374 = vpack.c.b16 %v3581, %v3580
    %v4375 = vpack.c.b16 %v3583, %v3582
    %v4376 = vpack.c.b16 %v3585, %v3584
    %v4377 = vpack.c.b16 %v3587, %v3586
    %v4378 = vpack.c.b16 %v3589, %v3588
    %v4379 = vpack.c.b16 %v3591, %v3590
    %v4380 = vpack.c.b16 %v3593, %v3592
    %v4381 = vpack.c.b16 %v3595, %v3594
    %v4382 = vpack.c.b16 %v3597, %v3596
    %v4383 = vpack.c.b16 %v3599, %v3598
    %v4384 = vpack.c.b16 %v3601, %v3600
    %v4385 = vpack.c.b16 %v3603, %v3602
    %v4386 = vpack.c.b16 %v3605, %v3604
    %v4387 = vpack.c.b16 %v3607, %v3606
    %v4388 = vpack.c.b16 %v3609, %v3608
    %v4389 = vpack.c.b16 %v3611, %v3610
    %v4390 = vpack.c.b16 %v3613, %v3612
    %v4391 = vpack.c.b16 %v3615, %v3614
    %v4392 = vpack.c.b16 %v3617, %v3616
    %v4393 = vpack.c.b16 %v3619, %v3618
    %v4394 = vpack.c.b16 %v3621, %v3620
    %v4395 = vpack.c.b16 %v3623, %v3622
    %v4396 = vpack.c.b16 %v3625, %v3624
    %v4397 = vpack.c.b16 %v3627, %v3626
    %v4398 = vpack.c.b16 %v3629, %v3628
    %v4399 = vpack.c.b16 %v3631, %v3630
    %v4400 = vpack.c.b16 %v3633, %v3632
    %v4401 = vpack.c.b16 %v3635, %v3634
    %v4402 = vpack.c.b16 %v3637, %v3636
    %v4403 = vpack.c.b16 %v3639, %v3638
    %v4404 = vpack.c.b16 %v3641, %v3640
    %v4405 = vpack.c.b16 %v3643, %v3642
    %v4406 = vpack.c.b16 %v3645, %v3644
    %v4407 = vpack.c.b16 %v3647, %v3646
    %v4408 = vpack.c.b16 %v3649, %v3648
    %v4409 = vpack.c.b16 %v3651, %v3650
    %v4410 = vpack.c.b16 %v3653, %v3652
    %v4411 = vpack.c.b16 %v3655, %v3654
    %v4412 = vpack.c.b16 %v3657, %v3656
    %v4413 = vpack.c.b16 %v3659, %v3658
    %v4414 = vpack.c.b16 %v3661, %v3660
    %v4415 = vpack.c.b16 %v3663, %v3662
    %v4416 = vpack.c.b16 %v3665, %v3664
    %v4417 = vpack.c.b16 %v3667, %v3666
    %v4418 = vpack.c.b16 %v3669, %v3668
    %v4419 = vpack.c.b16 %v3671, %v3670
    %v4420 = vpack.c.b16 %v3673, %v3672
    %v4421 = vpack.c.b16 %v3675, %v3674
    %v4422 = vpack.c.b16 %v3677, %v3676
    %v4423 = vpack.c.b16 %v3679, %v3678
    %v4424 = vpack.c.b16 %v3681, %v3680
    %v4425 = vpack.c.b16 %v3683, %v3682
    %v4426 = vpack.c.b16 %v3685, %v3684
    %v4427 = vpack.c.b16 %v3687, %v3686
    %v4428 = vpack.c.b16 %v3689, %v3688
    %v4429 = vpack.c.b16 %v3691, %v3690
    %v4430 = vpack.c.b16 %v3693, %v3692
    %v4431 = vpack.c.b16 %v3695, %v3694
    %v4432 = vpack.c.b16 %v3697, %v3696
    %v4433 = vpack.c.b16 %v3699, %v3698
    %v4434 = vpack.c.b16 %v3701, %v3700
    %v4435 = vpack.c.b16 %v3703, %v3702
    %v4436 = vpack.c.b16 %v3705, %v3704
    %v4437 = vpack.c.b16 %v3707, %v3706
    %v4438 = vpack.c.b16 %v3709, %v3708
    %v4439 = vpack.c.b16 %v3711, %v3710
    %v4440 = vpack.c.b16 %v3713, %v3712
    %v4441 = vpack.c.b16 %v3715, %v3714
    %v4442 = vpack.c.b16 %v3717, %v3716
    %v4443 = vpack.c.b16 %v3719, %v3718
    %v4444 = vpack.c.b16 %v3721, %v3720
    %v4445 = vpack.c.b16 %v3723, %v3722
    %v4446 = vpack.c.b16 %v3725, %v3724
    %v4447 = vpack.c.b16 %v3727, %v3726
    %v4448 = vpack.c.b16 %v3729, %v3728
    %v4449 = vpack.c.b16 %v3731, %v3730
    %v4450 = vpack.c.b16 %v3733, %v3732
    %v4451 = vpack.c.b16 %v3735, %v3734
    %v4452 = vpack.c.b16 %v3737, %v3736
    %v4453 = vpack.c.b16 %v3739, %v3738
    %v4454 = vpack.c.b16 %v3741, %v3740
    %v4455 = vpack.c.b16 %v3743, %v3742
    %v4456 = vpack.c.b16 %v3745, %v3744
    %v4457 = vpack.c.b16 %v3747, %v3746
    %v4458 = vpack.c.b16 %v3749, %v3748
    %v4459 = vpack.c.b16 %v3751, %v3750
    %v4460 = vpack.c.b16 %v3753, %v3752
    %v4461 = vpack.c.b16 %v3755, %v3754
    %v4462 = vpack.c.b16 %v3757, %v3756
    %v4463 = vpack.c.b16 %v3759, %v3758
    %v4464 = vpack.c.b16 %v3761, %v3760
    %v4465 = vpack.c.b16 %v3763, %v3762
    %v4466 = vpack.c.b16 %v3765, %v3764
    %v4467 = vpack.c.b16 %v3767, %v3766
    %v4468 = vpack.c.b16 %v3769, %v3768
    %v4469 = vpack.c.b16 %v3771, %v3770
    %v4470 = vpack.c.b16 %v3773, %v3772
    %v4471 = vpack.c.b16 %v3775, %v3774
    %v4472 = vpack.c.b16 %v3777, %v3776
    %v4473 = vpack.c.b16 %v3779, %v3778
    %v4474 = vpack.c.b16 %v3781, %v3780
    %v4475 = vpack.c.b16 %v3783, %v3782
    %v4476 = vpack.c.b16 %v3785, %v3784
    %v4477 = vpack.c.b16 %v3787, %v3786
    %v4478 = vpack.c.b16 %v3789, %v3788
    %v4479 = vpack.c.b16 %v3791, %v3790
    %v4480 = vpack.c.b16 %v3793, %v3792
    %v4481 = vpack.c.b16 %v3795, %v3794
    %v4482 = vpack.c.b16 %v3797, %v3796
    %v4483 = vpack.c.b16 %v3799, %v3798
    %v4484 = vpack.c.b16 %v3801, %v3800
    %v4485 = vpack.c.b16 %v3803, %v3802
    %v4486 = vpack.c.b16 %v3805, %v3804
    %v4487 = vpack.c.b16 %v3807, %v3806
    %v4488 = vpack.c.b16 %v3809, %v3808
    %v4489 = vpack.c.b16 %v3811, %v3810
    %v4490 = vpack.c.b16 %v3813, %v3812
    %v4491 = vpack.c.b16 %v3815, %v3814
    %v4492 = vpack.c.b16 %v3817, %v3816
    %v4493 = vpack.c.b16 %v3819, %v3818
    %v4494 = vpack.c.b16 %v3821, %v3820
    %v4495 = vpack.c.b16 %v3823, %v3822
    %v4496 = vpack.c.b16 %v3825, %v3824
    %v4497 = vpack.c.b16 %v3827, %v3826
    %v4498 = vpack.c.b16 %v3829, %v3828
    %v4499 = vpack.c.b16 %v3831, %v3830
    %v4500 = vpack.c.b16 %v3833, %v3832
    %v4501 = vpack.c.b16 %v3835, %v3834
    %v4502 = vpack.c.b16 %v3837, %v3836
    %v4503 = vpack.c.b16 %v3839, %v3838
    %v4504 = vpack.c.b16 %v3841, %v3840
    %v4505 = vpack.c.b16 %v3843, %v3842
    %v4506 = vpack.c.b16 %v3845, %v3844
    %v4507 = vpack.c.b16 %v3847, %v3846
    %v4508 = vpack.c.b16 %v3849, %v3848
    %v4509 = vpack.c.b16 %v3851, %v3850
    %v4510 = vpack.c.b16 %v3853, %v3852
    %v4511 = vpack.c.b16 %v3855, %v3854
    %v4512 = vpack.c.b16 %v3857, %v3856
    %v4513 = vpack.c.b16 %v3859, %v3858
    %v4514 = vpack.c.b16 %v3861, %v3860
    %v4515 = vpack.c.b16 %v3863, %v3862
    %v4516 = vpack.c.b16 %v3865, %v3864
    %v4517 = vpack.c.b16 %v3867, %v3866
    %v4518 = vpack.c.b16 %v3869, %v3868
    %v4519 = vpack.c.b16 %v3871, %v3870
    %v4520 = vpack.c.b16 %v3873, %v3872
    %v4521 = vpack.c.b16 %v3875, %v3874
    %v4522 = vpack.c.b16 %v3877, %v3876
    %v4523 = vpack.c.b16 %v3879, %v3878
    %v4524 = vpack.c.b16 %v3881, %v3880
    %v4525 = vpack.c.b16 %v3883, %v3882
    %v4526 = vpack.c.b16 %v3885, %v3884
    %v4527 = vpack.c.b16 %v3887, %v3886
    %v4528 = vpack.c.b16 %v3889, %v3888
    %v4529 = vpack.c.b16 %v3891, %v3890
    %v4530 = vpack.c.b16 %v3893, %v3892
    %v4531 = vpack.c.b16 %v3895, %v3894
    %v4532 = vpack.c.b16 %v3897, %v3896
    %v4533 = vpack.c.b16 %v3899, %v3898
    %v4534 = vpack.c.b16 %v3901, %v3900
    %v4535 = vpack.c.b16 %v3903, %v3902
    %v4536 = vpack.c.b16 %v3905, %v3904
    %v4537 = vpack.c.b16 %v3907, %v3906
    %v4538 = vpack.c.b16 %v3909, %v3908
    %v4539 = vpack.c.b16 %v3911, %v3910
    %v4540 = vpack.c.b16 %v3913, %v3912
    %v4541 = vpack.c.b16 %v3915, %v3914
    %v4542 = vpack.c.b16 %v3917, %v3916
    %v4543 = vpack.c.b16 %v3919, %v3918
    %v4544 = vpack.c.b16 %v3921, %v3920
    %v4545 = vpack.c.b16 %v3923, %v3922
    %v4546 = vpack.c.b16 %v3925, %v3924
    %v4547 = vpack.c.b16 %v3927, %v3926
    %v4548 = vpack.c.b16 %v3929, %v3928
    %v4549 = vpack.c.b16 %v3931, %v3930
    %v4550 = vpack.c.b16 %v3933, %v3932
    %v4551 = vpack.c.b16 %v3935, %v3934
    %v4552 = vpack.c.b16 %v3937, %v3936
    %v4553 = vpack.c.b16 %v3939, %v3938
    %v4554 = vpack.c.b16 %v3941, %v3940
    %v4555 = vpack.c.b16 %v3943, %v3942
    %v4556 = vpack.c.b16 %v3945, %v3944
    %v4557 = vpack.c.b16 %v3947, %v3946
    %v4558 = vpack.c.b16 %v3949, %v3948
    %v4559 = vpack.c.b16 %v3951, %v3950
    %v4560 = vpack.c.b16 %v3953, %v3952
    %v4561 = vpack.c.b16 %v3955, %v3954
    %v4562 = vpack.c.b16 %v3957, %v3956
    %v4563 = vpack.c.b16 %v3959, %v3958
    %v4564 = vpack.c.b16 %v3961, %v3960
    %v4565 = vpack.c.b16 %v3963, %v3962
    %v4566 = vpack.c.b16 %v3965, %v3964
    %v4567 = vpack.c.b16 %v3967, %v3966
    %v4568 = vpack.c.b16 %v3969, %v3968
    %v4569 = vpack.c.b16 %v3971, %v3970
    %v4570 = vpack.c.b16 %v3973, %v3972
    %v4571 = vpack.c.b16 %v3975, %v3974
    %v4572 = vpack.c.b16 %v3977, %v3976
    %v4573 = vpack.c.b16 %v3979, %v3978
    %v4574 = vpack.c.b16 %v3981, %v3980
    %v4575 = vpack.c.b16 %v3983, %v3982
    %v4576 = vpack.c.b16 %v3985, %v3984
    %v4577 = vpack.c.b16 %v3987, %v3986
    %v4578 = vpack.c.b16 %v3989, %v3988
    %v4579 = vpack.c.b16 %v3991, %v3990
    %v4580 = vpack.c.b16 %v3993, %v3992
    %v4581 = vpack.c.b16 %v3995, %v3994
    %v4582 = vpack.c.b16 %v3997, %v3996
    %v4583 = vpack.c.b16 %v3999, %v3998
    %v4584 = vpack.c.b16 %v4001, %v4000
    %v4585 = vpack.c.b16 %v4003, %v4002
    %v4586 = vpack.c.b16 %v4005, %v4004
    %v4587 = vpack.c.b16 %v4007, %v4006
    %v4588 = vpack.c.b16 %v4009, %v4008
    %v4589 = vpack.c.b16 %v4011, %v4010
    %v4590 = vpack.c.b16 %v4013, %v4012
    %v4591 = vpack.c.b16 %v4015, %v4014
    %5168 = vmatprep.subr.bf16.mxu0 0
    %5169 = vmatpush1.bf16.msra.mxu0 %v4016
    %5170 = vmatprep.subr.bf16.mxu0 0
    %5171 = vmatpush1.bf16.msra.mxu0 %v4017
    %5172 = vmatprep.subr.bf16.mxu0 0
    %5173 = vmatpush1.bf16.msra.mxu0 %v4018
    %5174 = vmatprep.subr.bf16.mxu0 0
    %5175 = vmatpush1.bf16.msra.mxu0 %v4019
    %5176 = vmatprep.subr.bf16.mxu0 0
    %5177 = vmatpush1.bf16.msra.mxu0 %v4020
    %5178 = vmatprep.subr.bf16.mxu0 0
    %5179 = vmatpush1.bf16.msra.mxu0 %v4021
    %5180 = vmatprep.subr.bf16.mxu0 0
    %5181 = vmatpush1.bf16.msra.mxu0 %v4022
    %5182 = vmatprep.subr.bf16.mxu0 0
    %5183 = vmatpush1.bf16.msra.mxu0 %v4023
    %5184 = vmatprep.subr.bf16.mxu0 0
    %5185 = vmatpush1.bf16.msra.mxu0 %v4024
    %5186 = vmatprep.subr.bf16.mxu0 0
    %5187 = vmatpush1.bf16.msra.mxu0 %v4025
    %5188 = vmatprep.subr.bf16.mxu0 0
    %5189 = vmatpush1.bf16.msra.mxu0 %v4026
    %5190 = vmatprep.subr.bf16.mxu0 0
    %5191 = vmatpush1.bf16.msra.mxu0 %v4027
    %5192 = vmatprep.subr.bf16.mxu0 0
    %5193 = vmatpush1.bf16.msra.mxu0 %v4028
    %5194 = vmatprep.subr.bf16.mxu0 0
    %5195 = vmatpush1.bf16.msra.mxu0 %v4029
    %5196 = vmatprep.subr.bf16.mxu0 0
    %5197 = vmatpush1.bf16.msra.mxu0 %v4030
    %5198 = vmatprep.subr.bf16.mxu0 0
    %5199 = vmatpush1.bf16.msra.mxu0 %v4031
    %5200 = vmatprep.mubr.bf16.mxu0 %v1236
    %5201 = vmatmul.mubr.bf16.gmra.mrb[0].mxu0 %v1222
    %v5202 = vpop.f32.mrb[0].mxu0
    %v5203 = vadd.f32 %v1188, %v5202
    %v5204 = vpop.f32.mrb[0].mxu0
    %v5205 = vpop.f32.mrb[0].mxu0
    %v5206 = vpop.f32.mrb[0].mxu0
    %5207 = vdwg.mxu0
    %5208 = vmatprep.subr.bf16.mxu0 0
    %5209 = vmatpush1.bf16.msra.mxu0 %v4032
    %5210 = vmatprep.subr.bf16.mxu0 0
    %5211 = vmatpush1.bf16.msra.mxu0 %v4033
    %5212 = vmatprep.subr.bf16.mxu0 0
    %5213 = vmatpush1.bf16.msra.mxu0 %v4034
    %5214 = vmatprep.subr.bf16.mxu0 0
    %5215 = vmatpush1.bf16.msra.mxu0 %v4035
    %5216 = vmatprep.subr.bf16.mxu0 0
    %5217 = vmatpush1.bf16.msra.mxu0 %v4036
    %5218 = vmatprep.subr.bf16.mxu0 0
    %5219 = vmatpush1.bf16.msra.mxu0 %v4037
    %5220 = vmatprep.subr.bf16.mxu0 0
    %5221 = vmatpush1.bf16.msra.mxu0 %v4038
    %5222 = vmatprep.subr.bf16.mxu0 0
    %5223 = vmatpush1.bf16.msra.mxu0 %v4039
    %5224 = vmatprep.subr.bf16.mxu0 0
    %5225 = vmatpush1.bf16.msra.mxu0 %v4040
    %5226 = vmatprep.subr.bf16.mxu0 0
    %5227 = vmatpush1.bf16.msra.mxu0 %v4041
    %5228 = vmatprep.subr.bf16.mxu0 0
    %5229 = vmatpush1.bf16.msra.mxu0 %v4042
    %5230 = vmatprep.subr.bf16.mxu0 0
    %5231 = vmatpush1.bf16.msra.mxu0 %v4043
    %5232 = vmatprep.subr.bf16.mxu0 0
    %5233 = vmatpush1.bf16.msra.mxu0 %v4044
    %5234 = vmatprep.subr.bf16.mxu0 0
    %5235 = vmatpush1.bf16.msra.mxu0 %v4045
    %5236 = vmatprep.subr.bf16.mxu0 0
    %5237 = vmatpush1.bf16.msra.mxu0 %v4046
    %5238 = vmatprep.subr.bf16.mxu0 0
    %5239 = vmatpush1.bf16.msra.mxu0 %v4047
    %5240 = vmatprep.mubr.bf16.mxu0 %v1246
    %5241 = vmatmul.mubr.bf16.gmra.mrb[0].mxu0 %v1244
    %v5242 = vpop.f32.mrb[0].mxu0
    %v5243 = vadd.f32 %v5203, %v5242
    %v5244 = vpop.f32.mrb[0].mxu0
    %v5245 = vpop.f32.mrb[0].mxu0
    %v5246 = vpop.f32.mrb[0].mxu0
    %5247 = vdwg.mxu0
    %5248 = vmatprep.subr.bf16.mxu0 0
    %5249 = vmatpush1.bf16.msra.mxu0 %v4048
    %5250 = vmatprep.subr.bf16.mxu0 0
    %5251 = vmatpush1.bf16.msra.mxu0 %v4049
    %5252 = vmatprep.subr.bf16.mxu0 0
    %5253 = vmatpush1.bf16.msra.mxu0 %v4050
    %5254 = vmatprep.subr.bf16.mxu0 0
    %5255 = vmatpush1.bf16.msra.mxu0 %v4051
    %5256 = vmatprep.subr.bf16.mxu0 0
    %5257 = vmatpush1.bf16.msra.mxu0 %v4052
    %5258 = vmatprep.subr.bf16.mxu0 0
    %5259 = vmatpush1.bf16.msra.mxu0 %v4053
    %5260 = vmatprep.subr.bf16.mxu0 0
    %5261 = vmatpush1.bf16.msra.mxu0 %v4054
    %5262 = vmatprep.subr.bf16.mxu0 0
    %5263 = vmatpush1.bf16.msra.mxu0 %v4055
    %5264 = vmatprep.subr.bf16.mxu0 0
    %5265 = vmatpush1.bf16.msra.mxu0 %v4056
    %5266 = vmatprep.subr.bf16.mxu0 0
    %5267 = vmatpush1.bf16.msra.mxu0 %v4057
    %5268 = vmatprep.subr.bf16.mxu0 0
    %5269 = vmatpush1.bf16.msra.mxu0 %v4058
    %5270 = vmatprep.subr.bf16.mxu0 0
    %5271 = vmatpush1.bf16.msra.mxu0 %v4059
    %5272 = vmatprep.subr.bf16.mxu0 0
    %5273 = vmatpush1.bf16.msra.mxu0 %v4060
    %5274 = vmatprep.subr.bf16.mxu0 0
    %5275 = vmatpush1.bf16.msra.mxu0 %v4061
    %5276 = vmatprep.subr.bf16.mxu0 0
    %5277 = vmatpush1.bf16.msra.mxu0 %v4062
    %5278 = vmatprep.subr.bf16.mxu0 0
    %5279 = vmatpush1.bf16.msra.mxu0 %v4063
    %5280 = vmatprep.mubr.bf16.mxu0 %v1243
    %5281 = vmatmul.mubr.bf16.gmra.mrb[0].mxu0 %v1229
    %v5282 = vpop.f32.mrb[0].mxu0
    %v5283 = vadd.f32 %v5243, %v5282
    %v5284 = vpop.f32.mrb[0].mxu0
    %v5285 = vpop.f32.mrb[0].mxu0
    %v5286 = vpop.f32.mrb[0].mxu0
    %5287 = vdwg.mxu0
    %5288 = vmatprep.subr.bf16.mxu0 0
    %5289 = vmatpush1.bf16.msra.mxu0 %v4064
    %5290 = vmatprep.subr.bf16.mxu0 0
    %5291 = vmatpush1.bf16.msra.mxu0 %v4065
    %5292 = vmatprep.subr.bf16.mxu0 0
    %5293 = vmatpush1.bf16.msra.mxu0 %v4066
    %5294 = vmatprep.subr.bf16.mxu0 0
    %5295 = vmatpush1.bf16.msra.mxu0 %v4067
    %5296 = vmatprep.subr.bf16.mxu0 0
    %5297 = vmatpush1.bf16.msra.mxu0 %v4068
    %5298 = vmatprep.subr.bf16.mxu0 0
    %5299 = vmatpush1.bf16.msra.mxu0 %v4069
    %5300 = vmatprep.subr.bf16.mxu0 0
    %5301 = vmatpush1.bf16.msra.mxu0 %v4070
    %5302 = vmatprep.subr.bf16.mxu0 0
    %5303 = vmatpush1.bf16.msra.mxu0 %v4071
    %5304 = vmatprep.subr.bf16.mxu0 0
    %5305 = vmatpush1.bf16.msra.mxu0 %v4072
    %5306 = vmatprep.subr.bf16.mxu0 0
    %5307 = vmatpush1.bf16.msra.mxu0 %v4073
    %5308 = vmatprep.subr.bf16.mxu0 0
    %5309 = vmatpush1.bf16.msra.mxu0 %v4074
    %5310 = vmatprep.subr.bf16.mxu0 0
    %5311 = vmatpush1.bf16.msra.mxu0 %v4075
    %5312 = vmatprep.subr.bf16.mxu0 0
    %5313 = vmatpush1.bf16.msra.mxu0 %v4076
    %5314 = vmatprep.subr.bf16.mxu0 0
    %5315 = vmatpush1.bf16.msra.mxu0 %v4077
    %5316 = vmatprep.subr.bf16.mxu0 0
    %5317 = vmatpush1.bf16.msra.mxu0 %v4078
    %5318 = vmatprep.subr.bf16.mxu0 0
    %5319 = vmatpush1.bf16.msra.mxu0 %v4079
    %5320 = vmatprep.mubr.bf16.mxu0 %v1247
    %5321 = vmatmul.mubr.bf16.gmra.mrb[0].mxu0 %v1245
    %v5322 = vpop.f32.mrb[0].mxu0
    %v5323 = vadd.f32 %v5283, %v5322
    %v5324 = vpop.f32.mrb[0].mxu0
    %v5325 = vpop.f32.mrb[0].mxu0
    %v5326 = vpop.f32.mrb[0].mxu0
    %5327 = vdwg.mxu0
    %5328 = vmatprep.subr.bf16.mxu0 0
    %5329 = vmatpush1.bf16.msra.mxu0 %v4080
    %5330 = vmatprep.subr.bf16.mxu0 0
    %5331 = vmatpush1.bf16.msra.mxu0 %v4081
    %5332 = vmatprep.subr.bf16.mxu0 0
    %5333 = vmatpush1.bf16.msra.mxu0 %v4082
    %5334 = vmatprep.subr.bf16.mxu0 0
    %5335 = vmatpush1.bf16.msra.mxu0 %v4083
    %5336 = vmatprep.subr.bf16.mxu0 0
    %5337 = vmatpush1.bf16.msra.mxu0 %v4084
    %5338 = vmatprep.subr.bf16.mxu0 0
    %5339 = vmatpush1.bf16.msra.mxu0 %v4085
    %5340 = vmatprep.subr.bf16.mxu0 0
    %5341 = vmatpush1.bf16.msra.mxu0 %v4086
    %5342 = vmatprep.subr.bf16.mxu0 0
    %5343 = vmatpush1.bf16.msra.mxu0 %v4087
    %5344 = vmatprep.subr.bf16.mxu0 0
    %5345 = vmatpush1.bf16.msra.mxu0 %v4088
    %5346 = vmatprep.subr.bf16.mxu0 0
    %5347 = vmatpush1.bf16.msra.mxu0 %v4089
    %5348 = vmatprep.subr.bf16.mxu0 0
    %5349 = vmatpush1.bf16.msra.mxu0 %v4090
    %5350 = vmatprep.subr.bf16.mxu0 0
    %5351 = vmatpush1.bf16.msra.mxu0 %v4091
    %5352 = vmatprep.subr.bf16.mxu0 0
    %5353 = vmatpush1.bf16.msra.mxu0 %v4092
    %5354 = vmatprep.subr.bf16.mxu0 0
    %5355 = vmatpush1.bf16.msra.mxu0 %v4093
    %5356 = vmatprep.subr.bf16.mxu0 0
    %5357 = vmatpush1.bf16.msra.mxu0 %v4094
    %5358 = vmatprep.subr.bf16.mxu0 0
    %5359 = vmatpush1.bf16.msra.mxu0 %v4095
    %5360 = vmatprep.mubr.bf16.mxu0 %v1285
    %5361 = vmatmul.mubr.bf16.gmra.mrb[0].mxu0 %v1271
    %v5362 = vpop.f32.mrb[0].mxu0
    %v5363 = vadd.f32 %v5323, %v5362
    %v5364 = vpop.f32.mrb[0].mxu0
    %v5365 = vpop.f32.mrb[0].mxu0
    %v5366 = vpop.f32.mrb[0].mxu0
    %5367 = vdwg.mxu0
    %5368 = vmatprep.subr.bf16.mxu0 0
    %5369 = vmatpush1.bf16.msra.mxu0 %v4096
    %5370 = vmatprep.subr.bf16.mxu0 0
    %5371 = vmatpush1.bf16.msra.mxu0 %v4097
    %5372 = vmatprep.subr.bf16.mxu0 0
    %5373 = vmatpush1.bf16.msra.mxu0 %v4098
    %5374 = vmatprep.subr.bf16.mxu0 0
    %5375 = vmatpush1.bf16.msra.mxu0 %v4099
    %5376 = vmatprep.subr.bf16.mxu0 0
    %5377 = vmatpush1.bf16.msra.mxu0 %v4100
    %5378 = vmatprep.subr.bf16.mxu0 0
    %5379 = vmatpush1.bf16.msra.mxu0 %v4101
    %5380 = vmatprep.subr.bf16.mxu0 0
    %5381 = vmatpush1.bf16.msra.mxu0 %v4102
    %5382 = vmatprep.subr.bf16.mxu0 0
    %5383 = vmatpush1.bf16.msra.mxu0 %v4103
    %5384 = vmatprep.subr.bf16.mxu0 0
    %5385 = vmatpush1.bf16.msra.mxu0 %v4104
    %5386 = vmatprep.subr.bf16.mxu0 0
    %5387 = vmatpush1.bf16.msra.mxu0 %v4105
    %5388 = vmatprep.subr.bf16.mxu0 0
    %5389 = vmatpush1.bf16.msra.mxu0 %v4106
    %5390 = vmatprep.subr.bf16.mxu0 0
    %5391 = vmatpush1.bf16.msra.mxu0 %v4107
    %5392 = vmatprep.subr.bf16.mxu0 0
    %5393 = vmatpush1.bf16.msra.mxu0 %v4108
    %5394 = vmatprep.subr.bf16.mxu0 0
    %5395 = vmatpush1.bf16.msra.mxu0 %v4109
    %5396 = vmatprep.subr.bf16.mxu0 0
    %5397 = vmatpush1.bf16.msra.mxu0 %v4110
    %5398 = vmatprep.subr.bf16.mxu0 0
    %5399 = vmatpush1.bf16.msra.mxu0 %v4111
    %5400 = vmatprep.mubr.bf16.mxu0 %v1295
    %5401 = vmatmul.mubr.bf16.gmra.mrb[0].mxu0 %v1293
    %v5402 = vpop.f32.mrb[0].mxu0
    %v5403 = vadd.f32 %v5363, %v5402
    %v5404 = vpop.f32.mrb[0].mxu0
    %v5405 = vpop.f32.mrb[0].mxu0
    %v5406 = vpop.f32.mrb[0].mxu0
    %5407 = vdwg.mxu0
    %5408 = vmatprep.subr.bf16.mxu0 0
    %5409 = vmatpush1.bf16.msra.mxu0 %v4112
    %5410 = vmatprep.subr.bf16.mxu0 0
    %5411 = vmatpush1.bf16.msra.mxu0 %v4113
    %5412 = vmatprep.subr.bf16.mxu0 0
    %5413 = vmatpush1.bf16.msra.mxu0 %v4114
    %5414 = vmatprep.subr.bf16.mxu0 0
    %5415 = vmatpush1.bf16.msra.mxu0 %v4115
    %5416 = vmatprep.subr.bf16.mxu0 0
    %5417 = vmatpush1.bf16.msra.mxu0 %v4116
    %5418 = vmatprep.subr.bf16.mxu0 0
    %5419 = vmatpush1.bf16.msra.mxu0 %v4117
    %5420 = vmatprep.subr.bf16.mxu0 0
    %5421 = vmatpush1.bf16.msra.mxu0 %v4118
    %5422 = vmatprep.subr.bf16.mxu0 0
    %5423 = vmatpush1.bf16.msra.mxu0 %v4119
    %5424 = vmatprep.subr.bf16.mxu0 0
    %5425 = vmatpush1.bf16.msra.mxu0 %v4120
    %5426 = vmatprep.subr.bf16.mxu0 0
    %5427 = vmatpush1.bf16.msra.mxu0 %v4121
    %5428 = vmatprep.subr.bf16.mxu0 0
    %5429 = vmatpush1.bf16.msra.mxu0 %v4122
    %5430 = vmatprep.subr.bf16.mxu0 0
    %5431 = vmatpush1.bf16.msra.mxu0 %v4123
    %5432 = vmatprep.subr.bf16.mxu0 0
    %5433 = vmatpush1.bf16.msra.mxu0 %v4124
    %5434 = vmatprep.subr.bf16.mxu0 0
    %5435 = vmatpush1.bf16.msra.mxu0 %v4125
    %5436 = vmatprep.subr.bf16.mxu0 0
    %5437 = vmatpush1.bf16.msra.mxu0 %v4126
    %5438 = vmatprep.subr.bf16.mxu0 0
    %5439 = vmatpush1.bf16.msra.mxu0 %v4127
    %5440 = vmatprep.mubr.bf16.mxu0 %v1292
    %5441 = vmatmul.mubr.bf16.gmra.mrb[0].mxu0 %v1278
    %v5442 = vpop.f32.mrb[0].mxu0
    %v5443 = vadd.f32 %v5403, %v5442
    %v5444 = vpop.f32.mrb[0].mxu0
    %v5445 = vpop.f32.mrb[0].mxu0
    %v5446 = vpop.f32.mrb[0].mxu0
    %5447 = vdwg.mxu0
    %5448 = vmatprep.subr.bf16.mxu0 0
    %5449 = vmatpush1.bf16.msra.mxu0 %v4128
    %5450 = vmatprep.subr.bf16.mxu0 0
    %5451 = vmatpush1.bf16.msra.mxu0 %v4129
    %5452 = vmatprep.subr.bf16.mxu0 0
    %5453 = vmatpush1.bf16.msra.mxu0 %v4130
    %5454 = vmatprep.subr.bf16.mxu0 0
    %5455 = vmatpush1.bf16.msra.mxu0 %v4131
    %5456 = vmatprep.subr.bf16.mxu0 0
    %5457 = vmatpush1.bf16.msra.mxu0 %v4132
    %5458 = vmatprep.subr.bf16.mxu0 0
    %5459 = vmatpush1.bf16.msra.mxu0 %v4133
    %5460 = vmatprep.subr.bf16.mxu0 0
    %5461 = vmatpush1.bf16.msra.mxu0 %v4134
    %5462 = vmatprep.subr.bf16.mxu0 0
    %5463 = vmatpush1.bf16.msra.mxu0 %v4135
    %5464 = vmatprep.subr.bf16.mxu0 0
    %5465 = vmatpush1.bf16.msra.mxu0 %v4136
    %5466 = vmatprep.subr.bf16.mxu0 0
    %5467 = vmatpush1.bf16.msra.mxu0 %v4137
    %5468 = vmatprep.subr.bf16.mxu0 0
    %5469 = vmatpush1.bf16.msra.mxu0 %v4138
    %5470 = vmatprep.subr.bf16.mxu0 0
    %5471 = vmatpush1.bf16.msra.mxu0 %v4139
    %5472 = vmatprep.subr.bf16.mxu0 0
    %5473 = vmatpush1.bf16.msra.mxu0 %v4140
    %5474 = vmatprep.subr.bf16.mxu0 0
    %5475 = vmatpush1.bf16.msra.mxu0 %v4141
    %5476 = vmatprep.subr.bf16.mxu0 0
    %5477 = vmatpush1.bf16.msra.mxu0 %v4142
    %5478 = vmatprep.subr.bf16.mxu0 0
    %5479 = vmatpush1.bf16.msra.mxu0 %v4143
    %5480 = vmatprep.mubr.bf16.mxu0 %v1296
    %5481 = vmatmul.mubr.bf16.gmra.mrb[0].mxu0 %v1294
    %v5482 = vpop.f32.mrb[0].mxu0
    %v5483 = vadd.f32 %v5443, %v5482
    %v5484 = vpop.f32.mrb[0].mxu0
    %v5485 = vpop.f32.mrb[0].mxu0
    %v5486 = vpop.f32.mrb[0].mxu0
    %5487 = vdwg.mxu0
    %5488 = vmatprep.subr.bf16.mxu0 0
    %5489 = vmatpush1.bf16.msra.mxu0 %v4144
    %5490 = vmatprep.subr.bf16.mxu0 0
    %5491 = vmatpush1.bf16.msra.mxu0 %v4145
    %5492 = vmatprep.subr.bf16.mxu0 0
    %5493 = vmatpush1.bf16.msra.mxu0 %v4146
    %5494 = vmatprep.subr.bf16.mxu0 0
    %5495 = vmatpush1.bf16.msra.mxu0 %v4147
    %5496 = vmatprep.subr.bf16.mxu0 0
    %5497 = vmatpush1.bf16.msra.mxu0 %v4148
    %5498 = vmatprep.subr.bf16.mxu0 0
    %5499 = vmatpush1.bf16.msra.mxu0 %v4149
    %5500 = vmatprep.subr.bf16.mxu0 0
    %5501 = vmatpush1.bf16.msra.mxu0 %v4150
    %5502 = vmatprep.subr.bf16.mxu0 0
    %5503 = vmatpush1.bf16.msra.mxu0 %v4151
    %5504 = vmatprep.subr.bf16.mxu0 0
    %5505 = vmatpush1.bf16.msra.mxu0 %v4152
    %5506 = vmatprep.subr.bf16.mxu0 0
    %5507 = vmatpush1.bf16.msra.mxu0 %v4153
    %5508 = vmatprep.subr.bf16.mxu0 0
    %5509 = vmatpush1.bf16.msra.mxu0 %v4154
    %5510 = vmatprep.subr.bf16.mxu0 0
    %5511 = vmatpush1.bf16.msra.mxu0 %v4155
    %5512 = vmatprep.subr.bf16.mxu0 0
    %5513 = vmatpush1.bf16.msra.mxu0 %v4156
    %5514 = vmatprep.subr.bf16.mxu0 0
    %5515 = vmatpush1.bf16.msra.mxu0 %v4157
    %5516 = vmatprep.subr.bf16.mxu0 0
    %5517 = vmatpush1.bf16.msra.mxu0 %v4158
    %5518 = vmatprep.subr.bf16.mxu0 0
    %5519 = vmatpush1.bf16.msra.mxu0 %v4159
    %5520 = vmatprep.mubr.bf16.mxu0 %v1334
    %5521 = vmatmul.mubr.bf16.gmra.mrb[0].mxu0 %v1320
    %v5522 = vpop.f32.mrb[0].mxu0
    %v5523 = vadd.f32 %v5483, %v5522
    %v5524 = vpop.f32.mrb[0].mxu0
    %v5525 = vpop.f32.mrb[0].mxu0
    %v5526 = vpop.f32.mrb[0].mxu0
    %5527 = vdwg.mxu0
    %5528 = vmatprep.subr.bf16.mxu0 0
    %5529 = vmatpush1.bf16.msra.mxu0 %v4160
    %5530 = vmatprep.subr.bf16.mxu0 0
    %5531 = vmatpush1.bf16.msra.mxu0 %v4161
    %5532 = vmatprep.subr.bf16.mxu0 0
    %5533 = vmatpush1.bf16.msra.mxu0 %v4162
    %5534 = vmatprep.subr.bf16.mxu0 0
    %5535 = vmatpush1.bf16.msra.mxu0 %v4163
    %5536 = vmatprep.subr.bf16.mxu0 0
    %5537 = vmatpush1.bf16.msra.mxu0 %v4164
    %5538 = vmatprep.subr.bf16.mxu0 0
    %5539 = vmatpush1.bf16.msra.mxu0 %v4165
    %5540 = vmatprep.subr.bf16.mxu0 0
    %5541 = vmatpush1.bf16.msra.mxu0 %v4166
    %5542 = vmatprep.subr.bf16.mxu0 0
    %5543 = vmatpush1.bf16.msra.mxu0 %v4167
    %5544 = vmatprep.subr.bf16.mxu0 0
    %5545 = vmatpush1.bf16.msra.mxu0 %v4168
    %5546 = vmatprep.subr.bf16.mxu0 0
    %5547 = vmatpush1.bf16.msra.mxu0 %v4169
    %5548 = vmatprep.subr.bf16.mxu0 0
    %5549 = vmatpush1.bf16.msra.mxu0 %v4170
    %5550 = vmatprep.subr.bf16.mxu0 0
    %5551 = vmatpush1.bf16.msra.mxu0 %v4171
    %5552 = vmatprep.subr.bf16.mxu0 0
    %5553 = vmatpush1.bf16.msra.mxu0 %v4172
    %5554 = vmatprep.subr.bf16.mxu0 0
    %5555 = vmatpush1.bf16.msra.mxu0 %v4173
    %5556 = vmatprep.subr.bf16.mxu0 0
    %5557 = vmatpush1.bf16.msra.mxu0 %v4174
    %5558 = vmatprep.subr.bf16.mxu0 0
    %5559 = vmatpush1.bf16.msra.mxu0 %v4175
    %5560 = vmatprep.mubr.bf16.mxu0 %v1344
    %5561 = vmatmul.mubr.bf16.gmra.mrb[0].mxu0 %v1342
    %v5562 = vpop.f32.mrb[0].mxu0
    %v5563 = vadd.f32 %v5523, %v5562
    %v5564 = vpop.f32.mrb[0].mxu0
    %v5565 = vpop.f32.mrb[0].mxu0
    %v5566 = vpop.f32.mrb[0].mxu0
    %5567 = vdwg.mxu0
    %5568 = vmatprep.subr.bf16.mxu0 0
    %5569 = vmatpush1.bf16.msra.mxu0 %v4176
    %5570 = vmatprep.subr.bf16.mxu0 0
    %5571 = vmatpush1.bf16.msra.mxu0 %v4177
    %5572 = vmatprep.subr.bf16.mxu0 0
    %5573 = vmatpush1.bf16.msra.mxu0 %v4178
    %5574 = vmatprep.subr.bf16.mxu0 0
    %5575 = vmatpush1.bf16.msra.mxu0 %v4179
    %5576 = vmatprep.subr.bf16.mxu0 0
    %5577 = vmatpush1.bf16.msra.mxu0 %v4180
    %5578 = vmatprep.subr.bf16.mxu0 0
    %5579 = vmatpush1.bf16.msra.mxu0 %v4181
    %5580 = vmatprep.subr.bf16.mxu0 0
    %5581 = vmatpush1.bf16.msra.mxu0 %v4182
    %5582 = vmatprep.subr.bf16.mxu0 0
    %5583 = vmatpush1.bf16.msra.mxu0 %v4183
    %5584 = vmatprep.subr.bf16.mxu0 0
    %5585 = vmatpush1.bf16.msra.mxu0 %v4184
    %5586 = vmatprep.subr.bf16.mxu0 0
    %5587 = vmatpush1.bf16.msra.mxu0 %v4185
    %5588 = vmatprep.subr.bf16.mxu0 0
    %5589 = vmatpush1.bf16.msra.mxu0 %v4186
    %5590 = vmatprep.subr.bf16.mxu0 0
    %5591 = vmatpush1.bf16.msra.mxu0 %v4187
    %5592 = vmatprep.subr.bf16.mxu0 0
    %5593 = vmatpush1.bf16.msra.mxu0 %v4188
    %5594 = vmatprep.subr.bf16.mxu0 0
    %5595 = vmatpush1.bf16.msra.mxu0 %v4189
    %5596 = vmatprep.subr.bf16.mxu0 0
    %5597 = vmatpush1.bf16.msra.mxu0 %v4190
    %5598 = vmatprep.subr.bf16.mxu0 0
    %5599 = vmatpush1.bf16.msra.mxu0 %v4191
    %5600 = vmatprep.mubr.bf16.mxu0 %v1341
    %5601 = vmatmul.mubr.bf16.gmra.mrb[0].mxu0 %v1327
    %v5602 = vpop.f32.mrb[0].mxu0
    %v5603 = vadd.f32 %v5563, %v5602
    %v5604 = vpop.f32.mrb[0].mxu0
    %v5605 = vpop.f32.mrb[0].mxu0
    %v5606 = vpop.f32.mrb[0].mxu0
    %5607 = vdwg.mxu0
    %5608 = vmatprep.subr.bf16.mxu0 0
    %5609 = vmatpush1.bf16.msra.mxu0 %v4192
    %5610 = vmatprep.subr.bf16.mxu0 0
    %5611 = vmatpush1.bf16.msra.mxu0 %v4193
    %5612 = vmatprep.subr.bf16.mxu0 0
    %5613 = vmatpush1.bf16.msra.mxu0 %v4194
    %5614 = vmatprep.subr.bf16.mxu0 0
    %5615 = vmatpush1.bf16.msra.mxu0 %v4195
    %5616 = vmatprep.subr.bf16.mxu0 0
    %5617 = vmatpush1.bf16.msra.mxu0 %v4196
    %5618 = vmatprep.subr.bf16.mxu0 0
    %5619 = vmatpush1.bf16.msra.mxu0 %v4197
    %5620 = vmatprep.subr.bf16.mxu0 0
    %5621 = vmatpush1.bf16.msra.mxu0 %v4198
    %5622 = vmatprep.subr.bf16.mxu0 0
    %5623 = vmatpush1.bf16.msra.mxu0 %v4199
    %5624 = vmatprep.subr.bf16.mxu0 0
    %5625 = vmatpush1.bf16.msra.mxu0 %v4200
    %5626 = vmatprep.subr.bf16.mxu0 0
    %5627 = vmatpush1.bf16.msra.mxu0 %v4201
    %5628 = vmatprep.subr.bf16.mxu0 0
    %5629 = vmatpush1.bf16.msra.mxu0 %v4202
    %5630 = vmatprep.subr.bf16.mxu0 0
    %5631 = vmatpush1.bf16.msra.mxu0 %v4203
    %5632 = vmatprep.subr.bf16.mxu0 0
    %5633 = vmatpush1.bf16.msra.mxu0 %v4204
    %5634 = vmatprep.subr.bf16.mxu0 0
    %5635 = vmatpush1.bf16.msra.mxu0 %v4205
    %5636 = vmatprep.subr.bf16.mxu0 0
    %5637 = vmatpush1.bf16.msra.mxu0 %v4206
    %5638 = vmatprep.subr.bf16.mxu0 0
    %5639 = vmatpush1.bf16.msra.mxu0 %v4207
    %5640 = vmatprep.mubr.bf16.mxu0 %v1345
    %5641 = vmatmul.mubr.bf16.gmra.mrb[0].mxu0 %v1343
    %v5642 = vpop.f32.mrb[0].mxu0
    %v5643 = vadd.f32 %v5603, %v5642
    %v5644 = vpop.f32.mrb[0].mxu0
    %v5645 = vpop.f32.mrb[0].mxu0
    %v5646 = vpop.f32.mrb[0].mxu0
    %5647 = vdwg.mxu0
    %5648 = vmatprep.subr.bf16.mxu0 0
    %5649 = vmatpush1.bf16.msra.mxu0 %v4208
    %5650 = vmatprep.subr.bf16.mxu0 0
    %5651 = vmatpush1.bf16.msra.mxu0 %v4209
    %5652 = vmatprep.subr.bf16.mxu0 0
    %5653 = vmatpush1.bf16.msra.mxu0 %v4210
    %5654 = vmatprep.subr.bf16.mxu0 0
    %5655 = vmatpush1.bf16.msra.mxu0 %v4211
    %5656 = vmatprep.subr.bf16.mxu0 0
    %5657 = vmatpush1.bf16.msra.mxu0 %v4212
    %5658 = vmatprep.subr.bf16.mxu0 0
    %5659 = vmatpush1.bf16.msra.mxu0 %v4213
    %5660 = vmatprep.subr.bf16.mxu0 0
    %5661 = vmatpush1.bf16.msra.mxu0 %v4214
    %5662 = vmatprep.subr.bf16.mxu0 0
    %5663 = vmatpush1.bf16.msra.mxu0 %v4215
    %5664 = vmatprep.subr.bf16.mxu0 0
    %5665 = vmatpush1.bf16.msra.mxu0 %v4216
    %5666 = vmatprep.subr.bf16.mxu0 0
    %5667 = vmatpush1.bf16.msra.mxu0 %v4217
    %5668 = vmatprep.subr.bf16.mxu0 0
    %5669 = vmatpush1.bf16.msra.mxu0 %v4218
    %5670 = vmatprep.subr.bf16.mxu0 0
    %5671 = vmatpush1.bf16.msra.mxu0 %v4219
    %5672 = vmatprep.subr.bf16.mxu0 0
    %5673 = vmatpush1.bf16.msra.mxu0 %v4220
    %5674 = vmatprep.subr.bf16.mxu0 0
    %5675 = vmatpush1.bf16.msra.mxu0 %v4221
    %5676 = vmatprep.subr.bf16.mxu0 0
    %5677 = vmatpush1.bf16.msra.mxu0 %v4222
    %5678 = vmatprep.subr.bf16.mxu0 0
    %5679 = vmatpush1.bf16.msra.mxu0 %v4223
    %5680 = vmatprep.mubr.bf16.mxu0 %v1383
    %5681 = vmatmul.mubr.bf16.gmra.mrb[0].mxu0 %v1369
    %v5682 = vpop.f32.mrb[0].mxu0
    %v5683 = vadd.f32 %v5643, %v5682
    %v5684 = vpop.f32.mrb[0].mxu0
    %v5685 = vpop.f32.mrb[0].mxu0
    %v5686 = vpop.f32.mrb[0].mxu0
    %5687 = vdwg.mxu0
    %5688 = vmatprep.subr.bf16.mxu0 0
    %5689 = vmatpush1.bf16.msra.mxu0 %v4224
    %5690 = vmatprep.subr.bf16.mxu0 0
    %5691 = vmatpush1.bf16.msra.mxu0 %v4225
    %5692 = vmatprep.subr.bf16.mxu0 0
    %5693 = vmatpush1.bf16.msra.mxu0 %v4226
    %5694 = vmatprep.subr.bf16.mxu0 0
    %5695 = vmatpush1.bf16.msra.mxu0 %v4227
    %5696 = vmatprep.subr.bf16.mxu0 0
    %5697 = vmatpush1.bf16.msra.mxu0 %v4228
    %5698 = vmatprep.subr.bf16.mxu0 0
    %5699 = vmatpush1.bf16.msra.mxu0 %v4229
    %5700 = vmatprep.subr.bf16.mxu0 0
    %5701 = vmatpush1.bf16.msra.mxu0 %v4230
    %5702 = vmatprep.subr.bf16.mxu0 0
    %5703 = vmatpush1.bf16.msra.mxu0 %v4231
    %5704 = vmatprep.subr.bf16.mxu0 0
    %5705 = vmatpush1.bf16.msra.mxu0 %v4232
    %5706 = vmatprep.subr.bf16.mxu0 0
    %5707 = vmatpush1.bf16.msra.mxu0 %v4233
    %5708 = vmatprep.subr.bf16.mxu0 0
    %5709 = vmatpush1.bf16.msra.mxu0 %v4234
    %5710 = vmatprep.subr.bf16.mxu0 0
    %5711 = vmatpush1.bf16.msra.mxu0 %v4235
    %5712 = vmatprep.subr.bf16.mxu0 0
    %5713 = vmatpush1.bf16.msra.mxu0 %v4236
    %5714 = vmatprep.subr.bf16.mxu0 0
    %5715 = vmatpush1.bf16.msra.mxu0 %v4237
    %5716 = vmatprep.subr.bf16.mxu0 0
    %5717 = vmatpush1.bf16.msra.mxu0 %v4238
    %5718 = vmatprep.subr.bf16.mxu0 0
    %5719 = vmatpush1.bf16.msra.mxu0 %v4239
    %5720 = vmatprep.mubr.bf16.mxu0 %v1393
    %5721 = vmatmul.mubr.bf16.gmra.mrb[0].mxu0 %v1391
    %v5722 = vpop.f32.mrb[0].mxu0
    %v5723 = vadd.f32 %v5683, %v5722
    %v5724 = vpop.f32.mrb[0].mxu0
    %v5725 = vpop.f32.mrb[0].mxu0
    %v5726 = vpop.f32.mrb[0].mxu0
    %5727 = vdwg.mxu0
    %5728 = vmatprep.subr.bf16.mxu0 0
    %5729 = vmatpush1.bf16.msra.mxu0 %v4240
    %5730 = vmatprep.subr.bf16.mxu0 0
    %5731 = vmatpush1.bf16.msra.mxu0 %v4241
    %5732 = vmatprep.subr.bf16.mxu0 0
    %5733 = vmatpush1.bf16.msra.mxu0 %v4242
    %5734 = vmatprep.subr.bf16.mxu0 0
    %5735 = vmatpush1.bf16.msra.mxu0 %v4243
    %5736 = vmatprep.subr.bf16.mxu0 0
    %5737 = vmatpush1.bf16.msra.mxu0 %v4244
    %5738 = vmatprep.subr.bf16.mxu0 0
    %5739 = vmatpush1.bf16.msra.mxu0 %v4245
    %5740 = vmatprep.subr.bf16.mxu0 0
    %5741 = vmatpush1.bf16.msra.mxu0 %v4246
    %5742 = vmatprep.subr.bf16.mxu0 0
    %5743 = vmatpush1.bf16.msra.mxu0 %v4247
    %5744 = vmatprep.subr.bf16.mxu0 0
    %5745 = vmatpush1.bf16.msra.mxu0 %v4248
    %5746 = vmatprep.subr.bf16.mxu0 0
    %5747 = vmatpush1.bf16.msra.mxu0 %v4249
    %5748 = vmatprep.subr.bf16.mxu0 0
    %5749 = vmatpush1.bf16.msra.mxu0 %v4250
    %5750 = vmatprep.subr.bf16.mxu0 0
    %5751 = vmatpush1.bf16.msra.mxu0 %v4251
    %5752 = vmatprep.subr.bf16.mxu0 0
    %5753 = vmatpush1.bf16.msra.mxu0 %v4252
    %5754 = vmatprep.subr.bf16.mxu0 0
    %5755 = vmatpush1.bf16.msra.mxu0 %v4253
    %5756 = vmatprep.subr.bf16.mxu0 0
    %5757 = vmatpush1.bf16.msra.mxu0 %v4254
    %5758 = vmatprep.subr.bf16.mxu0 0
    %5759 = vmatpush1.bf16.msra.mxu0 %v4255
    %5760 = vmatprep.mubr.bf16.mxu0 %v1390
    %5761 = vmatmul.mubr.bf16.gmra.mrb[0].mxu0 %v1376
    %v5762 = vpop.f32.mrb[0].mxu0
    %v5763 = vadd.f32 %v5723, %v5762
    %v5764 = vpop.f32.mrb[0].mxu0
    %v5765 = vpop.f32.mrb[0].mxu0
    %v5766 = vpop.f32.mrb[0].mxu0
    %5767 = vdwg.mxu0
    %5768 = vmatprep.subr.bf16.mxu0 0
    %5769 = vmatpush1.bf16.msra.mxu0 %v4256
    %5770 = vmatprep.subr.bf16.mxu0 0
    %5771 = vmatpush1.bf16.msra.mxu0 %v4257
    %5772 = vmatprep.subr.bf16.mxu0 0
    %5773 = vmatpush1.bf16.msra.mxu0 %v4258
    %5774 = vmatprep.subr.bf16.mxu0 0
    %5775 = vmatpush1.bf16.msra.mxu0 %v4259
    %5776 = vmatprep.subr.bf16.mxu0 0
    %5777 = vmatpush1.bf16.msra.mxu0 %v4260
    %5778 = vmatprep.subr.bf16.mxu0 0
    %5779 = vmatpush1.bf16.msra.mxu0 %v4261
    %5780 = vmatprep.subr.bf16.mxu0 0
    %5781 = vmatpush1.bf16.msra.mxu0 %v4262
    %5782 = vmatprep.subr.bf16.mxu0 0
    %5783 = vmatpush1.bf16.msra.mxu0 %v4263
    %5784 = vmatprep.subr.bf16.mxu0 0
    %5785 = vmatpush1.bf16.msra.mxu0 %v4264
    %5786 = vmatprep.subr.bf16.mxu0 0
    %5787 = vmatpush1.bf16.msra.mxu0 %v4265
    %5788 = vmatprep.subr.bf16.mxu0 0
    %5789 = vmatpush1.bf16.msra.mxu0 %v4266
    %5790 = vmatprep.subr.bf16.mxu0 0
    %5791 = vmatpush1.bf16.msra.mxu0 %v4267
    %5792 = vmatprep.subr.bf16.mxu0 0
    %5793 = vmatpush1.bf16.msra.mxu0 %v4268
    %5794 = vmatprep.subr.bf16.mxu0 0
    %5795 = vmatpush1.bf16.msra.mxu0 %v4269
    %5796 = vmatprep.subr.bf16.mxu0 0
    %5797 = vmatpush1.bf16.msra.mxu0 %v4270
    %5798 = vmatprep.subr.bf16.mxu0 0
    %5799 = vmatpush1.bf16.msra.mxu0 %v4271
    %5800 = vmatprep.mubr.bf16.mxu0 %v1394
    %5801 = vmatmul.mubr.bf16.gmra.mrb[0].mxu0 %v1392
    %v5802 = vpop.f32.mrb[0].mxu0
    %v5803 = vadd.f32 %v5763, %v5802
    %v5804 = vpop.f32.mrb[0].mxu0
    %v5805 = vpop.f32.mrb[0].mxu0
    %v5806 = vpop.f32.mrb[0].mxu0
    %5807 = vdwg.mxu0
    %5808 = vmatprep.subr.bf16.mxu0 0
    %5809 = vmatpush1.bf16.msra.mxu0 %v4272
    %5810 = vmatprep.subr.bf16.mxu0 0
    %5811 = vmatpush1.bf16.msra.mxu0 %v4273
    %5812 = vmatprep.subr.bf16.mxu0 0
    %5813 = vmatpush1.bf16.msra.mxu0 %v4274
    %5814 = vmatprep.subr.bf16.mxu0 0
    %5815 = vmatpush1.bf16.msra.mxu0 %v4275
    %5816 = vmatprep.subr.bf16.mxu0 0
    %5817 = vmatpush1.bf16.msra.mxu0 %v4276
    %5818 = vmatprep.subr.bf16.mxu0 0
    %5819 = vmatpush1.bf16.msra.mxu0 %v4277
    %5820 = vmatprep.subr.bf16.mxu0 0
    %5821 = vmatpush1.bf16.msra.mxu0 %v4278
    %5822 = vmatprep.subr.bf16.mxu0 0
    %5823 = vmatpush1.bf16.msra.mxu0 %v4279
    %5824 = vmatprep.subr.bf16.mxu0 0
    %5825 = vmatpush1.bf16.msra.mxu0 %v4280
    %5826 = vmatprep.subr.bf16.mxu0 0
    %5827 = vmatpush1.bf16.msra.mxu0 %v4281
    %5828 = vmatprep.subr.bf16.mxu0 0
    %5829 = vmatpush1.bf16.msra.mxu0 %v4282
    %5830 = vmatprep.subr.bf16.mxu0 0
    %5831 = vmatpush1.bf16.msra.mxu0 %v4283
    %5832 = vmatprep.subr.bf16.mxu0 0
    %5833 = vmatpush1.bf16.msra.mxu0 %v4284
    %5834 = vmatprep.subr.bf16.mxu0 0
    %5835 = vmatpush1.bf16.msra.mxu0 %v4285
    %5836 = vmatprep.subr.bf16.mxu0 0
    %5837 = vmatpush1.bf16.msra.mxu0 %v4286
    %5838 = vmatprep.subr.bf16.mxu0 0
    %5839 = vmatpush1.bf16.msra.mxu0 %v4287
    %5840 = vmatprep.mubr.bf16.mxu0 %v1432
    %5841 = vmatmul.mubr.bf16.gmra.mrb[0].mxu0 %v1418
    %v5842 = vpop.f32.mrb[0].mxu0
    %v5843 = vadd.f32 %v5803, %v5842
    %v5844 = vpop.f32.mrb[0].mxu0
    %v5845 = vpop.f32.mrb[0].mxu0
    %v5846 = vpop.f32.mrb[0].mxu0
    %5847 = vdwg.mxu0
    %5848 = vmatprep.subr.bf16.mxu0 0
    %5849 = vmatpush1.bf16.msra.mxu0 %v4288
    %5850 = vmatprep.subr.bf16.mxu0 0
    %5851 = vmatpush1.bf16.msra.mxu0 %v4289
    %5852 = vmatprep.subr.bf16.mxu0 0
    %5853 = vmatpush1.bf16.msra.mxu0 %v4290
    %5854 = vmatprep.subr.bf16.mxu0 0
    %5855 = vmatpush1.bf16.msra.mxu0 %v4291
    %5856 = vmatprep.subr.bf16.mxu0 0
    %5857 = vmatpush1.bf16.msra.mxu0 %v4292
    %5858 = vmatprep.subr.bf16.mxu0 0
    %5859 = vmatpush1.bf16.msra.mxu0 %v4293
    %5860 = vmatprep.subr.bf16.mxu0 0
    %5861 = vmatpush1.bf16.msra.mxu0 %v4294
    %5862 = vmatprep.subr.bf16.mxu0 0
    %5863 = vmatpush1.bf16.msra.mxu0 %v4295
    %5864 = vmatprep.subr.bf16.mxu0 0
    %5865 = vmatpush1.bf16.msra.mxu0 %v4296
    %5866 = vmatprep.subr.bf16.mxu0 0
    %5867 = vmatpush1.bf16.msra.mxu0 %v4297
    %5868 = vmatprep.subr.bf16.mxu0 0
    %5869 = vmatpush1.bf16.msra.mxu0 %v4298
    %5870 = vmatprep.subr.bf16.mxu0 0
    %5871 = vmatpush1.bf16.msra.mxu0 %v4299
    %5872 = vmatprep.subr.bf16.mxu0 0
    %5873 = vmatpush1.bf16.msra.mxu0 %v4300
    %5874 = vmatprep.subr.bf16.mxu0 0
    %5875 = vmatpush1.bf16.msra.mxu0 %v4301
    %5876 = vmatprep.subr.bf16.mxu0 0
    %5877 = vmatpush1.bf16.msra.mxu0 %v4302
    %5878 = vmatprep.subr.bf16.mxu0 0
    %5879 = vmatpush1.bf16.msra.mxu0 %v4303
    %5880 = vmatprep.mubr.bf16.mxu0 %v1442
    %5881 = vmatmul.mubr.bf16.gmra.mrb[0].mxu0 %v1440
    %v5882 = vpop.f32.mrb[0].mxu0
    %v5883 = vadd.f32 %v5843, %v5882
    %v5884 = vpop.f32.mrb[0].mxu0
    %v5885 = vpop.f32.mrb[0].mxu0
    %v5886 = vpop.f32.mrb[0].mxu0
    %5887 = vdwg.mxu0
    %5888 = vmatprep.subr.bf16.mxu0 0
    %5889 = vmatpush1.bf16.msra.mxu0 %v4304
    %5890 = vmatprep.subr.bf16.mxu0 0
    %5891 = vmatpush1.bf16.msra.mxu0 %v4305
    %5892 = vmatprep.subr.bf16.mxu0 0
    %5893 = vmatpush1.bf16.msra.mxu0 %v4306
    %5894 = vmatprep.subr.bf16.mxu0 0
    %5895 = vmatpush1.bf16.msra.mxu0 %v4307
    %5896 = vmatprep.subr.bf16.mxu0 0
    %5897 = vmatpush1.bf16.msra.mxu0 %v4308
    %5898 = vmatprep.subr.bf16.mxu0 0
    %5899 = vmatpush1.bf16.msra.mxu0 %v4309
    %5900 = vmatprep.subr.bf16.mxu0 0
    %5901 = vmatpush1.bf16.msra.mxu0 %v4310
    %5902 = vmatprep.subr.bf16.mxu0 0
    %5903 = vmatpush1.bf16.msra.mxu0 %v4311
    %5904 = vmatprep.subr.bf16.mxu0 0
    %5905 = vmatpush1.bf16.msra.mxu0 %v4312
    %5906 = vmatprep.subr.bf16.mxu0 0
    %5907 = vmatpush1.bf16.msra.mxu0 %v4313
    %5908 = vmatprep.subr.bf16.mxu0 0
    %5909 = vmatpush1.bf16.msra.mxu0 %v4314
    %5910 = vmatprep.subr.bf16.mxu0 0
    %5911 = vmatpush1.bf16.msra.mxu0 %v4315
    %5912 = vmatprep.subr.bf16.mxu0 0
    %5913 = vmatpush1.bf16.msra.mxu0 %v4316
    %5914 = vmatprep.subr.bf16.mxu0 0
    %5915 = vmatpush1.bf16.msra.mxu0 %v4317
    %5916 = vmatprep.subr.bf16.mxu0 0
    %5917 = vmatpush1.bf16.msra.mxu0 %v4318
    %5918 = vmatprep.subr.bf16.mxu0 0
    %5919 = vmatpush1.bf16.msra.mxu0 %v4319
    %5920 = vmatprep.mubr.bf16.mxu0 %v1439
    %5921 = vmatmul.mubr.bf16.gmra.mrb[0].mxu0 %v1425
    %v5922 = vpop.f32.mrb[0].mxu0
    %v5923 = vadd.f32 %v5883, %v5922
    %v5924 = vpop.f32.mrb[0].mxu0
    %v5925 = vpop.f32.mrb[0].mxu0
    %v5926 = vpop.f32.mrb[0].mxu0
    %5927 = vdwg.mxu0
    %5928 = vmatprep.subr.bf16.mxu0 0
    %5929 = vmatpush1.bf16.msra.mxu0 %v4320
    %5930 = vmatprep.subr.bf16.mxu0 0
    %5931 = vmatpush1.bf16.msra.mxu0 %v4321
    %5932 = vmatprep.subr.bf16.mxu0 0
    %5933 = vmatpush1.bf16.msra.mxu0 %v4322
    %5934 = vmatprep.subr.bf16.mxu0 0
    %5935 = vmatpush1.bf16.msra.mxu0 %v4323
    %5936 = vmatprep.subr.bf16.mxu0 0
    %5937 = vmatpush1.bf16.msra.mxu0 %v4324
    %5938 = vmatprep.subr.bf16.mxu0 0
    %5939 = vmatpush1.bf16.msra.mxu0 %v4325
    %5940 = vmatprep.subr.bf16.mxu0 0
    %5941 = vmatpush1.bf16.msra.mxu0 %v4326
    %5942 = vmatprep.subr.bf16.mxu0 0
    %5943 = vmatpush1.bf16.msra.mxu0 %v4327
    %5944 = vmatprep.subr.bf16.mxu0 0
    %5945 = vmatpush1.bf16.msra.mxu0 %v4328
    %5946 = vmatprep.subr.bf16.mxu0 0
    %5947 = vmatpush1.bf16.msra.mxu0 %v4329
    %5948 = vmatprep.subr.bf16.mxu0 0
    %5949 = vmatpush1.bf16.msra.mxu0 %v4330
    %5950 = vmatprep.subr.bf16.mxu0 0
    %5951 = vmatpush1.bf16.msra.mxu0 %v4331
    %5952 = vmatprep.subr.bf16.mxu0 0
    %5953 = vmatpush1.bf16.msra.mxu0 %v4332
    %5954 = vmatprep.subr.bf16.mxu0 0
    %5955 = vmatpush1.bf16.msra.mxu0 %v4333
    %5956 = vmatprep.subr.bf16.mxu0 0
    %5957 = vmatpush1.bf16.msra.mxu0 %v4334
    %5958 = vmatprep.subr.bf16.mxu0 0
    %5959 = vmatpush1.bf16.msra.mxu0 %v4335
    %5960 = vmatprep.mubr.bf16.mxu0 %v1443
    %5961 = vmatmul.mubr.bf16.gmra.mrb[0].mxu0 %v1441
    %v5962 = vpop.f32.mrb[0].mxu0
    %v5963 = vadd.f32 %v5923, %v5962
    %v5964 = vpop.f32.mrb[0].mxu0
    %v5965 = vpop.f32.mrb[0].mxu0
    %v5966 = vpop.f32.mrb[0].mxu0
    %5967 = vdwg.mxu0
    %5968 = vmatprep.subr.bf16.mxu0 0
    %5969 = vmatpush1.bf16.msra.mxu0 %v4336
    %5970 = vmatprep.subr.bf16.mxu0 0
    %5971 = vmatpush1.bf16.msra.mxu0 %v4337
    %5972 = vmatprep.subr.bf16.mxu0 0
    %5973 = vmatpush1.bf16.msra.mxu0 %v4338
    %5974 = vmatprep.subr.bf16.mxu0 0
    %5975 = vmatpush1.bf16.msra.mxu0 %v4339
    %5976 = vmatprep.subr.bf16.mxu0 0
    %5977 = vmatpush1.bf16.msra.mxu0 %v4340
    %5978 = vmatprep.subr.bf16.mxu0 0
    %5979 = vmatpush1.bf16.msra.mxu0 %v4341
    %5980 = vmatprep.subr.bf16.mxu0 0
    %5981 = vmatpush1.bf16.msra.mxu0 %v4342
    %5982 = vmatprep.subr.bf16.mxu0 0
    %5983 = vmatpush1.bf16.msra.mxu0 %v4343
    %5984 = vmatprep.subr.bf16.mxu0 0
    %5985 = vmatpush1.bf16.msra.mxu0 %v4344
    %5986 = vmatprep.subr.bf16.mxu0 0
    %5987 = vmatpush1.bf16.msra.mxu0 %v4345
    %5988 = vmatprep.subr.bf16.mxu0 0
    %5989 = vmatpush1.bf16.msra.mxu0 %v4346
    %5990 = vmatprep.subr.bf16.mxu0 0
    %5991 = vmatpush1.bf16.msra.mxu0 %v4347
    %5992 = vmatprep.subr.bf16.mxu0 0
    %5993 = vmatpush1.bf16.msra.mxu0 %v4348
    %5994 = vmatprep.subr.bf16.mxu0 0
    %5995 = vmatpush1.bf16.msra.mxu0 %v4349
    %5996 = vmatprep.subr.bf16.mxu0 0
    %5997 = vmatpush1.bf16.msra.mxu0 %v4350
    %5998 = vmatprep.subr.bf16.mxu0 0
    %5999 = vmatpush1.bf16.msra.mxu0 %v4351
    %6000 = vmatprep.mubr.bf16.mxu0 %v1481
    %6001 = vmatmul.mubr.bf16.gmra.mrb[0].mxu0 %v1467
    %v6002 = vpop.f32.mrb[0].mxu0
    %v6003 = vadd.f32 %v5963, %v6002
    %v6004 = vpop.f32.mrb[0].mxu0
    %v6005 = vpop.f32.mrb[0].mxu0
    %v6006 = vpop.f32.mrb[0].mxu0
    %6007 = vdwg.mxu0
    %6008 = vmatprep.subr.bf16.mxu0 0
    %6009 = vmatpush1.bf16.msra.mxu0 %v4352
    %6010 = vmatprep.subr.bf16.mxu0 0
    %6011 = vmatpush1.bf16.msra.mxu0 %v4353
    %6012 = vmatprep.subr.bf16.mxu0 0
    %6013 = vmatpush1.bf16.msra.mxu0 %v4354
    %6014 = vmatprep.subr.bf16.mxu0 0
    %6015 = vmatpush1.bf16.msra.mxu0 %v4355
    %6016 = vmatprep.subr.bf16.mxu0 0
    %6017 = vmatpush1.bf16.msra.mxu0 %v4356
    %6018 = vmatprep.subr.bf16.mxu0 0
    %6019 = vmatpush1.bf16.msra.mxu0 %v4357
    %6020 = vmatprep.subr.bf16.mxu0 0
    %6021 = vmatpush1.bf16.msra.mxu0 %v4358
    %6022 = vmatprep.subr.bf16.mxu0 0
    %6023 = vmatpush1.bf16.msra.mxu0 %v4359
    %6024 = vmatprep.subr.bf16.mxu0 0
    %6025 = vmatpush1.bf16.msra.mxu0 %v4360
    %6026 = vmatprep.subr.bf16.mxu0 0
    %6027 = vmatpush1.bf16.msra.mxu0 %v4361
    %6028 = vmatprep.subr.bf16.mxu0 0
    %6029 = vmatpush1.bf16.msra.mxu0 %v4362
    %6030 = vmatprep.subr.bf16.mxu0 0
    %6031 = vmatpush1.bf16.msra.mxu0 %v4363
    %6032 = vmatprep.subr.bf16.mxu0 0
    %6033 = vmatpush1.bf16.msra.mxu0 %v4364
    %6034 = vmatprep.subr.bf16.mxu0 0
    %6035 = vmatpush1.bf16.msra.mxu0 %v4365
    %6036 = vmatprep.subr.bf16.mxu0 0
    %6037 = vmatpush1.bf16.msra.mxu0 %v4366
    %6038 = vmatprep.subr.bf16.mxu0 0
    %6039 = vmatpush1.bf16.msra.mxu0 %v4367
    %6040 = vmatprep.mubr.bf16.mxu0 %v1491
    %6041 = vmatmul.mubr.bf16.gmra.mrb[0].mxu0 %v1489
    %v6042 = vpop.f32.mrb[0].mxu0
    %v6043 = vadd.f32 %v6003, %v6042
    %v6044 = vpop.f32.mrb[0].mxu0
    %v6045 = vpop.f32.mrb[0].mxu0
    %v6046 = vpop.f32.mrb[0].mxu0
    %6047 = vdwg.mxu0
    %6048 = vmatprep.subr.bf16.mxu0 0
    %6049 = vmatpush1.bf16.msra.mxu0 %v4368
    %6050 = vmatprep.subr.bf16.mxu0 0
    %6051 = vmatpush1.bf16.msra.mxu0 %v4369
    %6052 = vmatprep.subr.bf16.mxu0 0
    %6053 = vmatpush1.bf16.msra.mxu0 %v4370
    %6054 = vmatprep.subr.bf16.mxu0 0
    %6055 = vmatpush1.bf16.msra.mxu0 %v4371
    %6056 = vmatprep.subr.bf16.mxu0 0
    %6057 = vmatpush1.bf16.msra.mxu0 %v4372
    %6058 = vmatprep.subr.bf16.mxu0 0
    %6059 = vmatpush1.bf16.msra.mxu0 %v4373
    %6060 = vmatprep.subr.bf16.mxu0 0
    %6061 = vmatpush1.bf16.msra.mxu0 %v4374
    %6062 = vmatprep.subr.bf16.mxu0 0
    %6063 = vmatpush1.bf16.msra.mxu0 %v4375
    %6064 = vmatprep.subr.bf16.mxu0 0
    %6065 = vmatpush1.bf16.msra.mxu0 %v4376
    %6066 = vmatprep.subr.bf16.mxu0 0
    %6067 = vmatpush1.bf16.msra.mxu0 %v4377
    %6068 = vmatprep.subr.bf16.mxu0 0
    %6069 = vmatpush1.bf16.msra.mxu0 %v4378
    %6070 = vmatprep.subr.bf16.mxu0 0
    %6071 = vmatpush1.bf16.msra.mxu0 %v4379
    %6072 = vmatprep.subr.bf16.mxu0 0
    %6073 = vmatpush1.bf16.msra.mxu0 %v4380
    %6074 = vmatprep.subr.bf16.mxu0 0
    %6075 = vmatpush1.bf16.msra.mxu0 %v4381
    %6076 = vmatprep.subr.bf16.mxu0 0
    %6077 = vmatpush1.bf16.msra.mxu0 %v4382
    %6078 = vmatprep.subr.bf16.mxu0 0
    %6079 = vmatpush1.bf16.msra.mxu0 %v4383
    %6080 = vmatprep.mubr.bf16.mxu0 %v1488
    %6081 = vmatmul.mubr.bf16.gmra.mrb[0].mxu0 %v1474
    %v6082 = vpop.f32.mrb[0].mxu0
    %v6083 = vadd.f32 %v6043, %v6082
    %v6084 = vpop.f32.mrb[0].mxu0
    %v6085 = vpop.f32.mrb[0].mxu0
    %v6086 = vpop.f32.mrb[0].mxu0
    %6087 = vdwg.mxu0
    %6088 = vmatprep.subr.bf16.mxu0 0
    %6089 = vmatpush1.bf16.msra.mxu0 %v4384
    %6090 = vmatprep.subr.bf16.mxu0 0
    %6091 = vmatpush1.bf16.msra.mxu0 %v4385
    %6092 = vmatprep.subr.bf16.mxu0 0
    %6093 = vmatpush1.bf16.msra.mxu0 %v4386
    %6094 = vmatprep.subr.bf16.mxu0 0
    %6095 = vmatpush1.bf16.msra.mxu0 %v4387
    %6096 = vmatprep.subr.bf16.mxu0 0
    %6097 = vmatpush1.bf16.msra.mxu0 %v4388
    %6098 = vmatprep.subr.bf16.mxu0 0
    %6099 = vmatpush1.bf16.msra.mxu0 %v4389
    %6100 = vmatprep.subr.bf16.mxu0 0
    %6101 = vmatpush1.bf16.msra.mxu0 %v4390
    %6102 = vmatprep.subr.bf16.mxu0 0
    %6103 = vmatpush1.bf16.msra.mxu0 %v4391
    %6104 = vmatprep.subr.bf16.mxu0 0
    %6105 = vmatpush1.bf16.msra.mxu0 %v4392
    %6106 = vmatprep.subr.bf16.mxu0 0
    %6107 = vmatpush1.bf16.msra.mxu0 %v4393
    %6108 = vmatprep.subr.bf16.mxu0 0
    %6109 = vmatpush1.bf16.msra.mxu0 %v4394
    %6110 = vmatprep.subr.bf16.mxu0 0
    %6111 = vmatpush1.bf16.msra.mxu0 %v4395
    %6112 = vmatprep.subr.bf16.mxu0 0
    %6113 = vmatpush1.bf16.msra.mxu0 %v4396
    %6114 = vmatprep.subr.bf16.mxu0 0
    %6115 = vmatpush1.bf16.msra.mxu0 %v4397
    %6116 = vmatprep.subr.bf16.mxu0 0
    %6117 = vmatpush1.bf16.msra.mxu0 %v4398
    %6118 = vmatprep.subr.bf16.mxu0 0
    %6119 = vmatpush1.bf16.msra.mxu0 %v4399
    %6120 = vmatprep.mubr.bf16.mxu0 %v1492
    %6121 = vmatmul.mubr.bf16.gmra.mrb[0].mxu0 %v1490
    %v6122 = vpop.f32.mrb[0].mxu0
    %v6123 = vadd.f32 %v6083, %v6122
    %v6124 = vpop.f32.mrb[0].mxu0
    %v6125 = vpop.f32.mrb[0].mxu0
    %v6126 = vpop.f32.mrb[0].mxu0
    %6127 = vdwg.mxu0
    %6128 = vmatprep.subr.bf16.mxu0 0
    %6129 = vmatpush1.bf16.msra.mxu0 %v4400
    %6130 = vmatprep.subr.bf16.mxu0 0
    %6131 = vmatpush1.bf16.msra.mxu0 %v4401
    %6132 = vmatprep.subr.bf16.mxu0 0
    %6133 = vmatpush1.bf16.msra.mxu0 %v4402
    %6134 = vmatprep.subr.bf16.mxu0 0
    %6135 = vmatpush1.bf16.msra.mxu0 %v4403
    %6136 = vmatprep.subr.bf16.mxu0 0
    %6137 = vmatpush1.bf16.msra.mxu0 %v4404
    %6138 = vmatprep.subr.bf16.mxu0 0
    %6139 = vmatpush1.bf16.msra.mxu0 %v4405
    %6140 = vmatprep.subr.bf16.mxu0 0
    %6141 = vmatpush1.bf16.msra.mxu0 %v4406
    %6142 = vmatprep.subr.bf16.mxu0 0
    %6143 = vmatpush1.bf16.msra.mxu0 %v4407
    %6144 = vmatprep.subr.bf16.mxu0 0
    %6145 = vmatpush1.bf16.msra.mxu0 %v4408
    %6146 = vmatprep.subr.bf16.mxu0 0
    %6147 = vmatpush1.bf16.msra.mxu0 %v4409
    %6148 = vmatprep.subr.bf16.mxu0 0
    %6149 = vmatpush1.bf16.msra.mxu0 %v4410
    %6150 = vmatprep.subr.bf16.mxu0 0
    %6151 = vmatpush1.bf16.msra.mxu0 %v4411
    %6152 = vmatprep.subr.bf16.mxu0 0
    %6153 = vmatpush1.bf16.msra.mxu0 %v4412
    %6154 = vmatprep.subr.bf16.mxu0 0
    %6155 = vmatpush1.bf16.msra.mxu0 %v4413
    %6156 = vmatprep.subr.bf16.mxu0 0
    %6157 = vmatpush1.bf16.msra.mxu0 %v4414
    %6158 = vmatprep.subr.bf16.mxu0 0
    %6159 = vmatpush1.bf16.msra.mxu0 %v4415
    %6160 = vmatprep.mubr.bf16.mxu0 %v1530
    %6161 = vmatmul.mubr.bf16.gmra.mrb[0].mxu0 %v1516
    %v6162 = vpop.f32.mrb[0].mxu0
    %v6163 = vadd.f32 %v6123, %v6162
    %v6164 = vpop.f32.mrb[0].mxu0
    %v6165 = vpop.f32.mrb[0].mxu0
    %v6166 = vpop.f32.mrb[0].mxu0
    %6167 = vdwg.mxu0
    %6168 = vmatprep.subr.bf16.mxu0 0
    %6169 = vmatpush1.bf16.msra.mxu0 %v4416
    %6170 = vmatprep.subr.bf16.mxu0 0
    %6171 = vmatpush1.bf16.msra.mxu0 %v4417
    %6172 = vmatprep.subr.bf16.mxu0 0
    %6173 = vmatpush1.bf16.msra.mxu0 %v4418
    %6174 = vmatprep.subr.bf16.mxu0 0
    %6175 = vmatpush1.bf16.msra.mxu0 %v4419
    %6176 = vmatprep.subr.bf16.mxu0 0
    %6177 = vmatpush1.bf16.msra.mxu0 %v4420
    %6178 = vmatprep.subr.bf16.mxu0 0
    %6179 = vmatpush1.bf16.msra.mxu0 %v4421
    %6180 = vmatprep.subr.bf16.mxu0 0
    %6181 = vmatpush1.bf16.msra.mxu0 %v4422
    %6182 = vmatprep.subr.bf16.mxu0 0
    %6183 = vmatpush1.bf16.msra.mxu0 %v4423
    %6184 = vmatprep.subr.bf16.mxu0 0
    %6185 = vmatpush1.bf16.msra.mxu0 %v4424
    %6186 = vmatprep.subr.bf16.mxu0 0
    %6187 = vmatpush1.bf16.msra.mxu0 %v4425
    %6188 = vmatprep.subr.bf16.mxu0 0
    %6189 = vmatpush1.bf16.msra.mxu0 %v4426
    %6190 = vmatprep.subr.bf16.mxu0 0
    %6191 = vmatpush1.bf16.msra.mxu0 %v4427
    %6192 = vmatprep.subr.bf16.mxu0 0
    %6193 = vmatpush1.bf16.msra.mxu0 %v4428
    %6194 = vmatprep.subr.bf16.mxu0 0
    %6195 = vmatpush1.bf16.msra.mxu0 %v4429
    %6196 = vmatprep.subr.bf16.mxu0 0
    %6197 = vmatpush1.bf16.msra.mxu0 %v4430
    %6198 = vmatprep.subr.bf16.mxu0 0
    %6199 = vmatpush1.bf16.msra.mxu0 %v4431
    %6200 = vmatprep.mubr.bf16.mxu0 %v1540
    %6201 = vmatmul.mubr.bf16.gmra.mrb[0].mxu0 %v1538
    %v6202 = vpop.f32.mrb[0].mxu0
    %v6203 = vadd.f32 %v6163, %v6202
    %v6204 = vpop.f32.mrb[0].mxu0
    %v6205 = vpop.f32.mrb[0].mxu0
    %v6206 = vpop.f32.mrb[0].mxu0
    %6207 = vdwg.mxu0
    %6208 = vmatprep.subr.bf16.mxu0 0
    %6209 = vmatpush1.bf16.msra.mxu0 %v4432
    %6210 = vmatprep.subr.bf16.mxu0 0
    %6211 = vmatpush1.bf16.msra.mxu0 %v4433
    %6212 = vmatprep.subr.bf16.mxu0 0
    %6213 = vmatpush1.bf16.msra.mxu0 %v4434
    %6214 = vmatprep.subr.bf16.mxu0 0
    %6215 = vmatpush1.bf16.msra.mxu0 %v4435
    %6216 = vmatprep.subr.bf16.mxu0 0
    %6217 = vmatpush1.bf16.msra.mxu0 %v4436
    %6218 = vmatprep.subr.bf16.mxu0 0
    %6219 = vmatpush1.bf16.msra.mxu0 %v4437
    %6220 = vmatprep.subr.bf16.mxu0 0
    %6221 = vmatpush1.bf16.msra.mxu0 %v4438
    %6222 = vmatprep.subr.bf16.mxu0 0
    %6223 = vmatpush1.bf16.msra.mxu0 %v4439
    %6224 = vmatprep.subr.bf16.mxu0 0
    %6225 = vmatpush1.bf16.msra.mxu0 %v4440
    %6226 = vmatprep.subr.bf16.mxu0 0
    %6227 = vmatpush1.bf16.msra.mxu0 %v4441
    %6228 = vmatprep.subr.bf16.mxu0 0
    %6229 = vmatpush1.bf16.msra.mxu0 %v4442
    %6230 = vmatprep.subr.bf16.mxu0 0
    %6231 = vmatpush1.bf16.msra.mxu0 %v4443
    %6232 = vmatprep.subr.bf16.mxu0 0
    %6233 = vmatpush1.bf16.msra.mxu0 %v4444
    %6234 = vmatprep.subr.bf16.mxu0 0
    %6235 = vmatpush1.bf16.msra.mxu0 %v4445
    %6236 = vmatprep.subr.bf16.mxu0 0
    %6237 = vmatpush1.bf16.msra.mxu0 %v4446
    %6238 = vmatprep.subr.bf16.mxu0 0
    %6239 = vmatpush1.bf16.msra.mxu0 %v4447
    %6240 = vmatprep.mubr.bf16.mxu0 %v1537
    %6241 = vmatmul.mubr.bf16.gmra.mrb[0].mxu0 %v1523
    %v6242 = vpop.f32.mrb[0].mxu0
    %v6243 = vadd.f32 %v6203, %v6242
    %v6244 = vpop.f32.mrb[0].mxu0
    %v6245 = vpop.f32.mrb[0].mxu0
    %v6246 = vpop.f32.mrb[0].mxu0
    %6247 = vdwg.mxu0
    %6248 = vmatprep.subr.bf16.mxu0 0
    %6249 = vmatpush1.bf16.msra.mxu0 %v4448
    %6250 = vmatprep.subr.bf16.mxu0 0
    %6251 = vmatpush1.bf16.msra.mxu0 %v4449
    %6252 = vmatprep.subr.bf16.mxu0 0
    %6253 = vmatpush1.bf16.msra.mxu0 %v4450
    %6254 = vmatprep.subr.bf16.mxu0 0
    %6255 = vmatpush1.bf16.msra.mxu0 %v4451
    %6256 = vmatprep.subr.bf16.mxu0 0
    %6257 = vmatpush1.bf16.msra.mxu0 %v4452
    %6258 = vmatprep.subr.bf16.mxu0 0
    %6259 = vmatpush1.bf16.msra.mxu0 %v4453
    %6260 = vmatprep.subr.bf16.mxu0 0
    %6261 = vmatpush1.bf16.msra.mxu0 %v4454
    %6262 = vmatprep.subr.bf16.mxu0 0
    %6263 = vmatpush1.bf16.msra.mxu0 %v4455
    %6264 = vmatprep.subr.bf16.mxu0 0
    %6265 = vmatpush1.bf16.msra.mxu0 %v4456
    %6266 = vmatprep.subr.bf16.mxu0 0
    %6267 = vmatpush1.bf16.msra.mxu0 %v4457
    %6268 = vmatprep.subr.bf16.mxu0 0
    %6269 = vmatpush1.bf16.msra.mxu0 %v4458
    %6270 = vmatprep.subr.bf16.mxu0 0
    %6271 = vmatpush1.bf16.msra.mxu0 %v4459
    %6272 = vmatprep.subr.bf16.mxu0 0
    %6273 = vmatpush1.bf16.msra.mxu0 %v4460
    %6274 = vmatprep.subr.bf16.mxu0 0
    %6275 = vmatpush1.bf16.msra.mxu0 %v4461
    %6276 = vmatprep.subr.bf16.mxu0 0
    %6277 = vmatpush1.bf16.msra.mxu0 %v4462
    %6278 = vmatprep.subr.bf16.mxu0 0
    %6279 = vmatpush1.bf16.msra.mxu0 %v4463
    %6280 = vmatprep.mubr.bf16.mxu0 %v1541
    %6281 = vmatmul.mubr.bf16.gmra.mrb[0].mxu0 %v1539
    %v6282 = vpop.f32.mrb[0].mxu0
    %v6283 = vadd.f32 %v6243, %v6282
    %v6284 = vpop.f32.mrb[0].mxu0
    %v6285 = vpop.f32.mrb[0].mxu0
    %v6286 = vpop.f32.mrb[0].mxu0
    %6287 = vdwg.mxu0
    %6288 = vmatprep.subr.bf16.mxu0 0
    %6289 = vmatpush1.bf16.msra.mxu0 %v4464
    %6290 = vmatprep.subr.bf16.mxu0 0
    %6291 = vmatpush1.bf16.msra.mxu0 %v4465
    %6292 = vmatprep.subr.bf16.mxu0 0
    %6293 = vmatpush1.bf16.msra.mxu0 %v4466
    %6294 = vmatprep.subr.bf16.mxu0 0
    %6295 = vmatpush1.bf16.msra.mxu0 %v4467
    %6296 = vmatprep.subr.bf16.mxu0 0
    %6297 = vmatpush1.bf16.msra.mxu0 %v4468
    %6298 = vmatprep.subr.bf16.mxu0 0
    %6299 = vmatpush1.bf16.msra.mxu0 %v4469
    %6300 = vmatprep.subr.bf16.mxu0 0
    %6301 = vmatpush1.bf16.msra.mxu0 %v4470
    %6302 = vmatprep.subr.bf16.mxu0 0
    %6303 = vmatpush1.bf16.msra.mxu0 %v4471
    %6304 = vmatprep.subr.bf16.mxu0 0
    %6305 = vmatpush1.bf16.msra.mxu0 %v4472
    %6306 = vmatprep.subr.bf16.mxu0 0
    %6307 = vmatpush1.bf16.msra.mxu0 %v4473
    %6308 = vmatprep.subr.bf16.mxu0 0
    %6309 = vmatpush1.bf16.msra.mxu0 %v4474
    %6310 = vmatprep.subr.bf16.mxu0 0
    %6311 = vmatpush1.bf16.msra.mxu0 %v4475
    %6312 = vmatprep.subr.bf16.mxu0 0
    %6313 = vmatpush1.bf16.msra.mxu0 %v4476
    %6314 = vmatprep.subr.bf16.mxu0 0
    %6315 = vmatpush1.bf16.msra.mxu0 %v4477
    %6316 = vmatprep.subr.bf16.mxu0 0
    %6317 = vmatpush1.bf16.msra.mxu0 %v4478
    %6318 = vmatprep.subr.bf16.mxu0 0
    %6319 = vmatpush1.bf16.msra.mxu0 %v4479
    %6320 = vmatprep.mubr.bf16.mxu0 %v1579
    %6321 = vmatmul.mubr.bf16.gmra.mrb[0].mxu0 %v1565
    %v6322 = vpop.f32.mrb[0].mxu0
    %v6323 = vadd.f32 %v6283, %v6322
    %v6324 = vpop.f32.mrb[0].mxu0
    %v6325 = vpop.f32.mrb[0].mxu0
    %v6326 = vpop.f32.mrb[0].mxu0
    %6327 = vdwg.mxu0
    %6328 = vmatprep.subr.bf16.mxu0 0
    %6329 = vmatpush1.bf16.msra.mxu0 %v4480
    %6330 = vmatprep.subr.bf16.mxu0 0
    %6331 = vmatpush1.bf16.msra.mxu0 %v4481
    %6332 = vmatprep.subr.bf16.mxu0 0
    %6333 = vmatpush1.bf16.msra.mxu0 %v4482
    %6334 = vmatprep.subr.bf16.mxu0 0
    %6335 = vmatpush1.bf16.msra.mxu0 %v4483
    %6336 = vmatprep.subr.bf16.mxu0 0
    %6337 = vmatpush1.bf16.msra.mxu0 %v4484
    %6338 = vmatprep.subr.bf16.mxu0 0
    %6339 = vmatpush1.bf16.msra.mxu0 %v4485
    %6340 = vmatprep.subr.bf16.mxu0 0
    %6341 = vmatpush1.bf16.msra.mxu0 %v4486
    %6342 = vmatprep.subr.bf16.mxu0 0
    %6343 = vmatpush1.bf16.msra.mxu0 %v4487
    %6344 = vmatprep.subr.bf16.mxu0 0
    %6345 = vmatpush1.bf16.msra.mxu0 %v4488
    %6346 = vmatprep.subr.bf16.mxu0 0
    %6347 = vmatpush1.bf16.msra.mxu0 %v4489
    %6348 = vmatprep.subr.bf16.mxu0 0
    %6349 = vmatpush1.bf16.msra.mxu0 %v4490
    %6350 = vmatprep.subr.bf16.mxu0 0
    %6351 = vmatpush1.bf16.msra.mxu0 %v4491
    %6352 = vmatprep.subr.bf16.mxu0 0
    %6353 = vmatpush1.bf16.msra.mxu0 %v4492
    %6354 = vmatprep.subr.bf16.mxu0 0
    %6355 = vmatpush1.bf16.msra.mxu0 %v4493
    %6356 = vmatprep.subr.bf16.mxu0 0
    %6357 = vmatpush1.bf16.msra.mxu0 %v4494
    %6358 = vmatprep.subr.bf16.mxu0 0
    %6359 = vmatpush1.bf16.msra.mxu0 %v4495
    %6360 = vmatprep.mubr.bf16.mxu0 %v1589
    %6361 = vmatmul.mubr.bf16.gmra.mrb[0].mxu0 %v1587
    %v6362 = vpop.f32.mrb[0].mxu0
    %v6363 = vadd.f32 %v6323, %v6362
    %v6364 = vpop.f32.mrb[0].mxu0
    %v6365 = vpop.f32.mrb[0].mxu0
    %v6366 = vpop.f32.mrb[0].mxu0
    %6367 = vdwg.mxu0
    %6368 = vmatprep.subr.bf16.mxu0 0
    %6369 = vmatpush1.bf16.msra.mxu0 %v4496
    %6370 = vmatprep.subr.bf16.mxu0 0
    %6371 = vmatpush1.bf16.msra.mxu0 %v4497
    %6372 = vmatprep.subr.bf16.mxu0 0
    %6373 = vmatpush1.bf16.msra.mxu0 %v4498
    %6374 = vmatprep.subr.bf16.mxu0 0
    %6375 = vmatpush1.bf16.msra.mxu0 %v4499
    %6376 = vmatprep.subr.bf16.mxu0 0
    %6377 = vmatpush1.bf16.msra.mxu0 %v4500
    %6378 = vmatprep.subr.bf16.mxu0 0
    %6379 = vmatpush1.bf16.msra.mxu0 %v4501
    %6380 = vmatprep.subr.bf16.mxu0 0
    %6381 = vmatpush1.bf16.msra.mxu0 %v4502
    %6382 = vmatprep.subr.bf16.mxu0 0
    %6383 = vmatpush1.bf16.msra.mxu0 %v4503
    %6384 = vmatprep.subr.bf16.mxu0 0
    %6385 = vmatpush1.bf16.msra.mxu0 %v4504
    %6386 = vmatprep.subr.bf16.mxu0 0
    %6387 = vmatpush1.bf16.msra.mxu0 %v4505
    %6388 = vmatprep.subr.bf16.mxu0 0
    %6389 = vmatpush1.bf16.msra.mxu0 %v4506
    %6390 = vmatprep.subr.bf16.mxu0 0
    %6391 = vmatpush1.bf16.msra.mxu0 %v4507
    %6392 = vmatprep.subr.bf16.mxu0 0
    %6393 = vmatpush1.bf16.msra.mxu0 %v4508
    %6394 = vmatprep.subr.bf16.mxu0 0
    %6395 = vmatpush1.bf16.msra.mxu0 %v4509
    %6396 = vmatprep.subr.bf16.mxu0 0
    %6397 = vmatpush1.bf16.msra.mxu0 %v4510
    %6398 = vmatprep.subr.bf16.mxu0 0
    %6399 = vmatpush1.bf16.msra.mxu0 %v4511
    %6400 = vmatprep.mubr.bf16.mxu0 %v1586
    %6401 = vmatmul.mubr.bf16.gmra.mrb[0].mxu0 %v1572
    %v6402 = vpop.f32.mrb[0].mxu0
    %v6403 = vadd.f32 %v6363, %v6402
    %v6404 = vpop.f32.mrb[0].mxu0
    %v6405 = vpop.f32.mrb[0].mxu0
    %v6406 = vpop.f32.mrb[0].mxu0
    %6407 = vdwg.mxu0
    %6408 = vmatprep.subr.bf16.mxu0 0
    %6409 = vmatpush1.bf16.msra.mxu0 %v4512
    %6410 = vmatprep.subr.bf16.mxu0 0
    %6411 = vmatpush1.bf16.msra.mxu0 %v4513
    %6412 = vmatprep.subr.bf16.mxu0 0
    %6413 = vmatpush1.bf16.msra.mxu0 %v4514
    %6414 = vmatprep.subr.bf16.mxu0 0
    %6415 = vmatpush1.bf16.msra.mxu0 %v4515
    %6416 = vmatprep.subr.bf16.mxu0 0
    %6417 = vmatpush1.bf16.msra.mxu0 %v4516
    %6418 = vmatprep.subr.bf16.mxu0 0
    %6419 = vmatpush1.bf16.msra.mxu0 %v4517
    %6420 = vmatprep.subr.bf16.mxu0 0
    %6421 = vmatpush1.bf16.msra.mxu0 %v4518
    %6422 = vmatprep.subr.bf16.mxu0 0
    %6423 = vmatpush1.bf16.msra.mxu0 %v4519
    %6424 = vmatprep.subr.bf16.mxu0 0
    %6425 = vmatpush1.bf16.msra.mxu0 %v4520
    %6426 = vmatprep.subr.bf16.mxu0 0
    %6427 = vmatpush1.bf16.msra.mxu0 %v4521
    %6428 = vmatprep.subr.bf16.mxu0 0
    %6429 = vmatpush1.bf16.msra.mxu0 %v4522
    %6430 = vmatprep.subr.bf16.mxu0 0
    %6431 = vmatpush1.bf16.msra.mxu0 %v4523
    %6432 = vmatprep.subr.bf16.mxu0 0
    %6433 = vmatpush1.bf16.msra.mxu0 %v4524
    %6434 = vmatprep.subr.bf16.mxu0 0
    %6435 = vmatpush1.bf16.msra.mxu0 %v4525
    %6436 = vmatprep.subr.bf16.mxu0 0
    %6437 = vmatpush1.bf16.msra.mxu0 %v4526
    %6438 = vmatprep.subr.bf16.mxu0 0
    %6439 = vmatpush1.bf16.msra.mxu0 %v4527
    %6440 = vmatprep.mubr.bf16.mxu0 %v1590
    %6441 = vmatmul.mubr.bf16.gmra.mrb[0].mxu0 %v1588
    %v6442 = vpop.f32.mrb[0].mxu0
    %v6443 = vadd.f32 %v6403, %v6442
    %v6444 = vpop.f32.mrb[0].mxu0
    %v6445 = vpop.f32.mrb[0].mxu0
    %v6446 = vpop.f32.mrb[0].mxu0
    %6447 = vdwg.mxu0
    %6448 = vmatprep.subr.bf16.mxu0 0
    %6449 = vmatpush1.bf16.msra.mxu0 %v4528
    %6450 = vmatprep.subr.bf16.mxu0 0
    %6451 = vmatpush1.bf16.msra.mxu0 %v4529
    %6452 = vmatprep.subr.bf16.mxu0 0
    %6453 = vmatpush1.bf16.msra.mxu0 %v4530
    %6454 = vmatprep.subr.bf16.mxu0 0
    %6455 = vmatpush1.bf16.msra.mxu0 %v4531
    %6456 = vmatprep.subr.bf16.mxu0 0
    %6457 = vmatpush1.bf16.msra.mxu0 %v4532
    %6458 = vmatprep.subr.bf16.mxu0 0
    %6459 = vmatpush1.bf16.msra.mxu0 %v4533
    %6460 = vmatprep.subr.bf16.mxu0 0
    %6461 = vmatpush1.bf16.msra.mxu0 %v4534
    %6462 = vmatprep.subr.bf16.mxu0 0
    %6463 = vmatpush1.bf16.msra.mxu0 %v4535
    %6464 = vmatprep.subr.bf16.mxu0 0
    %6465 = vmatpush1.bf16.msra.mxu0 %v4536
    %6466 = vmatprep.subr.bf16.mxu0 0
    %6467 = vmatpush1.bf16.msra.mxu0 %v4537
    %6468 = vmatprep.subr.bf16.mxu0 0
    %6469 = vmatpush1.bf16.msra.mxu0 %v4538
    %6470 = vmatprep.subr.bf16.mxu0 0
    %6471 = vmatpush1.bf16.msra.mxu0 %v4539
    %6472 = vmatprep.subr.bf16.mxu0 0
    %6473 = vmatpush1.bf16.msra.mxu0 %v4540
    %6474 = vmatprep.subr.bf16.mxu0 0
    %6475 = vmatpush1.bf16.msra.mxu0 %v4541
    %6476 = vmatprep.subr.bf16.mxu0 0
    %6477 = vmatpush1.bf16.msra.mxu0 %v4542
    %6478 = vmatprep.subr.bf16.mxu0 0
    %6479 = vmatpush1.bf16.msra.mxu0 %v4543
    %6480 = vmatprep.mubr.bf16.mxu0 %v1628
    %6481 = vmatmul.mubr.bf16.gmra.mrb[0].mxu0 %v1614
    %v6482 = vpop.f32.mrb[0].mxu0
    %v6483 = vadd.f32 %v6443, %v6482
    %v6484 = vpop.f32.mrb[0].mxu0
    %v6485 = vpop.f32.mrb[0].mxu0
    %v6486 = vpop.f32.mrb[0].mxu0
    %6487 = vdwg.mxu0
    %6488 = vmatprep.subr.bf16.mxu0 0
    %6489 = vmatpush1.bf16.msra.mxu0 %v4544
    %6490 = vmatprep.subr.bf16.mxu0 0
    %6491 = vmatpush1.bf16.msra.mxu0 %v4545
    %6492 = vmatprep.subr.bf16.mxu0 0
    %6493 = vmatpush1.bf16.msra.mxu0 %v4546
    %6494 = vmatprep.subr.bf16.mxu0 0
    %6495 = vmatpush1.bf16.msra.mxu0 %v4547
    %6496 = vmatprep.subr.bf16.mxu0 0
    %6497 = vmatpush1.bf16.msra.mxu0 %v4548
    %6498 = vmatprep.subr.bf16.mxu0 0
    %6499 = vmatpush1.bf16.msra.mxu0 %v4549
    %6500 = vmatprep.subr.bf16.mxu0 0
    %6501 = vmatpush1.bf16.msra.mxu0 %v4550
    %6502 = vmatprep.subr.bf16.mxu0 0
    %6503 = vmatpush1.bf16.msra.mxu0 %v4551
    %6504 = vmatprep.subr.bf16.mxu0 0
    %6505 = vmatpush1.bf16.msra.mxu0 %v4552
    %6506 = vmatprep.subr.bf16.mxu0 0
    %6507 = vmatpush1.bf16.msra.mxu0 %v4553
    %6508 = vmatprep.subr.bf16.mxu0 0
    %6509 = vmatpush1.bf16.msra.mxu0 %v4554
    %6510 = vmatprep.subr.bf16.mxu0 0
    %6511 = vmatpush1.bf16.msra.mxu0 %v4555
    %6512 = vmatprep.subr.bf16.mxu0 0
    %6513 = vmatpush1.bf16.msra.mxu0 %v4556
    %6514 = vmatprep.subr.bf16.mxu0 0
    %6515 = vmatpush1.bf16.msra.mxu0 %v4557
    %6516 = vmatprep.subr.bf16.mxu0 0
    %6517 = vmatpush1.bf16.msra.mxu0 %v4558
    %6518 = vmatprep.subr.bf16.mxu0 0
    %6519 = vmatpush1.bf16.msra.mxu0 %v4559
    %6520 = vmatprep.mubr.bf16.mxu0 %v1638
    %6521 = vmatmul.mubr.bf16.gmra.mrb[0].mxu0 %v1636
    %v6522 = vpop.f32.mrb[0].mxu0
    %v6523 = vadd.f32 %v6483, %v6522
    %v6524 = vpop.f32.mrb[0].mxu0
    %v6525 = vpop.f32.mrb[0].mxu0
    %v6526 = vpop.f32.mrb[0].mxu0
    %6527 = vdwg.mxu0
    %6528 = vmatprep.subr.bf16.mxu0 0
    %6529 = vmatpush1.bf16.msra.mxu0 %v4560
    %6530 = vmatprep.subr.bf16.mxu0 0
    %6531 = vmatpush1.bf16.msra.mxu0 %v4561
    %6532 = vmatprep.subr.bf16.mxu0 0
    %6533 = vmatpush1.bf16.msra.mxu0 %v4562
    %6534 = vmatprep.subr.bf16.mxu0 0
    %6535 = vmatpush1.bf16.msra.mxu0 %v4563
    %6536 = vmatprep.subr.bf16.mxu0 0
    %6537 = vmatpush1.bf16.msra.mxu0 %v4564
    %6538 = vmatprep.subr.bf16.mxu0 0
    %6539 = vmatpush1.bf16.msra.mxu0 %v4565
    %6540 = vmatprep.subr.bf16.mxu0 0
    %6541 = vmatpush1.bf16.msra.mxu0 %v4566
    %6542 = vmatprep.subr.bf16.mxu0 0
    %6543 = vmatpush1.bf16.msra.mxu0 %v4567
    %6544 = vmatprep.subr.bf16.mxu0 0
    %6545 = vmatpush1.bf16.msra.mxu0 %v4568
    %6546 = vmatprep.subr.bf16.mxu0 0
    %6547 = vmatpush1.bf16.msra.mxu0 %v4569
    %6548 = vmatprep.subr.bf16.mxu0 0
    %6549 = vmatpush1.bf16.msra.mxu0 %v4570
    %6550 = vmatprep.subr.bf16.mxu0 0
    %6551 = vmatpush1.bf16.msra.mxu0 %v4571
    %6552 = vmatprep.subr.bf16.mxu0 0
    %6553 = vmatpush1.bf16.msra.mxu0 %v4572
    %6554 = vmatprep.subr.bf16.mxu0 0
    %6555 = vmatpush1.bf16.msra.mxu0 %v4573
    %6556 = vmatprep.subr.bf16.mxu0 0
    %6557 = vmatpush1.bf16.msra.mxu0 %v4574
    %6558 = vmatprep.subr.bf16.mxu0 0
    %6559 = vmatpush1.bf16.msra.mxu0 %v4575
    %6560 = vmatprep.mubr.bf16.mxu0 %v1635
    %6561 = vmatmul.mubr.bf16.gmra.mrb[0].mxu0 %v1621
    %v6562 = vpop.f32.mrb[0].mxu0
    %v6563 = vadd.f32 %v6523, %v6562
    %v6564 = vpop.f32.mrb[0].mxu0
    %v6565 = vpop.f32.mrb[0].mxu0
    %v6566 = vpop.f32.mrb[0].mxu0
    %6567 = vdwg.mxu0
    %6568 = vmatprep.subr.bf16.mxu0 0
    %6569 = vmatpush1.bf16.msra.mxu0 %v4576
    %6570 = vmatprep.subr.bf16.mxu0 0
    %6571 = vmatpush1.bf16.msra.mxu0 %v4577
    %6572 = vmatprep.subr.bf16.mxu0 0
    %6573 = vmatpush1.bf16.msra.mxu0 %v4578
    %6574 = vmatprep.subr.bf16.mxu0 0
    %6575 = vmatpush1.bf16.msra.mxu0 %v4579
    %6576 = vmatprep.subr.bf16.mxu0 0
    %6577 = vmatpush1.bf16.msra.mxu0 %v4580
    %6578 = vmatprep.subr.bf16.mxu0 0
    %6579 = vmatpush1.bf16.msra.mxu0 %v4581
    %6580 = vmatprep.subr.bf16.mxu0 0
    %6581 = vmatpush1.bf16.msra.mxu0 %v4582
    %6582 = vmatprep.subr.bf16.mxu0 0
    %6583 = vmatpush1.bf16.msra.mxu0 %v4583
    %6584 = vmatprep.subr.bf16.mxu0 0
    %6585 = vmatpush1.bf16.msra.mxu0 %v4584
    %6586 = vmatprep.subr.bf16.mxu0 0
    %6587 = vmatpush1.bf16.msra.mxu0 %v4585
    %6588 = vmatprep.subr.bf16.mxu0 0
    %6589 = vmatpush1.bf16.msra.mxu0 %v4586
    %6590 = vmatprep.subr.bf16.mxu0 0
    %6591 = vmatpush1.bf16.msra.mxu0 %v4587
    %6592 = vmatprep.subr.bf16.mxu0 0
    %6593 = vmatpush1.bf16.msra.mxu0 %v4588
    %6594 = vmatprep.subr.bf16.mxu0 0
    %6595 = vmatpush1.bf16.msra.mxu0 %v4589
    %6596 = vmatprep.subr.bf16.mxu0 0
    %6597 = vmatpush1.bf16.msra.mxu0 %v4590
    %6598 = vmatprep.subr.bf16.mxu0 0
    %6599 = vmatpush1.bf16.msra.mxu0 %v4591
    %6600 = vmatprep.mubr.bf16.mxu0 %v1639
    %6601 = vmatmul.mubr.bf16.gmra.mrb[0].mxu0 %v1637
    %v6602 = vpop.f32.mrb[0].mxu0
    %v6603 = vadd.f32 %v6563, %v6602
    %v6604 = vpop.f32.mrb[0].mxu0
    %v6605 = vpop.f32.mrb[0].mxu0
    %v6606 = vpop.f32.mrb[0].mxu0
    %6607 = vdwg.mxu0
    %v6608 = vmax.f32 %v6603, 0.0
    %v6609 = vpack.c.bf16 %v6608, %v6608
    %v6610 = vld [vmem:[%s3] sm:$0xf]
    %v6611 = vld [vmem:[%s3 + $0x4] sm:$0xf]
    %v6612 = vld [vmem:[%s3 + $0x8] sm:$0xf]
    %v6613 = vld [vmem:[%s3 + $0xc] sm:$0xf]
    %v6614 = vld [vmem:[%s3 + $0x10] sm:$0xf]
    %v6615 = vld [vmem:[%s3 + $0x14] sm:$0xf]
    %v6616 = vld [vmem:[%s3 + $0x18] sm:$0xf]
    %v6617 = vld [vmem:[%s3 + $0x1c] sm:$0xf]
    %v6618 = vld [vmem:[%s3 + $0x20] sm:$0xf]
    %v6619 = vld [vmem:[%s3 + $0x24] sm:$0xf]
    %v6620 = vld [vmem:[%s3 + $0x28] sm:$0xf]
    %v6621 = vld [vmem:[%s3 + $0x2c] sm:$0xf]
    %v6622 = vld [vmem:[%s3 + $0x30] sm:$0xf]
    %v6623 = vld [vmem:[%s3 + $0x34] sm:$0xf]
    %v6624 = vld [vmem:[%s3 + $0x38] sm:$0xf]
    %v6625 = vld [vmem:[%s3 + $0x3c] sm:$0xf]
    %v6626 = vld [vmem:[%s4] sm:$0x1]
    %v6628 = vlaneseq
    %v6629 = vshrl.u32 %v6628, 7
    %v6630 = vsub.s32 0, %v6629
    %v6631 = vrot.slane %v6626, %v6630
    %v6649 = vunpack.c.l.b16 %v6610
    %v6650 = vunpack.c.l.b16 %v6611
    %v6651 = vunpack.c.l.b16 %v6612
    %v6652 = vunpack.c.l.b16 %v6613
    %v6653 = vunpack.c.l.b16 %v6614
    %v6654 = vunpack.c.l.b16 %v6615
    %v6655 = vunpack.c.l.b16 %v6616
    %v6656 = vunpack.c.l.b16 %v6617
    %v6657 = vunpack.c.l.b16 %v6618
    %v6658 = vunpack.c.l.b16 %v6619
    %v6659 = vunpack.c.l.b16 %v6620
    %v6660 = vunpack.c.l.b16 %v6621
    %v6661 = vunpack.c.l.b16 %v6622
    %v6662 = vunpack.c.l.b16 %v6623
    %v6663 = vunpack.c.l.b16 %v6624
    %v6664 = vunpack.c.l.b16 %v6625
    %v6665 = vpack.c.b16 %v6650, %v6649
    %v6666 = vpack.c.b16 %v6652, %v6651
    %v6667 = vpack.c.b16 %v6654, %v6653
    %v6668 = vpack.c.b16 %v6656, %v6655
    %v6669 = vpack.c.b16 %v6658, %v6657
    %v6670 = vpack.c.b16 %v6660, %v6659
    %v6671 = vpack.c.b16 %v6662, %v6661
    %v6672 = vpack.c.b16 %v6664, %v6663
    %6681 = vmatprep.subr.bf16.mxu0 0
    %6682 = vmatpush1.bf16.msra.mxu0 %v6665
    %6683 = vmatprep.subr.bf16.mxu0 0
    %6684 = vmatpush1.bf16.msra.mxu0 %v6666
    %6685 = vmatprep.subr.bf16.mxu0 0
    %6686 = vmatpush1.bf16.msra.mxu0 %v6667
    %6687 = vmatprep.subr.bf16.mxu0 0
    %6688 = vmatpush1.bf16.msra.mxu0 %v6668
    %6689 = vmatprep.subr.bf16.mxu0 0
    %6690 = vmatpush1.bf16.msra.mxu0 %v6669
    %6691 = vmatprep.subr.bf16.mxu0 0
    %6692 = vmatpush1.bf16.msra.mxu0 %v6670
    %6693 = vmatprep.subr.bf16.mxu0 0
    %6694 = vmatpush1.bf16.msra.mxu0 %v6671
    %6695 = vmatprep.subr.bf16.mxu0 0
    %6696 = vmatpush1.bf16.msra.mxu0 %v6672
    %6697 = vmatprep.subr.bf16.mxu0 0
    %6698 = vmatpush1.bf16.msra.mxu0 0
    %6699 = vmatprep.subr.bf16.mxu0 0
    %6700 = vmatpush1.bf16.msra.mxu0 0
    %6701 = vmatprep.subr.bf16.mxu0 0
    %6702 = vmatpush1.bf16.msra.mxu0 0
    %6703 = vmatprep.subr.bf16.mxu0 0
    %6704 = vmatpush1.bf16.msra.mxu0 0
    %6705 = vmatprep.subr.bf16.mxu0 0
    %6706 = vmatpush1.bf16.msra.mxu0 0
    %6707 = vmatprep.subr.bf16.mxu0 0
    %6708 = vmatpush1.bf16.msra.mxu0 0
    %6709 = vmatprep.subr.bf16.mxu0 0
    %6710 = vmatpush1.bf16.msra.mxu0 0
    %6711 = vmatprep.subr.bf16.mxu0 0
    %6712 = vmatpush1.bf16.msra.mxu0 0
    %6713 = vmatprep.mubr.bf16.mxu0 0
    %6714 = vmatmul.mubr.bf16.gmra.mrb[0].mxu0 %v6609
    %v6715 = vpop.f32.mrb[0].mxu0
    %v6716 = vadd.f32 %v6631, %v6715
    %v6717 = vpop.f32.mrb[0].mxu0
    %v6718 = vpop.f32.mrb[0].mxu0
    %v6719 = vpop.f32.mrb[0].mxu0
    %6720 = vdwg.mxu0
    %vm6721 = vcmask 74752
    %v6722 = vsel %vm6721, %v6716, -inf
    %6723 = vmax.xlane.f32.xlu0 %v6722
    %v6724 = vpop.xlane.xlu0 %6723
    %v6725 = vsub.f32 %v6716, %v6724
    %v6726 = vmul.f32 %v6725, 1.442695
    %v6727 = vpow.pop %v6726
    %v6728 = vsel %vm6721, %v6727, 0.0
    %6729 = vadd.xlane.f32.xlu0 %v6728
    %v6730 = vpop.xlane.xlu0 %6729
    %v6731 = vlog2.pop %v6730
    %v6732 = vmul.f32 %v6731, 0.6931472
    %v6733 = vsub.f32 %v6725, %v6732
    %6734 = vst.msk [vmem:[#allocation2] sm:$0x3] %vm6721, %v6733
    // Predicated region
    $region22: #{cnn_net_forward.5} parent=1 // pred_check
      _
    $region23: #{cnn_net_forward.5} parent=1 // pred_check_branch
      %6736 = sbr.rel (0) target = $region25
    $region24: #{cnn_net_forward.5} parent=1 // pred_region
      %s6738 = ssub.s32 32, 32
      %6739 = vsyncadd [#allocation3], %s6738
      %s6741 = sshll.u32 [#allocation2], 4
      %s6742 = int_to_ptr.vmem [resolvable:$true] %s6741
      %6744 = dma.vmem_to_hbm [thread:$0]  %s6742, 32, %s5, [#allocation3]
    $region25: #{cnn_net_forward.5} parent=1 // pred_fallthru
      _
    // Predicated region
    $region26: #{cnn_net_forward.5} parent=1 // pred_check
      _
    $region27: #{cnn_net_forward.5} parent=1 // pred_check_branch
      %6746 = sbr.rel (0) target = $region29
    $region28: #{cnn_net_forward.5} parent=1 // pred_region
      %6747 = dma.done [#allocation3], 32
    $region29: #{cnn_net_forward.5} parent=1 // pred_fallthru
      _
    %6748 = vsyncpa [#allocation3], 1

</llo_original>
